<compile_context>
chip_gen: v7x
topology: tpu7x:2x2x1
jax: 0.10.0
libtpu: 0.0.40
codegen_flags: <defaults>
</compile_context>

<pallas_src>
import jax
import jax.numpy as jnp
from jax.experimental import pallas as pl
from jax.experimental.pallas import tpu as pltpu

IN_DIM = 3 * 32 * 32   # 3072
HID = 512
LATENT = 128           # latent_dim (lane-friendly choice)


def _autoencoder_kernel(x_ref,
                        w1_ref, b1_ref,
                        w2_ref, b2_ref,
                        w3_ref, b3_ref,
                        w4_ref, b4_ref,
                        o_ref):
    # x arrives as f32 from HBM; cast to bf16 in VMEM for the MXU feed.
    x = x_ref[...].astype(jnp.bfloat16)                        # (TB, 3072)

    # ---- encoder ----
    h1 = jnp.dot(x, w1_ref[...], preferred_element_type=jnp.float32) + b1_ref[...]
    h1 = jnp.maximum(h1, 0.0).astype(jnp.bfloat16)             # ReLU (f32) -> bf16
    z = jnp.dot(h1, w2_ref[...], preferred_element_type=jnp.float32) + b2_ref[...]

    # ---- decoder ----
    h2 = jnp.dot(z.astype(jnp.bfloat16), w3_ref[...],
                 preferred_element_type=jnp.float32) + b3_ref[...]
    h2 = jnp.maximum(h2, 0.0).astype(jnp.bfloat16)             # ReLU (f32) -> bf16
    y = jnp.dot(h2, w4_ref[...], preferred_element_type=jnp.float32) + b4_ref[...]

    # Sigmoid via a single EUP transcendental: sigmoid(y) = 0.5*(tanh(y/2)+1).
    o_ref[...] = (0.5 * (jnp.tanh(0.5 * y) + 1.0)).astype(o_ref.dtype)


def cifar_autoencoder_forward(x_nchw, params, *, out_dtype=jnp.bfloat16):
    """x_nchw: (B, 3, 32, 32) float32 -> reconstructed (B, 3, 32, 32) out_dtype."""
    B = x_nchw.shape[0]
    # nn.Flatten; keep f32 — the bf16 cast happens on the tile inside the kernel.
    x_flat = x_nchw.reshape(B, IN_DIM)

    (w1, b1, w2, b2, w3, b3, w4, b4) = params
    # bf16 weights for the MXU; biases stay f32 (added post-accumulation).
    w1, w2, w3, w4 = (w.astype(jnp.bfloat16) for w in (w1, w2, w3, w4))

    # Batch tile: 256 rows matches v6e/v7x's 256-wide MXU; small batches take
    # the whole batch in one tile (block dim == full array dim is always legal).
    if B <= 256:
        TB = B
        pad = 0
    else:
        TB = 256
        pad = (-B) % TB
        if pad:
            x_flat = jnp.pad(x_flat, ((0, pad), (0, 0)))
    Bp = B + pad
    grid = (Bp // TB,)

    def batch_spec(d):
        return pl.BlockSpec((TB, d), lambda i: (i, 0))

    def const_spec(shape):
        # Constant index_map: block is fetched once and stays VMEM-resident
        # across all batch-grid steps.
        return pl.BlockSpec(shape, lambda i: (0, 0))

    out_flat = pl.pallas_call(
        _autoencoder_kernel,
        out_shape=jax.ShapeDtypeStruct((Bp, IN_DIM), out_dtype),
        grid_spec=pltpu.PrefetchScalarGridSpec(
            num_scalar_prefetch=0,
            grid=grid,
            in_specs=[
                batch_spec(IN_DIM),
                const_spec((IN_DIM, HID)), const_spec((1, HID)),
                const_spec((HID, LATENT)), const_spec((1, LATENT)),
                const_spec((LATENT, HID)), const_spec((1, HID)),
                const_spec((HID, IN_DIM)), const_spec((1, IN_DIM)),
            ],
            out_specs=batch_spec(IN_DIM),
        ),
        compiler_params=pltpu.CompilerParams(
            dimension_semantics=("parallel",),
            vmem_limit_bytes=48 * 1024 * 1024,
        ),
    )(x_flat, w1, b1, w2, b2, w3, b3, w4, b4)

    if pad:
        out_flat = out_flat[:B]
    return out_flat.reshape(B, 3, 32, 32)                      # nn.Unflatten(1, (3,32,32))


def init_params(key):
    """Deterministic synthetic parameters (shapes from the module's __init__)."""
    ks = jax.random.split(key, 8)
    scale = 0.02

    def w(k, shape):
        return scale * jax.random.normal(k, shape, dtype=jnp.float32)

    w1 = w(ks[0], (IN_DIM, HID));    b1 = w(ks[1], (1, HID))
    w2 = w(ks[2], (HID, LATENT));    b2 = w(ks[3], (1, LATENT))
    w3 = w(ks[4], (LATENT, HID));    b3 = w(ks[5], (1, HID))
    w4 = w(ks[6], (HID, IN_DIM));    b4 = w(ks[7], (1, IN_DIM))
    return (w1, b1, w2, b2, w3, b3, w4, b4)


if __name__ == "__main__":
    key = jax.random.PRNGKey(0)
    k_params, k_x = jax.random.split(key)

    params = init_params(k_params)
    B = 8
    x = jax.random.normal(k_x, (B, 3, 32, 32), dtype=jnp.float32)  # NCHW like PyTorch

    out = cifar_autoencoder_forward(x, params)
    jax.block_until_ready(out)

    assert out.shape == (B, 3, 32, 32), out.shape
    assert out.dtype == jnp.bfloat16, out.dtype

    # Sanity check against a pure-JAX reference using the same bf16 weight /
    # activation casting with f32 accumulation, so only MXU accumulation order
    # and the bf16 output rounding differ.
    (w1, b1, w2, b2, w3, b3, w4, b4) = params
    bf = jnp.bfloat16
    xf = x.reshape(B, -1).astype(bf)
    h1 = jnp.maximum(jnp.dot(xf, w1.astype(bf), preferred_element_type=jnp.float32) + b1, 0.0)
    z = jnp.dot(h1.astype(bf), w2.astype(bf), preferred_element_type=jnp.float32) + b2
    h2 = jnp.maximum(jnp.dot(z.astype(bf), w3.astype(bf), preferred_element_type=jnp.float32) + b3, 0.0)
    ref = jax.nn.sigmoid(
        jnp.dot(h2.astype(bf), w4.astype(bf), preferred_element_type=jnp.float32) + b4
    ).reshape(B, 3, 32, 32)

    err = float(jnp.max(jnp.abs(out.astype(jnp.float32) - ref)))
    assert err < 2e-2, err

    print("KERNEL_OK")
</pallas_src>

<mosaic_0001>
module attributes {stable_mosaic.version = 11 : i64} {
  func.func @_autoencoder_kernel(%arg0: i32, %arg1: memref<8x3072xf32, #tpu.memory_space<vmem>>, %arg2: memref<3072x512xbf16, #tpu.memory_space<vmem>>, %arg3: memref<1x512xf32, #tpu.memory_space<vmem>>, %arg4: memref<512x128xbf16, #tpu.memory_space<vmem>>, %arg5: memref<1x128xf32, #tpu.memory_space<vmem>>, %arg6: memref<128x512xbf16, #tpu.memory_space<vmem>>, %arg7: memref<1x512xf32, #tpu.memory_space<vmem>>, %arg8: memref<512x3072xbf16, #tpu.memory_space<vmem>>, %arg9: memref<1x3072xf32, #tpu.memory_space<vmem>>, %arg10: memref<8x3072xbf16, #tpu.memory_space<vmem>>) attributes {dimension_semantics = [#tpu.dimension_semantics<parallel>], iteration_bounds = array<i64: 1>, scalar_prefetch = 0 : i64, scratch_operands = 0 : i64, tpu.core_type = #tpu.core_type<tc>, window_params = [{transform_indices = @transform_0, window_bounds = array<i64: 8, 3072>}, {pipeline_mode = #tpu.pipeline_mode<synchronous>, transform_indices = @transform_1, window_bounds = array<i64: 3072, 512>}, {pipeline_mode = #tpu.pipeline_mode<synchronous>, transform_indices = @transform_2, window_bounds = array<i64: 1, 512>}, {pipeline_mode = #tpu.pipeline_mode<synchronous>, transform_indices = @transform_3, window_bounds = array<i64: 512, 128>}, {pipeline_mode = #tpu.pipeline_mode<synchronous>, transform_indices = @transform_4, window_bounds = array<i64: 1, 128>}, {pipeline_mode = #tpu.pipeline_mode<synchronous>, transform_indices = @transform_5, window_bounds = array<i64: 128, 512>}, {pipeline_mode = #tpu.pipeline_mode<synchronous>, transform_indices = @transform_6, window_bounds = array<i64: 1, 512>}, {pipeline_mode = #tpu.pipeline_mode<synchronous>, transform_indices = @transform_7, window_bounds = array<i64: 512, 3072>}, {pipeline_mode = #tpu.pipeline_mode<synchronous>, transform_indices = @transform_8, window_bounds = array<i64: 1, 3072>}, {transform_indices = @transform_9, window_bounds = array<i64: 8, 3072>}]} {
    %c0 = arith.constant 0 : index
    %c0_0 = arith.constant 0 : index
    %0 = vector.load %arg1[%c0, %c0_0] : memref<8x3072xf32, #tpu.memory_space<vmem>>, vector<8x3072xf32>
    %1 = arith.truncf %0 : vector<8x3072xf32> to vector<8x3072xbf16>
    %c0_1 = arith.constant 0 : index
    %c0_2 = arith.constant 0 : index
    %2 = vector.load %arg2[%c0_1, %c0_2] : memref<3072x512xbf16, #tpu.memory_space<vmem>>, vector<3072x512xbf16>
    %cst = arith.constant dense<0.000000e+00> : vector<8x512xf32>
    %3 = tpu.matmul %1, %2, %cst {dimension_numbers = #tpu.dot_dimension_numbers<[1], [0], [0], [1], [0, 0, 1, 1], [], []>} : vector<8x3072xbf16>, vector<3072x512xbf16>, vector<8x512xf32> -> vector<8x512xf32>
    %c0_3 = arith.constant 0 : index
    %c0_4 = arith.constant 0 : index
    %4 = vector.load %arg3[%c0_3, %c0_4] : memref<1x512xf32, #tpu.memory_space<vmem>>, vector<1x512xf32>
    %5 = vector.broadcast %4 : vector<1x512xf32> to vector<8x512xf32>
    %6 = arith.addf %3, %5 : vector<8x512xf32>
    %cst_5 = arith.constant 0.000000e+00 : f32
    %7 = vector.broadcast %cst_5 : f32 to vector<8x512xf32>
    %8 = arith.maximumf %6, %7 : vector<8x512xf32>
    %9 = arith.truncf %8 : vector<8x512xf32> to vector<8x512xbf16>
    %c0_6 = arith.constant 0 : index
    %c0_7 = arith.constant 0 : index
    %10 = vector.load %arg4[%c0_6, %c0_7] : memref<512x128xbf16, #tpu.memory_space<vmem>>, vector<512x128xbf16>
    %cst_8 = arith.constant dense<0.000000e+00> : vector<8x128xf32>
    %11 = tpu.matmul %9, %10, %cst_8 {dimension_numbers = #tpu.dot_dimension_numbers<[1], [0], [0], [1], [0, 0, 1, 1], [], []>} : vector<8x512xbf16>, vector<512x128xbf16>, vector<8x128xf32> -> vector<8x128xf32>
    %c0_9 = arith.constant 0 : index
    %c0_10 = arith.constant 0 : index
    %12 = vector.load %arg5[%c0_9, %c0_10] : memref<1x128xf32, #tpu.memory_space<vmem>>, vector<1x128xf32>
    %13 = vector.broadcast %12 : vector<1x128xf32> to vector<8x128xf32>
    %14 = arith.addf %11, %13 : vector<8x128xf32>
    %15 = arith.truncf %14 : vector<8x128xf32> to vector<8x128xbf16>
    %c0_11 = arith.constant 0 : index
    %c0_12 = arith.constant 0 : index
    %16 = vector.load %arg6[%c0_11, %c0_12] : memref<128x512xbf16, #tpu.memory_space<vmem>>, vector<128x512xbf16>
    %cst_13 = arith.constant dense<0.000000e+00> : vector<8x512xf32>
    %17 = tpu.matmul %15, %16, %cst_13 {dimension_numbers = #tpu.dot_dimension_numbers<[1], [0], [0], [1], [0, 0, 1, 1], [], []>} : vector<8x128xbf16>, vector<128x512xbf16>, vector<8x512xf32> -> vector<8x512xf32>
    %c0_14 = arith.constant 0 : index
    %c0_15 = arith.constant 0 : index
    %18 = vector.load %arg7[%c0_14, %c0_15] : memref<1x512xf32, #tpu.memory_space<vmem>>, vector<1x512xf32>
    %19 = vector.broadcast %18 : vector<1x512xf32> to vector<8x512xf32>
    %20 = arith.addf %17, %19 : vector<8x512xf32>
    %cst_16 = arith.constant 0.000000e+00 : f32
    %21 = vector.broadcast %cst_16 : f32 to vector<8x512xf32>
    %22 = arith.maximumf %20, %21 : vector<8x512xf32>
    %23 = arith.truncf %22 : vector<8x512xf32> to vector<8x512xbf16>
    %c0_17 = arith.constant 0 : index
    %c0_18 = arith.constant 0 : index
    %24 = vector.load %arg8[%c0_17, %c0_18] : memref<512x3072xbf16, #tpu.memory_space<vmem>>, vector<512x3072xbf16>
    %cst_19 = arith.constant dense<0.000000e+00> : vector<8x3072xf32>
    %25 = tpu.matmul %23, %24, %cst_19 {dimension_numbers = #tpu.dot_dimension_numbers<[1], [0], [0], [1], [0, 0, 1, 1], [], []>} : vector<8x512xbf16>, vector<512x3072xbf16>, vector<8x3072xf32> -> vector<8x3072xf32>
    %c0_20 = arith.constant 0 : index
    %c0_21 = arith.constant 0 : index
    %26 = vector.load %arg9[%c0_20, %c0_21] : memref<1x3072xf32, #tpu.memory_space<vmem>>, vector<1x3072xf32>
    %27 = vector.broadcast %26 : vector<1x3072xf32> to vector<8x3072xf32>
    %28 = arith.addf %25, %27 : vector<8x3072xf32>
    %cst_22 = arith.constant 5.000000e-01 : f32
    %29 = vector.broadcast %cst_22 : f32 to vector<8x3072xf32>
    %30 = arith.mulf %29, %28 : vector<8x3072xf32>
    %31 = math.tanh %30 : vector<8x3072xf32>
    %cst_23 = arith.constant 1.000000e+00 : f32
    %32 = vector.broadcast %cst_23 : f32 to vector<8x3072xf32>
    %33 = arith.addf %31, %32 : vector<8x3072xf32>
    %cst_24 = arith.constant 5.000000e-01 : f32
    %34 = vector.broadcast %cst_24 : f32 to vector<8x3072xf32>
    %35 = arith.mulf %34, %33 : vector<8x3072xf32>
    %36 = arith.truncf %35 : vector<8x3072xf32> to vector<8x3072xbf16>
    %c0_25 = arith.constant 0 : index
    %c0_26 = arith.constant 0 : index
    %37 = vector.load %arg10[%c0_25, %c0_26] : memref<8x3072xbf16, #tpu.memory_space<vmem>>, vector<8x3072xbf16>
    tpu.vector_store %arg10[%c0_25, %c0_26], %36 {strides = array<i32>} : memref<8x3072xbf16, #tpu.memory_space<vmem>>, vector<8x3072xbf16>,
    return
  }
  func.func @transform_0(%arg0: i32) -> (i32, i32) {
    %c0_i32 = arith.constant 0 : i32
    %c0_i32_0 = arith.constant 0 : i32
    return %arg0, %c0_i32 : i32, i32
  }
  func.func @transform_1(%arg0: i32) -> (i32, i32) {
    %c0_i32 = arith.constant 0 : i32
    %c0_i32_0 = arith.constant 0 : i32
    %c0_i32_1 = arith.constant 0 : i32
    return %c0_i32, %c0_i32_0 : i32, i32
  }
  func.func @transform_2(%arg0: i32) -> (i32, i32) {
    %c0_i32 = arith.constant 0 : i32
    %c0_i32_0 = arith.constant 0 : i32
    %c0_i32_1 = arith.constant 0 : i32
    return %c0_i32, %c0_i32_0 : i32, i32
  }
  func.func @transform_3(%arg0: i32) -> (i32, i32) {
    %c0_i32 = arith.constant 0 : i32
    %c0_i32_0 = arith.constant 0 : i32
    %c0_i32_1 = arith.constant 0 : i32
    return %c0_i32, %c0_i32_0 : i32, i32
  }
  func.func @transform_4(%arg0: i32) -> (i32, i32) {
    %c0_i32 = arith.constant 0 : i32
    %c0_i32_0 = arith.constant 0 : i32
    %c0_i32_1 = arith.constant 0 : i32
    return %c0_i32, %c0_i32_0 : i32, i32
  }
  func.func @transform_5(%arg0: i32) -> (i32, i32) {
    %c0_i32 = arith.constant 0 : i32
    %c0_i32_0 = arith.constant 0 : i32
    %c0_i32_1 = arith.constant 0 : i32
    return %c0_i32, %c0_i32_0 : i32, i32
  }
  func.func @transform_6(%arg0: i32) -> (i32, i32) {
    %c0_i32 = arith.constant 0 : i32
    %c0_i32_0 = arith.constant 0 : i32
    %c0_i32_1 = arith.constant 0 : i32
    return %c0_i32, %c0_i32_0 : i32, i32
  }
  func.func @transform_7(%arg0: i32) -> (i32, i32) {
    %c0_i32 = arith.constant 0 : i32
    %c0_i32_0 = arith.constant 0 : i32
    %c0_i32_1 = arith.constant 0 : i32
    return %c0_i32, %c0_i32_0 : i32, i32
  }
  func.func @transform_8(%arg0: i32) -> (i32, i32) {
    %c0_i32 = arith.constant 0 : i32
    %c0_i32_0 = arith.constant 0 : i32
    %c0_i32_1 = arith.constant 0 : i32
    return %c0_i32, %c0_i32_0 : i32, i32
  }
  func.func @transform_9(%arg0: i32) -> (i32, i32) {
    %c0_i32 = arith.constant 0 : i32
    %c0_i32_0 = arith.constant 0 : i32
    return %arg0, %c0_i32 : i32, i32
  }
}

</mosaic_0001>

<llo_original>
// kernel: tpu_custom_call.1
$region0: #{tpu_custom_call.1}
  #allocation0 [shape = 'u32[]', space=smem, size = 0x4, offset = 0x4, fixed_abs, tag = 'smem constant byte address 0x4 - core index']
  #allocation1 [shape = 'u32[144,128]{1,0:T(1,128)}', space=vmem, size = 0x12000, scoped, tag = 'internal scratch']
  %s0 = inlined_call_operand.hbm [shape: f32[8,3072], index: 0, kind: input, shape index: {}]
  %s1 = inlined_call_operand.hbm [shape: bf16[3072,512], index: 1, kind: input, shape index: {}]
  %s2 = inlined_call_operand.hbm [shape: f32[1,512], index: 2, kind: input, shape index: {}]
  %s3 = inlined_call_operand.hbm [shape: bf16[512,128], index: 3, kind: input, shape index: {}]
  %s4 = inlined_call_operand.hbm [shape: f32[1,128], index: 4, kind: input, shape index: {}]
  %s5 = inlined_call_operand.hbm [shape: bf16[128,512], index: 5, kind: input, shape index: {}]
  %s6 = inlined_call_operand.hbm [shape: f32[1,512], index: 6, kind: input, shape index: {}]
  %s7 = inlined_call_operand.hbm [shape: bf16[512,3072], index: 7, kind: input, shape index: {}]
  %s8 = inlined_call_operand.hbm [shape: f32[1,3072], index: 8, kind: input, shape index: {}]
  %s9 = inlined_call_operand.hbm [shape: bf16[8,3072], index: 9, kind: output, shape index: {}]
  %s10 = sld [smem:[#allocation0]]
  $region82: #{tpu_custom_call.1} parent=0
    _
  %s12 = ssub.s32 1, %s10
  %s13 = scalar_select 0, %s12, %s10
  $region1: #{tpu_custom_call.1} parent=0
    #allocation2 [shape = 'u8[98304]{0}', space=vmem, size = 0x18000, scoped, tag = 'input window, operand 0, single buffered']
    #allocation3 [shape = 's32[1]{0}', space=sflag, size = 0x4, scoped, tag = 'scoped memory for tpu_custom_call.1']
    #allocation4 [shape = 's32[1]{0}', space=sflag, size = 0x4, scoped, tag = 'scoped memory for tpu_custom_call.1']
    #allocation5 [shape = 'u8[3145728]{0}', space=vmem, size = 0x300000, scoped, tag = 'input window, operand 1, single buffered']
    #allocation6 [shape = 's32[1]{0}', space=sflag, size = 0x4, scoped, tag = 'scoped memory for tpu_custom_call.1']
    #allocation7 [shape = 'u8[2048]{0}', space=vmem, size = 0x800, scoped, tag = 'input window, operand 2, single buffered']
    #allocation8 [shape = 'u8[131072]{0}', space=vmem, size = 0x20000, scoped, tag = 'input window, operand 3, single buffered']
    #allocation9 [shape = 's32[1]{0}', space=sflag, size = 0x4, scoped, tag = 'scoped memory for tpu_custom_call.1']
    #allocation10 [shape = 'u8[512]{0}', space=vmem, size = 0x400, scoped, tag = 'input window, operand 4, single buffered']
    #allocation11 [shape = 'u8[131072]{0}', space=vmem, size = 0x20000, scoped, tag = 'input window, operand 5, single buffered']
    #allocation12 [shape = 's32[1]{0}', space=sflag, size = 0x4, scoped, tag = 'scoped memory for tpu_custom_call.1']
    #allocation13 [shape = 'u8[2048]{0}', space=vmem, size = 0x800, scoped, tag = 'input window, operand 6, single buffered']
    #allocation14 [shape = 'u8[3145728]{0}', space=vmem, size = 0x300000, scoped, tag = 'input window, operand 7, single buffered']
    #allocation15 [shape = 's32[1]{0}', space=sflag, size = 0x4, scoped, tag = 'scoped memory for tpu_custom_call.1']
    #allocation16 [shape = 'u8[12288]{0}', space=vmem, size = 0x3000, scoped, tag = 'input window, operand 8, single buffered']
    #allocation17 [shape = 'u8[49152]{0}', space=vmem, size = 0xc000, scoped, tag = 'output window, operand 0, single buffered']
    %14 = vsyncpa [#allocation3], 0
    %15 = vsyncpa [#allocation6], 0
    %16 = vsyncpa [#allocation9], 0
    %17 = vsyncpa [#allocation12], 0
    %18 = vsyncpa [#allocation15], 0
    %19 = vsyncpa [#allocation4], 0
    // Predicated region
    $region2: #{tpu_custom_call.1} parent=1 // pred_check
      _
    $region3: #{tpu_custom_call.1} parent=1 // pred_check_branch
      %21 = sbr.rel (0) target = $region5
    $region4: #{tpu_custom_call.1} parent=1 // pred_region
      %s23 = ssub.s32 3072, 3072
      %24 = vsyncadd [#allocation3], %s23
      %s26 = sshll.u32 [#allocation2], 4
      %s27 = int_to_ptr.vmem [resolvable:$true] %s26
      %29 = dma.hbm_to_vmem [thread:$0]  %s0, 3072, %s27, [#allocation3]
    $region5: #{tpu_custom_call.1} parent=1 // pred_fallthru
      _
    // Predicated region
    $region6: #{tpu_custom_call.1} parent=1 // pred_check
      _
    $region7: #{tpu_custom_call.1} parent=1 // pred_check_branch
      %31 = sbr.rel (0) target = $region9
    $region8: #{tpu_custom_call.1} parent=1 // pred_region
      %s33 = ssub.s32 98304, 98304
      %34 = vsyncadd [#allocation6], %s33
      %s35 = sshll.u32 [#allocation5], 4
      %s36 = int_to_ptr.vmem [resolvable:$true] %s35
      %41 = dma.hbm_to_vmem [thread:$0]  %s1, 98304, %s36, [#allocation6], 256, 256, 16
    $region9: #{tpu_custom_call.1} parent=1 // pred_fallthru
      _
    // Predicated region
    $region10: #{tpu_custom_call.1} parent=1 // pred_check
      _
    $region11: #{tpu_custom_call.1} parent=1 // pred_check_branch
      %43 = sbr.rel (0) target = $region13
    $region12: #{tpu_custom_call.1} parent=1 // pred_region
      %s45 = ssub.s32 64, 64
      %46 = vsyncadd [#allocation6], %s45
      %s48 = sshll.u32 [#allocation7], 4
      %s49 = int_to_ptr.vmem [resolvable:$true] %s48
      %51 = dma.hbm_to_vmem [thread:$0]  %s2, 64, %s49, [#allocation6]
    $region13: #{tpu_custom_call.1} parent=1 // pred_fallthru
      _
    // Predicated region
    $region14: #{tpu_custom_call.1} parent=1 // pred_check
      _
    $region15: #{tpu_custom_call.1} parent=1 // pred_check_branch
      %53 = sbr.rel (0) target = $region17
    $region16: #{tpu_custom_call.1} parent=1 // pred_region
      %s55 = ssub.s32 4096, 4096
      %56 = vsyncadd [#allocation9], %s55
      %s57 = sshll.u32 [#allocation8], 4
      %s58 = int_to_ptr.vmem [resolvable:$true] %s57
      %63 = dma.hbm_to_vmem [thread:$0]  %s3, 4096, %s58, [#allocation9], 64, 64, 4
    $region17: #{tpu_custom_call.1} parent=1 // pred_fallthru
      _
    // Predicated region
    $region18: #{tpu_custom_call.1} parent=1 // pred_check
      _
    $region19: #{tpu_custom_call.1} parent=1 // pred_check_branch
      %65 = sbr.rel (0) target = $region21
    $region20: #{tpu_custom_call.1} parent=1 // pred_region
      %s67 = ssub.s32 16, 16
      %68 = vsyncadd [#allocation9], %s67
      %s70 = sshll.u32 [#allocation10], 4
      %s71 = int_to_ptr.vmem [resolvable:$true] %s70
      %73 = dma.hbm_to_vmem [thread:$0]  %s4, 16, %s71, [#allocation9]
    $region21: #{tpu_custom_call.1} parent=1 // pred_fallthru
      _
    // Predicated region
    $region22: #{tpu_custom_call.1} parent=1 // pred_check
      _
    $region23: #{tpu_custom_call.1} parent=1 // pred_check_branch
      %75 = sbr.rel (0) target = $region25
    $region24: #{tpu_custom_call.1} parent=1 // pred_region
      %s77 = ssub.s32 4096, 4096
      %78 = vsyncadd [#allocation12], %s77
      %s79 = sshll.u32 [#allocation11], 4
      %s80 = int_to_ptr.vmem [resolvable:$true] %s79
      %85 = dma.hbm_to_vmem [thread:$0]  %s5, 4096, %s80, [#allocation12], 256, 256, 16
    $region25: #{tpu_custom_call.1} parent=1 // pred_fallthru
      _
    // Predicated region
    $region26: #{tpu_custom_call.1} parent=1 // pred_check
      _
    $region27: #{tpu_custom_call.1} parent=1 // pred_check_branch
      %87 = sbr.rel (0) target = $region29
    $region28: #{tpu_custom_call.1} parent=1 // pred_region
      %s89 = ssub.s32 64, 64
      %90 = vsyncadd [#allocation12], %s89
      %s92 = sshll.u32 [#allocation13], 4
      %s93 = int_to_ptr.vmem [resolvable:$true] %s92
      %95 = dma.hbm_to_vmem [thread:$0]  %s6, 64, %s93, [#allocation12]
    $region29: #{tpu_custom_call.1} parent=1 // pred_fallthru
      _
    // Predicated region
    $region30: #{tpu_custom_call.1} parent=1 // pred_check
      _
    $region31: #{tpu_custom_call.1} parent=1 // pred_check_branch
      %97 = sbr.rel (0) target = $region33
    $region32: #{tpu_custom_call.1} parent=1 // pred_region
      %s99 = ssub.s32 98304, 98304
      %100 = vsyncadd [#allocation15], %s99
      %s101 = sshll.u32 [#allocation14], 4
      %s102 = int_to_ptr.vmem [resolvable:$true] %s101
      %107 = dma.hbm_to_vmem [thread:$0]  %s7, 98304, %s102, [#allocation15], 1536, 1536, 96
    $region33: #{tpu_custom_call.1} parent=1 // pred_fallthru
      _
    // Predicated region
    $region34: #{tpu_custom_call.1} parent=1 // pred_check
      _
    $region35: #{tpu_custom_call.1} parent=1 // pred_check_branch
      %109 = sbr.rel (0) target = $region37
    $region36: #{tpu_custom_call.1} parent=1 // pred_region
      %s111 = ssub.s32 384, 384
      %112 = vsyncadd [#allocation15], %s111
      %s114 = sshll.u32 [#allocation16], 4
      %s115 = int_to_ptr.vmem [resolvable:$true] %s114
      %117 = dma.hbm_to_vmem [thread:$0]  %s8, 384, %s115, [#allocation15]
    $region37: #{tpu_custom_call.1} parent=1 // pred_fallthru
      _
    // Predicated region
    $region38: #{tpu_custom_call.1} parent=1 // pred_check
      _
    $region39: #{tpu_custom_call.1} parent=1 // pred_check_branch
      %119 = sbr.rel (0) target = $region41
    $region40: #{tpu_custom_call.1} parent=1 // pred_region
      %120 = dma.done [#allocation3], 3072
    $region41: #{tpu_custom_call.1} parent=1 // pred_fallthru
      _
    // Predicated region
    $region42: #{tpu_custom_call.1} parent=1 // pred_check
      _
    $region43: #{tpu_custom_call.1} parent=1 // pred_check_branch
      %122 = sbr.rel (0) target = $region45
    $region44: #{tpu_custom_call.1} parent=1 // pred_region
      %123 = dma.done [#allocation6], 98304
    $region45: #{tpu_custom_call.1} parent=1 // pred_fallthru
      _
    // Predicated region
    $region46: #{tpu_custom_call.1} parent=1 // pred_check
      _
    $region47: #{tpu_custom_call.1} parent=1 // pred_check_branch
      %125 = sbr.rel (0) target = $region49
    $region48: #{tpu_custom_call.1} parent=1 // pred_region
      %126 = dma.done [#allocation6], 64
    $region49: #{tpu_custom_call.1} parent=1 // pred_fallthru
      _
    // Predicated region
    $region50: #{tpu_custom_call.1} parent=1 // pred_check
      _
    $region51: #{tpu_custom_call.1} parent=1 // pred_check_branch
      %128 = sbr.rel (0) target = $region53
    $region52: #{tpu_custom_call.1} parent=1 // pred_region
      %129 = dma.done [#allocation9], 4096
    $region53: #{tpu_custom_call.1} parent=1 // pred_fallthru
      _
    // Predicated region
    $region54: #{tpu_custom_call.1} parent=1 // pred_check
      _
    $region55: #{tpu_custom_call.1} parent=1 // pred_check_branch
      %131 = sbr.rel (0) target = $region57
    $region56: #{tpu_custom_call.1} parent=1 // pred_region
      %132 = dma.done [#allocation9], 16
    $region57: #{tpu_custom_call.1} parent=1 // pred_fallthru
      _
    // Predicated region
    $region58: #{tpu_custom_call.1} parent=1 // pred_check
      _
    $region59: #{tpu_custom_call.1} parent=1 // pred_check_branch
      %134 = sbr.rel (0) target = $region61
    $region60: #{tpu_custom_call.1} parent=1 // pred_region
      %135 = dma.done [#allocation12], 4096
    $region61: #{tpu_custom_call.1} parent=1 // pred_fallthru
      _
    // Predicated region
    $region62: #{tpu_custom_call.1} parent=1 // pred_check
      _
    $region63: #{tpu_custom_call.1} parent=1 // pred_check_branch
      %137 = sbr.rel (0) target = $region65
    $region64: #{tpu_custom_call.1} parent=1 // pred_region
      %138 = dma.done [#allocation12], 64
    $region65: #{tpu_custom_call.1} parent=1 // pred_fallthru
      _
    // Predicated region
    $region66: #{tpu_custom_call.1} parent=1 // pred_check
      _
    $region67: #{tpu_custom_call.1} parent=1 // pred_check_branch
      %140 = sbr.rel (0) target = $region69
    $region68: #{tpu_custom_call.1} parent=1 // pred_region
      %141 = dma.done [#allocation15], 98304
    $region69: #{tpu_custom_call.1} parent=1 // pred_fallthru
      _
    // Predicated region
    $region70: #{tpu_custom_call.1} parent=1 // pred_check
      _
    $region71: #{tpu_custom_call.1} parent=1 // pred_check_branch
      %143 = sbr.rel (0) target = $region73
    $region72: #{tpu_custom_call.1} parent=1 // pred_region
      %144 = dma.done [#allocation15], 384
    $region73: #{tpu_custom_call.1} parent=1 // pred_fallthru
      _
    %v146 = vld [vmem:[#allocation2] sm:$0xff]
    %v147 = vld [vmem:[#allocation2 + $0x8] sm:$0xff]
    %v148 = vld [vmem:[#allocation2 + $0x10] sm:$0xff]
    %v149 = vld [vmem:[#allocation2 + $0x18] sm:$0xff]
    %v150 = vld [vmem:[#allocation2 + $0x20] sm:$0xff]
    %v151 = vld [vmem:[#allocation2 + $0x28] sm:$0xff]
    %v152 = vld [vmem:[#allocation2 + $0x30] sm:$0xff]
    %v153 = vld [vmem:[#allocation2 + $0x38] sm:$0xff]
    %v154 = vld [vmem:[#allocation2 + $0x40] sm:$0xff]
    %v155 = vld [vmem:[#allocation2 + $0x48] sm:$0xff]
    %v156 = vld [vmem:[#allocation2 + $0x50] sm:$0xff]
    %v157 = vld [vmem:[#allocation2 + $0x58] sm:$0xff]
    %v158 = vld [vmem:[#allocation2 + $0x60] sm:$0xff]
    %v159 = vld [vmem:[#allocation2 + $0x68] sm:$0xff]
    %v160 = vld [vmem:[#allocation2 + $0x70] sm:$0xff]
    %v161 = vld [vmem:[#allocation2 + $0x78] sm:$0xff]
    %v162 = vld [vmem:[#allocation2 + $0x80] sm:$0xff]
    %v163 = vld [vmem:[#allocation2 + $0x88] sm:$0xff]
    %v164 = vld [vmem:[#allocation2 + $0x90] sm:$0xff]
    %v165 = vld [vmem:[#allocation2 + $0x98] sm:$0xff]
    %v166 = vld [vmem:[#allocation2 + $0xa0] sm:$0xff]
    %v167 = vld [vmem:[#allocation2 + $0xa8] sm:$0xff]
    %v168 = vld [vmem:[#allocation2 + $0xb0] sm:$0xff]
    %v169 = vld [vmem:[#allocation2 + $0xb8] sm:$0xff]
    %v170 = vpack.c.bf16 %v146, %v146
    %v171 = vpack.c.bf16 %v147, %v147
    %v172 = vpack.c.bf16 %v148, %v148
    %v173 = vpack.c.bf16 %v149, %v149
    %v174 = vpack.c.bf16 %v150, %v150
    %v175 = vpack.c.bf16 %v151, %v151
    %v176 = vpack.c.bf16 %v152, %v152
    %v177 = vpack.c.bf16 %v153, %v153
    %v178 = vpack.c.bf16 %v154, %v154
    %v179 = vpack.c.bf16 %v155, %v155
    %v180 = vpack.c.bf16 %v156, %v156
    %v181 = vpack.c.bf16 %v157, %v157
    %v182 = vpack.c.bf16 %v158, %v158
    %v183 = vpack.c.bf16 %v159, %v159
    %v184 = vpack.c.bf16 %v160, %v160
    %v185 = vpack.c.bf16 %v161, %v161
    %v186 = vpack.c.bf16 %v162, %v162
    %v187 = vpack.c.bf16 %v163, %v163
    %v188 = vpack.c.bf16 %v164, %v164
    %v189 = vpack.c.bf16 %v165, %v165
    %v190 = vpack.c.bf16 %v166, %v166
    %v191 = vpack.c.bf16 %v167, %v167
    %v192 = vpack.c.bf16 %v168, %v168
    %v193 = vpack.c.bf16 %v169, %v169
    %v194 = vld [vmem:[#allocation5] sm:$0xff]
    %v195 = vld [vmem:[#allocation5 + $0x8] sm:$0xff]
    %v196 = vld [vmem:[#allocation5 + $0x10] sm:$0xff]
    %v197 = vld [vmem:[#allocation5 + $0x18] sm:$0xff]
    %v198 = vld [vmem:[#allocation5 + $0x20] sm:$0xff]
    %v199 = vld [vmem:[#allocation5 + $0x28] sm:$0xff]
    %v200 = vld [vmem:[#allocation5 + $0x30] sm:$0xff]
    %v201 = vld [vmem:[#allocation5 + $0x38] sm:$0xff]
    %v202 = vld [vmem:[#allocation5 + $0x40] sm:$0xff]
    %v203 = vld [vmem:[#allocation5 + $0x48] sm:$0xff]
    %v204 = vld [vmem:[#allocation5 + $0x50] sm:$0xff]
    %v205 = vld [vmem:[#allocation5 + $0x58] sm:$0xff]
    %v206 = vld [vmem:[#allocation5 + $0x60] sm:$0xff]
    %v207 = vld [vmem:[#allocation5 + $0x68] sm:$0xff]
    %v208 = vld [vmem:[#allocation5 + $0x70] sm:$0xff]
    %v209 = vld [vmem:[#allocation5 + $0x78] sm:$0xff]
    %v210 = vld [vmem:[#allocation5 + $0x80] sm:$0xff]
    %v211 = vld [vmem:[#allocation5 + $0x88] sm:$0xff]
    %v212 = vld [vmem:[#allocation5 + $0x90] sm:$0xff]
    %v213 = vld [vmem:[#allocation5 + $0x98] sm:$0xff]
    %v214 = vld [vmem:[#allocation5 + $0xa0] sm:$0xff]
    %v215 = vld [vmem:[#allocation5 + $0xa8] sm:$0xff]
    %v216 = vld [vmem:[#allocation5 + $0xb0] sm:$0xff]
    %v217 = vld [vmem:[#allocation5 + $0xb8] sm:$0xff]
    %v218 = vld [vmem:[#allocation5 + $0xc0] sm:$0xff]
    %v219 = vld [vmem:[#allocation5 + $0xc8] sm:$0xff]
    %v220 = vld [vmem:[#allocation5 + $0xd0] sm:$0xff]
    %v221 = vld [vmem:[#allocation5 + $0xd8] sm:$0xff]
    %v222 = vld [vmem:[#allocation5 + $0xe0] sm:$0xff]
    %v223 = vld [vmem:[#allocation5 + $0xe8] sm:$0xff]
    %v224 = vld [vmem:[#allocation5 + $0xf0] sm:$0xff]
    %v225 = vld [vmem:[#allocation5 + $0xf8] sm:$0xff]
    %v226 = vld [vmem:[#allocation5 + $0x100] sm:$0xff]
    %v227 = vld [vmem:[#allocation5 + $0x108] sm:$0xff]
    %v228 = vld [vmem:[#allocation5 + $0x110] sm:$0xff]
    %v229 = vld [vmem:[#allocation5 + $0x118] sm:$0xff]
    %v230 = vld [vmem:[#allocation5 + $0x120] sm:$0xff]
    %v231 = vld [vmem:[#allocation5 + $0x128] sm:$0xff]
    %v232 = vld [vmem:[#allocation5 + $0x130] sm:$0xff]
    %v233 = vld [vmem:[#allocation5 + $0x138] sm:$0xff]
    %v234 = vld [vmem:[#allocation5 + $0x140] sm:$0xff]
    %v235 = vld [vmem:[#allocation5 + $0x148] sm:$0xff]
    %v236 = vld [vmem:[#allocation5 + $0x150] sm:$0xff]
    %v237 = vld [vmem:[#allocation5 + $0x158] sm:$0xff]
    %v238 = vld [vmem:[#allocation5 + $0x160] sm:$0xff]
    %v239 = vld [vmem:[#allocation5 + $0x168] sm:$0xff]
    %v240 = vld [vmem:[#allocation5 + $0x170] sm:$0xff]
    %v241 = vld [vmem:[#allocation5 + $0x178] sm:$0xff]
    %v242 = vld [vmem:[#allocation5 + $0x180] sm:$0xff]
    %v243 = vld [vmem:[#allocation5 + $0x188] sm:$0xff]
    %v244 = vld [vmem:[#allocation5 + $0x190] sm:$0xff]
    %v245 = vld [vmem:[#allocation5 + $0x198] sm:$0xff]
    %v246 = vld [vmem:[#allocation5 + $0x1a0] sm:$0xff]
    %v247 = vld [vmem:[#allocation5 + $0x1a8] sm:$0xff]
    %v248 = vld [vmem:[#allocation5 + $0x1b0] sm:$0xff]
    %v249 = vld [vmem:[#allocation5 + $0x1b8] sm:$0xff]
    %v250 = vld [vmem:[#allocation5 + $0x1c0] sm:$0xff]
    %v251 = vld [vmem:[#allocation5 + $0x1c8] sm:$0xff]
    %v252 = vld [vmem:[#allocation5 + $0x1d0] sm:$0xff]
    %v253 = vld [vmem:[#allocation5 + $0x1d8] sm:$0xff]
    %v254 = vld [vmem:[#allocation5 + $0x1e0] sm:$0xff]
    %v255 = vld [vmem:[#allocation5 + $0x1e8] sm:$0xff]
    %v256 = vld [vmem:[#allocation5 + $0x1f0] sm:$0xff]
    %v257 = vld [vmem:[#allocation5 + $0x1f8] sm:$0xff]
    %v258 = vld [vmem:[#allocation5 + $0x200] sm:$0xff]
    %v259 = vld [vmem:[#allocation5 + $0x208] sm:$0xff]
    %v260 = vld [vmem:[#allocation5 + $0x210] sm:$0xff]
    %v261 = vld [vmem:[#allocation5 + $0x218] sm:$0xff]
    %v262 = vld [vmem:[#allocation5 + $0x220] sm:$0xff]
    %v263 = vld [vmem:[#allocation5 + $0x228] sm:$0xff]
    %v264 = vld [vmem:[#allocation5 + $0x230] sm:$0xff]
    %v265 = vld [vmem:[#allocation5 + $0x238] sm:$0xff]
    %v266 = vld [vmem:[#allocation5 + $0x240] sm:$0xff]
    %v267 = vld [vmem:[#allocation5 + $0x248] sm:$0xff]
    %v268 = vld [vmem:[#allocation5 + $0x250] sm:$0xff]
    %v269 = vld [vmem:[#allocation5 + $0x258] sm:$0xff]
    %v270 = vld [vmem:[#allocation5 + $0x260] sm:$0xff]
    %v271 = vld [vmem:[#allocation5 + $0x268] sm:$0xff]
    %v272 = vld [vmem:[#allocation5 + $0x270] sm:$0xff]
    %v273 = vld [vmem:[#allocation5 + $0x278] sm:$0xff]
    %v274 = vld [vmem:[#allocation5 + $0x280] sm:$0xff]
    %v275 = vld [vmem:[#allocation5 + $0x288] sm:$0xff]
    %v276 = vld [vmem:[#allocation5 + $0x290] sm:$0xff]
    %v277 = vld [vmem:[#allocation5 + $0x298] sm:$0xff]
    %v278 = vld [vmem:[#allocation5 + $0x2a0] sm:$0xff]
    %v279 = vld [vmem:[#allocation5 + $0x2a8] sm:$0xff]
    %v280 = vld [vmem:[#allocation5 + $0x2b0] sm:$0xff]
    %v281 = vld [vmem:[#allocation5 + $0x2b8] sm:$0xff]
    %v282 = vld [vmem:[#allocation5 + $0x2c0] sm:$0xff]
    %v283 = vld [vmem:[#allocation5 + $0x2c8] sm:$0xff]
    %v284 = vld [vmem:[#allocation5 + $0x2d0] sm:$0xff]
    %v285 = vld [vmem:[#allocation5 + $0x2d8] sm:$0xff]
    %v286 = vld [vmem:[#allocation5 + $0x2e0] sm:$0xff]
    %v287 = vld [vmem:[#allocation5 + $0x2e8] sm:$0xff]
    %v288 = vld [vmem:[#allocation5 + $0x2f0] sm:$0xff]
    %v289 = vld [vmem:[#allocation5 + $0x2f8] sm:$0xff]
    %v290 = vld [vmem:[#allocation5 + $0x300] sm:$0xff]
    %v291 = vld [vmem:[#allocation5 + $0x308] sm:$0xff]
    %v292 = vld [vmem:[#allocation5 + $0x310] sm:$0xff]
    %v293 = vld [vmem:[#allocation5 + $0x318] sm:$0xff]
    %v294 = vld [vmem:[#allocation5 + $0x320] sm:$0xff]
    %v295 = vld [vmem:[#allocation5 + $0x328] sm:$0xff]
    %v296 = vld [vmem:[#allocation5 + $0x330] sm:$0xff]
    %v297 = vld [vmem:[#allocation5 + $0x338] sm:$0xff]
    %v298 = vld [vmem:[#allocation5 + $0x340] sm:$0xff]
    %v299 = vld [vmem:[#allocation5 + $0x348] sm:$0xff]
    %v300 = vld [vmem:[#allocation5 + $0x350] sm:$0xff]
    %v301 = vld [vmem:[#allocation5 + $0x358] sm:$0xff]
    %v302 = vld [vmem:[#allocation5 + $0x360] sm:$0xff]
    %v303 = vld [vmem:[#allocation5 + $0x368] sm:$0xff]
    %v304 = vld [vmem:[#allocation5 + $0x370] sm:$0xff]
    %v305 = vld [vmem:[#allocation5 + $0x378] sm:$0xff]
    %v306 = vld [vmem:[#allocation5 + $0x380] sm:$0xff]
    %v307 = vld [vmem:[#allocation5 + $0x388] sm:$0xff]
    %v308 = vld [vmem:[#allocation5 + $0x390] sm:$0xff]
    %v309 = vld [vmem:[#allocation5 + $0x398] sm:$0xff]
    %v310 = vld [vmem:[#allocation5 + $0x3a0] sm:$0xff]
    %v311 = vld [vmem:[#allocation5 + $0x3a8] sm:$0xff]
    %v312 = vld [vmem:[#allocation5 + $0x3b0] sm:$0xff]
    %v313 = vld [vmem:[#allocation5 + $0x3b8] sm:$0xff]
    %v314 = vld [vmem:[#allocation5 + $0x3c0] sm:$0xff]
    %v315 = vld [vmem:[#allocation5 + $0x3c8] sm:$0xff]
    %v316 = vld [vmem:[#allocation5 + $0x3d0] sm:$0xff]
    %v317 = vld [vmem:[#allocation5 + $0x3d8] sm:$0xff]
    %v318 = vld [vmem:[#allocation5 + $0x3e0] sm:$0xff]
    %v319 = vld [vmem:[#allocation5 + $0x3e8] sm:$0xff]
    %v320 = vld [vmem:[#allocation5 + $0x3f0] sm:$0xff]
    %v321 = vld [vmem:[#allocation5 + $0x3f8] sm:$0xff]
    %v322 = vld [vmem:[#allocation5 + $0x400] sm:$0xff]
    %v323 = vld [vmem:[#allocation5 + $0x408] sm:$0xff]
    %v324 = vld [vmem:[#allocation5 + $0x410] sm:$0xff]
    %v325 = vld [vmem:[#allocation5 + $0x418] sm:$0xff]
    %v326 = vld [vmem:[#allocation5 + $0x420] sm:$0xff]
    %v327 = vld [vmem:[#allocation5 + $0x428] sm:$0xff]
    %v328 = vld [vmem:[#allocation5 + $0x430] sm:$0xff]
    %v329 = vld [vmem:[#allocation5 + $0x438] sm:$0xff]
    %v330 = vld [vmem:[#allocation5 + $0x440] sm:$0xff]
    %v331 = vld [vmem:[#allocation5 + $0x448] sm:$0xff]
    %v332 = vld [vmem:[#allocation5 + $0x450] sm:$0xff]
    %v333 = vld [vmem:[#allocation5 + $0x458] sm:$0xff]
    %v334 = vld [vmem:[#allocation5 + $0x460] sm:$0xff]
    %v335 = vld [vmem:[#allocation5 + $0x468] sm:$0xff]
    %v336 = vld [vmem:[#allocation5 + $0x470] sm:$0xff]
    %v337 = vld [vmem:[#allocation5 + $0x478] sm:$0xff]
    %v338 = vld [vmem:[#allocation5 + $0x480] sm:$0xff]
    %v339 = vld [vmem:[#allocation5 + $0x488] sm:$0xff]
    %v340 = vld [vmem:[#allocation5 + $0x490] sm:$0xff]
    %v341 = vld [vmem:[#allocation5 + $0x498] sm:$0xff]
    %v342 = vld [vmem:[#allocation5 + $0x4a0] sm:$0xff]
    %v343 = vld [vmem:[#allocation5 + $0x4a8] sm:$0xff]
    %v344 = vld [vmem:[#allocation5 + $0x4b0] sm:$0xff]
    %v345 = vld [vmem:[#allocation5 + $0x4b8] sm:$0xff]
    %v346 = vld [vmem:[#allocation5 + $0x4c0] sm:$0xff]
    %v347 = vld [vmem:[#allocation5 + $0x4c8] sm:$0xff]
    %v348 = vld [vmem:[#allocation5 + $0x4d0] sm:$0xff]
    %v349 = vld [vmem:[#allocation5 + $0x4d8] sm:$0xff]
    %v350 = vld [vmem:[#allocation5 + $0x4e0] sm:$0xff]
    %v351 = vld [vmem:[#allocation5 + $0x4e8] sm:$0xff]
    %v352 = vld [vmem:[#allocation5 + $0x4f0] sm:$0xff]
    %v353 = vld [vmem:[#allocation5 + $0x4f8] sm:$0xff]
    %v354 = vld [vmem:[#allocation5 + $0x500] sm:$0xff]
    %v355 = vld [vmem:[#allocation5 + $0x508] sm:$0xff]
    %v356 = vld [vmem:[#allocation5 + $0x510] sm:$0xff]
    %v357 = vld [vmem:[#allocation5 + $0x518] sm:$0xff]
    %v358 = vld [vmem:[#allocation5 + $0x520] sm:$0xff]
    %v359 = vld [vmem:[#allocation5 + $0x528] sm:$0xff]
    %v360 = vld [vmem:[#allocation5 + $0x530] sm:$0xff]
    %v361 = vld [vmem:[#allocation5 + $0x538] sm:$0xff]
    %v362 = vld [vmem:[#allocation5 + $0x540] sm:$0xff]
    %v363 = vld [vmem:[#allocation5 + $0x548] sm:$0xff]
    %v364 = vld [vmem:[#allocation5 + $0x550] sm:$0xff]
    %v365 = vld [vmem:[#allocation5 + $0x558] sm:$0xff]
    %v366 = vld [vmem:[#allocation5 + $0x560] sm:$0xff]
    %v367 = vld [vmem:[#allocation5 + $0x568] sm:$0xff]
    %v368 = vld [vmem:[#allocation5 + $0x570] sm:$0xff]
    %v369 = vld [vmem:[#allocation5 + $0x578] sm:$0xff]
    %v370 = vld [vmem:[#allocation5 + $0x580] sm:$0xff]
    %v371 = vld [vmem:[#allocation5 + $0x588] sm:$0xff]
    %v372 = vld [vmem:[#allocation5 + $0x590] sm:$0xff]
    %v373 = vld [vmem:[#allocation5 + $0x598] sm:$0xff]
    %v374 = vld [vmem:[#allocation5 + $0x5a0] sm:$0xff]
    %v375 = vld [vmem:[#allocation5 + $0x5a8] sm:$0xff]
    %v376 = vld [vmem:[#allocation5 + $0x5b0] sm:$0xff]
    %v377 = vld [vmem:[#allocation5 + $0x5b8] sm:$0xff]
    %v378 = vld [vmem:[#allocation5 + $0x5c0] sm:$0xff]
    %v379 = vld [vmem:[#allocation5 + $0x5c8] sm:$0xff]
    %v380 = vld [vmem:[#allocation5 + $0x5d0] sm:$0xff]
    %v381 = vld [vmem:[#allocation5 + $0x5d8] sm:$0xff]
    %v382 = vld [vmem:[#allocation5 + $0x5e0] sm:$0xff]
    %v383 = vld [vmem:[#allocation5 + $0x5e8] sm:$0xff]
    %v384 = vld [vmem:[#allocation5 + $0x5f0] sm:$0xff]
    %v385 = vld [vmem:[#allocation5 + $0x5f8] sm:$0xff]
    %v386 = vld [vmem:[#allocation5 + $0x600] sm:$0xff]
    %v387 = vld [vmem:[#allocation5 + $0x608] sm:$0xff]
    %v388 = vld [vmem:[#allocation5 + $0x610] sm:$0xff]
    %v389 = vld [vmem:[#allocation5 + $0x618] sm:$0xff]
    %v390 = vld [vmem:[#allocation5 + $0x620] sm:$0xff]
    %v391 = vld [vmem:[#allocation5 + $0x628] sm:$0xff]
    %v392 = vld [vmem:[#allocation5 + $0x630] sm:$0xff]
    %v393 = vld [vmem:[#allocation5 + $0x638] sm:$0xff]
    %v394 = vld [vmem:[#allocation5 + $0x640] sm:$0xff]
    %v395 = vld [vmem:[#allocation5 + $0x648] sm:$0xff]
    %v396 = vld [vmem:[#allocation5 + $0x650] sm:$0xff]
    %v397 = vld [vmem:[#allocation5 + $0x658] sm:$0xff]
    %v398 = vld [vmem:[#allocation5 + $0x660] sm:$0xff]
    %v399 = vld [vmem:[#allocation5 + $0x668] sm:$0xff]
    %v400 = vld [vmem:[#allocation5 + $0x670] sm:$0xff]
    %v401 = vld [vmem:[#allocation5 + $0x678] sm:$0xff]
    %v402 = vld [vmem:[#allocation5 + $0x680] sm:$0xff]
    %v403 = vld [vmem:[#allocation5 + $0x688] sm:$0xff]
    %v404 = vld [vmem:[#allocation5 + $0x690] sm:$0xff]
    %v405 = vld [vmem:[#allocation5 + $0x698] sm:$0xff]
    %v406 = vld [vmem:[#allocation5 + $0x6a0] sm:$0xff]
    %v407 = vld [vmem:[#allocation5 + $0x6a8] sm:$0xff]
    %v408 = vld [vmem:[#allocation5 + $0x6b0] sm:$0xff]
    %v409 = vld [vmem:[#allocation5 + $0x6b8] sm:$0xff]
    %v410 = vld [vmem:[#allocation5 + $0x6c0] sm:$0xff]
    %v411 = vld [vmem:[#allocation5 + $0x6c8] sm:$0xff]
    %v412 = vld [vmem:[#allocation5 + $0x6d0] sm:$0xff]
    %v413 = vld [vmem:[#allocation5 + $0x6d8] sm:$0xff]
    %v414 = vld [vmem:[#allocation5 + $0x6e0] sm:$0xff]
    %v415 = vld [vmem:[#allocation5 + $0x6e8] sm:$0xff]
    %v416 = vld [vmem:[#allocation5 + $0x6f0] sm:$0xff]
    %v417 = vld [vmem:[#allocation5 + $0x6f8] sm:$0xff]
    %v418 = vld [vmem:[#allocation5 + $0x700] sm:$0xff]
    %v419 = vld [vmem:[#allocation5 + $0x708] sm:$0xff]
    %v420 = vld [vmem:[#allocation5 + $0x710] sm:$0xff]
    %v421 = vld [vmem:[#allocation5 + $0x718] sm:$0xff]
    %v422 = vld [vmem:[#allocation5 + $0x720] sm:$0xff]
    %v423 = vld [vmem:[#allocation5 + $0x728] sm:$0xff]
    %v424 = vld [vmem:[#allocation5 + $0x730] sm:$0xff]
    %v425 = vld [vmem:[#allocation5 + $0x738] sm:$0xff]
    %v426 = vld [vmem:[#allocation5 + $0x740] sm:$0xff]
    %v427 = vld [vmem:[#allocation5 + $0x748] sm:$0xff]
    %v428 = vld [vmem:[#allocation5 + $0x750] sm:$0xff]
    %v429 = vld [vmem:[#allocation5 + $0x758] sm:$0xff]
    %v430 = vld [vmem:[#allocation5 + $0x760] sm:$0xff]
    %v431 = vld [vmem:[#allocation5 + $0x768] sm:$0xff]
    %v432 = vld [vmem:[#allocation5 + $0x770] sm:$0xff]
    %v433 = vld [vmem:[#allocation5 + $0x778] sm:$0xff]
    %v434 = vld [vmem:[#allocation5 + $0x780] sm:$0xff]
    %v435 = vld [vmem:[#allocation5 + $0x788] sm:$0xff]
    %v436 = vld [vmem:[#allocation5 + $0x790] sm:$0xff]
    %v437 = vld [vmem:[#allocation5 + $0x798] sm:$0xff]
    %v438 = vld [vmem:[#allocation5 + $0x7a0] sm:$0xff]
    %v439 = vld [vmem:[#allocation5 + $0x7a8] sm:$0xff]
    %v440 = vld [vmem:[#allocation5 + $0x7b0] sm:$0xff]
    %v441 = vld [vmem:[#allocation5 + $0x7b8] sm:$0xff]
    %v442 = vld [vmem:[#allocation5 + $0x7c0] sm:$0xff]
    %v443 = vld [vmem:[#allocation5 + $0x7c8] sm:$0xff]
    %v444 = vld [vmem:[#allocation5 + $0x7d0] sm:$0xff]
    %v445 = vld [vmem:[#allocation5 + $0x7d8] sm:$0xff]
    %v446 = vld [vmem:[#allocation5 + $0x7e0] sm:$0xff]
    %v447 = vld [vmem:[#allocation5 + $0x7e8] sm:$0xff]
    %v448 = vld [vmem:[#allocation5 + $0x7f0] sm:$0xff]
    %v449 = vld [vmem:[#allocation5 + $0x7f8] sm:$0xff]
    %v450 = vld [vmem:[#allocation5 + $0x800] sm:$0xff]
    %v451 = vld [vmem:[#allocation5 + $0x808] sm:$0xff]
    %v452 = vld [vmem:[#allocation5 + $0x810] sm:$0xff]
    %v453 = vld [vmem:[#allocation5 + $0x818] sm:$0xff]
    %v454 = vld [vmem:[#allocation5 + $0x820] sm:$0xff]
    %v455 = vld [vmem:[#allocation5 + $0x828] sm:$0xff]
    %v456 = vld [vmem:[#allocation5 + $0x830] sm:$0xff]
    %v457 = vld [vmem:[#allocation5 + $0x838] sm:$0xff]
    %v458 = vld [vmem:[#allocation5 + $0x840] sm:$0xff]
    %v459 = vld [vmem:[#allocation5 + $0x848] sm:$0xff]
    %v460 = vld [vmem:[#allocation5 + $0x850] sm:$0xff]
    %v461 = vld [vmem:[#allocation5 + $0x858] sm:$0xff]
    %v462 = vld [vmem:[#allocation5 + $0x860] sm:$0xff]
    %v463 = vld [vmem:[#allocation5 + $0x868] sm:$0xff]
    %v464 = vld [vmem:[#allocation5 + $0x870] sm:$0xff]
    %v465 = vld [vmem:[#allocation5 + $0x878] sm:$0xff]
    %v466 = vld [vmem:[#allocation5 + $0x880] sm:$0xff]
    %v467 = vld [vmem:[#allocation5 + $0x888] sm:$0xff]
    %v468 = vld [vmem:[#allocation5 + $0x890] sm:$0xff]
    %v469 = vld [vmem:[#allocation5 + $0x898] sm:$0xff]
    %v470 = vld [vmem:[#allocation5 + $0x8a0] sm:$0xff]
    %v471 = vld [vmem:[#allocation5 + $0x8a8] sm:$0xff]
    %v472 = vld [vmem:[#allocation5 + $0x8b0] sm:$0xff]
    %v473 = vld [vmem:[#allocation5 + $0x8b8] sm:$0xff]
    %v474 = vld [vmem:[#allocation5 + $0x8c0] sm:$0xff]
    %v475 = vld [vmem:[#allocation5 + $0x8c8] sm:$0xff]
    %v476 = vld [vmem:[#allocation5 + $0x8d0] sm:$0xff]
    %v477 = vld [vmem:[#allocation5 + $0x8d8] sm:$0xff]
    %v478 = vld [vmem:[#allocation5 + $0x8e0] sm:$0xff]
    %v479 = vld [vmem:[#allocation5 + $0x8e8] sm:$0xff]
    %v480 = vld [vmem:[#allocation5 + $0x8f0] sm:$0xff]
    %v481 = vld [vmem:[#allocation5 + $0x8f8] sm:$0xff]
    %v482 = vld [vmem:[#allocation5 + $0x900] sm:$0xff]
    %v483 = vld [vmem:[#allocation5 + $0x908] sm:$0xff]
    %v484 = vld [vmem:[#allocation5 + $0x910] sm:$0xff]
    %v485 = vld [vmem:[#allocation5 + $0x918] sm:$0xff]
    %v486 = vld [vmem:[#allocation5 + $0x920] sm:$0xff]
    %v487 = vld [vmem:[#allocation5 + $0x928] sm:$0xff]
    %v488 = vld [vmem:[#allocation5 + $0x930] sm:$0xff]
    %v489 = vld [vmem:[#allocation5 + $0x938] sm:$0xff]
    %v490 = vld [vmem:[#allocation5 + $0x940] sm:$0xff]
    %v491 = vld [vmem:[#allocation5 + $0x948] sm:$0xff]
    %v492 = vld [vmem:[#allocation5 + $0x950] sm:$0xff]
    %v493 = vld [vmem:[#allocation5 + $0x958] sm:$0xff]
    %v494 = vld [vmem:[#allocation5 + $0x960] sm:$0xff]
    %v495 = vld [vmem:[#allocation5 + $0x968] sm:$0xff]
    %v496 = vld [vmem:[#allocation5 + $0x970] sm:$0xff]
    %v497 = vld [vmem:[#allocation5 + $0x978] sm:$0xff]
    %v498 = vld [vmem:[#allocation5 + $0x980] sm:$0xff]
    %v499 = vld [vmem:[#allocation5 + $0x988] sm:$0xff]
    %v500 = vld [vmem:[#allocation5 + $0x990] sm:$0xff]
    %v501 = vld [vmem:[#allocation5 + $0x998] sm:$0xff]
    %v502 = vld [vmem:[#allocation5 + $0x9a0] sm:$0xff]
    %v503 = vld [vmem:[#allocation5 + $0x9a8] sm:$0xff]
    %v504 = vld [vmem:[#allocation5 + $0x9b0] sm:$0xff]
    %v505 = vld [vmem:[#allocation5 + $0x9b8] sm:$0xff]
    %v506 = vld [vmem:[#allocation5 + $0x9c0] sm:$0xff]
    %v507 = vld [vmem:[#allocation5 + $0x9c8] sm:$0xff]
    %v508 = vld [vmem:[#allocation5 + $0x9d0] sm:$0xff]
    %v509 = vld [vmem:[#allocation5 + $0x9d8] sm:$0xff]
    %v510 = vld [vmem:[#allocation5 + $0x9e0] sm:$0xff]
    %v511 = vld [vmem:[#allocation5 + $0x9e8] sm:$0xff]
    %v512 = vld [vmem:[#allocation5 + $0x9f0] sm:$0xff]
    %v513 = vld [vmem:[#allocation5 + $0x9f8] sm:$0xff]
    %v514 = vld [vmem:[#allocation5 + $0xa00] sm:$0xff]
    %v515 = vld [vmem:[#allocation5 + $0xa08] sm:$0xff]
    %v516 = vld [vmem:[#allocation5 + $0xa10] sm:$0xff]
    %v517 = vld [vmem:[#allocation5 + $0xa18] sm:$0xff]
    %v518 = vld [vmem:[#allocation5 + $0xa20] sm:$0xff]
    %v519 = vld [vmem:[#allocation5 + $0xa28] sm:$0xff]
    %v520 = vld [vmem:[#allocation5 + $0xa30] sm:$0xff]
    %v521 = vld [vmem:[#allocation5 + $0xa38] sm:$0xff]
    %v522 = vld [vmem:[#allocation5 + $0xa40] sm:$0xff]
    %v523 = vld [vmem:[#allocation5 + $0xa48] sm:$0xff]
    %v524 = vld [vmem:[#allocation5 + $0xa50] sm:$0xff]
    %v525 = vld [vmem:[#allocation5 + $0xa58] sm:$0xff]
    %v526 = vld [vmem:[#allocation5 + $0xa60] sm:$0xff]
    %v527 = vld [vmem:[#allocation5 + $0xa68] sm:$0xff]
    %v528 = vld [vmem:[#allocation5 + $0xa70] sm:$0xff]
    %v529 = vld [vmem:[#allocation5 + $0xa78] sm:$0xff]
    %v530 = vld [vmem:[#allocation5 + $0xa80] sm:$0xff]
    %v531 = vld [vmem:[#allocation5 + $0xa88] sm:$0xff]
    %v532 = vld [vmem:[#allocation5 + $0xa90] sm:$0xff]
    %v533 = vld [vmem:[#allocation5 + $0xa98] sm:$0xff]
    %v534 = vld [vmem:[#allocation5 + $0xaa0] sm:$0xff]
    %v535 = vld [vmem:[#allocation5 + $0xaa8] sm:$0xff]
    %v536 = vld [vmem:[#allocation5 + $0xab0] sm:$0xff]
    %v537 = vld [vmem:[#allocation5 + $0xab8] sm:$0xff]
    %v538 = vld [vmem:[#allocation5 + $0xac0] sm:$0xff]
    %v539 = vld [vmem:[#allocation5 + $0xac8] sm:$0xff]
    %v540 = vld [vmem:[#allocation5 + $0xad0] sm:$0xff]
    %v541 = vld [vmem:[#allocation5 + $0xad8] sm:$0xff]
    %v542 = vld [vmem:[#allocation5 + $0xae0] sm:$0xff]
    %v543 = vld [vmem:[#allocation5 + $0xae8] sm:$0xff]
    %v544 = vld [vmem:[#allocation5 + $0xaf0] sm:$0xff]
    %v545 = vld [vmem:[#allocation5 + $0xaf8] sm:$0xff]
    %v546 = vld [vmem:[#allocation5 + $0xb00] sm:$0xff]
    %v547 = vld [vmem:[#allocation5 + $0xb08] sm:$0xff]
    %v548 = vld [vmem:[#allocation5 + $0xb10] sm:$0xff]
    %v549 = vld [vmem:[#allocation5 + $0xb18] sm:$0xff]
    %v550 = vld [vmem:[#allocation5 + $0xb20] sm:$0xff]
    %v551 = vld [vmem:[#allocation5 + $0xb28] sm:$0xff]
    %v552 = vld [vmem:[#allocation5 + $0xb30] sm:$0xff]
    %v553 = vld [vmem:[#allocation5 + $0xb38] sm:$0xff]
    %v554 = vld [vmem:[#allocation5 + $0xb40] sm:$0xff]
    %v555 = vld [vmem:[#allocation5 + $0xb48] sm:$0xff]
    %v556 = vld [vmem:[#allocation5 + $0xb50] sm:$0xff]
    %v557 = vld [vmem:[#allocation5 + $0xb58] sm:$0xff]
    %v558 = vld [vmem:[#allocation5 + $0xb60] sm:$0xff]
    %v559 = vld [vmem:[#allocation5 + $0xb68] sm:$0xff]
    %v560 = vld [vmem:[#allocation5 + $0xb70] sm:$0xff]
    %v561 = vld [vmem:[#allocation5 + $0xb78] sm:$0xff]
    %v562 = vld [vmem:[#allocation5 + $0xb80] sm:$0xff]
    %v563 = vld [vmem:[#allocation5 + $0xb88] sm:$0xff]
    %v564 = vld [vmem:[#allocation5 + $0xb90] sm:$0xff]
    %v565 = vld [vmem:[#allocation5 + $0xb98] sm:$0xff]
    %v566 = vld [vmem:[#allocation5 + $0xba0] sm:$0xff]
    %v567 = vld [vmem:[#allocation5 + $0xba8] sm:$0xff]
    %v568 = vld [vmem:[#allocation5 + $0xbb0] sm:$0xff]
    %v569 = vld [vmem:[#allocation5 + $0xbb8] sm:$0xff]
    %v570 = vld [vmem:[#allocation5 + $0xbc0] sm:$0xff]
    %v571 = vld [vmem:[#allocation5 + $0xbc8] sm:$0xff]
    %v572 = vld [vmem:[#allocation5 + $0xbd0] sm:$0xff]
    %v573 = vld [vmem:[#allocation5 + $0xbd8] sm:$0xff]
    %v574 = vld [vmem:[#allocation5 + $0xbe0] sm:$0xff]
    %v575 = vld [vmem:[#allocation5 + $0xbe8] sm:$0xff]
    %v576 = vld [vmem:[#allocation5 + $0xbf0] sm:$0xff]
    %v577 = vld [vmem:[#allocation5 + $0xbf8] sm:$0xff]
    %v578 = vld [vmem:[#allocation5 + $0xc00] sm:$0xff]
    %v579 = vld [vmem:[#allocation5 + $0xc08] sm:$0xff]
    %v580 = vld [vmem:[#allocation5 + $0xc10] sm:$0xff]
    %v581 = vld [vmem:[#allocation5 + $0xc18] sm:$0xff]
    %v582 = vld [vmem:[#allocation5 + $0xc20] sm:$0xff]
    %v583 = vld [vmem:[#allocation5 + $0xc28] sm:$0xff]
    %v584 = vld [vmem:[#allocation5 + $0xc30] sm:$0xff]
    %v585 = vld [vmem:[#allocation5 + $0xc38] sm:$0xff]
    %v586 = vld [vmem:[#allocation5 + $0xc40] sm:$0xff]
    %v587 = vld [vmem:[#allocation5 + $0xc48] sm:$0xff]
    %v588 = vld [vmem:[#allocation5 + $0xc50] sm:$0xff]
    %v589 = vld [vmem:[#allocation5 + $0xc58] sm:$0xff]
    %v590 = vld [vmem:[#allocation5 + $0xc60] sm:$0xff]
    %v591 = vld [vmem:[#allocation5 + $0xc68] sm:$0xff]
    %v592 = vld [vmem:[#allocation5 + $0xc70] sm:$0xff]
    %v593 = vld [vmem:[#allocation5 + $0xc78] sm:$0xff]
    %v594 = vld [vmem:[#allocation5 + $0xc80] sm:$0xff]
    %v595 = vld [vmem:[#allocation5 + $0xc88] sm:$0xff]
    %v596 = vld [vmem:[#allocation5 + $0xc90] sm:$0xff]
    %v597 = vld [vmem:[#allocation5 + $0xc98] sm:$0xff]
    %v598 = vld [vmem:[#allocation5 + $0xca0] sm:$0xff]
    %v599 = vld [vmem:[#allocation5 + $0xca8] sm:$0xff]
    %v600 = vld [vmem:[#allocation5 + $0xcb0] sm:$0xff]
    %v601 = vld [vmem:[#allocation5 + $0xcb8] sm:$0xff]
    %v602 = vld [vmem:[#allocation5 + $0xcc0] sm:$0xff]
    %v603 = vld [vmem:[#allocation5 + $0xcc8] sm:$0xff]
    %v604 = vld [vmem:[#allocation5 + $0xcd0] sm:$0xff]
    %v605 = vld [vmem:[#allocation5 + $0xcd8] sm:$0xff]
    %v606 = vld [vmem:[#allocation5 + $0xce0] sm:$0xff]
    %v607 = vld [vmem:[#allocation5 + $0xce8] sm:$0xff]
    %v608 = vld [vmem:[#allocation5 + $0xcf0] sm:$0xff]
    %v609 = vld [vmem:[#allocation5 + $0xcf8] sm:$0xff]
    %v610 = vld [vmem:[#allocation5 + $0xd00] sm:$0xff]
    %v611 = vld [vmem:[#allocation5 + $0xd08] sm:$0xff]
    %v612 = vld [vmem:[#allocation5 + $0xd10] sm:$0xff]
    %v613 = vld [vmem:[#allocation5 + $0xd18] sm:$0xff]
    %v614 = vld [vmem:[#allocation5 + $0xd20] sm:$0xff]
    %v615 = vld [vmem:[#allocation5 + $0xd28] sm:$0xff]
    %v616 = vld [vmem:[#allocation5 + $0xd30] sm:$0xff]
    %v617 = vld [vmem:[#allocation5 + $0xd38] sm:$0xff]
    %v618 = vld [vmem:[#allocation5 + $0xd40] sm:$0xff]
    %v619 = vld [vmem:[#allocation5 + $0xd48] sm:$0xff]
    %v620 = vld [vmem:[#allocation5 + $0xd50] sm:$0xff]
    %v621 = vld [vmem:[#allocation5 + $0xd58] sm:$0xff]
    %v622 = vld [vmem:[#allocation5 + $0xd60] sm:$0xff]
    %v623 = vld [vmem:[#allocation5 + $0xd68] sm:$0xff]
    %v624 = vld [vmem:[#allocation5 + $0xd70] sm:$0xff]
    %v625 = vld [vmem:[#allocation5 + $0xd78] sm:$0xff]
    %v626 = vld [vmem:[#allocation5 + $0xd80] sm:$0xff]
    %v627 = vld [vmem:[#allocation5 + $0xd88] sm:$0xff]
    %v628 = vld [vmem:[#allocation5 + $0xd90] sm:$0xff]
    %v629 = vld [vmem:[#allocation5 + $0xd98] sm:$0xff]
    %v630 = vld [vmem:[#allocation5 + $0xda0] sm:$0xff]
    %v631 = vld [vmem:[#allocation5 + $0xda8] sm:$0xff]
    %v632 = vld [vmem:[#allocation5 + $0xdb0] sm:$0xff]
    %v633 = vld [vmem:[#allocation5 + $0xdb8] sm:$0xff]
    %v634 = vld [vmem:[#allocation5 + $0xdc0] sm:$0xff]
    %v635 = vld [vmem:[#allocation5 + $0xdc8] sm:$0xff]
    %v636 = vld [vmem:[#allocation5 + $0xdd0] sm:$0xff]
    %v637 = vld [vmem:[#allocation5 + $0xdd8] sm:$0xff]
    %v638 = vld [vmem:[#allocation5 + $0xde0] sm:$0xff]
    %v639 = vld [vmem:[#allocation5 + $0xde8] sm:$0xff]
    %v640 = vld [vmem:[#allocation5 + $0xdf0] sm:$0xff]
    %v641 = vld [vmem:[#allocation5 + $0xdf8] sm:$0xff]
    %v642 = vld [vmem:[#allocation5 + $0xe00] sm:$0xff]
    %v643 = vld [vmem:[#allocation5 + $0xe08] sm:$0xff]
    %v644 = vld [vmem:[#allocation5 + $0xe10] sm:$0xff]
    %v645 = vld [vmem:[#allocation5 + $0xe18] sm:$0xff]
    %v646 = vld [vmem:[#allocation5 + $0xe20] sm:$0xff]
    %v647 = vld [vmem:[#allocation5 + $0xe28] sm:$0xff]
    %v648 = vld [vmem:[#allocation5 + $0xe30] sm:$0xff]
    %v649 = vld [vmem:[#allocation5 + $0xe38] sm:$0xff]
    %v650 = vld [vmem:[#allocation5 + $0xe40] sm:$0xff]
    %v651 = vld [vmem:[#allocation5 + $0xe48] sm:$0xff]
    %v652 = vld [vmem:[#allocation5 + $0xe50] sm:$0xff]
    %v653 = vld [vmem:[#allocation5 + $0xe58] sm:$0xff]
    %v654 = vld [vmem:[#allocation5 + $0xe60] sm:$0xff]
    %v655 = vld [vmem:[#allocation5 + $0xe68] sm:$0xff]
    %v656 = vld [vmem:[#allocation5 + $0xe70] sm:$0xff]
    %v657 = vld [vmem:[#allocation5 + $0xe78] sm:$0xff]
    %v658 = vld [vmem:[#allocation5 + $0xe80] sm:$0xff]
    %v659 = vld [vmem:[#allocation5 + $0xe88] sm:$0xff]
    %v660 = vld [vmem:[#allocation5 + $0xe90] sm:$0xff]
    %v661 = vld [vmem:[#allocation5 + $0xe98] sm:$0xff]
    %v662 = vld [vmem:[#allocation5 + $0xea0] sm:$0xff]
    %v663 = vld [vmem:[#allocation5 + $0xea8] sm:$0xff]
    %v664 = vld [vmem:[#allocation5 + $0xeb0] sm:$0xff]
    %v665 = vld [vmem:[#allocation5 + $0xeb8] sm:$0xff]
    %v666 = vld [vmem:[#allocation5 + $0xec0] sm:$0xff]
    %v667 = vld [vmem:[#allocation5 + $0xec8] sm:$0xff]
    %v668 = vld [vmem:[#allocation5 + $0xed0] sm:$0xff]
    %v669 = vld [vmem:[#allocation5 + $0xed8] sm:$0xff]
    %v670 = vld [vmem:[#allocation5 + $0xee0] sm:$0xff]
    %v671 = vld [vmem:[#allocation5 + $0xee8] sm:$0xff]
    %v672 = vld [vmem:[#allocation5 + $0xef0] sm:$0xff]
    %v673 = vld [vmem:[#allocation5 + $0xef8] sm:$0xff]
    %v674 = vld [vmem:[#allocation5 + $0xf00] sm:$0xff]
    %v675 = vld [vmem:[#allocation5 + $0xf08] sm:$0xff]
    %v676 = vld [vmem:[#allocation5 + $0xf10] sm:$0xff]
    %v677 = vld [vmem:[#allocation5 + $0xf18] sm:$0xff]
    %v678 = vld [vmem:[#allocation5 + $0xf20] sm:$0xff]
    %v679 = vld [vmem:[#allocation5 + $0xf28] sm:$0xff]
    %v680 = vld [vmem:[#allocation5 + $0xf30] sm:$0xff]
    %v681 = vld [vmem:[#allocation5 + $0xf38] sm:$0xff]
    %v682 = vld [vmem:[#allocation5 + $0xf40] sm:$0xff]
    %v683 = vld [vmem:[#allocation5 + $0xf48] sm:$0xff]
    %v684 = vld [vmem:[#allocation5 + $0xf50] sm:$0xff]
    %v685 = vld [vmem:[#allocation5 + $0xf58] sm:$0xff]
    %v686 = vld [vmem:[#allocation5 + $0xf60] sm:$0xff]
    %v687 = vld [vmem:[#allocation5 + $0xf68] sm:$0xff]
    %v688 = vld [vmem:[#allocation5 + $0xf70] sm:$0xff]
    %v689 = vld [vmem:[#allocation5 + $0xf78] sm:$0xff]
    %v690 = vld [vmem:[#allocation5 + $0xf80] sm:$0xff]
    %v691 = vld [vmem:[#allocation5 + $0xf88] sm:$0xff]
    %v692 = vld [vmem:[#allocation5 + $0xf90] sm:$0xff]
    %v693 = vld [vmem:[#allocation5 + $0xf98] sm:$0xff]
    %v694 = vld [vmem:[#allocation5 + $0xfa0] sm:$0xff]
    %v695 = vld [vmem:[#allocation5 + $0xfa8] sm:$0xff]
    %v696 = vld [vmem:[#allocation5 + $0xfb0] sm:$0xff]
    %v697 = vld [vmem:[#allocation5 + $0xfb8] sm:$0xff]
    %v698 = vld [vmem:[#allocation5 + $0xfc0] sm:$0xff]
    %v699 = vld [vmem:[#allocation5 + $0xfc8] sm:$0xff]
    %v700 = vld [vmem:[#allocation5 + $0xfd0] sm:$0xff]
    %v701 = vld [vmem:[#allocation5 + $0xfd8] sm:$0xff]
    %v702 = vld [vmem:[#allocation5 + $0xfe0] sm:$0xff]
    %v703 = vld [vmem:[#allocation5 + $0xfe8] sm:$0xff]
    %v704 = vld [vmem:[#allocation5 + $0xff0] sm:$0xff]
    %v705 = vld [vmem:[#allocation5 + $0xff8] sm:$0xff]
    %v706 = vld [vmem:[#allocation5 + $0x1000] sm:$0xff]
    %v707 = vld [vmem:[#allocation5 + $0x1008] sm:$0xff]
    %v708 = vld [vmem:[#allocation5 + $0x1010] sm:$0xff]
    %v709 = vld [vmem:[#allocation5 + $0x1018] sm:$0xff]
    %v710 = vld [vmem:[#allocation5 + $0x1020] sm:$0xff]
    %v711 = vld [vmem:[#allocation5 + $0x1028] sm:$0xff]
    %v712 = vld [vmem:[#allocation5 + $0x1030] sm:$0xff]
    %v713 = vld [vmem:[#allocation5 + $0x1038] sm:$0xff]
    %v714 = vld [vmem:[#allocation5 + $0x1040] sm:$0xff]
    %v715 = vld [vmem:[#allocation5 + $0x1048] sm:$0xff]
    %v716 = vld [vmem:[#allocation5 + $0x1050] sm:$0xff]
    %v717 = vld [vmem:[#allocation5 + $0x1058] sm:$0xff]
    %v718 = vld [vmem:[#allocation5 + $0x1060] sm:$0xff]
    %v719 = vld [vmem:[#allocation5 + $0x1068] sm:$0xff]
    %v720 = vld [vmem:[#allocation5 + $0x1070] sm:$0xff]
    %v721 = vld [vmem:[#allocation5 + $0x1078] sm:$0xff]
    %v722 = vld [vmem:[#allocation5 + $0x1080] sm:$0xff]
    %v723 = vld [vmem:[#allocation5 + $0x1088] sm:$0xff]
    %v724 = vld [vmem:[#allocation5 + $0x1090] sm:$0xff]
    %v725 = vld [vmem:[#allocation5 + $0x1098] sm:$0xff]
    %v726 = vld [vmem:[#allocation5 + $0x10a0] sm:$0xff]
    %v727 = vld [vmem:[#allocation5 + $0x10a8] sm:$0xff]
    %v728 = vld [vmem:[#allocation5 + $0x10b0] sm:$0xff]
    %v729 = vld [vmem:[#allocation5 + $0x10b8] sm:$0xff]
    %v730 = vld [vmem:[#allocation5 + $0x10c0] sm:$0xff]
    %v731 = vld [vmem:[#allocation5 + $0x10c8] sm:$0xff]
    %v732 = vld [vmem:[#allocation5 + $0x10d0] sm:$0xff]
    %v733 = vld [vmem:[#allocation5 + $0x10d8] sm:$0xff]
    %v734 = vld [vmem:[#allocation5 + $0x10e0] sm:$0xff]
    %v735 = vld [vmem:[#allocation5 + $0x10e8] sm:$0xff]
    %v736 = vld [vmem:[#allocation5 + $0x10f0] sm:$0xff]
    %v737 = vld [vmem:[#allocation5 + $0x10f8] sm:$0xff]
    %v738 = vld [vmem:[#allocation5 + $0x1100] sm:$0xff]
    %v739 = vld [vmem:[#allocation5 + $0x1108] sm:$0xff]
    %v740 = vld [vmem:[#allocation5 + $0x1110] sm:$0xff]
    %v741 = vld [vmem:[#allocation5 + $0x1118] sm:$0xff]
    %v742 = vld [vmem:[#allocation5 + $0x1120] sm:$0xff]
    %v743 = vld [vmem:[#allocation5 + $0x1128] sm:$0xff]
    %v744 = vld [vmem:[#allocation5 + $0x1130] sm:$0xff]
    %v745 = vld [vmem:[#allocation5 + $0x1138] sm:$0xff]
    %v746 = vld [vmem:[#allocation5 + $0x1140] sm:$0xff]
    %v747 = vld [vmem:[#allocation5 + $0x1148] sm:$0xff]
    %v748 = vld [vmem:[#allocation5 + $0x1150] sm:$0xff]
    %v749 = vld [vmem:[#allocation5 + $0x1158] sm:$0xff]
    %v750 = vld [vmem:[#allocation5 + $0x1160] sm:$0xff]
    %v751 = vld [vmem:[#allocation5 + $0x1168] sm:$0xff]
    %v752 = vld [vmem:[#allocation5 + $0x1170] sm:$0xff]
    %v753 = vld [vmem:[#allocation5 + $0x1178] sm:$0xff]
    %v754 = vld [vmem:[#allocation5 + $0x1180] sm:$0xff]
    %v755 = vld [vmem:[#allocation5 + $0x1188] sm:$0xff]
    %v756 = vld [vmem:[#allocation5 + $0x1190] sm:$0xff]
    %v757 = vld [vmem:[#allocation5 + $0x1198] sm:$0xff]
    %v758 = vld [vmem:[#allocation5 + $0x11a0] sm:$0xff]
    %v759 = vld [vmem:[#allocation5 + $0x11a8] sm:$0xff]
    %v760 = vld [vmem:[#allocation5 + $0x11b0] sm:$0xff]
    %v761 = vld [vmem:[#allocation5 + $0x11b8] sm:$0xff]
    %v762 = vld [vmem:[#allocation5 + $0x11c0] sm:$0xff]
    %v763 = vld [vmem:[#allocation5 + $0x11c8] sm:$0xff]
    %v764 = vld [vmem:[#allocation5 + $0x11d0] sm:$0xff]
    %v765 = vld [vmem:[#allocation5 + $0x11d8] sm:$0xff]
    %v766 = vld [vmem:[#allocation5 + $0x11e0] sm:$0xff]
    %v767 = vld [vmem:[#allocation5 + $0x11e8] sm:$0xff]
    %v768 = vld [vmem:[#allocation5 + $0x11f0] sm:$0xff]
    %v769 = vld [vmem:[#allocation5 + $0x11f8] sm:$0xff]
    %v770 = vld [vmem:[#allocation5 + $0x1200] sm:$0xff]
    %v771 = vld [vmem:[#allocation5 + $0x1208] sm:$0xff]
    %v772 = vld [vmem:[#allocation5 + $0x1210] sm:$0xff]
    %v773 = vld [vmem:[#allocation5 + $0x1218] sm:$0xff]
    %v774 = vld [vmem:[#allocation5 + $0x1220] sm:$0xff]
    %v775 = vld [vmem:[#allocation5 + $0x1228] sm:$0xff]
    %v776 = vld [vmem:[#allocation5 + $0x1230] sm:$0xff]
    %v777 = vld [vmem:[#allocation5 + $0x1238] sm:$0xff]
    %v778 = vld [vmem:[#allocation5 + $0x1240] sm:$0xff]
    %v779 = vld [vmem:[#allocation5 + $0x1248] sm:$0xff]
    %v780 = vld [vmem:[#allocation5 + $0x1250] sm:$0xff]
    %v781 = vld [vmem:[#allocation5 + $0x1258] sm:$0xff]
    %v782 = vld [vmem:[#allocation5 + $0x1260] sm:$0xff]
    %v783 = vld [vmem:[#allocation5 + $0x1268] sm:$0xff]
    %v784 = vld [vmem:[#allocation5 + $0x1270] sm:$0xff]
    %v785 = vld [vmem:[#allocation5 + $0x1278] sm:$0xff]
    %v786 = vld [vmem:[#allocation5 + $0x1280] sm:$0xff]
    %v787 = vld [vmem:[#allocation5 + $0x1288] sm:$0xff]
    %v788 = vld [vmem:[#allocation5 + $0x1290] sm:$0xff]
    %v789 = vld [vmem:[#allocation5 + $0x1298] sm:$0xff]
    %v790 = vld [vmem:[#allocation5 + $0x12a0] sm:$0xff]
    %v791 = vld [vmem:[#allocation5 + $0x12a8] sm:$0xff]
    %v792 = vld [vmem:[#allocation5 + $0x12b0] sm:$0xff]
    %v793 = vld [vmem:[#allocation5 + $0x12b8] sm:$0xff]
    %v794 = vld [vmem:[#allocation5 + $0x12c0] sm:$0xff]
    %v795 = vld [vmem:[#allocation5 + $0x12c8] sm:$0xff]
    %v796 = vld [vmem:[#allocation5 + $0x12d0] sm:$0xff]
    %v797 = vld [vmem:[#allocation5 + $0x12d8] sm:$0xff]
    %v798 = vld [vmem:[#allocation5 + $0x12e0] sm:$0xff]
    %v799 = vld [vmem:[#allocation5 + $0x12e8] sm:$0xff]
    %v800 = vld [vmem:[#allocation5 + $0x12f0] sm:$0xff]
    %v801 = vld [vmem:[#allocation5 + $0x12f8] sm:$0xff]
    %v802 = vld [vmem:[#allocation5 + $0x1300] sm:$0xff]
    %v803 = vld [vmem:[#allocation5 + $0x1308] sm:$0xff]
    %v804 = vld [vmem:[#allocation5 + $0x1310] sm:$0xff]
    %v805 = vld [vmem:[#allocation5 + $0x1318] sm:$0xff]
    %v806 = vld [vmem:[#allocation5 + $0x1320] sm:$0xff]
    %v807 = vld [vmem:[#allocation5 + $0x1328] sm:$0xff]
    %v808 = vld [vmem:[#allocation5 + $0x1330] sm:$0xff]
    %v809 = vld [vmem:[#allocation5 + $0x1338] sm:$0xff]
    %v810 = vld [vmem:[#allocation5 + $0x1340] sm:$0xff]
    %v811 = vld [vmem:[#allocation5 + $0x1348] sm:$0xff]
    %v812 = vld [vmem:[#allocation5 + $0x1350] sm:$0xff]
    %v813 = vld [vmem:[#allocation5 + $0x1358] sm:$0xff]
    %v814 = vld [vmem:[#allocation5 + $0x1360] sm:$0xff]
    %v815 = vld [vmem:[#allocation5 + $0x1368] sm:$0xff]
    %v816 = vld [vmem:[#allocation5 + $0x1370] sm:$0xff]
    %v817 = vld [vmem:[#allocation5 + $0x1378] sm:$0xff]
    %v818 = vld [vmem:[#allocation5 + $0x1380] sm:$0xff]
    %v819 = vld [vmem:[#allocation5 + $0x1388] sm:$0xff]
    %v820 = vld [vmem:[#allocation5 + $0x1390] sm:$0xff]
    %v821 = vld [vmem:[#allocation5 + $0x1398] sm:$0xff]
    %v822 = vld [vmem:[#allocation5 + $0x13a0] sm:$0xff]
    %v823 = vld [vmem:[#allocation5 + $0x13a8] sm:$0xff]
    %v824 = vld [vmem:[#allocation5 + $0x13b0] sm:$0xff]
    %v825 = vld [vmem:[#allocation5 + $0x13b8] sm:$0xff]
    %v826 = vld [vmem:[#allocation5 + $0x13c0] sm:$0xff]
    %v827 = vld [vmem:[#allocation5 + $0x13c8] sm:$0xff]
    %v828 = vld [vmem:[#allocation5 + $0x13d0] sm:$0xff]
    %v829 = vld [vmem:[#allocation5 + $0x13d8] sm:$0xff]
    %v830 = vld [vmem:[#allocation5 + $0x13e0] sm:$0xff]
    %v831 = vld [vmem:[#allocation5 + $0x13e8] sm:$0xff]
    %v832 = vld [vmem:[#allocation5 + $0x13f0] sm:$0xff]
    %v833 = vld [vmem:[#allocation5 + $0x13f8] sm:$0xff]
    %v834 = vld [vmem:[#allocation5 + $0x1400] sm:$0xff]
    %v835 = vld [vmem:[#allocation5 + $0x1408] sm:$0xff]
    %v836 = vld [vmem:[#allocation5 + $0x1410] sm:$0xff]
    %v837 = vld [vmem:[#allocation5 + $0x1418] sm:$0xff]
    %v838 = vld [vmem:[#allocation5 + $0x1420] sm:$0xff]
    %v839 = vld [vmem:[#allocation5 + $0x1428] sm:$0xff]
    %v840 = vld [vmem:[#allocation5 + $0x1430] sm:$0xff]
    %v841 = vld [vmem:[#allocation5 + $0x1438] sm:$0xff]
    %v842 = vld [vmem:[#allocation5 + $0x1440] sm:$0xff]
    %v843 = vld [vmem:[#allocation5 + $0x1448] sm:$0xff]
    %v844 = vld [vmem:[#allocation5 + $0x1450] sm:$0xff]
    %v845 = vld [vmem:[#allocation5 + $0x1458] sm:$0xff]
    %v846 = vld [vmem:[#allocation5 + $0x1460] sm:$0xff]
    %v847 = vld [vmem:[#allocation5 + $0x1468] sm:$0xff]
    %v848 = vld [vmem:[#allocation5 + $0x1470] sm:$0xff]
    %v849 = vld [vmem:[#allocation5 + $0x1478] sm:$0xff]
    %v850 = vld [vmem:[#allocation5 + $0x1480] sm:$0xff]
    %v851 = vld [vmem:[#allocation5 + $0x1488] sm:$0xff]
    %v852 = vld [vmem:[#allocation5 + $0x1490] sm:$0xff]
    %v853 = vld [vmem:[#allocation5 + $0x1498] sm:$0xff]
    %v854 = vld [vmem:[#allocation5 + $0x14a0] sm:$0xff]
    %v855 = vld [vmem:[#allocation5 + $0x14a8] sm:$0xff]
    %v856 = vld [vmem:[#allocation5 + $0x14b0] sm:$0xff]
    %v857 = vld [vmem:[#allocation5 + $0x14b8] sm:$0xff]
    %v858 = vld [vmem:[#allocation5 + $0x14c0] sm:$0xff]
    %v859 = vld [vmem:[#allocation5 + $0x14c8] sm:$0xff]
    %v860 = vld [vmem:[#allocation5 + $0x14d0] sm:$0xff]
    %v861 = vld [vmem:[#allocation5 + $0x14d8] sm:$0xff]
    %v862 = vld [vmem:[#allocation5 + $0x14e0] sm:$0xff]
    %v863 = vld [vmem:[#allocation5 + $0x14e8] sm:$0xff]
    %v864 = vld [vmem:[#allocation5 + $0x14f0] sm:$0xff]
    %v865 = vld [vmem:[#allocation5 + $0x14f8] sm:$0xff]
    %v866 = vld [vmem:[#allocation5 + $0x1500] sm:$0xff]
    %v867 = vld [vmem:[#allocation5 + $0x1508] sm:$0xff]
    %v868 = vld [vmem:[#allocation5 + $0x1510] sm:$0xff]
    %v869 = vld [vmem:[#allocation5 + $0x1518] sm:$0xff]
    %v870 = vld [vmem:[#allocation5 + $0x1520] sm:$0xff]
    %v871 = vld [vmem:[#allocation5 + $0x1528] sm:$0xff]
    %v872 = vld [vmem:[#allocation5 + $0x1530] sm:$0xff]
    %v873 = vld [vmem:[#allocation5 + $0x1538] sm:$0xff]
    %v874 = vld [vmem:[#allocation5 + $0x1540] sm:$0xff]
    %v875 = vld [vmem:[#allocation5 + $0x1548] sm:$0xff]
    %v876 = vld [vmem:[#allocation5 + $0x1550] sm:$0xff]
    %v877 = vld [vmem:[#allocation5 + $0x1558] sm:$0xff]
    %v878 = vld [vmem:[#allocation5 + $0x1560] sm:$0xff]
    %v879 = vld [vmem:[#allocation5 + $0x1568] sm:$0xff]
    %v880 = vld [vmem:[#allocation5 + $0x1570] sm:$0xff]
    %v881 = vld [vmem:[#allocation5 + $0x1578] sm:$0xff]
    %v882 = vld [vmem:[#allocation5 + $0x1580] sm:$0xff]
    %v883 = vld [vmem:[#allocation5 + $0x1588] sm:$0xff]
    %v884 = vld [vmem:[#allocation5 + $0x1590] sm:$0xff]
    %v885 = vld [vmem:[#allocation5 + $0x1598] sm:$0xff]
    %v886 = vld [vmem:[#allocation5 + $0x15a0] sm:$0xff]
    %v887 = vld [vmem:[#allocation5 + $0x15a8] sm:$0xff]
    %v888 = vld [vmem:[#allocation5 + $0x15b0] sm:$0xff]
    %v889 = vld [vmem:[#allocation5 + $0x15b8] sm:$0xff]
    %v890 = vld [vmem:[#allocation5 + $0x15c0] sm:$0xff]
    %v891 = vld [vmem:[#allocation5 + $0x15c8] sm:$0xff]
    %v892 = vld [vmem:[#allocation5 + $0x15d0] sm:$0xff]
    %v893 = vld [vmem:[#allocation5 + $0x15d8] sm:$0xff]
    %v894 = vld [vmem:[#allocation5 + $0x15e0] sm:$0xff]
    %v895 = vld [vmem:[#allocation5 + $0x15e8] sm:$0xff]
    %v896 = vld [vmem:[#allocation5 + $0x15f0] sm:$0xff]
    %v897 = vld [vmem:[#allocation5 + $0x15f8] sm:$0xff]
    %v898 = vld [vmem:[#allocation5 + $0x1600] sm:$0xff]
    %v899 = vld [vmem:[#allocation5 + $0x1608] sm:$0xff]
    %v900 = vld [vmem:[#allocation5 + $0x1610] sm:$0xff]
    %v901 = vld [vmem:[#allocation5 + $0x1618] sm:$0xff]
    %v902 = vld [vmem:[#allocation5 + $0x1620] sm:$0xff]
    %v903 = vld [vmem:[#allocation5 + $0x1628] sm:$0xff]
    %v904 = vld [vmem:[#allocation5 + $0x1630] sm:$0xff]
    %v905 = vld [vmem:[#allocation5 + $0x1638] sm:$0xff]
    %v906 = vld [vmem:[#allocation5 + $0x1640] sm:$0xff]
    %v907 = vld [vmem:[#allocation5 + $0x1648] sm:$0xff]
    %v908 = vld [vmem:[#allocation5 + $0x1650] sm:$0xff]
    %v909 = vld [vmem:[#allocation5 + $0x1658] sm:$0xff]
    %v910 = vld [vmem:[#allocation5 + $0x1660] sm:$0xff]
    %v911 = vld [vmem:[#allocation5 + $0x1668] sm:$0xff]
    %v912 = vld [vmem:[#allocation5 + $0x1670] sm:$0xff]
    %v913 = vld [vmem:[#allocation5 + $0x1678] sm:$0xff]
    %v914 = vld [vmem:[#allocation5 + $0x1680] sm:$0xff]
    %v915 = vld [vmem:[#allocation5 + $0x1688] sm:$0xff]
    %v916 = vld [vmem:[#allocation5 + $0x1690] sm:$0xff]
    %v917 = vld [vmem:[#allocation5 + $0x1698] sm:$0xff]
    %v918 = vld [vmem:[#allocation5 + $0x16a0] sm:$0xff]
    %v919 = vld [vmem:[#allocation5 + $0x16a8] sm:$0xff]
    %v920 = vld [vmem:[#allocation5 + $0x16b0] sm:$0xff]
    %v921 = vld [vmem:[#allocation5 + $0x16b8] sm:$0xff]
    %v922 = vld [vmem:[#allocation5 + $0x16c0] sm:$0xff]
    %v923 = vld [vmem:[#allocation5 + $0x16c8] sm:$0xff]
    %v924 = vld [vmem:[#allocation5 + $0x16d0] sm:$0xff]
    %v925 = vld [vmem:[#allocation5 + $0x16d8] sm:$0xff]
    %v926 = vld [vmem:[#allocation5 + $0x16e0] sm:$0xff]
    %v927 = vld [vmem:[#allocation5 + $0x16e8] sm:$0xff]
    %v928 = vld [vmem:[#allocation5 + $0x16f0] sm:$0xff]
    %v929 = vld [vmem:[#allocation5 + $0x16f8] sm:$0xff]
    %v930 = vld [vmem:[#allocation5 + $0x1700] sm:$0xff]
    %v931 = vld [vmem:[#allocation5 + $0x1708] sm:$0xff]
    %v932 = vld [vmem:[#allocation5 + $0x1710] sm:$0xff]
    %v933 = vld [vmem:[#allocation5 + $0x1718] sm:$0xff]
    %v934 = vld [vmem:[#allocation5 + $0x1720] sm:$0xff]
    %v935 = vld [vmem:[#allocation5 + $0x1728] sm:$0xff]
    %v936 = vld [vmem:[#allocation5 + $0x1730] sm:$0xff]
    %v937 = vld [vmem:[#allocation5 + $0x1738] sm:$0xff]
    %v938 = vld [vmem:[#allocation5 + $0x1740] sm:$0xff]
    %v939 = vld [vmem:[#allocation5 + $0x1748] sm:$0xff]
    %v940 = vld [vmem:[#allocation5 + $0x1750] sm:$0xff]
    %v941 = vld [vmem:[#allocation5 + $0x1758] sm:$0xff]
    %v942 = vld [vmem:[#allocation5 + $0x1760] sm:$0xff]
    %v943 = vld [vmem:[#allocation5 + $0x1768] sm:$0xff]
    %v944 = vld [vmem:[#allocation5 + $0x1770] sm:$0xff]
    %v945 = vld [vmem:[#allocation5 + $0x1778] sm:$0xff]
    %v946 = vld [vmem:[#allocation5 + $0x1780] sm:$0xff]
    %v947 = vld [vmem:[#allocation5 + $0x1788] sm:$0xff]
    %v948 = vld [vmem:[#allocation5 + $0x1790] sm:$0xff]
    %v949 = vld [vmem:[#allocation5 + $0x1798] sm:$0xff]
    %v950 = vld [vmem:[#allocation5 + $0x17a0] sm:$0xff]
    %v951 = vld [vmem:[#allocation5 + $0x17a8] sm:$0xff]
    %v952 = vld [vmem:[#allocation5 + $0x17b0] sm:$0xff]
    %v953 = vld [vmem:[#allocation5 + $0x17b8] sm:$0xff]
    %v954 = vld [vmem:[#allocation5 + $0x17c0] sm:$0xff]
    %v955 = vld [vmem:[#allocation5 + $0x17c8] sm:$0xff]
    %v956 = vld [vmem:[#allocation5 + $0x17d0] sm:$0xff]
    %v957 = vld [vmem:[#allocation5 + $0x17d8] sm:$0xff]
    %v958 = vld [vmem:[#allocation5 + $0x17e0] sm:$0xff]
    %v959 = vld [vmem:[#allocation5 + $0x17e8] sm:$0xff]
    %v960 = vld [vmem:[#allocation5 + $0x17f0] sm:$0xff]
    %v961 = vld [vmem:[#allocation5 + $0x17f8] sm:$0xff]
    %v962 = vld [vmem:[#allocation7] sm:$0xf]
    %v964 = vlaneseq
    %v965 = vshrl.u32 %v964, 7
    %v966 = vsub.s32 0, %v965
    %v967 = vrot.slane %v962, %v966
    %v968 = vlaneseq
    %v969 = vshrl.u32 %v968, 7
    %v970 = vsub.s32 1, %v969
    %v971 = vrot.slane %v962, %v970
    %v972 = vlaneseq
    %v973 = vshrl.u32 %v972, 7
    %v974 = vsub.s32 2, %v973
    %v975 = vrot.slane %v962, %v974
    %v976 = vlaneseq
    %v977 = vshrl.u32 %v976, 7
    %v978 = vsub.s32 3, %v977
    %v979 = vrot.slane %v962, %v978
    %v1752 = vunpack.c.l.b16 %v194
    %v1753 = vunpack.c.h.b16 %v194
    %v1754 = vunpack.c.l.b16 %v195
    %v1755 = vunpack.c.h.b16 %v195
    %v1756 = vunpack.c.l.b16 %v196
    %v1757 = vunpack.c.h.b16 %v196
    %v1758 = vunpack.c.l.b16 %v197
    %v1759 = vunpack.c.h.b16 %v197
    %v1760 = vunpack.c.l.b16 %v198
    %v1761 = vunpack.c.h.b16 %v198
    %v1762 = vunpack.c.l.b16 %v199
    %v1763 = vunpack.c.h.b16 %v199
    %v1764 = vunpack.c.l.b16 %v200
    %v1765 = vunpack.c.h.b16 %v200
    %v1766 = vunpack.c.l.b16 %v201
    %v1767 = vunpack.c.h.b16 %v201
    %v1768 = vunpack.c.l.b16 %v202
    %v1769 = vunpack.c.h.b16 %v202
    %v1770 = vunpack.c.l.b16 %v203
    %v1771 = vunpack.c.h.b16 %v203
    %v1772 = vunpack.c.l.b16 %v204
    %v1773 = vunpack.c.h.b16 %v204
    %v1774 = vunpack.c.l.b16 %v205
    %v1775 = vunpack.c.h.b16 %v205
    %v1776 = vunpack.c.l.b16 %v206
    %v1777 = vunpack.c.h.b16 %v206
    %v1778 = vunpack.c.l.b16 %v207
    %v1779 = vunpack.c.h.b16 %v207
    %v1780 = vunpack.c.l.b16 %v208
    %v1781 = vunpack.c.h.b16 %v208
    %v1782 = vunpack.c.l.b16 %v209
    %v1783 = vunpack.c.h.b16 %v209
    %v1784 = vunpack.c.l.b16 %v210
    %v1785 = vunpack.c.h.b16 %v210
    %v1786 = vunpack.c.l.b16 %v211
    %v1787 = vunpack.c.h.b16 %v211
    %v1788 = vunpack.c.l.b16 %v212
    %v1789 = vunpack.c.h.b16 %v212
    %v1790 = vunpack.c.l.b16 %v213
    %v1791 = vunpack.c.h.b16 %v213
    %v1792 = vunpack.c.l.b16 %v214
    %v1793 = vunpack.c.h.b16 %v214
    %v1794 = vunpack.c.l.b16 %v215
    %v1795 = vunpack.c.h.b16 %v215
    %v1796 = vunpack.c.l.b16 %v216
    %v1797 = vunpack.c.h.b16 %v216
    %v1798 = vunpack.c.l.b16 %v217
    %v1799 = vunpack.c.h.b16 %v217
    %v1800 = vunpack.c.l.b16 %v218
    %v1801 = vunpack.c.h.b16 %v218
    %v1802 = vunpack.c.l.b16 %v219
    %v1803 = vunpack.c.h.b16 %v219
    %v1804 = vunpack.c.l.b16 %v220
    %v1805 = vunpack.c.h.b16 %v220
    %v1806 = vunpack.c.l.b16 %v221
    %v1807 = vunpack.c.h.b16 %v221
    %v1808 = vunpack.c.l.b16 %v222
    %v1809 = vunpack.c.h.b16 %v222
    %v1810 = vunpack.c.l.b16 %v223
    %v1811 = vunpack.c.h.b16 %v223
    %v1812 = vunpack.c.l.b16 %v224
    %v1813 = vunpack.c.h.b16 %v224
    %v1814 = vunpack.c.l.b16 %v225
    %v1815 = vunpack.c.h.b16 %v225
    %v1816 = vunpack.c.l.b16 %v226
    %v1817 = vunpack.c.h.b16 %v226
    %v1818 = vunpack.c.l.b16 %v227
    %v1819 = vunpack.c.h.b16 %v227
    %v1820 = vunpack.c.l.b16 %v228
    %v1821 = vunpack.c.h.b16 %v228
    %v1822 = vunpack.c.l.b16 %v229
    %v1823 = vunpack.c.h.b16 %v229
    %v1824 = vunpack.c.l.b16 %v230
    %v1825 = vunpack.c.h.b16 %v230
    %v1826 = vunpack.c.l.b16 %v231
    %v1827 = vunpack.c.h.b16 %v231
    %v1828 = vunpack.c.l.b16 %v232
    %v1829 = vunpack.c.h.b16 %v232
    %v1830 = vunpack.c.l.b16 %v233
    %v1831 = vunpack.c.h.b16 %v233
    %v1832 = vunpack.c.l.b16 %v234
    %v1833 = vunpack.c.h.b16 %v234
    %v1834 = vunpack.c.l.b16 %v235
    %v1835 = vunpack.c.h.b16 %v235
    %v1836 = vunpack.c.l.b16 %v236
    %v1837 = vunpack.c.h.b16 %v236
    %v1838 = vunpack.c.l.b16 %v237
    %v1839 = vunpack.c.h.b16 %v237
    %v1840 = vunpack.c.l.b16 %v238
    %v1841 = vunpack.c.h.b16 %v238
    %v1842 = vunpack.c.l.b16 %v239
    %v1843 = vunpack.c.h.b16 %v239
    %v1844 = vunpack.c.l.b16 %v240
    %v1845 = vunpack.c.h.b16 %v240
    %v1846 = vunpack.c.l.b16 %v241
    %v1847 = vunpack.c.h.b16 %v241
    %v1848 = vunpack.c.l.b16 %v242
    %v1849 = vunpack.c.h.b16 %v242
    %v1850 = vunpack.c.l.b16 %v243
    %v1851 = vunpack.c.h.b16 %v243
    %v1852 = vunpack.c.l.b16 %v244
    %v1853 = vunpack.c.h.b16 %v244
    %v1854 = vunpack.c.l.b16 %v245
    %v1855 = vunpack.c.h.b16 %v245
    %v1856 = vunpack.c.l.b16 %v246
    %v1857 = vunpack.c.h.b16 %v246
    %v1858 = vunpack.c.l.b16 %v247
    %v1859 = vunpack.c.h.b16 %v247
    %v1860 = vunpack.c.l.b16 %v248
    %v1861 = vunpack.c.h.b16 %v248
    %v1862 = vunpack.c.l.b16 %v249
    %v1863 = vunpack.c.h.b16 %v249
    %v1864 = vunpack.c.l.b16 %v250
    %v1865 = vunpack.c.h.b16 %v250
    %v1866 = vunpack.c.l.b16 %v251
    %v1867 = vunpack.c.h.b16 %v251
    %v1868 = vunpack.c.l.b16 %v252
    %v1869 = vunpack.c.h.b16 %v252
    %v1870 = vunpack.c.l.b16 %v253
    %v1871 = vunpack.c.h.b16 %v253
    %v1872 = vunpack.c.l.b16 %v254
    %v1873 = vunpack.c.h.b16 %v254
    %v1874 = vunpack.c.l.b16 %v255
    %v1875 = vunpack.c.h.b16 %v255
    %v1876 = vunpack.c.l.b16 %v256
    %v1877 = vunpack.c.h.b16 %v256
    %v1878 = vunpack.c.l.b16 %v257
    %v1879 = vunpack.c.h.b16 %v257
    %v1880 = vunpack.c.l.b16 %v258
    %v1881 = vunpack.c.h.b16 %v258
    %v1882 = vunpack.c.l.b16 %v259
    %v1883 = vunpack.c.h.b16 %v259
    %v1884 = vunpack.c.l.b16 %v260
    %v1885 = vunpack.c.h.b16 %v260
    %v1886 = vunpack.c.l.b16 %v261
    %v1887 = vunpack.c.h.b16 %v261
    %v1888 = vunpack.c.l.b16 %v262
    %v1889 = vunpack.c.h.b16 %v262
    %v1890 = vunpack.c.l.b16 %v263
    %v1891 = vunpack.c.h.b16 %v263
    %v1892 = vunpack.c.l.b16 %v264
    %v1893 = vunpack.c.h.b16 %v264
    %v1894 = vunpack.c.l.b16 %v265
    %v1895 = vunpack.c.h.b16 %v265
    %v1896 = vunpack.c.l.b16 %v266
    %v1897 = vunpack.c.h.b16 %v266
    %v1898 = vunpack.c.l.b16 %v267
    %v1899 = vunpack.c.h.b16 %v267
    %v1900 = vunpack.c.l.b16 %v268
    %v1901 = vunpack.c.h.b16 %v268
    %v1902 = vunpack.c.l.b16 %v269
    %v1903 = vunpack.c.h.b16 %v269
    %v1904 = vunpack.c.l.b16 %v270
    %v1905 = vunpack.c.h.b16 %v270
    %v1906 = vunpack.c.l.b16 %v271
    %v1907 = vunpack.c.h.b16 %v271
    %v1908 = vunpack.c.l.b16 %v272
    %v1909 = vunpack.c.h.b16 %v272
    %v1910 = vunpack.c.l.b16 %v273
    %v1911 = vunpack.c.h.b16 %v273
    %v1912 = vunpack.c.l.b16 %v274
    %v1913 = vunpack.c.h.b16 %v274
    %v1914 = vunpack.c.l.b16 %v275
    %v1915 = vunpack.c.h.b16 %v275
    %v1916 = vunpack.c.l.b16 %v276
    %v1917 = vunpack.c.h.b16 %v276
    %v1918 = vunpack.c.l.b16 %v277
    %v1919 = vunpack.c.h.b16 %v277
    %v1920 = vunpack.c.l.b16 %v278
    %v1921 = vunpack.c.h.b16 %v278
    %v1922 = vunpack.c.l.b16 %v279
    %v1923 = vunpack.c.h.b16 %v279
    %v1924 = vunpack.c.l.b16 %v280
    %v1925 = vunpack.c.h.b16 %v280
    %v1926 = vunpack.c.l.b16 %v281
    %v1927 = vunpack.c.h.b16 %v281
    %v1928 = vunpack.c.l.b16 %v282
    %v1929 = vunpack.c.h.b16 %v282
    %v1930 = vunpack.c.l.b16 %v283
    %v1931 = vunpack.c.h.b16 %v283
    %v1932 = vunpack.c.l.b16 %v284
    %v1933 = vunpack.c.h.b16 %v284
    %v1934 = vunpack.c.l.b16 %v285
    %v1935 = vunpack.c.h.b16 %v285
    %v1936 = vunpack.c.l.b16 %v286
    %v1937 = vunpack.c.h.b16 %v286
    %v1938 = vunpack.c.l.b16 %v287
    %v1939 = vunpack.c.h.b16 %v287
    %v1940 = vunpack.c.l.b16 %v288
    %v1941 = vunpack.c.h.b16 %v288
    %v1942 = vunpack.c.l.b16 %v289
    %v1943 = vunpack.c.h.b16 %v289
    %v1944 = vunpack.c.l.b16 %v290
    %v1945 = vunpack.c.h.b16 %v290
    %v1946 = vunpack.c.l.b16 %v291
    %v1947 = vunpack.c.h.b16 %v291
    %v1948 = vunpack.c.l.b16 %v292
    %v1949 = vunpack.c.h.b16 %v292
    %v1950 = vunpack.c.l.b16 %v293
    %v1951 = vunpack.c.h.b16 %v293
    %v1952 = vunpack.c.l.b16 %v294
    %v1953 = vunpack.c.h.b16 %v294
    %v1954 = vunpack.c.l.b16 %v295
    %v1955 = vunpack.c.h.b16 %v295
    %v1956 = vunpack.c.l.b16 %v296
    %v1957 = vunpack.c.h.b16 %v296
    %v1958 = vunpack.c.l.b16 %v297
    %v1959 = vunpack.c.h.b16 %v297
    %v1960 = vunpack.c.l.b16 %v298
    %v1961 = vunpack.c.h.b16 %v298
    %v1962 = vunpack.c.l.b16 %v299
    %v1963 = vunpack.c.h.b16 %v299
    %v1964 = vunpack.c.l.b16 %v300
    %v1965 = vunpack.c.h.b16 %v300
    %v1966 = vunpack.c.l.b16 %v301
    %v1967 = vunpack.c.h.b16 %v301
    %v1968 = vunpack.c.l.b16 %v302
    %v1969 = vunpack.c.h.b16 %v302
    %v1970 = vunpack.c.l.b16 %v303
    %v1971 = vunpack.c.h.b16 %v303
    %v1972 = vunpack.c.l.b16 %v304
    %v1973 = vunpack.c.h.b16 %v304
    %v1974 = vunpack.c.l.b16 %v305
    %v1975 = vunpack.c.h.b16 %v305
    %v1976 = vunpack.c.l.b16 %v306
    %v1977 = vunpack.c.h.b16 %v306
    %v1978 = vunpack.c.l.b16 %v307
    %v1979 = vunpack.c.h.b16 %v307
    %v1980 = vunpack.c.l.b16 %v308
    %v1981 = vunpack.c.h.b16 %v308
    %v1982 = vunpack.c.l.b16 %v309
    %v1983 = vunpack.c.h.b16 %v309
    %v1984 = vunpack.c.l.b16 %v310
    %v1985 = vunpack.c.h.b16 %v310
    %v1986 = vunpack.c.l.b16 %v311
    %v1987 = vunpack.c.h.b16 %v311
    %v1988 = vunpack.c.l.b16 %v312
    %v1989 = vunpack.c.h.b16 %v312
    %v1990 = vunpack.c.l.b16 %v313
    %v1991 = vunpack.c.h.b16 %v313
    %v1992 = vunpack.c.l.b16 %v314
    %v1993 = vunpack.c.h.b16 %v314
    %v1994 = vunpack.c.l.b16 %v315
    %v1995 = vunpack.c.h.b16 %v315
    %v1996 = vunpack.c.l.b16 %v316
    %v1997 = vunpack.c.h.b16 %v316
    %v1998 = vunpack.c.l.b16 %v317
    %v1999 = vunpack.c.h.b16 %v317
    %v2000 = vunpack.c.l.b16 %v318
    %v2001 = vunpack.c.h.b16 %v318
    %v2002 = vunpack.c.l.b16 %v319
    %v2003 = vunpack.c.h.b16 %v319
    %v2004 = vunpack.c.l.b16 %v320
    %v2005 = vunpack.c.h.b16 %v320
    %v2006 = vunpack.c.l.b16 %v321
    %v2007 = vunpack.c.h.b16 %v321
    %v2008 = vunpack.c.l.b16 %v322
    %v2009 = vunpack.c.h.b16 %v322
    %v2010 = vunpack.c.l.b16 %v323
    %v2011 = vunpack.c.h.b16 %v323
    %v2012 = vunpack.c.l.b16 %v324
    %v2013 = vunpack.c.h.b16 %v324
    %v2014 = vunpack.c.l.b16 %v325
    %v2015 = vunpack.c.h.b16 %v325
    %v2016 = vunpack.c.l.b16 %v326
    %v2017 = vunpack.c.h.b16 %v326
    %v2018 = vunpack.c.l.b16 %v327
    %v2019 = vunpack.c.h.b16 %v327
    %v2020 = vunpack.c.l.b16 %v328
    %v2021 = vunpack.c.h.b16 %v328
    %v2022 = vunpack.c.l.b16 %v329
    %v2023 = vunpack.c.h.b16 %v329
    %v2024 = vunpack.c.l.b16 %v330
    %v2025 = vunpack.c.h.b16 %v330
    %v2026 = vunpack.c.l.b16 %v331
    %v2027 = vunpack.c.h.b16 %v331
    %v2028 = vunpack.c.l.b16 %v332
    %v2029 = vunpack.c.h.b16 %v332
    %v2030 = vunpack.c.l.b16 %v333
    %v2031 = vunpack.c.h.b16 %v333
    %v2032 = vunpack.c.l.b16 %v334
    %v2033 = vunpack.c.h.b16 %v334
    %v2034 = vunpack.c.l.b16 %v335
    %v2035 = vunpack.c.h.b16 %v335
    %v2036 = vunpack.c.l.b16 %v336
    %v2037 = vunpack.c.h.b16 %v336
    %v2038 = vunpack.c.l.b16 %v337
    %v2039 = vunpack.c.h.b16 %v337
    %v2040 = vunpack.c.l.b16 %v338
    %v2041 = vunpack.c.h.b16 %v338
    %v2042 = vunpack.c.l.b16 %v339
    %v2043 = vunpack.c.h.b16 %v339
    %v2044 = vunpack.c.l.b16 %v340
    %v2045 = vunpack.c.h.b16 %v340
    %v2046 = vunpack.c.l.b16 %v341
    %v2047 = vunpack.c.h.b16 %v341
    %v2048 = vunpack.c.l.b16 %v342
    %v2049 = vunpack.c.h.b16 %v342
    %v2050 = vunpack.c.l.b16 %v343
    %v2051 = vunpack.c.h.b16 %v343
    %v2052 = vunpack.c.l.b16 %v344
    %v2053 = vunpack.c.h.b16 %v344
    %v2054 = vunpack.c.l.b16 %v345
    %v2055 = vunpack.c.h.b16 %v345
    %v2056 = vunpack.c.l.b16 %v346
    %v2057 = vunpack.c.h.b16 %v346
    %v2058 = vunpack.c.l.b16 %v347
    %v2059 = vunpack.c.h.b16 %v347
    %v2060 = vunpack.c.l.b16 %v348
    %v2061 = vunpack.c.h.b16 %v348
    %v2062 = vunpack.c.l.b16 %v349
    %v2063 = vunpack.c.h.b16 %v349
    %v2064 = vunpack.c.l.b16 %v350
    %v2065 = vunpack.c.h.b16 %v350
    %v2066 = vunpack.c.l.b16 %v351
    %v2067 = vunpack.c.h.b16 %v351
    %v2068 = vunpack.c.l.b16 %v352
    %v2069 = vunpack.c.h.b16 %v352
    %v2070 = vunpack.c.l.b16 %v353
    %v2071 = vunpack.c.h.b16 %v353
    %v2072 = vunpack.c.l.b16 %v354
    %v2073 = vunpack.c.h.b16 %v354
    %v2074 = vunpack.c.l.b16 %v355
    %v2075 = vunpack.c.h.b16 %v355
    %v2076 = vunpack.c.l.b16 %v356
    %v2077 = vunpack.c.h.b16 %v356
    %v2078 = vunpack.c.l.b16 %v357
    %v2079 = vunpack.c.h.b16 %v357
    %v2080 = vunpack.c.l.b16 %v358
    %v2081 = vunpack.c.h.b16 %v358
    %v2082 = vunpack.c.l.b16 %v359
    %v2083 = vunpack.c.h.b16 %v359
    %v2084 = vunpack.c.l.b16 %v360
    %v2085 = vunpack.c.h.b16 %v360
    %v2086 = vunpack.c.l.b16 %v361
    %v2087 = vunpack.c.h.b16 %v361
    %v2088 = vunpack.c.l.b16 %v362
    %v2089 = vunpack.c.h.b16 %v362
    %v2090 = vunpack.c.l.b16 %v363
    %v2091 = vunpack.c.h.b16 %v363
    %v2092 = vunpack.c.l.b16 %v364
    %v2093 = vunpack.c.h.b16 %v364
    %v2094 = vunpack.c.l.b16 %v365
    %v2095 = vunpack.c.h.b16 %v365
    %v2096 = vunpack.c.l.b16 %v366
    %v2097 = vunpack.c.h.b16 %v366
    %v2098 = vunpack.c.l.b16 %v367
    %v2099 = vunpack.c.h.b16 %v367
    %v2100 = vunpack.c.l.b16 %v368
    %v2101 = vunpack.c.h.b16 %v368
    %v2102 = vunpack.c.l.b16 %v369
    %v2103 = vunpack.c.h.b16 %v369
    %v2104 = vunpack.c.l.b16 %v370
    %v2105 = vunpack.c.h.b16 %v370
    %v2106 = vunpack.c.l.b16 %v371
    %v2107 = vunpack.c.h.b16 %v371
    %v2108 = vunpack.c.l.b16 %v372
    %v2109 = vunpack.c.h.b16 %v372
    %v2110 = vunpack.c.l.b16 %v373
    %v2111 = vunpack.c.h.b16 %v373
    %v2112 = vunpack.c.l.b16 %v374
    %v2113 = vunpack.c.h.b16 %v374
    %v2114 = vunpack.c.l.b16 %v375
    %v2115 = vunpack.c.h.b16 %v375
    %v2116 = vunpack.c.l.b16 %v376
    %v2117 = vunpack.c.h.b16 %v376
    %v2118 = vunpack.c.l.b16 %v377
    %v2119 = vunpack.c.h.b16 %v377
    %v2120 = vunpack.c.l.b16 %v378
    %v2121 = vunpack.c.h.b16 %v378
    %v2122 = vunpack.c.l.b16 %v379
    %v2123 = vunpack.c.h.b16 %v379
    %v2124 = vunpack.c.l.b16 %v380
    %v2125 = vunpack.c.h.b16 %v380
    %v2126 = vunpack.c.l.b16 %v381
    %v2127 = vunpack.c.h.b16 %v381
    %v2128 = vunpack.c.l.b16 %v382
    %v2129 = vunpack.c.h.b16 %v382
    %v2130 = vunpack.c.l.b16 %v383
    %v2131 = vunpack.c.h.b16 %v383
    %v2132 = vunpack.c.l.b16 %v384
    %v2133 = vunpack.c.h.b16 %v384
    %v2134 = vunpack.c.l.b16 %v385
    %v2135 = vunpack.c.h.b16 %v385
    %v2136 = vunpack.c.l.b16 %v386
    %v2137 = vunpack.c.h.b16 %v386
    %v2138 = vunpack.c.l.b16 %v387
    %v2139 = vunpack.c.h.b16 %v387
    %v2140 = vunpack.c.l.b16 %v388
    %v2141 = vunpack.c.h.b16 %v388
    %v2142 = vunpack.c.l.b16 %v389
    %v2143 = vunpack.c.h.b16 %v389
    %v2144 = vunpack.c.l.b16 %v390
    %v2145 = vunpack.c.h.b16 %v390
    %v2146 = vunpack.c.l.b16 %v391
    %v2147 = vunpack.c.h.b16 %v391
    %v2148 = vunpack.c.l.b16 %v392
    %v2149 = vunpack.c.h.b16 %v392
    %v2150 = vunpack.c.l.b16 %v393
    %v2151 = vunpack.c.h.b16 %v393
    %v2152 = vunpack.c.l.b16 %v394
    %v2153 = vunpack.c.h.b16 %v394
    %v2154 = vunpack.c.l.b16 %v395
    %v2155 = vunpack.c.h.b16 %v395
    %v2156 = vunpack.c.l.b16 %v396
    %v2157 = vunpack.c.h.b16 %v396
    %v2158 = vunpack.c.l.b16 %v397
    %v2159 = vunpack.c.h.b16 %v397
    %v2160 = vunpack.c.l.b16 %v398
    %v2161 = vunpack.c.h.b16 %v398
    %v2162 = vunpack.c.l.b16 %v399
    %v2163 = vunpack.c.h.b16 %v399
    %v2164 = vunpack.c.l.b16 %v400
    %v2165 = vunpack.c.h.b16 %v400
    %v2166 = vunpack.c.l.b16 %v401
    %v2167 = vunpack.c.h.b16 %v401
    %v2168 = vunpack.c.l.b16 %v402
    %v2169 = vunpack.c.h.b16 %v402
    %v2170 = vunpack.c.l.b16 %v403
    %v2171 = vunpack.c.h.b16 %v403
    %v2172 = vunpack.c.l.b16 %v404
    %v2173 = vunpack.c.h.b16 %v404
    %v2174 = vunpack.c.l.b16 %v405
    %v2175 = vunpack.c.h.b16 %v405
    %v2176 = vunpack.c.l.b16 %v406
    %v2177 = vunpack.c.h.b16 %v406
    %v2178 = vunpack.c.l.b16 %v407
    %v2179 = vunpack.c.h.b16 %v407
    %v2180 = vunpack.c.l.b16 %v408
    %v2181 = vunpack.c.h.b16 %v408
    %v2182 = vunpack.c.l.b16 %v409
    %v2183 = vunpack.c.h.b16 %v409
    %v2184 = vunpack.c.l.b16 %v410
    %v2185 = vunpack.c.h.b16 %v410
    %v2186 = vunpack.c.l.b16 %v411
    %v2187 = vunpack.c.h.b16 %v411
    %v2188 = vunpack.c.l.b16 %v412
    %v2189 = vunpack.c.h.b16 %v412
    %v2190 = vunpack.c.l.b16 %v413
    %v2191 = vunpack.c.h.b16 %v413
    %v2192 = vunpack.c.l.b16 %v414
    %v2193 = vunpack.c.h.b16 %v414
    %v2194 = vunpack.c.l.b16 %v415
    %v2195 = vunpack.c.h.b16 %v415
    %v2196 = vunpack.c.l.b16 %v416
    %v2197 = vunpack.c.h.b16 %v416
    %v2198 = vunpack.c.l.b16 %v417
    %v2199 = vunpack.c.h.b16 %v417
    %v2200 = vunpack.c.l.b16 %v418
    %v2201 = vunpack.c.h.b16 %v418
    %v2202 = vunpack.c.l.b16 %v419
    %v2203 = vunpack.c.h.b16 %v419
    %v2204 = vunpack.c.l.b16 %v420
    %v2205 = vunpack.c.h.b16 %v420
    %v2206 = vunpack.c.l.b16 %v421
    %v2207 = vunpack.c.h.b16 %v421
    %v2208 = vunpack.c.l.b16 %v422
    %v2209 = vunpack.c.h.b16 %v422
    %v2210 = vunpack.c.l.b16 %v423
    %v2211 = vunpack.c.h.b16 %v423
    %v2212 = vunpack.c.l.b16 %v424
    %v2213 = vunpack.c.h.b16 %v424
    %v2214 = vunpack.c.l.b16 %v425
    %v2215 = vunpack.c.h.b16 %v425
    %v2216 = vunpack.c.l.b16 %v426
    %v2217 = vunpack.c.h.b16 %v426
    %v2218 = vunpack.c.l.b16 %v427
    %v2219 = vunpack.c.h.b16 %v427
    %v2220 = vunpack.c.l.b16 %v428
    %v2221 = vunpack.c.h.b16 %v428
    %v2222 = vunpack.c.l.b16 %v429
    %v2223 = vunpack.c.h.b16 %v429
    %v2224 = vunpack.c.l.b16 %v430
    %v2225 = vunpack.c.h.b16 %v430
    %v2226 = vunpack.c.l.b16 %v431
    %v2227 = vunpack.c.h.b16 %v431
    %v2228 = vunpack.c.l.b16 %v432
    %v2229 = vunpack.c.h.b16 %v432
    %v2230 = vunpack.c.l.b16 %v433
    %v2231 = vunpack.c.h.b16 %v433
    %v2232 = vunpack.c.l.b16 %v434
    %v2233 = vunpack.c.h.b16 %v434
    %v2234 = vunpack.c.l.b16 %v435
    %v2235 = vunpack.c.h.b16 %v435
    %v2236 = vunpack.c.l.b16 %v436
    %v2237 = vunpack.c.h.b16 %v436
    %v2238 = vunpack.c.l.b16 %v437
    %v2239 = vunpack.c.h.b16 %v437
    %v2240 = vunpack.c.l.b16 %v438
    %v2241 = vunpack.c.h.b16 %v438
    %v2242 = vunpack.c.l.b16 %v439
    %v2243 = vunpack.c.h.b16 %v439
    %v2244 = vunpack.c.l.b16 %v440
    %v2245 = vunpack.c.h.b16 %v440
    %v2246 = vunpack.c.l.b16 %v441
    %v2247 = vunpack.c.h.b16 %v441
    %v2248 = vunpack.c.l.b16 %v442
    %v2249 = vunpack.c.h.b16 %v442
    %v2250 = vunpack.c.l.b16 %v443
    %v2251 = vunpack.c.h.b16 %v443
    %v2252 = vunpack.c.l.b16 %v444
    %v2253 = vunpack.c.h.b16 %v444
    %v2254 = vunpack.c.l.b16 %v445
    %v2255 = vunpack.c.h.b16 %v445
    %v2256 = vunpack.c.l.b16 %v446
    %v2257 = vunpack.c.h.b16 %v446
    %v2258 = vunpack.c.l.b16 %v447
    %v2259 = vunpack.c.h.b16 %v447
    %v2260 = vunpack.c.l.b16 %v448
    %v2261 = vunpack.c.h.b16 %v448
    %v2262 = vunpack.c.l.b16 %v449
    %v2263 = vunpack.c.h.b16 %v449
    %v2264 = vunpack.c.l.b16 %v450
    %v2265 = vunpack.c.h.b16 %v450
    %v2266 = vunpack.c.l.b16 %v451
    %v2267 = vunpack.c.h.b16 %v451
    %v2268 = vunpack.c.l.b16 %v452
    %v2269 = vunpack.c.h.b16 %v452
    %v2270 = vunpack.c.l.b16 %v453
    %v2271 = vunpack.c.h.b16 %v453
    %v2272 = vunpack.c.l.b16 %v454
    %v2273 = vunpack.c.h.b16 %v454
    %v2274 = vunpack.c.l.b16 %v455
    %v2275 = vunpack.c.h.b16 %v455
    %v2276 = vunpack.c.l.b16 %v456
    %v2277 = vunpack.c.h.b16 %v456
    %v2278 = vunpack.c.l.b16 %v457
    %v2279 = vunpack.c.h.b16 %v457
    %v2280 = vunpack.c.l.b16 %v458
    %v2281 = vunpack.c.h.b16 %v458
    %v2282 = vunpack.c.l.b16 %v459
    %v2283 = vunpack.c.h.b16 %v459
    %v2284 = vunpack.c.l.b16 %v460
    %v2285 = vunpack.c.h.b16 %v460
    %v2286 = vunpack.c.l.b16 %v461
    %v2287 = vunpack.c.h.b16 %v461
    %v2288 = vunpack.c.l.b16 %v462
    %v2289 = vunpack.c.h.b16 %v462
    %v2290 = vunpack.c.l.b16 %v463
    %v2291 = vunpack.c.h.b16 %v463
    %v2292 = vunpack.c.l.b16 %v464
    %v2293 = vunpack.c.h.b16 %v464
    %v2294 = vunpack.c.l.b16 %v465
    %v2295 = vunpack.c.h.b16 %v465
    %v2296 = vunpack.c.l.b16 %v466
    %v2297 = vunpack.c.h.b16 %v466
    %v2298 = vunpack.c.l.b16 %v467
    %v2299 = vunpack.c.h.b16 %v467
    %v2300 = vunpack.c.l.b16 %v468
    %v2301 = vunpack.c.h.b16 %v468
    %v2302 = vunpack.c.l.b16 %v469
    %v2303 = vunpack.c.h.b16 %v469
    %v2304 = vunpack.c.l.b16 %v470
    %v2305 = vunpack.c.h.b16 %v470
    %v2306 = vunpack.c.l.b16 %v471
    %v2307 = vunpack.c.h.b16 %v471
    %v2308 = vunpack.c.l.b16 %v472
    %v2309 = vunpack.c.h.b16 %v472
    %v2310 = vunpack.c.l.b16 %v473
    %v2311 = vunpack.c.h.b16 %v473
    %v2312 = vunpack.c.l.b16 %v474
    %v2313 = vunpack.c.h.b16 %v474
    %v2314 = vunpack.c.l.b16 %v475
    %v2315 = vunpack.c.h.b16 %v475
    %v2316 = vunpack.c.l.b16 %v476
    %v2317 = vunpack.c.h.b16 %v476
    %v2318 = vunpack.c.l.b16 %v477
    %v2319 = vunpack.c.h.b16 %v477
    %v2320 = vunpack.c.l.b16 %v478
    %v2321 = vunpack.c.h.b16 %v478
    %v2322 = vunpack.c.l.b16 %v479
    %v2323 = vunpack.c.h.b16 %v479
    %v2324 = vunpack.c.l.b16 %v480
    %v2325 = vunpack.c.h.b16 %v480
    %v2326 = vunpack.c.l.b16 %v481
    %v2327 = vunpack.c.h.b16 %v481
    %v2328 = vunpack.c.l.b16 %v482
    %v2329 = vunpack.c.h.b16 %v482
    %v2330 = vunpack.c.l.b16 %v483
    %v2331 = vunpack.c.h.b16 %v483
    %v2332 = vunpack.c.l.b16 %v484
    %v2333 = vunpack.c.h.b16 %v484
    %v2334 = vunpack.c.l.b16 %v485
    %v2335 = vunpack.c.h.b16 %v485
    %v2336 = vunpack.c.l.b16 %v486
    %v2337 = vunpack.c.h.b16 %v486
    %v2338 = vunpack.c.l.b16 %v487
    %v2339 = vunpack.c.h.b16 %v487
    %v2340 = vunpack.c.l.b16 %v488
    %v2341 = vunpack.c.h.b16 %v488
    %v2342 = vunpack.c.l.b16 %v489
    %v2343 = vunpack.c.h.b16 %v489
    %v2344 = vunpack.c.l.b16 %v490
    %v2345 = vunpack.c.h.b16 %v490
    %v2346 = vunpack.c.l.b16 %v491
    %v2347 = vunpack.c.h.b16 %v491
    %v2348 = vunpack.c.l.b16 %v492
    %v2349 = vunpack.c.h.b16 %v492
    %v2350 = vunpack.c.l.b16 %v493
    %v2351 = vunpack.c.h.b16 %v493
    %v2352 = vunpack.c.l.b16 %v494
    %v2353 = vunpack.c.h.b16 %v494
    %v2354 = vunpack.c.l.b16 %v495
    %v2355 = vunpack.c.h.b16 %v495
    %v2356 = vunpack.c.l.b16 %v496
    %v2357 = vunpack.c.h.b16 %v496
    %v2358 = vunpack.c.l.b16 %v497
    %v2359 = vunpack.c.h.b16 %v497
    %v2360 = vunpack.c.l.b16 %v498
    %v2361 = vunpack.c.h.b16 %v498
    %v2362 = vunpack.c.l.b16 %v499
    %v2363 = vunpack.c.h.b16 %v499
    %v2364 = vunpack.c.l.b16 %v500
    %v2365 = vunpack.c.h.b16 %v500
    %v2366 = vunpack.c.l.b16 %v501
    %v2367 = vunpack.c.h.b16 %v501
    %v2368 = vunpack.c.l.b16 %v502
    %v2369 = vunpack.c.h.b16 %v502
    %v2370 = vunpack.c.l.b16 %v503
    %v2371 = vunpack.c.h.b16 %v503
    %v2372 = vunpack.c.l.b16 %v504
    %v2373 = vunpack.c.h.b16 %v504
    %v2374 = vunpack.c.l.b16 %v505
    %v2375 = vunpack.c.h.b16 %v505
    %v2376 = vunpack.c.l.b16 %v506
    %v2377 = vunpack.c.h.b16 %v506
    %v2378 = vunpack.c.l.b16 %v507
    %v2379 = vunpack.c.h.b16 %v507
    %v2380 = vunpack.c.l.b16 %v508
    %v2381 = vunpack.c.h.b16 %v508
    %v2382 = vunpack.c.l.b16 %v509
    %v2383 = vunpack.c.h.b16 %v509
    %v2384 = vunpack.c.l.b16 %v510
    %v2385 = vunpack.c.h.b16 %v510
    %v2386 = vunpack.c.l.b16 %v511
    %v2387 = vunpack.c.h.b16 %v511
    %v2388 = vunpack.c.l.b16 %v512
    %v2389 = vunpack.c.h.b16 %v512
    %v2390 = vunpack.c.l.b16 %v513
    %v2391 = vunpack.c.h.b16 %v513
    %v2392 = vunpack.c.l.b16 %v514
    %v2393 = vunpack.c.h.b16 %v514
    %v2394 = vunpack.c.l.b16 %v515
    %v2395 = vunpack.c.h.b16 %v515
    %v2396 = vunpack.c.l.b16 %v516
    %v2397 = vunpack.c.h.b16 %v516
    %v2398 = vunpack.c.l.b16 %v517
    %v2399 = vunpack.c.h.b16 %v517
    %v2400 = vunpack.c.l.b16 %v518
    %v2401 = vunpack.c.h.b16 %v518
    %v2402 = vunpack.c.l.b16 %v519
    %v2403 = vunpack.c.h.b16 %v519
    %v2404 = vunpack.c.l.b16 %v520
    %v2405 = vunpack.c.h.b16 %v520
    %v2406 = vunpack.c.l.b16 %v521
    %v2407 = vunpack.c.h.b16 %v521
    %v2408 = vunpack.c.l.b16 %v522
    %v2409 = vunpack.c.h.b16 %v522
    %v2410 = vunpack.c.l.b16 %v523
    %v2411 = vunpack.c.h.b16 %v523
    %v2412 = vunpack.c.l.b16 %v524
    %v2413 = vunpack.c.h.b16 %v524
    %v2414 = vunpack.c.l.b16 %v525
    %v2415 = vunpack.c.h.b16 %v525
    %v2416 = vunpack.c.l.b16 %v526
    %v2417 = vunpack.c.h.b16 %v526
    %v2418 = vunpack.c.l.b16 %v527
    %v2419 = vunpack.c.h.b16 %v527
    %v2420 = vunpack.c.l.b16 %v528
    %v2421 = vunpack.c.h.b16 %v528
    %v2422 = vunpack.c.l.b16 %v529
    %v2423 = vunpack.c.h.b16 %v529
    %v2424 = vunpack.c.l.b16 %v530
    %v2425 = vunpack.c.h.b16 %v530
    %v2426 = vunpack.c.l.b16 %v531
    %v2427 = vunpack.c.h.b16 %v531
    %v2428 = vunpack.c.l.b16 %v532
    %v2429 = vunpack.c.h.b16 %v532
    %v2430 = vunpack.c.l.b16 %v533
    %v2431 = vunpack.c.h.b16 %v533
    %v2432 = vunpack.c.l.b16 %v534
    %v2433 = vunpack.c.h.b16 %v534
    %v2434 = vunpack.c.l.b16 %v535
    %v2435 = vunpack.c.h.b16 %v535
    %v2436 = vunpack.c.l.b16 %v536
    %v2437 = vunpack.c.h.b16 %v536
    %v2438 = vunpack.c.l.b16 %v537
    %v2439 = vunpack.c.h.b16 %v537
    %v2440 = vunpack.c.l.b16 %v538
    %v2441 = vunpack.c.h.b16 %v538
    %v2442 = vunpack.c.l.b16 %v539
    %v2443 = vunpack.c.h.b16 %v539
    %v2444 = vunpack.c.l.b16 %v540
    %v2445 = vunpack.c.h.b16 %v540
    %v2446 = vunpack.c.l.b16 %v541
    %v2447 = vunpack.c.h.b16 %v541
    %v2448 = vunpack.c.l.b16 %v542
    %v2449 = vunpack.c.h.b16 %v542
    %v2450 = vunpack.c.l.b16 %v543
    %v2451 = vunpack.c.h.b16 %v543
    %v2452 = vunpack.c.l.b16 %v544
    %v2453 = vunpack.c.h.b16 %v544
    %v2454 = vunpack.c.l.b16 %v545
    %v2455 = vunpack.c.h.b16 %v545
    %v2456 = vunpack.c.l.b16 %v546
    %v2457 = vunpack.c.h.b16 %v546
    %v2458 = vunpack.c.l.b16 %v547
    %v2459 = vunpack.c.h.b16 %v547
    %v2460 = vunpack.c.l.b16 %v548
    %v2461 = vunpack.c.h.b16 %v548
    %v2462 = vunpack.c.l.b16 %v549
    %v2463 = vunpack.c.h.b16 %v549
    %v2464 = vunpack.c.l.b16 %v550
    %v2465 = vunpack.c.h.b16 %v550
    %v2466 = vunpack.c.l.b16 %v551
    %v2467 = vunpack.c.h.b16 %v551
    %v2468 = vunpack.c.l.b16 %v552
    %v2469 = vunpack.c.h.b16 %v552
    %v2470 = vunpack.c.l.b16 %v553
    %v2471 = vunpack.c.h.b16 %v553
    %v2472 = vunpack.c.l.b16 %v554
    %v2473 = vunpack.c.h.b16 %v554
    %v2474 = vunpack.c.l.b16 %v555
    %v2475 = vunpack.c.h.b16 %v555
    %v2476 = vunpack.c.l.b16 %v556
    %v2477 = vunpack.c.h.b16 %v556
    %v2478 = vunpack.c.l.b16 %v557
    %v2479 = vunpack.c.h.b16 %v557
    %v2480 = vunpack.c.l.b16 %v558
    %v2481 = vunpack.c.h.b16 %v558
    %v2482 = vunpack.c.l.b16 %v559
    %v2483 = vunpack.c.h.b16 %v559
    %v2484 = vunpack.c.l.b16 %v560
    %v2485 = vunpack.c.h.b16 %v560
    %v2486 = vunpack.c.l.b16 %v561
    %v2487 = vunpack.c.h.b16 %v561
    %v2488 = vunpack.c.l.b16 %v562
    %v2489 = vunpack.c.h.b16 %v562
    %v2490 = vunpack.c.l.b16 %v563
    %v2491 = vunpack.c.h.b16 %v563
    %v2492 = vunpack.c.l.b16 %v564
    %v2493 = vunpack.c.h.b16 %v564
    %v2494 = vunpack.c.l.b16 %v565
    %v2495 = vunpack.c.h.b16 %v565
    %v2496 = vunpack.c.l.b16 %v566
    %v2497 = vunpack.c.h.b16 %v566
    %v2498 = vunpack.c.l.b16 %v567
    %v2499 = vunpack.c.h.b16 %v567
    %v2500 = vunpack.c.l.b16 %v568
    %v2501 = vunpack.c.h.b16 %v568
    %v2502 = vunpack.c.l.b16 %v569
    %v2503 = vunpack.c.h.b16 %v569
    %v2504 = vunpack.c.l.b16 %v570
    %v2505 = vunpack.c.h.b16 %v570
    %v2506 = vunpack.c.l.b16 %v571
    %v2507 = vunpack.c.h.b16 %v571
    %v2508 = vunpack.c.l.b16 %v572
    %v2509 = vunpack.c.h.b16 %v572
    %v2510 = vunpack.c.l.b16 %v573
    %v2511 = vunpack.c.h.b16 %v573
    %v2512 = vunpack.c.l.b16 %v574
    %v2513 = vunpack.c.h.b16 %v574
    %v2514 = vunpack.c.l.b16 %v575
    %v2515 = vunpack.c.h.b16 %v575
    %v2516 = vunpack.c.l.b16 %v576
    %v2517 = vunpack.c.h.b16 %v576
    %v2518 = vunpack.c.l.b16 %v577
    %v2519 = vunpack.c.h.b16 %v577
    %v2520 = vunpack.c.l.b16 %v578
    %v2521 = vunpack.c.h.b16 %v578
    %v2522 = vunpack.c.l.b16 %v579
    %v2523 = vunpack.c.h.b16 %v579
    %v2524 = vunpack.c.l.b16 %v580
    %v2525 = vunpack.c.h.b16 %v580
    %v2526 = vunpack.c.l.b16 %v581
    %v2527 = vunpack.c.h.b16 %v581
    %v2528 = vunpack.c.l.b16 %v582
    %v2529 = vunpack.c.h.b16 %v582
    %v2530 = vunpack.c.l.b16 %v583
    %v2531 = vunpack.c.h.b16 %v583
    %v2532 = vunpack.c.l.b16 %v584
    %v2533 = vunpack.c.h.b16 %v584
    %v2534 = vunpack.c.l.b16 %v585
    %v2535 = vunpack.c.h.b16 %v585
    %v2536 = vunpack.c.l.b16 %v586
    %v2537 = vunpack.c.h.b16 %v586
    %v2538 = vunpack.c.l.b16 %v587
    %v2539 = vunpack.c.h.b16 %v587
    %v2540 = vunpack.c.l.b16 %v588
    %v2541 = vunpack.c.h.b16 %v588
    %v2542 = vunpack.c.l.b16 %v589
    %v2543 = vunpack.c.h.b16 %v589
    %v2544 = vunpack.c.l.b16 %v590
    %v2545 = vunpack.c.h.b16 %v590
    %v2546 = vunpack.c.l.b16 %v591
    %v2547 = vunpack.c.h.b16 %v591
    %v2548 = vunpack.c.l.b16 %v592
    %v2549 = vunpack.c.h.b16 %v592
    %v2550 = vunpack.c.l.b16 %v593
    %v2551 = vunpack.c.h.b16 %v593
    %v2552 = vunpack.c.l.b16 %v594
    %v2553 = vunpack.c.h.b16 %v594
    %v2554 = vunpack.c.l.b16 %v595
    %v2555 = vunpack.c.h.b16 %v595
    %v2556 = vunpack.c.l.b16 %v596
    %v2557 = vunpack.c.h.b16 %v596
    %v2558 = vunpack.c.l.b16 %v597
    %v2559 = vunpack.c.h.b16 %v597
    %v2560 = vunpack.c.l.b16 %v598
    %v2561 = vunpack.c.h.b16 %v598
    %v2562 = vunpack.c.l.b16 %v599
    %v2563 = vunpack.c.h.b16 %v599
    %v2564 = vunpack.c.l.b16 %v600
    %v2565 = vunpack.c.h.b16 %v600
    %v2566 = vunpack.c.l.b16 %v601
    %v2567 = vunpack.c.h.b16 %v601
    %v2568 = vunpack.c.l.b16 %v602
    %v2569 = vunpack.c.h.b16 %v602
    %v2570 = vunpack.c.l.b16 %v603
    %v2571 = vunpack.c.h.b16 %v603
    %v2572 = vunpack.c.l.b16 %v604
    %v2573 = vunpack.c.h.b16 %v604
    %v2574 = vunpack.c.l.b16 %v605
    %v2575 = vunpack.c.h.b16 %v605
    %v2576 = vunpack.c.l.b16 %v606
    %v2577 = vunpack.c.h.b16 %v606
    %v2578 = vunpack.c.l.b16 %v607
    %v2579 = vunpack.c.h.b16 %v607
    %v2580 = vunpack.c.l.b16 %v608
    %v2581 = vunpack.c.h.b16 %v608
    %v2582 = vunpack.c.l.b16 %v609
    %v2583 = vunpack.c.h.b16 %v609
    %v2584 = vunpack.c.l.b16 %v610
    %v2585 = vunpack.c.h.b16 %v610
    %v2586 = vunpack.c.l.b16 %v611
    %v2587 = vunpack.c.h.b16 %v611
    %v2588 = vunpack.c.l.b16 %v612
    %v2589 = vunpack.c.h.b16 %v612
    %v2590 = vunpack.c.l.b16 %v613
    %v2591 = vunpack.c.h.b16 %v613
    %v2592 = vunpack.c.l.b16 %v614
    %v2593 = vunpack.c.h.b16 %v614
    %v2594 = vunpack.c.l.b16 %v615
    %v2595 = vunpack.c.h.b16 %v615
    %v2596 = vunpack.c.l.b16 %v616
    %v2597 = vunpack.c.h.b16 %v616
    %v2598 = vunpack.c.l.b16 %v617
    %v2599 = vunpack.c.h.b16 %v617
    %v2600 = vunpack.c.l.b16 %v618
    %v2601 = vunpack.c.h.b16 %v618
    %v2602 = vunpack.c.l.b16 %v619
    %v2603 = vunpack.c.h.b16 %v619
    %v2604 = vunpack.c.l.b16 %v620
    %v2605 = vunpack.c.h.b16 %v620
    %v2606 = vunpack.c.l.b16 %v621
    %v2607 = vunpack.c.h.b16 %v621
    %v2608 = vunpack.c.l.b16 %v622
    %v2609 = vunpack.c.h.b16 %v622
    %v2610 = vunpack.c.l.b16 %v623
    %v2611 = vunpack.c.h.b16 %v623
    %v2612 = vunpack.c.l.b16 %v624
    %v2613 = vunpack.c.h.b16 %v624
    %v2614 = vunpack.c.l.b16 %v625
    %v2615 = vunpack.c.h.b16 %v625
    %v2616 = vunpack.c.l.b16 %v626
    %v2617 = vunpack.c.h.b16 %v626
    %v2618 = vunpack.c.l.b16 %v627
    %v2619 = vunpack.c.h.b16 %v627
    %v2620 = vunpack.c.l.b16 %v628
    %v2621 = vunpack.c.h.b16 %v628
    %v2622 = vunpack.c.l.b16 %v629
    %v2623 = vunpack.c.h.b16 %v629
    %v2624 = vunpack.c.l.b16 %v630
    %v2625 = vunpack.c.h.b16 %v630
    %v2626 = vunpack.c.l.b16 %v631
    %v2627 = vunpack.c.h.b16 %v631
    %v2628 = vunpack.c.l.b16 %v632
    %v2629 = vunpack.c.h.b16 %v632
    %v2630 = vunpack.c.l.b16 %v633
    %v2631 = vunpack.c.h.b16 %v633
    %v2632 = vunpack.c.l.b16 %v634
    %v2633 = vunpack.c.h.b16 %v634
    %v2634 = vunpack.c.l.b16 %v635
    %v2635 = vunpack.c.h.b16 %v635
    %v2636 = vunpack.c.l.b16 %v636
    %v2637 = vunpack.c.h.b16 %v636
    %v2638 = vunpack.c.l.b16 %v637
    %v2639 = vunpack.c.h.b16 %v637
    %v2640 = vunpack.c.l.b16 %v638
    %v2641 = vunpack.c.h.b16 %v638
    %v2642 = vunpack.c.l.b16 %v639
    %v2643 = vunpack.c.h.b16 %v639
    %v2644 = vunpack.c.l.b16 %v640
    %v2645 = vunpack.c.h.b16 %v640
    %v2646 = vunpack.c.l.b16 %v641
    %v2647 = vunpack.c.h.b16 %v641
    %v2648 = vunpack.c.l.b16 %v642
    %v2649 = vunpack.c.h.b16 %v642
    %v2650 = vunpack.c.l.b16 %v643
    %v2651 = vunpack.c.h.b16 %v643
    %v2652 = vunpack.c.l.b16 %v644
    %v2653 = vunpack.c.h.b16 %v644
    %v2654 = vunpack.c.l.b16 %v645
    %v2655 = vunpack.c.h.b16 %v645
    %v2656 = vunpack.c.l.b16 %v646
    %v2657 = vunpack.c.h.b16 %v646
    %v2658 = vunpack.c.l.b16 %v647
    %v2659 = vunpack.c.h.b16 %v647
    %v2660 = vunpack.c.l.b16 %v648
    %v2661 = vunpack.c.h.b16 %v648
    %v2662 = vunpack.c.l.b16 %v649
    %v2663 = vunpack.c.h.b16 %v649
    %v2664 = vunpack.c.l.b16 %v650
    %v2665 = vunpack.c.h.b16 %v650
    %v2666 = vunpack.c.l.b16 %v651
    %v2667 = vunpack.c.h.b16 %v651
    %v2668 = vunpack.c.l.b16 %v652
    %v2669 = vunpack.c.h.b16 %v652
    %v2670 = vunpack.c.l.b16 %v653
    %v2671 = vunpack.c.h.b16 %v653
    %v2672 = vunpack.c.l.b16 %v654
    %v2673 = vunpack.c.h.b16 %v654
    %v2674 = vunpack.c.l.b16 %v655
    %v2675 = vunpack.c.h.b16 %v655
    %v2676 = vunpack.c.l.b16 %v656
    %v2677 = vunpack.c.h.b16 %v656
    %v2678 = vunpack.c.l.b16 %v657
    %v2679 = vunpack.c.h.b16 %v657
    %v2680 = vunpack.c.l.b16 %v658
    %v2681 = vunpack.c.h.b16 %v658
    %v2682 = vunpack.c.l.b16 %v659
    %v2683 = vunpack.c.h.b16 %v659
    %v2684 = vunpack.c.l.b16 %v660
    %v2685 = vunpack.c.h.b16 %v660
    %v2686 = vunpack.c.l.b16 %v661
    %v2687 = vunpack.c.h.b16 %v661
    %v2688 = vunpack.c.l.b16 %v662
    %v2689 = vunpack.c.h.b16 %v662
    %v2690 = vunpack.c.l.b16 %v663
    %v2691 = vunpack.c.h.b16 %v663
    %v2692 = vunpack.c.l.b16 %v664
    %v2693 = vunpack.c.h.b16 %v664
    %v2694 = vunpack.c.l.b16 %v665
    %v2695 = vunpack.c.h.b16 %v665
    %v2696 = vunpack.c.l.b16 %v666
    %v2697 = vunpack.c.h.b16 %v666
    %v2698 = vunpack.c.l.b16 %v667
    %v2699 = vunpack.c.h.b16 %v667
    %v2700 = vunpack.c.l.b16 %v668
    %v2701 = vunpack.c.h.b16 %v668
    %v2702 = vunpack.c.l.b16 %v669
    %v2703 = vunpack.c.h.b16 %v669
    %v2704 = vunpack.c.l.b16 %v670
    %v2705 = vunpack.c.h.b16 %v670
    %v2706 = vunpack.c.l.b16 %v671
    %v2707 = vunpack.c.h.b16 %v671
    %v2708 = vunpack.c.l.b16 %v672
    %v2709 = vunpack.c.h.b16 %v672
    %v2710 = vunpack.c.l.b16 %v673
    %v2711 = vunpack.c.h.b16 %v673
    %v2712 = vunpack.c.l.b16 %v674
    %v2713 = vunpack.c.h.b16 %v674
    %v2714 = vunpack.c.l.b16 %v675
    %v2715 = vunpack.c.h.b16 %v675
    %v2716 = vunpack.c.l.b16 %v676
    %v2717 = vunpack.c.h.b16 %v676
    %v2718 = vunpack.c.l.b16 %v677
    %v2719 = vunpack.c.h.b16 %v677
    %v2720 = vunpack.c.l.b16 %v678
    %v2721 = vunpack.c.h.b16 %v678
    %v2722 = vunpack.c.l.b16 %v679
    %v2723 = vunpack.c.h.b16 %v679
    %v2724 = vunpack.c.l.b16 %v680
    %v2725 = vunpack.c.h.b16 %v680
    %v2726 = vunpack.c.l.b16 %v681
    %v2727 = vunpack.c.h.b16 %v681
    %v2728 = vunpack.c.l.b16 %v682
    %v2729 = vunpack.c.h.b16 %v682
    %v2730 = vunpack.c.l.b16 %v683
    %v2731 = vunpack.c.h.b16 %v683
    %v2732 = vunpack.c.l.b16 %v684
    %v2733 = vunpack.c.h.b16 %v684
    %v2734 = vunpack.c.l.b16 %v685
    %v2735 = vunpack.c.h.b16 %v685
    %v2736 = vunpack.c.l.b16 %v686
    %v2737 = vunpack.c.h.b16 %v686
    %v2738 = vunpack.c.l.b16 %v687
    %v2739 = vunpack.c.h.b16 %v687
    %v2740 = vunpack.c.l.b16 %v688
    %v2741 = vunpack.c.h.b16 %v688
    %v2742 = vunpack.c.l.b16 %v689
    %v2743 = vunpack.c.h.b16 %v689
    %v2744 = vunpack.c.l.b16 %v690
    %v2745 = vunpack.c.h.b16 %v690
    %v2746 = vunpack.c.l.b16 %v691
    %v2747 = vunpack.c.h.b16 %v691
    %v2748 = vunpack.c.l.b16 %v692
    %v2749 = vunpack.c.h.b16 %v692
    %v2750 = vunpack.c.l.b16 %v693
    %v2751 = vunpack.c.h.b16 %v693
    %v2752 = vunpack.c.l.b16 %v694
    %v2753 = vunpack.c.h.b16 %v694
    %v2754 = vunpack.c.l.b16 %v695
    %v2755 = vunpack.c.h.b16 %v695
    %v2756 = vunpack.c.l.b16 %v696
    %v2757 = vunpack.c.h.b16 %v696
    %v2758 = vunpack.c.l.b16 %v697
    %v2759 = vunpack.c.h.b16 %v697
    %v2760 = vunpack.c.l.b16 %v698
    %v2761 = vunpack.c.h.b16 %v698
    %v2762 = vunpack.c.l.b16 %v699
    %v2763 = vunpack.c.h.b16 %v699
    %v2764 = vunpack.c.l.b16 %v700
    %v2765 = vunpack.c.h.b16 %v700
    %v2766 = vunpack.c.l.b16 %v701
    %v2767 = vunpack.c.h.b16 %v701
    %v2768 = vunpack.c.l.b16 %v702
    %v2769 = vunpack.c.h.b16 %v702
    %v2770 = vunpack.c.l.b16 %v703
    %v2771 = vunpack.c.h.b16 %v703
    %v2772 = vunpack.c.l.b16 %v704
    %v2773 = vunpack.c.h.b16 %v704
    %v2774 = vunpack.c.l.b16 %v705
    %v2775 = vunpack.c.h.b16 %v705
    %v2776 = vunpack.c.l.b16 %v706
    %v2777 = vunpack.c.h.b16 %v706
    %v2778 = vunpack.c.l.b16 %v707
    %v2779 = vunpack.c.h.b16 %v707
    %v2780 = vunpack.c.l.b16 %v708
    %v2781 = vunpack.c.h.b16 %v708
    %v2782 = vunpack.c.l.b16 %v709
    %v2783 = vunpack.c.h.b16 %v709
    %v2784 = vunpack.c.l.b16 %v710
    %v2785 = vunpack.c.h.b16 %v710
    %v2786 = vunpack.c.l.b16 %v711
    %v2787 = vunpack.c.h.b16 %v711
    %v2788 = vunpack.c.l.b16 %v712
    %v2789 = vunpack.c.h.b16 %v712
    %v2790 = vunpack.c.l.b16 %v713
    %v2791 = vunpack.c.h.b16 %v713
    %v2792 = vunpack.c.l.b16 %v714
    %v2793 = vunpack.c.h.b16 %v714
    %v2794 = vunpack.c.l.b16 %v715
    %v2795 = vunpack.c.h.b16 %v715
    %v2796 = vunpack.c.l.b16 %v716
    %v2797 = vunpack.c.h.b16 %v716
    %v2798 = vunpack.c.l.b16 %v717
    %v2799 = vunpack.c.h.b16 %v717
    %v2800 = vunpack.c.l.b16 %v718
    %v2801 = vunpack.c.h.b16 %v718
    %v2802 = vunpack.c.l.b16 %v719
    %v2803 = vunpack.c.h.b16 %v719
    %v2804 = vunpack.c.l.b16 %v720
    %v2805 = vunpack.c.h.b16 %v720
    %v2806 = vunpack.c.l.b16 %v721
    %v2807 = vunpack.c.h.b16 %v721
    %v2808 = vunpack.c.l.b16 %v722
    %v2809 = vunpack.c.h.b16 %v722
    %v2810 = vunpack.c.l.b16 %v723
    %v2811 = vunpack.c.h.b16 %v723
    %v2812 = vunpack.c.l.b16 %v724
    %v2813 = vunpack.c.h.b16 %v724
    %v2814 = vunpack.c.l.b16 %v725
    %v2815 = vunpack.c.h.b16 %v725
    %v2816 = vunpack.c.l.b16 %v726
    %v2817 = vunpack.c.h.b16 %v726
    %v2818 = vunpack.c.l.b16 %v727
    %v2819 = vunpack.c.h.b16 %v727
    %v2820 = vunpack.c.l.b16 %v728
    %v2821 = vunpack.c.h.b16 %v728
    %v2822 = vunpack.c.l.b16 %v729
    %v2823 = vunpack.c.h.b16 %v729
    %v2824 = vunpack.c.l.b16 %v730
    %v2825 = vunpack.c.h.b16 %v730
    %v2826 = vunpack.c.l.b16 %v731
    %v2827 = vunpack.c.h.b16 %v731
    %v2828 = vunpack.c.l.b16 %v732
    %v2829 = vunpack.c.h.b16 %v732
    %v2830 = vunpack.c.l.b16 %v733
    %v2831 = vunpack.c.h.b16 %v733
    %v2832 = vunpack.c.l.b16 %v734
    %v2833 = vunpack.c.h.b16 %v734
    %v2834 = vunpack.c.l.b16 %v735
    %v2835 = vunpack.c.h.b16 %v735
    %v2836 = vunpack.c.l.b16 %v736
    %v2837 = vunpack.c.h.b16 %v736
    %v2838 = vunpack.c.l.b16 %v737
    %v2839 = vunpack.c.h.b16 %v737
    %v2840 = vunpack.c.l.b16 %v738
    %v2841 = vunpack.c.h.b16 %v738
    %v2842 = vunpack.c.l.b16 %v739
    %v2843 = vunpack.c.h.b16 %v739
    %v2844 = vunpack.c.l.b16 %v740
    %v2845 = vunpack.c.h.b16 %v740
    %v2846 = vunpack.c.l.b16 %v741
    %v2847 = vunpack.c.h.b16 %v741
    %v2848 = vunpack.c.l.b16 %v742
    %v2849 = vunpack.c.h.b16 %v742
    %v2850 = vunpack.c.l.b16 %v743
    %v2851 = vunpack.c.h.b16 %v743
    %v2852 = vunpack.c.l.b16 %v744
    %v2853 = vunpack.c.h.b16 %v744
    %v2854 = vunpack.c.l.b16 %v745
    %v2855 = vunpack.c.h.b16 %v745
    %v2856 = vunpack.c.l.b16 %v746
    %v2857 = vunpack.c.h.b16 %v746
    %v2858 = vunpack.c.l.b16 %v747
    %v2859 = vunpack.c.h.b16 %v747
    %v2860 = vunpack.c.l.b16 %v748
    %v2861 = vunpack.c.h.b16 %v748
    %v2862 = vunpack.c.l.b16 %v749
    %v2863 = vunpack.c.h.b16 %v749
    %v2864 = vunpack.c.l.b16 %v750
    %v2865 = vunpack.c.h.b16 %v750
    %v2866 = vunpack.c.l.b16 %v751
    %v2867 = vunpack.c.h.b16 %v751
    %v2868 = vunpack.c.l.b16 %v752
    %v2869 = vunpack.c.h.b16 %v752
    %v2870 = vunpack.c.l.b16 %v753
    %v2871 = vunpack.c.h.b16 %v753
    %v2872 = vunpack.c.l.b16 %v754
    %v2873 = vunpack.c.h.b16 %v754
    %v2874 = vunpack.c.l.b16 %v755
    %v2875 = vunpack.c.h.b16 %v755
    %v2876 = vunpack.c.l.b16 %v756
    %v2877 = vunpack.c.h.b16 %v756
    %v2878 = vunpack.c.l.b16 %v757
    %v2879 = vunpack.c.h.b16 %v757
    %v2880 = vunpack.c.l.b16 %v758
    %v2881 = vunpack.c.h.b16 %v758
    %v2882 = vunpack.c.l.b16 %v759
    %v2883 = vunpack.c.h.b16 %v759
    %v2884 = vunpack.c.l.b16 %v760
    %v2885 = vunpack.c.h.b16 %v760
    %v2886 = vunpack.c.l.b16 %v761
    %v2887 = vunpack.c.h.b16 %v761
    %v2888 = vunpack.c.l.b16 %v762
    %v2889 = vunpack.c.h.b16 %v762
    %v2890 = vunpack.c.l.b16 %v763
    %v2891 = vunpack.c.h.b16 %v763
    %v2892 = vunpack.c.l.b16 %v764
    %v2893 = vunpack.c.h.b16 %v764
    %v2894 = vunpack.c.l.b16 %v765
    %v2895 = vunpack.c.h.b16 %v765
    %v2896 = vunpack.c.l.b16 %v766
    %v2897 = vunpack.c.h.b16 %v766
    %v2898 = vunpack.c.l.b16 %v767
    %v2899 = vunpack.c.h.b16 %v767
    %v2900 = vunpack.c.l.b16 %v768
    %v2901 = vunpack.c.h.b16 %v768
    %v2902 = vunpack.c.l.b16 %v769
    %v2903 = vunpack.c.h.b16 %v769
    %v2904 = vunpack.c.l.b16 %v770
    %v2905 = vunpack.c.h.b16 %v770
    %v2906 = vunpack.c.l.b16 %v771
    %v2907 = vunpack.c.h.b16 %v771
    %v2908 = vunpack.c.l.b16 %v772
    %v2909 = vunpack.c.h.b16 %v772
    %v2910 = vunpack.c.l.b16 %v773
    %v2911 = vunpack.c.h.b16 %v773
    %v2912 = vunpack.c.l.b16 %v774
    %v2913 = vunpack.c.h.b16 %v774
    %v2914 = vunpack.c.l.b16 %v775
    %v2915 = vunpack.c.h.b16 %v775
    %v2916 = vunpack.c.l.b16 %v776
    %v2917 = vunpack.c.h.b16 %v776
    %v2918 = vunpack.c.l.b16 %v777
    %v2919 = vunpack.c.h.b16 %v777
    %v2920 = vunpack.c.l.b16 %v778
    %v2921 = vunpack.c.h.b16 %v778
    %v2922 = vunpack.c.l.b16 %v779
    %v2923 = vunpack.c.h.b16 %v779
    %v2924 = vunpack.c.l.b16 %v780
    %v2925 = vunpack.c.h.b16 %v780
    %v2926 = vunpack.c.l.b16 %v781
    %v2927 = vunpack.c.h.b16 %v781
    %v2928 = vunpack.c.l.b16 %v782
    %v2929 = vunpack.c.h.b16 %v782
    %v2930 = vunpack.c.l.b16 %v783
    %v2931 = vunpack.c.h.b16 %v783
    %v2932 = vunpack.c.l.b16 %v784
    %v2933 = vunpack.c.h.b16 %v784
    %v2934 = vunpack.c.l.b16 %v785
    %v2935 = vunpack.c.h.b16 %v785
    %v2936 = vunpack.c.l.b16 %v786
    %v2937 = vunpack.c.h.b16 %v786
    %v2938 = vunpack.c.l.b16 %v787
    %v2939 = vunpack.c.h.b16 %v787
    %v2940 = vunpack.c.l.b16 %v788
    %v2941 = vunpack.c.h.b16 %v788
    %v2942 = vunpack.c.l.b16 %v789
    %v2943 = vunpack.c.h.b16 %v789
    %v2944 = vunpack.c.l.b16 %v790
    %v2945 = vunpack.c.h.b16 %v790
    %v2946 = vunpack.c.l.b16 %v791
    %v2947 = vunpack.c.h.b16 %v791
    %v2948 = vunpack.c.l.b16 %v792
    %v2949 = vunpack.c.h.b16 %v792
    %v2950 = vunpack.c.l.b16 %v793
    %v2951 = vunpack.c.h.b16 %v793
    %v2952 = vunpack.c.l.b16 %v794
    %v2953 = vunpack.c.h.b16 %v794
    %v2954 = vunpack.c.l.b16 %v795
    %v2955 = vunpack.c.h.b16 %v795
    %v2956 = vunpack.c.l.b16 %v796
    %v2957 = vunpack.c.h.b16 %v796
    %v2958 = vunpack.c.l.b16 %v797
    %v2959 = vunpack.c.h.b16 %v797
    %v2960 = vunpack.c.l.b16 %v798
    %v2961 = vunpack.c.h.b16 %v798
    %v2962 = vunpack.c.l.b16 %v799
    %v2963 = vunpack.c.h.b16 %v799
    %v2964 = vunpack.c.l.b16 %v800
    %v2965 = vunpack.c.h.b16 %v800
    %v2966 = vunpack.c.l.b16 %v801
    %v2967 = vunpack.c.h.b16 %v801
    %v2968 = vunpack.c.l.b16 %v802
    %v2969 = vunpack.c.h.b16 %v802
    %v2970 = vunpack.c.l.b16 %v803
    %v2971 = vunpack.c.h.b16 %v803
    %v2972 = vunpack.c.l.b16 %v804
    %v2973 = vunpack.c.h.b16 %v804
    %v2974 = vunpack.c.l.b16 %v805
    %v2975 = vunpack.c.h.b16 %v805
    %v2976 = vunpack.c.l.b16 %v806
    %v2977 = vunpack.c.h.b16 %v806
    %v2978 = vunpack.c.l.b16 %v807
    %v2979 = vunpack.c.h.b16 %v807
    %v2980 = vunpack.c.l.b16 %v808
    %v2981 = vunpack.c.h.b16 %v808
    %v2982 = vunpack.c.l.b16 %v809
    %v2983 = vunpack.c.h.b16 %v809
    %v2984 = vunpack.c.l.b16 %v810
    %v2985 = vunpack.c.h.b16 %v810
    %v2986 = vunpack.c.l.b16 %v811
    %v2987 = vunpack.c.h.b16 %v811
    %v2988 = vunpack.c.l.b16 %v812
    %v2989 = vunpack.c.h.b16 %v812
    %v2990 = vunpack.c.l.b16 %v813
    %v2991 = vunpack.c.h.b16 %v813
    %v2992 = vunpack.c.l.b16 %v814
    %v2993 = vunpack.c.h.b16 %v814
    %v2994 = vunpack.c.l.b16 %v815
    %v2995 = vunpack.c.h.b16 %v815
    %v2996 = vunpack.c.l.b16 %v816
    %v2997 = vunpack.c.h.b16 %v816
    %v2998 = vunpack.c.l.b16 %v817
    %v2999 = vunpack.c.h.b16 %v817
    %v3000 = vunpack.c.l.b16 %v818
    %v3001 = vunpack.c.h.b16 %v818
    %v3002 = vunpack.c.l.b16 %v819
    %v3003 = vunpack.c.h.b16 %v819
    %v3004 = vunpack.c.l.b16 %v820
    %v3005 = vunpack.c.h.b16 %v820
    %v3006 = vunpack.c.l.b16 %v821
    %v3007 = vunpack.c.h.b16 %v821
    %v3008 = vunpack.c.l.b16 %v822
    %v3009 = vunpack.c.h.b16 %v822
    %v3010 = vunpack.c.l.b16 %v823
    %v3011 = vunpack.c.h.b16 %v823
    %v3012 = vunpack.c.l.b16 %v824
    %v3013 = vunpack.c.h.b16 %v824
    %v3014 = vunpack.c.l.b16 %v825
    %v3015 = vunpack.c.h.b16 %v825
    %v3016 = vunpack.c.l.b16 %v826
    %v3017 = vunpack.c.h.b16 %v826
    %v3018 = vunpack.c.l.b16 %v827
    %v3019 = vunpack.c.h.b16 %v827
    %v3020 = vunpack.c.l.b16 %v828
    %v3021 = vunpack.c.h.b16 %v828
    %v3022 = vunpack.c.l.b16 %v829
    %v3023 = vunpack.c.h.b16 %v829
    %v3024 = vunpack.c.l.b16 %v830
    %v3025 = vunpack.c.h.b16 %v830
    %v3026 = vunpack.c.l.b16 %v831
    %v3027 = vunpack.c.h.b16 %v831
    %v3028 = vunpack.c.l.b16 %v832
    %v3029 = vunpack.c.h.b16 %v832
    %v3030 = vunpack.c.l.b16 %v833
    %v3031 = vunpack.c.h.b16 %v833
    %v3032 = vunpack.c.l.b16 %v834
    %v3033 = vunpack.c.h.b16 %v834
    %v3034 = vunpack.c.l.b16 %v835
    %v3035 = vunpack.c.h.b16 %v835
    %v3036 = vunpack.c.l.b16 %v836
    %v3037 = vunpack.c.h.b16 %v836
    %v3038 = vunpack.c.l.b16 %v837
    %v3039 = vunpack.c.h.b16 %v837
    %v3040 = vunpack.c.l.b16 %v838
    %v3041 = vunpack.c.h.b16 %v838
    %v3042 = vunpack.c.l.b16 %v839
    %v3043 = vunpack.c.h.b16 %v839
    %v3044 = vunpack.c.l.b16 %v840
    %v3045 = vunpack.c.h.b16 %v840
    %v3046 = vunpack.c.l.b16 %v841
    %v3047 = vunpack.c.h.b16 %v841
    %v3048 = vunpack.c.l.b16 %v842
    %v3049 = vunpack.c.h.b16 %v842
    %v3050 = vunpack.c.l.b16 %v843
    %v3051 = vunpack.c.h.b16 %v843
    %v3052 = vunpack.c.l.b16 %v844
    %v3053 = vunpack.c.h.b16 %v844
    %v3054 = vunpack.c.l.b16 %v845
    %v3055 = vunpack.c.h.b16 %v845
    %v3056 = vunpack.c.l.b16 %v846
    %v3057 = vunpack.c.h.b16 %v846
    %v3058 = vunpack.c.l.b16 %v847
    %v3059 = vunpack.c.h.b16 %v847
    %v3060 = vunpack.c.l.b16 %v848
    %v3061 = vunpack.c.h.b16 %v848
    %v3062 = vunpack.c.l.b16 %v849
    %v3063 = vunpack.c.h.b16 %v849
    %v3064 = vunpack.c.l.b16 %v850
    %v3065 = vunpack.c.h.b16 %v850
    %v3066 = vunpack.c.l.b16 %v851
    %v3067 = vunpack.c.h.b16 %v851
    %v3068 = vunpack.c.l.b16 %v852
    %v3069 = vunpack.c.h.b16 %v852
    %v3070 = vunpack.c.l.b16 %v853
    %v3071 = vunpack.c.h.b16 %v853
    %v3072 = vunpack.c.l.b16 %v854
    %v3073 = vunpack.c.h.b16 %v854
    %v3074 = vunpack.c.l.b16 %v855
    %v3075 = vunpack.c.h.b16 %v855
    %v3076 = vunpack.c.l.b16 %v856
    %v3077 = vunpack.c.h.b16 %v856
    %v3078 = vunpack.c.l.b16 %v857
    %v3079 = vunpack.c.h.b16 %v857
    %v3080 = vunpack.c.l.b16 %v858
    %v3081 = vunpack.c.h.b16 %v858
    %v3082 = vunpack.c.l.b16 %v859
    %v3083 = vunpack.c.h.b16 %v859
    %v3084 = vunpack.c.l.b16 %v860
    %v3085 = vunpack.c.h.b16 %v860
    %v3086 = vunpack.c.l.b16 %v861
    %v3087 = vunpack.c.h.b16 %v861
    %v3088 = vunpack.c.l.b16 %v862
    %v3089 = vunpack.c.h.b16 %v862
    %v3090 = vunpack.c.l.b16 %v863
    %v3091 = vunpack.c.h.b16 %v863
    %v3092 = vunpack.c.l.b16 %v864
    %v3093 = vunpack.c.h.b16 %v864
    %v3094 = vunpack.c.l.b16 %v865
    %v3095 = vunpack.c.h.b16 %v865
    %v3096 = vunpack.c.l.b16 %v866
    %v3097 = vunpack.c.h.b16 %v866
    %v3098 = vunpack.c.l.b16 %v867
    %v3099 = vunpack.c.h.b16 %v867
    %v3100 = vunpack.c.l.b16 %v868
    %v3101 = vunpack.c.h.b16 %v868
    %v3102 = vunpack.c.l.b16 %v869
    %v3103 = vunpack.c.h.b16 %v869
    %v3104 = vunpack.c.l.b16 %v870
    %v3105 = vunpack.c.h.b16 %v870
    %v3106 = vunpack.c.l.b16 %v871
    %v3107 = vunpack.c.h.b16 %v871
    %v3108 = vunpack.c.l.b16 %v872
    %v3109 = vunpack.c.h.b16 %v872
    %v3110 = vunpack.c.l.b16 %v873
    %v3111 = vunpack.c.h.b16 %v873
    %v3112 = vunpack.c.l.b16 %v874
    %v3113 = vunpack.c.h.b16 %v874
    %v3114 = vunpack.c.l.b16 %v875
    %v3115 = vunpack.c.h.b16 %v875
    %v3116 = vunpack.c.l.b16 %v876
    %v3117 = vunpack.c.h.b16 %v876
    %v3118 = vunpack.c.l.b16 %v877
    %v3119 = vunpack.c.h.b16 %v877
    %v3120 = vunpack.c.l.b16 %v878
    %v3121 = vunpack.c.h.b16 %v878
    %v3122 = vunpack.c.l.b16 %v879
    %v3123 = vunpack.c.h.b16 %v879
    %v3124 = vunpack.c.l.b16 %v880
    %v3125 = vunpack.c.h.b16 %v880
    %v3126 = vunpack.c.l.b16 %v881
    %v3127 = vunpack.c.h.b16 %v881
    %v3128 = vunpack.c.l.b16 %v882
    %v3129 = vunpack.c.h.b16 %v882
    %v3130 = vunpack.c.l.b16 %v883
    %v3131 = vunpack.c.h.b16 %v883
    %v3132 = vunpack.c.l.b16 %v884
    %v3133 = vunpack.c.h.b16 %v884
    %v3134 = vunpack.c.l.b16 %v885
    %v3135 = vunpack.c.h.b16 %v885
    %v3136 = vunpack.c.l.b16 %v886
    %v3137 = vunpack.c.h.b16 %v886
    %v3138 = vunpack.c.l.b16 %v887
    %v3139 = vunpack.c.h.b16 %v887
    %v3140 = vunpack.c.l.b16 %v888
    %v3141 = vunpack.c.h.b16 %v888
    %v3142 = vunpack.c.l.b16 %v889
    %v3143 = vunpack.c.h.b16 %v889
    %v3144 = vunpack.c.l.b16 %v890
    %v3145 = vunpack.c.h.b16 %v890
    %v3146 = vunpack.c.l.b16 %v891
    %v3147 = vunpack.c.h.b16 %v891
    %v3148 = vunpack.c.l.b16 %v892
    %v3149 = vunpack.c.h.b16 %v892
    %v3150 = vunpack.c.l.b16 %v893
    %v3151 = vunpack.c.h.b16 %v893
    %v3152 = vunpack.c.l.b16 %v894
    %v3153 = vunpack.c.h.b16 %v894
    %v3154 = vunpack.c.l.b16 %v895
    %v3155 = vunpack.c.h.b16 %v895
    %v3156 = vunpack.c.l.b16 %v896
    %v3157 = vunpack.c.h.b16 %v896
    %v3158 = vunpack.c.l.b16 %v897
    %v3159 = vunpack.c.h.b16 %v897
    %v3160 = vunpack.c.l.b16 %v898
    %v3161 = vunpack.c.h.b16 %v898
    %v3162 = vunpack.c.l.b16 %v899
    %v3163 = vunpack.c.h.b16 %v899
    %v3164 = vunpack.c.l.b16 %v900
    %v3165 = vunpack.c.h.b16 %v900
    %v3166 = vunpack.c.l.b16 %v901
    %v3167 = vunpack.c.h.b16 %v901
    %v3168 = vunpack.c.l.b16 %v902
    %v3169 = vunpack.c.h.b16 %v902
    %v3170 = vunpack.c.l.b16 %v903
    %v3171 = vunpack.c.h.b16 %v903
    %v3172 = vunpack.c.l.b16 %v904
    %v3173 = vunpack.c.h.b16 %v904
    %v3174 = vunpack.c.l.b16 %v905
    %v3175 = vunpack.c.h.b16 %v905
    %v3176 = vunpack.c.l.b16 %v906
    %v3177 = vunpack.c.h.b16 %v906
    %v3178 = vunpack.c.l.b16 %v907
    %v3179 = vunpack.c.h.b16 %v907
    %v3180 = vunpack.c.l.b16 %v908
    %v3181 = vunpack.c.h.b16 %v908
    %v3182 = vunpack.c.l.b16 %v909
    %v3183 = vunpack.c.h.b16 %v909
    %v3184 = vunpack.c.l.b16 %v910
    %v3185 = vunpack.c.h.b16 %v910
    %v3186 = vunpack.c.l.b16 %v911
    %v3187 = vunpack.c.h.b16 %v911
    %v3188 = vunpack.c.l.b16 %v912
    %v3189 = vunpack.c.h.b16 %v912
    %v3190 = vunpack.c.l.b16 %v913
    %v3191 = vunpack.c.h.b16 %v913
    %v3192 = vunpack.c.l.b16 %v914
    %v3193 = vunpack.c.h.b16 %v914
    %v3194 = vunpack.c.l.b16 %v915
    %v3195 = vunpack.c.h.b16 %v915
    %v3196 = vunpack.c.l.b16 %v916
    %v3197 = vunpack.c.h.b16 %v916
    %v3198 = vunpack.c.l.b16 %v917
    %v3199 = vunpack.c.h.b16 %v917
    %v3200 = vunpack.c.l.b16 %v918
    %v3201 = vunpack.c.h.b16 %v918
    %v3202 = vunpack.c.l.b16 %v919
    %v3203 = vunpack.c.h.b16 %v919
    %v3204 = vunpack.c.l.b16 %v920
    %v3205 = vunpack.c.h.b16 %v920
    %v3206 = vunpack.c.l.b16 %v921
    %v3207 = vunpack.c.h.b16 %v921
    %v3208 = vunpack.c.l.b16 %v922
    %v3209 = vunpack.c.h.b16 %v922
    %v3210 = vunpack.c.l.b16 %v923
    %v3211 = vunpack.c.h.b16 %v923
    %v3212 = vunpack.c.l.b16 %v924
    %v3213 = vunpack.c.h.b16 %v924
    %v3214 = vunpack.c.l.b16 %v925
    %v3215 = vunpack.c.h.b16 %v925
    %v3216 = vunpack.c.l.b16 %v926
    %v3217 = vunpack.c.h.b16 %v926
    %v3218 = vunpack.c.l.b16 %v927
    %v3219 = vunpack.c.h.b16 %v927
    %v3220 = vunpack.c.l.b16 %v928
    %v3221 = vunpack.c.h.b16 %v928
    %v3222 = vunpack.c.l.b16 %v929
    %v3223 = vunpack.c.h.b16 %v929
    %v3224 = vunpack.c.l.b16 %v930
    %v3225 = vunpack.c.h.b16 %v930
    %v3226 = vunpack.c.l.b16 %v931
    %v3227 = vunpack.c.h.b16 %v931
    %v3228 = vunpack.c.l.b16 %v932
    %v3229 = vunpack.c.h.b16 %v932
    %v3230 = vunpack.c.l.b16 %v933
    %v3231 = vunpack.c.h.b16 %v933
    %v3232 = vunpack.c.l.b16 %v934
    %v3233 = vunpack.c.h.b16 %v934
    %v3234 = vunpack.c.l.b16 %v935
    %v3235 = vunpack.c.h.b16 %v935
    %v3236 = vunpack.c.l.b16 %v936
    %v3237 = vunpack.c.h.b16 %v936
    %v3238 = vunpack.c.l.b16 %v937
    %v3239 = vunpack.c.h.b16 %v937
    %v3240 = vunpack.c.l.b16 %v938
    %v3241 = vunpack.c.h.b16 %v938
    %v3242 = vunpack.c.l.b16 %v939
    %v3243 = vunpack.c.h.b16 %v939
    %v3244 = vunpack.c.l.b16 %v940
    %v3245 = vunpack.c.h.b16 %v940
    %v3246 = vunpack.c.l.b16 %v941
    %v3247 = vunpack.c.h.b16 %v941
    %v3248 = vunpack.c.l.b16 %v942
    %v3249 = vunpack.c.h.b16 %v942
    %v3250 = vunpack.c.l.b16 %v943
    %v3251 = vunpack.c.h.b16 %v943
    %v3252 = vunpack.c.l.b16 %v944
    %v3253 = vunpack.c.h.b16 %v944
    %v3254 = vunpack.c.l.b16 %v945
    %v3255 = vunpack.c.h.b16 %v945
    %v3256 = vunpack.c.l.b16 %v946
    %v3257 = vunpack.c.h.b16 %v946
    %v3258 = vunpack.c.l.b16 %v947
    %v3259 = vunpack.c.h.b16 %v947
    %v3260 = vunpack.c.l.b16 %v948
    %v3261 = vunpack.c.h.b16 %v948
    %v3262 = vunpack.c.l.b16 %v949
    %v3263 = vunpack.c.h.b16 %v949
    %v3264 = vunpack.c.l.b16 %v950
    %v3265 = vunpack.c.h.b16 %v950
    %v3266 = vunpack.c.l.b16 %v951
    %v3267 = vunpack.c.h.b16 %v951
    %v3268 = vunpack.c.l.b16 %v952
    %v3269 = vunpack.c.h.b16 %v952
    %v3270 = vunpack.c.l.b16 %v953
    %v3271 = vunpack.c.h.b16 %v953
    %v3272 = vunpack.c.l.b16 %v954
    %v3273 = vunpack.c.h.b16 %v954
    %v3274 = vunpack.c.l.b16 %v955
    %v3275 = vunpack.c.h.b16 %v955
    %v3276 = vunpack.c.l.b16 %v956
    %v3277 = vunpack.c.h.b16 %v956
    %v3278 = vunpack.c.l.b16 %v957
    %v3279 = vunpack.c.h.b16 %v957
    %v3280 = vunpack.c.l.b16 %v958
    %v3281 = vunpack.c.h.b16 %v958
    %v3282 = vunpack.c.l.b16 %v959
    %v3283 = vunpack.c.h.b16 %v959
    %v3284 = vunpack.c.l.b16 %v960
    %v3285 = vunpack.c.h.b16 %v960
    %v3286 = vunpack.c.l.b16 %v961
    %v3287 = vunpack.c.h.b16 %v961
    %v3288 = vpack.c.b16 %v1756, %v1752
    %v3289 = vpack.c.b16 %v1757, %v1753
    %v3290 = vpack.c.b16 %v1758, %v1754
    %v3291 = vpack.c.b16 %v1759, %v1755
    %v3292 = vpack.c.b16 %v1764, %v1760
    %v3293 = vpack.c.b16 %v1765, %v1761
    %v3294 = vpack.c.b16 %v1766, %v1762
    %v3295 = vpack.c.b16 %v1767, %v1763
    %v3296 = vpack.c.b16 %v1772, %v1768
    %v3297 = vpack.c.b16 %v1773, %v1769
    %v3298 = vpack.c.b16 %v1774, %v1770
    %v3299 = vpack.c.b16 %v1775, %v1771
    %v3300 = vpack.c.b16 %v1780, %v1776
    %v3301 = vpack.c.b16 %v1781, %v1777
    %v3302 = vpack.c.b16 %v1782, %v1778
    %v3303 = vpack.c.b16 %v1783, %v1779
    %v3304 = vpack.c.b16 %v1788, %v1784
    %v3305 = vpack.c.b16 %v1789, %v1785
    %v3306 = vpack.c.b16 %v1790, %v1786
    %v3307 = vpack.c.b16 %v1791, %v1787
    %v3308 = vpack.c.b16 %v1796, %v1792
    %v3309 = vpack.c.b16 %v1797, %v1793
    %v3310 = vpack.c.b16 %v1798, %v1794
    %v3311 = vpack.c.b16 %v1799, %v1795
    %v3312 = vpack.c.b16 %v1804, %v1800
    %v3313 = vpack.c.b16 %v1805, %v1801
    %v3314 = vpack.c.b16 %v1806, %v1802
    %v3315 = vpack.c.b16 %v1807, %v1803
    %v3316 = vpack.c.b16 %v1812, %v1808
    %v3317 = vpack.c.b16 %v1813, %v1809
    %v3318 = vpack.c.b16 %v1814, %v1810
    %v3319 = vpack.c.b16 %v1815, %v1811
    %v3320 = vpack.c.b16 %v1820, %v1816
    %v3321 = vpack.c.b16 %v1821, %v1817
    %v3322 = vpack.c.b16 %v1822, %v1818
    %v3323 = vpack.c.b16 %v1823, %v1819
    %v3324 = vpack.c.b16 %v1828, %v1824
    %v3325 = vpack.c.b16 %v1829, %v1825
    %v3326 = vpack.c.b16 %v1830, %v1826
    %v3327 = vpack.c.b16 %v1831, %v1827
    %v3328 = vpack.c.b16 %v1836, %v1832
    %v3329 = vpack.c.b16 %v1837, %v1833
    %v3330 = vpack.c.b16 %v1838, %v1834
    %v3331 = vpack.c.b16 %v1839, %v1835
    %v3332 = vpack.c.b16 %v1844, %v1840
    %v3333 = vpack.c.b16 %v1845, %v1841
    %v3334 = vpack.c.b16 %v1846, %v1842
    %v3335 = vpack.c.b16 %v1847, %v1843
    %v3336 = vpack.c.b16 %v1852, %v1848
    %v3337 = vpack.c.b16 %v1853, %v1849
    %v3338 = vpack.c.b16 %v1854, %v1850
    %v3339 = vpack.c.b16 %v1855, %v1851
    %v3340 = vpack.c.b16 %v1860, %v1856
    %v3341 = vpack.c.b16 %v1861, %v1857
    %v3342 = vpack.c.b16 %v1862, %v1858
    %v3343 = vpack.c.b16 %v1863, %v1859
    %v3344 = vpack.c.b16 %v1868, %v1864
    %v3345 = vpack.c.b16 %v1869, %v1865
    %v3346 = vpack.c.b16 %v1870, %v1866
    %v3347 = vpack.c.b16 %v1871, %v1867
    %v3348 = vpack.c.b16 %v1876, %v1872
    %v3349 = vpack.c.b16 %v1877, %v1873
    %v3350 = vpack.c.b16 %v1878, %v1874
    %v3351 = vpack.c.b16 %v1879, %v1875
    %v3352 = vpack.c.b16 %v1884, %v1880
    %v3353 = vpack.c.b16 %v1885, %v1881
    %v3354 = vpack.c.b16 %v1886, %v1882
    %v3355 = vpack.c.b16 %v1887, %v1883
    %v3356 = vpack.c.b16 %v1892, %v1888
    %v3357 = vpack.c.b16 %v1893, %v1889
    %v3358 = vpack.c.b16 %v1894, %v1890
    %v3359 = vpack.c.b16 %v1895, %v1891
    %v3360 = vpack.c.b16 %v1900, %v1896
    %v3361 = vpack.c.b16 %v1901, %v1897
    %v3362 = vpack.c.b16 %v1902, %v1898
    %v3363 = vpack.c.b16 %v1903, %v1899
    %v3364 = vpack.c.b16 %v1908, %v1904
    %v3365 = vpack.c.b16 %v1909, %v1905
    %v3366 = vpack.c.b16 %v1910, %v1906
    %v3367 = vpack.c.b16 %v1911, %v1907
    %v3368 = vpack.c.b16 %v1916, %v1912
    %v3369 = vpack.c.b16 %v1917, %v1913
    %v3370 = vpack.c.b16 %v1918, %v1914
    %v3371 = vpack.c.b16 %v1919, %v1915
    %v3372 = vpack.c.b16 %v1924, %v1920
    %v3373 = vpack.c.b16 %v1925, %v1921
    %v3374 = vpack.c.b16 %v1926, %v1922
    %v3375 = vpack.c.b16 %v1927, %v1923
    %v3376 = vpack.c.b16 %v1932, %v1928
    %v3377 = vpack.c.b16 %v1933, %v1929
    %v3378 = vpack.c.b16 %v1934, %v1930
    %v3379 = vpack.c.b16 %v1935, %v1931
    %v3380 = vpack.c.b16 %v1940, %v1936
    %v3381 = vpack.c.b16 %v1941, %v1937
    %v3382 = vpack.c.b16 %v1942, %v1938
    %v3383 = vpack.c.b16 %v1943, %v1939
    %v3384 = vpack.c.b16 %v1948, %v1944
    %v3385 = vpack.c.b16 %v1949, %v1945
    %v3386 = vpack.c.b16 %v1950, %v1946
    %v3387 = vpack.c.b16 %v1951, %v1947
    %v3388 = vpack.c.b16 %v1956, %v1952
    %v3389 = vpack.c.b16 %v1957, %v1953
    %v3390 = vpack.c.b16 %v1958, %v1954
    %v3391 = vpack.c.b16 %v1959, %v1955
    %v3392 = vpack.c.b16 %v1964, %v1960
    %v3393 = vpack.c.b16 %v1965, %v1961
    %v3394 = vpack.c.b16 %v1966, %v1962
    %v3395 = vpack.c.b16 %v1967, %v1963
    %v3396 = vpack.c.b16 %v1972, %v1968
    %v3397 = vpack.c.b16 %v1973, %v1969
    %v3398 = vpack.c.b16 %v1974, %v1970
    %v3399 = vpack.c.b16 %v1975, %v1971
    %v3400 = vpack.c.b16 %v1980, %v1976
    %v3401 = vpack.c.b16 %v1981, %v1977
    %v3402 = vpack.c.b16 %v1982, %v1978
    %v3403 = vpack.c.b16 %v1983, %v1979
    %v3404 = vpack.c.b16 %v1988, %v1984
    %v3405 = vpack.c.b16 %v1989, %v1985
    %v3406 = vpack.c.b16 %v1990, %v1986
    %v3407 = vpack.c.b16 %v1991, %v1987
    %v3408 = vpack.c.b16 %v1996, %v1992
    %v3409 = vpack.c.b16 %v1997, %v1993
    %v3410 = vpack.c.b16 %v1998, %v1994
    %v3411 = vpack.c.b16 %v1999, %v1995
    %v3412 = vpack.c.b16 %v2004, %v2000
    %v3413 = vpack.c.b16 %v2005, %v2001
    %v3414 = vpack.c.b16 %v2006, %v2002
    %v3415 = vpack.c.b16 %v2007, %v2003
    %v3416 = vpack.c.b16 %v2012, %v2008
    %v3417 = vpack.c.b16 %v2013, %v2009
    %v3418 = vpack.c.b16 %v2014, %v2010
    %v3419 = vpack.c.b16 %v2015, %v2011
    %v3420 = vpack.c.b16 %v2020, %v2016
    %v3421 = vpack.c.b16 %v2021, %v2017
    %v3422 = vpack.c.b16 %v2022, %v2018
    %v3423 = vpack.c.b16 %v2023, %v2019
    %v3424 = vpack.c.b16 %v2028, %v2024
    %v3425 = vpack.c.b16 %v2029, %v2025
    %v3426 = vpack.c.b16 %v2030, %v2026
    %v3427 = vpack.c.b16 %v2031, %v2027
    %v3428 = vpack.c.b16 %v2036, %v2032
    %v3429 = vpack.c.b16 %v2037, %v2033
    %v3430 = vpack.c.b16 %v2038, %v2034
    %v3431 = vpack.c.b16 %v2039, %v2035
    %v3432 = vpack.c.b16 %v2044, %v2040
    %v3433 = vpack.c.b16 %v2045, %v2041
    %v3434 = vpack.c.b16 %v2046, %v2042
    %v3435 = vpack.c.b16 %v2047, %v2043
    %v3436 = vpack.c.b16 %v2052, %v2048
    %v3437 = vpack.c.b16 %v2053, %v2049
    %v3438 = vpack.c.b16 %v2054, %v2050
    %v3439 = vpack.c.b16 %v2055, %v2051
    %v3440 = vpack.c.b16 %v2060, %v2056
    %v3441 = vpack.c.b16 %v2061, %v2057
    %v3442 = vpack.c.b16 %v2062, %v2058
    %v3443 = vpack.c.b16 %v2063, %v2059
    %v3444 = vpack.c.b16 %v2068, %v2064
    %v3445 = vpack.c.b16 %v2069, %v2065
    %v3446 = vpack.c.b16 %v2070, %v2066
    %v3447 = vpack.c.b16 %v2071, %v2067
    %v3448 = vpack.c.b16 %v2076, %v2072
    %v3449 = vpack.c.b16 %v2077, %v2073
    %v3450 = vpack.c.b16 %v2078, %v2074
    %v3451 = vpack.c.b16 %v2079, %v2075
    %v3452 = vpack.c.b16 %v2084, %v2080
    %v3453 = vpack.c.b16 %v2085, %v2081
    %v3454 = vpack.c.b16 %v2086, %v2082
    %v3455 = vpack.c.b16 %v2087, %v2083
    %v3456 = vpack.c.b16 %v2092, %v2088
    %v3457 = vpack.c.b16 %v2093, %v2089
    %v3458 = vpack.c.b16 %v2094, %v2090
    %v3459 = vpack.c.b16 %v2095, %v2091
    %v3460 = vpack.c.b16 %v2100, %v2096
    %v3461 = vpack.c.b16 %v2101, %v2097
    %v3462 = vpack.c.b16 %v2102, %v2098
    %v3463 = vpack.c.b16 %v2103, %v2099
    %v3464 = vpack.c.b16 %v2108, %v2104
    %v3465 = vpack.c.b16 %v2109, %v2105
    %v3466 = vpack.c.b16 %v2110, %v2106
    %v3467 = vpack.c.b16 %v2111, %v2107
    %v3468 = vpack.c.b16 %v2116, %v2112
    %v3469 = vpack.c.b16 %v2117, %v2113
    %v3470 = vpack.c.b16 %v2118, %v2114
    %v3471 = vpack.c.b16 %v2119, %v2115
    %v3472 = vpack.c.b16 %v2124, %v2120
    %v3473 = vpack.c.b16 %v2125, %v2121
    %v3474 = vpack.c.b16 %v2126, %v2122
    %v3475 = vpack.c.b16 %v2127, %v2123
    %v3476 = vpack.c.b16 %v2132, %v2128
    %v3477 = vpack.c.b16 %v2133, %v2129
    %v3478 = vpack.c.b16 %v2134, %v2130
    %v3479 = vpack.c.b16 %v2135, %v2131
    %v3480 = vpack.c.b16 %v2140, %v2136
    %v3481 = vpack.c.b16 %v2141, %v2137
    %v3482 = vpack.c.b16 %v2142, %v2138
    %v3483 = vpack.c.b16 %v2143, %v2139
    %v3484 = vpack.c.b16 %v2148, %v2144
    %v3485 = vpack.c.b16 %v2149, %v2145
    %v3486 = vpack.c.b16 %v2150, %v2146
    %v3487 = vpack.c.b16 %v2151, %v2147
    %v3488 = vpack.c.b16 %v2156, %v2152
    %v3489 = vpack.c.b16 %v2157, %v2153
    %v3490 = vpack.c.b16 %v2158, %v2154
    %v3491 = vpack.c.b16 %v2159, %v2155
    %v3492 = vpack.c.b16 %v2164, %v2160
    %v3493 = vpack.c.b16 %v2165, %v2161
    %v3494 = vpack.c.b16 %v2166, %v2162
    %v3495 = vpack.c.b16 %v2167, %v2163
    %v3496 = vpack.c.b16 %v2172, %v2168
    %v3497 = vpack.c.b16 %v2173, %v2169
    %v3498 = vpack.c.b16 %v2174, %v2170
    %v3499 = vpack.c.b16 %v2175, %v2171
    %v3500 = vpack.c.b16 %v2180, %v2176
    %v3501 = vpack.c.b16 %v2181, %v2177
    %v3502 = vpack.c.b16 %v2182, %v2178
    %v3503 = vpack.c.b16 %v2183, %v2179
    %v3504 = vpack.c.b16 %v2188, %v2184
    %v3505 = vpack.c.b16 %v2189, %v2185
    %v3506 = vpack.c.b16 %v2190, %v2186
    %v3507 = vpack.c.b16 %v2191, %v2187
    %v3508 = vpack.c.b16 %v2196, %v2192
    %v3509 = vpack.c.b16 %v2197, %v2193
    %v3510 = vpack.c.b16 %v2198, %v2194
    %v3511 = vpack.c.b16 %v2199, %v2195
    %v3512 = vpack.c.b16 %v2204, %v2200
    %v3513 = vpack.c.b16 %v2205, %v2201
    %v3514 = vpack.c.b16 %v2206, %v2202
    %v3515 = vpack.c.b16 %v2207, %v2203
    %v3516 = vpack.c.b16 %v2212, %v2208
    %v3517 = vpack.c.b16 %v2213, %v2209
    %v3518 = vpack.c.b16 %v2214, %v2210
    %v3519 = vpack.c.b16 %v2215, %v2211
    %v3520 = vpack.c.b16 %v2220, %v2216
    %v3521 = vpack.c.b16 %v2221, %v2217
    %v3522 = vpack.c.b16 %v2222, %v2218
    %v3523 = vpack.c.b16 %v2223, %v2219
    %v3524 = vpack.c.b16 %v2228, %v2224
    %v3525 = vpack.c.b16 %v2229, %v2225
    %v3526 = vpack.c.b16 %v2230, %v2226
    %v3527 = vpack.c.b16 %v2231, %v2227
    %v3528 = vpack.c.b16 %v2236, %v2232
    %v3529 = vpack.c.b16 %v2237, %v2233
    %v3530 = vpack.c.b16 %v2238, %v2234
    %v3531 = vpack.c.b16 %v2239, %v2235
    %v3532 = vpack.c.b16 %v2244, %v2240
    %v3533 = vpack.c.b16 %v2245, %v2241
    %v3534 = vpack.c.b16 %v2246, %v2242
    %v3535 = vpack.c.b16 %v2247, %v2243
    %v3536 = vpack.c.b16 %v2252, %v2248
    %v3537 = vpack.c.b16 %v2253, %v2249
    %v3538 = vpack.c.b16 %v2254, %v2250
    %v3539 = vpack.c.b16 %v2255, %v2251
    %v3540 = vpack.c.b16 %v2260, %v2256
    %v3541 = vpack.c.b16 %v2261, %v2257
    %v3542 = vpack.c.b16 %v2262, %v2258
    %v3543 = vpack.c.b16 %v2263, %v2259
    %v3544 = vpack.c.b16 %v2268, %v2264
    %v3545 = vpack.c.b16 %v2269, %v2265
    %v3546 = vpack.c.b16 %v2270, %v2266
    %v3547 = vpack.c.b16 %v2271, %v2267
    %v3548 = vpack.c.b16 %v2276, %v2272
    %v3549 = vpack.c.b16 %v2277, %v2273
    %v3550 = vpack.c.b16 %v2278, %v2274
    %v3551 = vpack.c.b16 %v2279, %v2275
    %v3552 = vpack.c.b16 %v2284, %v2280
    %v3553 = vpack.c.b16 %v2285, %v2281
    %v3554 = vpack.c.b16 %v2286, %v2282
    %v3555 = vpack.c.b16 %v2287, %v2283
    %v3556 = vpack.c.b16 %v2292, %v2288
    %v3557 = vpack.c.b16 %v2293, %v2289
    %v3558 = vpack.c.b16 %v2294, %v2290
    %v3559 = vpack.c.b16 %v2295, %v2291
    %v3560 = vpack.c.b16 %v2300, %v2296
    %v3561 = vpack.c.b16 %v2301, %v2297
    %v3562 = vpack.c.b16 %v2302, %v2298
    %v3563 = vpack.c.b16 %v2303, %v2299
    %v3564 = vpack.c.b16 %v2308, %v2304
    %v3565 = vpack.c.b16 %v2309, %v2305
    %v3566 = vpack.c.b16 %v2310, %v2306
    %v3567 = vpack.c.b16 %v2311, %v2307
    %v3568 = vpack.c.b16 %v2316, %v2312
    %v3569 = vpack.c.b16 %v2317, %v2313
    %v3570 = vpack.c.b16 %v2318, %v2314
    %v3571 = vpack.c.b16 %v2319, %v2315
    %v3572 = vpack.c.b16 %v2324, %v2320
    %v3573 = vpack.c.b16 %v2325, %v2321
    %v3574 = vpack.c.b16 %v2326, %v2322
    %v3575 = vpack.c.b16 %v2327, %v2323
    %v3576 = vpack.c.b16 %v2332, %v2328
    %v3577 = vpack.c.b16 %v2333, %v2329
    %v3578 = vpack.c.b16 %v2334, %v2330
    %v3579 = vpack.c.b16 %v2335, %v2331
    %v3580 = vpack.c.b16 %v2340, %v2336
    %v3581 = vpack.c.b16 %v2341, %v2337
    %v3582 = vpack.c.b16 %v2342, %v2338
    %v3583 = vpack.c.b16 %v2343, %v2339
    %v3584 = vpack.c.b16 %v2348, %v2344
    %v3585 = vpack.c.b16 %v2349, %v2345
    %v3586 = vpack.c.b16 %v2350, %v2346
    %v3587 = vpack.c.b16 %v2351, %v2347
    %v3588 = vpack.c.b16 %v2356, %v2352
    %v3589 = vpack.c.b16 %v2357, %v2353
    %v3590 = vpack.c.b16 %v2358, %v2354
    %v3591 = vpack.c.b16 %v2359, %v2355
    %v3592 = vpack.c.b16 %v2364, %v2360
    %v3593 = vpack.c.b16 %v2365, %v2361
    %v3594 = vpack.c.b16 %v2366, %v2362
    %v3595 = vpack.c.b16 %v2367, %v2363
    %v3596 = vpack.c.b16 %v2372, %v2368
    %v3597 = vpack.c.b16 %v2373, %v2369
    %v3598 = vpack.c.b16 %v2374, %v2370
    %v3599 = vpack.c.b16 %v2375, %v2371
    %v3600 = vpack.c.b16 %v2380, %v2376
    %v3601 = vpack.c.b16 %v2381, %v2377
    %v3602 = vpack.c.b16 %v2382, %v2378
    %v3603 = vpack.c.b16 %v2383, %v2379
    %v3604 = vpack.c.b16 %v2388, %v2384
    %v3605 = vpack.c.b16 %v2389, %v2385
    %v3606 = vpack.c.b16 %v2390, %v2386
    %v3607 = vpack.c.b16 %v2391, %v2387
    %v3608 = vpack.c.b16 %v2396, %v2392
    %v3609 = vpack.c.b16 %v2397, %v2393
    %v3610 = vpack.c.b16 %v2398, %v2394
    %v3611 = vpack.c.b16 %v2399, %v2395
    %v3612 = vpack.c.b16 %v2404, %v2400
    %v3613 = vpack.c.b16 %v2405, %v2401
    %v3614 = vpack.c.b16 %v2406, %v2402
    %v3615 = vpack.c.b16 %v2407, %v2403
    %v3616 = vpack.c.b16 %v2412, %v2408
    %v3617 = vpack.c.b16 %v2413, %v2409
    %v3618 = vpack.c.b16 %v2414, %v2410
    %v3619 = vpack.c.b16 %v2415, %v2411
    %v3620 = vpack.c.b16 %v2420, %v2416
    %v3621 = vpack.c.b16 %v2421, %v2417
    %v3622 = vpack.c.b16 %v2422, %v2418
    %v3623 = vpack.c.b16 %v2423, %v2419
    %v3624 = vpack.c.b16 %v2428, %v2424
    %v3625 = vpack.c.b16 %v2429, %v2425
    %v3626 = vpack.c.b16 %v2430, %v2426
    %v3627 = vpack.c.b16 %v2431, %v2427
    %v3628 = vpack.c.b16 %v2436, %v2432
    %v3629 = vpack.c.b16 %v2437, %v2433
    %v3630 = vpack.c.b16 %v2438, %v2434
    %v3631 = vpack.c.b16 %v2439, %v2435
    %v3632 = vpack.c.b16 %v2444, %v2440
    %v3633 = vpack.c.b16 %v2445, %v2441
    %v3634 = vpack.c.b16 %v2446, %v2442
    %v3635 = vpack.c.b16 %v2447, %v2443
    %v3636 = vpack.c.b16 %v2452, %v2448
    %v3637 = vpack.c.b16 %v2453, %v2449
    %v3638 = vpack.c.b16 %v2454, %v2450
    %v3639 = vpack.c.b16 %v2455, %v2451
    %v3640 = vpack.c.b16 %v2460, %v2456
    %v3641 = vpack.c.b16 %v2461, %v2457
    %v3642 = vpack.c.b16 %v2462, %v2458
    %v3643 = vpack.c.b16 %v2463, %v2459
    %v3644 = vpack.c.b16 %v2468, %v2464
    %v3645 = vpack.c.b16 %v2469, %v2465
    %v3646 = vpack.c.b16 %v2470, %v2466
    %v3647 = vpack.c.b16 %v2471, %v2467
    %v3648 = vpack.c.b16 %v2476, %v2472
    %v3649 = vpack.c.b16 %v2477, %v2473
    %v3650 = vpack.c.b16 %v2478, %v2474
    %v3651 = vpack.c.b16 %v2479, %v2475
    %v3652 = vpack.c.b16 %v2484, %v2480
    %v3653 = vpack.c.b16 %v2485, %v2481
    %v3654 = vpack.c.b16 %v2486, %v2482
    %v3655 = vpack.c.b16 %v2487, %v2483
    %v3656 = vpack.c.b16 %v2492, %v2488
    %v3657 = vpack.c.b16 %v2493, %v2489
    %v3658 = vpack.c.b16 %v2494, %v2490
    %v3659 = vpack.c.b16 %v2495, %v2491
    %v3660 = vpack.c.b16 %v2500, %v2496
    %v3661 = vpack.c.b16 %v2501, %v2497
    %v3662 = vpack.c.b16 %v2502, %v2498
    %v3663 = vpack.c.b16 %v2503, %v2499
    %v3664 = vpack.c.b16 %v2508, %v2504
    %v3665 = vpack.c.b16 %v2509, %v2505
    %v3666 = vpack.c.b16 %v2510, %v2506
    %v3667 = vpack.c.b16 %v2511, %v2507
    %v3668 = vpack.c.b16 %v2516, %v2512
    %v3669 = vpack.c.b16 %v2517, %v2513
    %v3670 = vpack.c.b16 %v2518, %v2514
    %v3671 = vpack.c.b16 %v2519, %v2515
    %v3672 = vpack.c.b16 %v2524, %v2520
    %v3673 = vpack.c.b16 %v2525, %v2521
    %v3674 = vpack.c.b16 %v2526, %v2522
    %v3675 = vpack.c.b16 %v2527, %v2523
    %v3676 = vpack.c.b16 %v2532, %v2528
    %v3677 = vpack.c.b16 %v2533, %v2529
    %v3678 = vpack.c.b16 %v2534, %v2530
    %v3679 = vpack.c.b16 %v2535, %v2531
    %v3680 = vpack.c.b16 %v2540, %v2536
    %v3681 = vpack.c.b16 %v2541, %v2537
    %v3682 = vpack.c.b16 %v2542, %v2538
    %v3683 = vpack.c.b16 %v2543, %v2539
    %v3684 = vpack.c.b16 %v2548, %v2544
    %v3685 = vpack.c.b16 %v2549, %v2545
    %v3686 = vpack.c.b16 %v2550, %v2546
    %v3687 = vpack.c.b16 %v2551, %v2547
    %v3688 = vpack.c.b16 %v2556, %v2552
    %v3689 = vpack.c.b16 %v2557, %v2553
    %v3690 = vpack.c.b16 %v2558, %v2554
    %v3691 = vpack.c.b16 %v2559, %v2555
    %v3692 = vpack.c.b16 %v2564, %v2560
    %v3693 = vpack.c.b16 %v2565, %v2561
    %v3694 = vpack.c.b16 %v2566, %v2562
    %v3695 = vpack.c.b16 %v2567, %v2563
    %v3696 = vpack.c.b16 %v2572, %v2568
    %v3697 = vpack.c.b16 %v2573, %v2569
    %v3698 = vpack.c.b16 %v2574, %v2570
    %v3699 = vpack.c.b16 %v2575, %v2571
    %v3700 = vpack.c.b16 %v2580, %v2576
    %v3701 = vpack.c.b16 %v2581, %v2577
    %v3702 = vpack.c.b16 %v2582, %v2578
    %v3703 = vpack.c.b16 %v2583, %v2579
    %v3704 = vpack.c.b16 %v2588, %v2584
    %v3705 = vpack.c.b16 %v2589, %v2585
    %v3706 = vpack.c.b16 %v2590, %v2586
    %v3707 = vpack.c.b16 %v2591, %v2587
    %v3708 = vpack.c.b16 %v2596, %v2592
    %v3709 = vpack.c.b16 %v2597, %v2593
    %v3710 = vpack.c.b16 %v2598, %v2594
    %v3711 = vpack.c.b16 %v2599, %v2595
    %v3712 = vpack.c.b16 %v2604, %v2600
    %v3713 = vpack.c.b16 %v2605, %v2601
    %v3714 = vpack.c.b16 %v2606, %v2602
    %v3715 = vpack.c.b16 %v2607, %v2603
    %v3716 = vpack.c.b16 %v2612, %v2608
    %v3717 = vpack.c.b16 %v2613, %v2609
    %v3718 = vpack.c.b16 %v2614, %v2610
    %v3719 = vpack.c.b16 %v2615, %v2611
    %v3720 = vpack.c.b16 %v2620, %v2616
    %v3721 = vpack.c.b16 %v2621, %v2617
    %v3722 = vpack.c.b16 %v2622, %v2618
    %v3723 = vpack.c.b16 %v2623, %v2619
    %v3724 = vpack.c.b16 %v2628, %v2624
    %v3725 = vpack.c.b16 %v2629, %v2625
    %v3726 = vpack.c.b16 %v2630, %v2626
    %v3727 = vpack.c.b16 %v2631, %v2627
    %v3728 = vpack.c.b16 %v2636, %v2632
    %v3729 = vpack.c.b16 %v2637, %v2633
    %v3730 = vpack.c.b16 %v2638, %v2634
    %v3731 = vpack.c.b16 %v2639, %v2635
    %v3732 = vpack.c.b16 %v2644, %v2640
    %v3733 = vpack.c.b16 %v2645, %v2641
    %v3734 = vpack.c.b16 %v2646, %v2642
    %v3735 = vpack.c.b16 %v2647, %v2643
    %v3736 = vpack.c.b16 %v2652, %v2648
    %v3737 = vpack.c.b16 %v2653, %v2649
    %v3738 = vpack.c.b16 %v2654, %v2650
    %v3739 = vpack.c.b16 %v2655, %v2651
    %v3740 = vpack.c.b16 %v2660, %v2656
    %v3741 = vpack.c.b16 %v2661, %v2657
    %v3742 = vpack.c.b16 %v2662, %v2658
    %v3743 = vpack.c.b16 %v2663, %v2659
    %v3744 = vpack.c.b16 %v2668, %v2664
    %v3745 = vpack.c.b16 %v2669, %v2665
    %v3746 = vpack.c.b16 %v2670, %v2666
    %v3747 = vpack.c.b16 %v2671, %v2667
    %v3748 = vpack.c.b16 %v2676, %v2672
    %v3749 = vpack.c.b16 %v2677, %v2673
    %v3750 = vpack.c.b16 %v2678, %v2674
    %v3751 = vpack.c.b16 %v2679, %v2675
    %v3752 = vpack.c.b16 %v2684, %v2680
    %v3753 = vpack.c.b16 %v2685, %v2681
    %v3754 = vpack.c.b16 %v2686, %v2682
    %v3755 = vpack.c.b16 %v2687, %v2683
    %v3756 = vpack.c.b16 %v2692, %v2688
    %v3757 = vpack.c.b16 %v2693, %v2689
    %v3758 = vpack.c.b16 %v2694, %v2690
    %v3759 = vpack.c.b16 %v2695, %v2691
    %v3760 = vpack.c.b16 %v2700, %v2696
    %v3761 = vpack.c.b16 %v2701, %v2697
    %v3762 = vpack.c.b16 %v2702, %v2698
    %v3763 = vpack.c.b16 %v2703, %v2699
    %v3764 = vpack.c.b16 %v2708, %v2704
    %v3765 = vpack.c.b16 %v2709, %v2705
    %v3766 = vpack.c.b16 %v2710, %v2706
    %v3767 = vpack.c.b16 %v2711, %v2707
    %v3768 = vpack.c.b16 %v2716, %v2712
    %v3769 = vpack.c.b16 %v2717, %v2713
    %v3770 = vpack.c.b16 %v2718, %v2714
    %v3771 = vpack.c.b16 %v2719, %v2715
    %v3772 = vpack.c.b16 %v2724, %v2720
    %v3773 = vpack.c.b16 %v2725, %v2721
    %v3774 = vpack.c.b16 %v2726, %v2722
    %v3775 = vpack.c.b16 %v2727, %v2723
    %v3776 = vpack.c.b16 %v2732, %v2728
    %v3777 = vpack.c.b16 %v2733, %v2729
    %v3778 = vpack.c.b16 %v2734, %v2730
    %v3779 = vpack.c.b16 %v2735, %v2731
    %v3780 = vpack.c.b16 %v2740, %v2736
    %v3781 = vpack.c.b16 %v2741, %v2737
    %v3782 = vpack.c.b16 %v2742, %v2738
    %v3783 = vpack.c.b16 %v2743, %v2739
    %v3784 = vpack.c.b16 %v2748, %v2744
    %v3785 = vpack.c.b16 %v2749, %v2745
    %v3786 = vpack.c.b16 %v2750, %v2746
    %v3787 = vpack.c.b16 %v2751, %v2747
    %v3788 = vpack.c.b16 %v2756, %v2752
    %v3789 = vpack.c.b16 %v2757, %v2753
    %v3790 = vpack.c.b16 %v2758, %v2754
    %v3791 = vpack.c.b16 %v2759, %v2755
    %v3792 = vpack.c.b16 %v2764, %v2760
    %v3793 = vpack.c.b16 %v2765, %v2761
    %v3794 = vpack.c.b16 %v2766, %v2762
    %v3795 = vpack.c.b16 %v2767, %v2763
    %v3796 = vpack.c.b16 %v2772, %v2768
    %v3797 = vpack.c.b16 %v2773, %v2769
    %v3798 = vpack.c.b16 %v2774, %v2770
    %v3799 = vpack.c.b16 %v2775, %v2771
    %v3800 = vpack.c.b16 %v2780, %v2776
    %v3801 = vpack.c.b16 %v2781, %v2777
    %v3802 = vpack.c.b16 %v2782, %v2778
    %v3803 = vpack.c.b16 %v2783, %v2779
    %v3804 = vpack.c.b16 %v2788, %v2784
    %v3805 = vpack.c.b16 %v2789, %v2785
    %v3806 = vpack.c.b16 %v2790, %v2786
    %v3807 = vpack.c.b16 %v2791, %v2787
    %v3808 = vpack.c.b16 %v2796, %v2792
    %v3809 = vpack.c.b16 %v2797, %v2793
    %v3810 = vpack.c.b16 %v2798, %v2794
    %v3811 = vpack.c.b16 %v2799, %v2795
    %v3812 = vpack.c.b16 %v2804, %v2800
    %v3813 = vpack.c.b16 %v2805, %v2801
    %v3814 = vpack.c.b16 %v2806, %v2802
    %v3815 = vpack.c.b16 %v2807, %v2803
    %v3816 = vpack.c.b16 %v2812, %v2808
    %v3817 = vpack.c.b16 %v2813, %v2809
    %v3818 = vpack.c.b16 %v2814, %v2810
    %v3819 = vpack.c.b16 %v2815, %v2811
    %v3820 = vpack.c.b16 %v2820, %v2816
    %v3821 = vpack.c.b16 %v2821, %v2817
    %v3822 = vpack.c.b16 %v2822, %v2818
    %v3823 = vpack.c.b16 %v2823, %v2819
    %v3824 = vpack.c.b16 %v2828, %v2824
    %v3825 = vpack.c.b16 %v2829, %v2825
    %v3826 = vpack.c.b16 %v2830, %v2826
    %v3827 = vpack.c.b16 %v2831, %v2827
    %v3828 = vpack.c.b16 %v2836, %v2832
    %v3829 = vpack.c.b16 %v2837, %v2833
    %v3830 = vpack.c.b16 %v2838, %v2834
    %v3831 = vpack.c.b16 %v2839, %v2835
    %v3832 = vpack.c.b16 %v2844, %v2840
    %v3833 = vpack.c.b16 %v2845, %v2841
    %v3834 = vpack.c.b16 %v2846, %v2842
    %v3835 = vpack.c.b16 %v2847, %v2843
    %v3836 = vpack.c.b16 %v2852, %v2848
    %v3837 = vpack.c.b16 %v2853, %v2849
    %v3838 = vpack.c.b16 %v2854, %v2850
    %v3839 = vpack.c.b16 %v2855, %v2851
    %v3840 = vpack.c.b16 %v2860, %v2856
    %v3841 = vpack.c.b16 %v2861, %v2857
    %v3842 = vpack.c.b16 %v2862, %v2858
    %v3843 = vpack.c.b16 %v2863, %v2859
    %v3844 = vpack.c.b16 %v2868, %v2864
    %v3845 = vpack.c.b16 %v2869, %v2865
    %v3846 = vpack.c.b16 %v2870, %v2866
    %v3847 = vpack.c.b16 %v2871, %v2867
    %v3848 = vpack.c.b16 %v2876, %v2872
    %v3849 = vpack.c.b16 %v2877, %v2873
    %v3850 = vpack.c.b16 %v2878, %v2874
    %v3851 = vpack.c.b16 %v2879, %v2875
    %v3852 = vpack.c.b16 %v2884, %v2880
    %v3853 = vpack.c.b16 %v2885, %v2881
    %v3854 = vpack.c.b16 %v2886, %v2882
    %v3855 = vpack.c.b16 %v2887, %v2883
    %v3856 = vpack.c.b16 %v2892, %v2888
    %v3857 = vpack.c.b16 %v2893, %v2889
    %v3858 = vpack.c.b16 %v2894, %v2890
    %v3859 = vpack.c.b16 %v2895, %v2891
    %v3860 = vpack.c.b16 %v2900, %v2896
    %v3861 = vpack.c.b16 %v2901, %v2897
    %v3862 = vpack.c.b16 %v2902, %v2898
    %v3863 = vpack.c.b16 %v2903, %v2899
    %v3864 = vpack.c.b16 %v2908, %v2904
    %v3865 = vpack.c.b16 %v2909, %v2905
    %v3866 = vpack.c.b16 %v2910, %v2906
    %v3867 = vpack.c.b16 %v2911, %v2907
    %v3868 = vpack.c.b16 %v2916, %v2912
    %v3869 = vpack.c.b16 %v2917, %v2913
    %v3870 = vpack.c.b16 %v2918, %v2914
    %v3871 = vpack.c.b16 %v2919, %v2915
    %v3872 = vpack.c.b16 %v2924, %v2920
    %v3873 = vpack.c.b16 %v2925, %v2921
    %v3874 = vpack.c.b16 %v2926, %v2922
    %v3875 = vpack.c.b16 %v2927, %v2923
    %v3876 = vpack.c.b16 %v2932, %v2928
    %v3877 = vpack.c.b16 %v2933, %v2929
    %v3878 = vpack.c.b16 %v2934, %v2930
    %v3879 = vpack.c.b16 %v2935, %v2931
    %v3880 = vpack.c.b16 %v2940, %v2936
    %v3881 = vpack.c.b16 %v2941, %v2937
    %v3882 = vpack.c.b16 %v2942, %v2938
    %v3883 = vpack.c.b16 %v2943, %v2939
    %v3884 = vpack.c.b16 %v2948, %v2944
    %v3885 = vpack.c.b16 %v2949, %v2945
    %v3886 = vpack.c.b16 %v2950, %v2946
    %v3887 = vpack.c.b16 %v2951, %v2947
    %v3888 = vpack.c.b16 %v2956, %v2952
    %v3889 = vpack.c.b16 %v2957, %v2953
    %v3890 = vpack.c.b16 %v2958, %v2954
    %v3891 = vpack.c.b16 %v2959, %v2955
    %v3892 = vpack.c.b16 %v2964, %v2960
    %v3893 = vpack.c.b16 %v2965, %v2961
    %v3894 = vpack.c.b16 %v2966, %v2962
    %v3895 = vpack.c.b16 %v2967, %v2963
    %v3896 = vpack.c.b16 %v2972, %v2968
    %v3897 = vpack.c.b16 %v2973, %v2969
    %v3898 = vpack.c.b16 %v2974, %v2970
    %v3899 = vpack.c.b16 %v2975, %v2971
    %v3900 = vpack.c.b16 %v2980, %v2976
    %v3901 = vpack.c.b16 %v2981, %v2977
    %v3902 = vpack.c.b16 %v2982, %v2978
    %v3903 = vpack.c.b16 %v2983, %v2979
    %v3904 = vpack.c.b16 %v2988, %v2984
    %v3905 = vpack.c.b16 %v2989, %v2985
    %v3906 = vpack.c.b16 %v2990, %v2986
    %v3907 = vpack.c.b16 %v2991, %v2987
    %v3908 = vpack.c.b16 %v2996, %v2992
    %v3909 = vpack.c.b16 %v2997, %v2993
    %v3910 = vpack.c.b16 %v2998, %v2994
    %v3911 = vpack.c.b16 %v2999, %v2995
    %v3912 = vpack.c.b16 %v3004, %v3000
    %v3913 = vpack.c.b16 %v3005, %v3001
    %v3914 = vpack.c.b16 %v3006, %v3002
    %v3915 = vpack.c.b16 %v3007, %v3003
    %v3916 = vpack.c.b16 %v3012, %v3008
    %v3917 = vpack.c.b16 %v3013, %v3009
    %v3918 = vpack.c.b16 %v3014, %v3010
    %v3919 = vpack.c.b16 %v3015, %v3011
    %v3920 = vpack.c.b16 %v3020, %v3016
    %v3921 = vpack.c.b16 %v3021, %v3017
    %v3922 = vpack.c.b16 %v3022, %v3018
    %v3923 = vpack.c.b16 %v3023, %v3019
    %v3924 = vpack.c.b16 %v3028, %v3024
    %v3925 = vpack.c.b16 %v3029, %v3025
    %v3926 = vpack.c.b16 %v3030, %v3026
    %v3927 = vpack.c.b16 %v3031, %v3027
    %v3928 = vpack.c.b16 %v3036, %v3032
    %v3929 = vpack.c.b16 %v3037, %v3033
    %v3930 = vpack.c.b16 %v3038, %v3034
    %v3931 = vpack.c.b16 %v3039, %v3035
    %v3932 = vpack.c.b16 %v3044, %v3040
    %v3933 = vpack.c.b16 %v3045, %v3041
    %v3934 = vpack.c.b16 %v3046, %v3042
    %v3935 = vpack.c.b16 %v3047, %v3043
    %v3936 = vpack.c.b16 %v3052, %v3048
    %v3937 = vpack.c.b16 %v3053, %v3049
    %v3938 = vpack.c.b16 %v3054, %v3050
    %v3939 = vpack.c.b16 %v3055, %v3051
    %v3940 = vpack.c.b16 %v3060, %v3056
    %v3941 = vpack.c.b16 %v3061, %v3057
    %v3942 = vpack.c.b16 %v3062, %v3058
    %v3943 = vpack.c.b16 %v3063, %v3059
    %v3944 = vpack.c.b16 %v3068, %v3064
    %v3945 = vpack.c.b16 %v3069, %v3065
    %v3946 = vpack.c.b16 %v3070, %v3066
    %v3947 = vpack.c.b16 %v3071, %v3067
    %v3948 = vpack.c.b16 %v3076, %v3072
    %v3949 = vpack.c.b16 %v3077, %v3073
    %v3950 = vpack.c.b16 %v3078, %v3074
    %v3951 = vpack.c.b16 %v3079, %v3075
    %v3952 = vpack.c.b16 %v3084, %v3080
    %v3953 = vpack.c.b16 %v3085, %v3081
    %v3954 = vpack.c.b16 %v3086, %v3082
    %v3955 = vpack.c.b16 %v3087, %v3083
    %v3956 = vpack.c.b16 %v3092, %v3088
    %v3957 = vpack.c.b16 %v3093, %v3089
    %v3958 = vpack.c.b16 %v3094, %v3090
    %v3959 = vpack.c.b16 %v3095, %v3091
    %v3960 = vpack.c.b16 %v3100, %v3096
    %v3961 = vpack.c.b16 %v3101, %v3097
    %v3962 = vpack.c.b16 %v3102, %v3098
    %v3963 = vpack.c.b16 %v3103, %v3099
    %v3964 = vpack.c.b16 %v3108, %v3104
    %v3965 = vpack.c.b16 %v3109, %v3105
    %v3966 = vpack.c.b16 %v3110, %v3106
    %v3967 = vpack.c.b16 %v3111, %v3107
    %v3968 = vpack.c.b16 %v3116, %v3112
    %v3969 = vpack.c.b16 %v3117, %v3113
    %v3970 = vpack.c.b16 %v3118, %v3114
    %v3971 = vpack.c.b16 %v3119, %v3115
    %v3972 = vpack.c.b16 %v3124, %v3120
    %v3973 = vpack.c.b16 %v3125, %v3121
    %v3974 = vpack.c.b16 %v3126, %v3122
    %v3975 = vpack.c.b16 %v3127, %v3123
    %v3976 = vpack.c.b16 %v3132, %v3128
    %v3977 = vpack.c.b16 %v3133, %v3129
    %v3978 = vpack.c.b16 %v3134, %v3130
    %v3979 = vpack.c.b16 %v3135, %v3131
    %v3980 = vpack.c.b16 %v3140, %v3136
    %v3981 = vpack.c.b16 %v3141, %v3137
    %v3982 = vpack.c.b16 %v3142, %v3138
    %v3983 = vpack.c.b16 %v3143, %v3139
    %v3984 = vpack.c.b16 %v3148, %v3144
    %v3985 = vpack.c.b16 %v3149, %v3145
    %v3986 = vpack.c.b16 %v3150, %v3146
    %v3987 = vpack.c.b16 %v3151, %v3147
    %v3988 = vpack.c.b16 %v3156, %v3152
    %v3989 = vpack.c.b16 %v3157, %v3153
    %v3990 = vpack.c.b16 %v3158, %v3154
    %v3991 = vpack.c.b16 %v3159, %v3155
    %v3992 = vpack.c.b16 %v3164, %v3160
    %v3993 = vpack.c.b16 %v3165, %v3161
    %v3994 = vpack.c.b16 %v3166, %v3162
    %v3995 = vpack.c.b16 %v3167, %v3163
    %v3996 = vpack.c.b16 %v3172, %v3168
    %v3997 = vpack.c.b16 %v3173, %v3169
    %v3998 = vpack.c.b16 %v3174, %v3170
    %v3999 = vpack.c.b16 %v3175, %v3171
    %v4000 = vpack.c.b16 %v3180, %v3176
    %v4001 = vpack.c.b16 %v3181, %v3177
    %v4002 = vpack.c.b16 %v3182, %v3178
    %v4003 = vpack.c.b16 %v3183, %v3179
    %v4004 = vpack.c.b16 %v3188, %v3184
    %v4005 = vpack.c.b16 %v3189, %v3185
    %v4006 = vpack.c.b16 %v3190, %v3186
    %v4007 = vpack.c.b16 %v3191, %v3187
    %v4008 = vpack.c.b16 %v3196, %v3192
    %v4009 = vpack.c.b16 %v3197, %v3193
    %v4010 = vpack.c.b16 %v3198, %v3194
    %v4011 = vpack.c.b16 %v3199, %v3195
    %v4012 = vpack.c.b16 %v3204, %v3200
    %v4013 = vpack.c.b16 %v3205, %v3201
    %v4014 = vpack.c.b16 %v3206, %v3202
    %v4015 = vpack.c.b16 %v3207, %v3203
    %v4016 = vpack.c.b16 %v3212, %v3208
    %v4017 = vpack.c.b16 %v3213, %v3209
    %v4018 = vpack.c.b16 %v3214, %v3210
    %v4019 = vpack.c.b16 %v3215, %v3211
    %v4020 = vpack.c.b16 %v3220, %v3216
    %v4021 = vpack.c.b16 %v3221, %v3217
    %v4022 = vpack.c.b16 %v3222, %v3218
    %v4023 = vpack.c.b16 %v3223, %v3219
    %v4024 = vpack.c.b16 %v3228, %v3224
    %v4025 = vpack.c.b16 %v3229, %v3225
    %v4026 = vpack.c.b16 %v3230, %v3226
    %v4027 = vpack.c.b16 %v3231, %v3227
    %v4028 = vpack.c.b16 %v3236, %v3232
    %v4029 = vpack.c.b16 %v3237, %v3233
    %v4030 = vpack.c.b16 %v3238, %v3234
    %v4031 = vpack.c.b16 %v3239, %v3235
    %v4032 = vpack.c.b16 %v3244, %v3240
    %v4033 = vpack.c.b16 %v3245, %v3241
    %v4034 = vpack.c.b16 %v3246, %v3242
    %v4035 = vpack.c.b16 %v3247, %v3243
    %v4036 = vpack.c.b16 %v3252, %v3248
    %v4037 = vpack.c.b16 %v3253, %v3249
    %v4038 = vpack.c.b16 %v3254, %v3250
    %v4039 = vpack.c.b16 %v3255, %v3251
    %v4040 = vpack.c.b16 %v3260, %v3256
    %v4041 = vpack.c.b16 %v3261, %v3257
    %v4042 = vpack.c.b16 %v3262, %v3258
    %v4043 = vpack.c.b16 %v3263, %v3259
    %v4044 = vpack.c.b16 %v3268, %v3264
    %v4045 = vpack.c.b16 %v3269, %v3265
    %v4046 = vpack.c.b16 %v3270, %v3266
    %v4047 = vpack.c.b16 %v3271, %v3267
    %v4048 = vpack.c.b16 %v3276, %v3272
    %v4049 = vpack.c.b16 %v3277, %v3273
    %v4050 = vpack.c.b16 %v3278, %v3274
    %v4051 = vpack.c.b16 %v3279, %v3275
    %v4052 = vpack.c.b16 %v3284, %v3280
    %v4053 = vpack.c.b16 %v3285, %v3281
    %v4054 = vpack.c.b16 %v3286, %v3282
    %v4055 = vpack.c.b16 %v3287, %v3283
    %4824 = vmatprep.subr.bf16.mxu0 %v3289
    %4825 = vmatpush1.bf16.msra.mxu0 %v3288
    %4826 = vmatprep.subr.bf16.mxu0 %v3293
    %4827 = vmatpush1.bf16.msra.mxu0 %v3292
    %4828 = vmatprep.subr.bf16.mxu0 %v3297
    %4829 = vmatpush1.bf16.msra.mxu0 %v3296
    %4830 = vmatprep.subr.bf16.mxu0 %v3301
    %4831 = vmatpush1.bf16.msra.mxu0 %v3300
    %4832 = vmatprep.subr.bf16.mxu0 %v3305
    %4833 = vmatpush1.bf16.msra.mxu0 %v3304
    %4834 = vmatprep.subr.bf16.mxu0 %v3309
    %4835 = vmatpush1.bf16.msra.mxu0 %v3308
    %4836 = vmatprep.subr.bf16.mxu0 %v3313
    %4837 = vmatpush1.bf16.msra.mxu0 %v3312
    %4838 = vmatprep.subr.bf16.mxu0 %v3317
    %4839 = vmatpush1.bf16.msra.mxu0 %v3316
    %4840 = vmatprep.subr.bf16.mxu0 %v3321
    %4841 = vmatpush1.bf16.msra.mxu0 %v3320
    %4842 = vmatprep.subr.bf16.mxu0 %v3325
    %4843 = vmatpush1.bf16.msra.mxu0 %v3324
    %4844 = vmatprep.subr.bf16.mxu0 %v3329
    %4845 = vmatpush1.bf16.msra.mxu0 %v3328
    %4846 = vmatprep.subr.bf16.mxu0 %v3333
    %4847 = vmatpush1.bf16.msra.mxu0 %v3332
    %4848 = vmatprep.subr.bf16.mxu0 %v3337
    %4849 = vmatpush1.bf16.msra.mxu0 %v3336
    %4850 = vmatprep.subr.bf16.mxu0 %v3341
    %4851 = vmatpush1.bf16.msra.mxu0 %v3340
    %4852 = vmatprep.subr.bf16.mxu0 %v3345
    %4853 = vmatpush1.bf16.msra.mxu0 %v3344
    %4854 = vmatprep.subr.bf16.mxu0 %v3349
    %4855 = vmatpush1.bf16.msra.mxu0 %v3348
    %4856 = vmatprep.mubr.bf16.mxu0 %v171
    %4857 = vmatmul.mubr.bf16.gmra.mrb[0].mxu0 %v170
    %v4858 = vpop.f32.mrb[0].mxu0
    %v4859 = vadd.f32 %v967, %v4858
    %v4860 = vpop.f32.mrb[0].mxu0
    %v4861 = vadd.f32 %v971, %v4860
    %v4862 = vpop.f32.mrb[0].mxu0
    %v4863 = vpop.f32.mrb[0].mxu0
    %4864 = vdwg.mxu0
    %4865 = vmatprep.subr.bf16.mxu0 %v3353
    %4866 = vmatpush1.bf16.msra.mxu0 %v3352
    %4867 = vmatprep.subr.bf16.mxu0 %v3357
    %4868 = vmatpush1.bf16.msra.mxu0 %v3356
    %4869 = vmatprep.subr.bf16.mxu0 %v3361
    %4870 = vmatpush1.bf16.msra.mxu0 %v3360
    %4871 = vmatprep.subr.bf16.mxu0 %v3365
    %4872 = vmatpush1.bf16.msra.mxu0 %v3364
    %4873 = vmatprep.subr.bf16.mxu0 %v3369
    %4874 = vmatpush1.bf16.msra.mxu0 %v3368
    %4875 = vmatprep.subr.bf16.mxu0 %v3373
    %4876 = vmatpush1.bf16.msra.mxu0 %v3372
    %4877 = vmatprep.subr.bf16.mxu0 %v3377
    %4878 = vmatpush1.bf16.msra.mxu0 %v3376
    %4879 = vmatprep.subr.bf16.mxu0 %v3381
    %4880 = vmatpush1.bf16.msra.mxu0 %v3380
    %4881 = vmatprep.subr.bf16.mxu0 %v3385
    %4882 = vmatpush1.bf16.msra.mxu0 %v3384
    %4883 = vmatprep.subr.bf16.mxu0 %v3389
    %4884 = vmatpush1.bf16.msra.mxu0 %v3388
    %4885 = vmatprep.subr.bf16.mxu0 %v3393
    %4886 = vmatpush1.bf16.msra.mxu0 %v3392
    %4887 = vmatprep.subr.bf16.mxu0 %v3397
    %4888 = vmatpush1.bf16.msra.mxu0 %v3396
    %4889 = vmatprep.subr.bf16.mxu0 %v3401
    %4890 = vmatpush1.bf16.msra.mxu0 %v3400
    %4891 = vmatprep.subr.bf16.mxu0 %v3405
    %4892 = vmatpush1.bf16.msra.mxu0 %v3404
    %4893 = vmatprep.subr.bf16.mxu0 %v3409
    %4894 = vmatpush1.bf16.msra.mxu0 %v3408
    %4895 = vmatprep.subr.bf16.mxu0 %v3413
    %4896 = vmatpush1.bf16.msra.mxu0 %v3412
    %4897 = vmatprep.mubr.bf16.mxu0 %v173
    %4898 = vmatmul.mubr.bf16.gmra.mrb[0].mxu0 %v172
    %v4899 = vpop.f32.mrb[0].mxu0
    %v4900 = vadd.f32 %v4859, %v4899
    %v4901 = vpop.f32.mrb[0].mxu0
    %v4902 = vadd.f32 %v4861, %v4901
    %v4903 = vpop.f32.mrb[0].mxu0
    %v4904 = vpop.f32.mrb[0].mxu0
    %4905 = vdwg.mxu0
    %4906 = vmatprep.subr.bf16.mxu0 %v3417
    %4907 = vmatpush1.bf16.msra.mxu0 %v3416
    %4908 = vmatprep.subr.bf16.mxu0 %v3421
    %4909 = vmatpush1.bf16.msra.mxu0 %v3420
    %4910 = vmatprep.subr.bf16.mxu0 %v3425
    %4911 = vmatpush1.bf16.msra.mxu0 %v3424
    %4912 = vmatprep.subr.bf16.mxu0 %v3429
    %4913 = vmatpush1.bf16.msra.mxu0 %v3428
    %4914 = vmatprep.subr.bf16.mxu0 %v3433
    %4915 = vmatpush1.bf16.msra.mxu0 %v3432
    %4916 = vmatprep.subr.bf16.mxu0 %v3437
    %4917 = vmatpush1.bf16.msra.mxu0 %v3436
    %4918 = vmatprep.subr.bf16.mxu0 %v3441
    %4919 = vmatpush1.bf16.msra.mxu0 %v3440
    %4920 = vmatprep.subr.bf16.mxu0 %v3445
    %4921 = vmatpush1.bf16.msra.mxu0 %v3444
    %4922 = vmatprep.subr.bf16.mxu0 %v3449
    %4923 = vmatpush1.bf16.msra.mxu0 %v3448
    %4924 = vmatprep.subr.bf16.mxu0 %v3453
    %4925 = vmatpush1.bf16.msra.mxu0 %v3452
    %4926 = vmatprep.subr.bf16.mxu0 %v3457
    %4927 = vmatpush1.bf16.msra.mxu0 %v3456
    %4928 = vmatprep.subr.bf16.mxu0 %v3461
    %4929 = vmatpush1.bf16.msra.mxu0 %v3460
    %4930 = vmatprep.subr.bf16.mxu0 %v3465
    %4931 = vmatpush1.bf16.msra.mxu0 %v3464
    %4932 = vmatprep.subr.bf16.mxu0 %v3469
    %4933 = vmatpush1.bf16.msra.mxu0 %v3468
    %4934 = vmatprep.subr.bf16.mxu0 %v3473
    %4935 = vmatpush1.bf16.msra.mxu0 %v3472
    %4936 = vmatprep.subr.bf16.mxu0 %v3477
    %4937 = vmatpush1.bf16.msra.mxu0 %v3476
    %4938 = vmatprep.mubr.bf16.mxu0 %v175
    %4939 = vmatmul.mubr.bf16.gmra.mrb[0].mxu0 %v174
    %v4940 = vpop.f32.mrb[0].mxu0
    %v4941 = vadd.f32 %v4900, %v4940
    %v4942 = vpop.f32.mrb[0].mxu0
    %v4943 = vadd.f32 %v4902, %v4942
    %v4944 = vpop.f32.mrb[0].mxu0
    %v4945 = vpop.f32.mrb[0].mxu0
    %4946 = vdwg.mxu0
    %4947 = vmatprep.subr.bf16.mxu0 %v3481
    %4948 = vmatpush1.bf16.msra.mxu0 %v3480
    %4949 = vmatprep.subr.bf16.mxu0 %v3485
    %4950 = vmatpush1.bf16.msra.mxu0 %v3484
    %4951 = vmatprep.subr.bf16.mxu0 %v3489
    %4952 = vmatpush1.bf16.msra.mxu0 %v3488
    %4953 = vmatprep.subr.bf16.mxu0 %v3493
    %4954 = vmatpush1.bf16.msra.mxu0 %v3492
    %4955 = vmatprep.subr.bf16.mxu0 %v3497
    %4956 = vmatpush1.bf16.msra.mxu0 %v3496
    %4957 = vmatprep.subr.bf16.mxu0 %v3501
    %4958 = vmatpush1.bf16.msra.mxu0 %v3500
    %4959 = vmatprep.subr.bf16.mxu0 %v3505
    %4960 = vmatpush1.bf16.msra.mxu0 %v3504
    %4961 = vmatprep.subr.bf16.mxu0 %v3509
    %4962 = vmatpush1.bf16.msra.mxu0 %v3508
    %4963 = vmatprep.subr.bf16.mxu0 %v3513
    %4964 = vmatpush1.bf16.msra.mxu0 %v3512
    %4965 = vmatprep.subr.bf16.mxu0 %v3517
    %4966 = vmatpush1.bf16.msra.mxu0 %v3516
    %4967 = vmatprep.subr.bf16.mxu0 %v3521
    %4968 = vmatpush1.bf16.msra.mxu0 %v3520
    %4969 = vmatprep.subr.bf16.mxu0 %v3525
    %4970 = vmatpush1.bf16.msra.mxu0 %v3524
    %4971 = vmatprep.subr.bf16.mxu0 %v3529
    %4972 = vmatpush1.bf16.msra.mxu0 %v3528
    %4973 = vmatprep.subr.bf16.mxu0 %v3533
    %4974 = vmatpush1.bf16.msra.mxu0 %v3532
    %4975 = vmatprep.subr.bf16.mxu0 %v3537
    %4976 = vmatpush1.bf16.msra.mxu0 %v3536
    %4977 = vmatprep.subr.bf16.mxu0 %v3541
    %4978 = vmatpush1.bf16.msra.mxu0 %v3540
    %4979 = vmatprep.mubr.bf16.mxu0 %v177
    %4980 = vmatmul.mubr.bf16.gmra.mrb[0].mxu0 %v176
    %v4981 = vpop.f32.mrb[0].mxu0
    %v4982 = vadd.f32 %v4941, %v4981
    %v4983 = vpop.f32.mrb[0].mxu0
    %v4984 = vadd.f32 %v4943, %v4983
    %v4985 = vpop.f32.mrb[0].mxu0
    %v4986 = vpop.f32.mrb[0].mxu0
    %4987 = vdwg.mxu0
    %4988 = vmatprep.subr.bf16.mxu0 %v3545
    %4989 = vmatpush1.bf16.msra.mxu0 %v3544
    %4990 = vmatprep.subr.bf16.mxu0 %v3549
    %4991 = vmatpush1.bf16.msra.mxu0 %v3548
    %4992 = vmatprep.subr.bf16.mxu0 %v3553
    %4993 = vmatpush1.bf16.msra.mxu0 %v3552
    %4994 = vmatprep.subr.bf16.mxu0 %v3557
    %4995 = vmatpush1.bf16.msra.mxu0 %v3556
    %4996 = vmatprep.subr.bf16.mxu0 %v3561
    %4997 = vmatpush1.bf16.msra.mxu0 %v3560
    %4998 = vmatprep.subr.bf16.mxu0 %v3565
    %4999 = vmatpush1.bf16.msra.mxu0 %v3564
    %5000 = vmatprep.subr.bf16.mxu0 %v3569
    %5001 = vmatpush1.bf16.msra.mxu0 %v3568
    %5002 = vmatprep.subr.bf16.mxu0 %v3573
    %5003 = vmatpush1.bf16.msra.mxu0 %v3572
    %5004 = vmatprep.subr.bf16.mxu0 %v3577
    %5005 = vmatpush1.bf16.msra.mxu0 %v3576
    %5006 = vmatprep.subr.bf16.mxu0 %v3581
    %5007 = vmatpush1.bf16.msra.mxu0 %v3580
    %5008 = vmatprep.subr.bf16.mxu0 %v3585
    %5009 = vmatpush1.bf16.msra.mxu0 %v3584
    %5010 = vmatprep.subr.bf16.mxu0 %v3589
    %5011 = vmatpush1.bf16.msra.mxu0 %v3588
    %5012 = vmatprep.subr.bf16.mxu0 %v3593
    %5013 = vmatpush1.bf16.msra.mxu0 %v3592
    %5014 = vmatprep.subr.bf16.mxu0 %v3597
    %5015 = vmatpush1.bf16.msra.mxu0 %v3596
    %5016 = vmatprep.subr.bf16.mxu0 %v3601
    %5017 = vmatpush1.bf16.msra.mxu0 %v3600
    %5018 = vmatprep.subr.bf16.mxu0 %v3605
    %5019 = vmatpush1.bf16.msra.mxu0 %v3604
    %5020 = vmatprep.mubr.bf16.mxu0 %v179
    %5021 = vmatmul.mubr.bf16.gmra.mrb[0].mxu0 %v178
    %v5022 = vpop.f32.mrb[0].mxu0
    %v5023 = vadd.f32 %v4982, %v5022
    %v5024 = vpop.f32.mrb[0].mxu0
    %v5025 = vadd.f32 %v4984, %v5024
    %v5026 = vpop.f32.mrb[0].mxu0
    %v5027 = vpop.f32.mrb[0].mxu0
    %5028 = vdwg.mxu0
    %5029 = vmatprep.subr.bf16.mxu0 %v3609
    %5030 = vmatpush1.bf16.msra.mxu0 %v3608
    %5031 = vmatprep.subr.bf16.mxu0 %v3613
    %5032 = vmatpush1.bf16.msra.mxu0 %v3612
    %5033 = vmatprep.subr.bf16.mxu0 %v3617
    %5034 = vmatpush1.bf16.msra.mxu0 %v3616
    %5035 = vmatprep.subr.bf16.mxu0 %v3621
    %5036 = vmatpush1.bf16.msra.mxu0 %v3620
    %5037 = vmatprep.subr.bf16.mxu0 %v3625
    %5038 = vmatpush1.bf16.msra.mxu0 %v3624
    %5039 = vmatprep.subr.bf16.mxu0 %v3629
    %5040 = vmatpush1.bf16.msra.mxu0 %v3628
    %5041 = vmatprep.subr.bf16.mxu0 %v3633
    %5042 = vmatpush1.bf16.msra.mxu0 %v3632
    %5043 = vmatprep.subr.bf16.mxu0 %v3637
    %5044 = vmatpush1.bf16.msra.mxu0 %v3636
    %5045 = vmatprep.subr.bf16.mxu0 %v3641
    %5046 = vmatpush1.bf16.msra.mxu0 %v3640
    %5047 = vmatprep.subr.bf16.mxu0 %v3645
    %5048 = vmatpush1.bf16.msra.mxu0 %v3644
    %5049 = vmatprep.subr.bf16.mxu0 %v3649
    %5050 = vmatpush1.bf16.msra.mxu0 %v3648
    %5051 = vmatprep.subr.bf16.mxu0 %v3653
    %5052 = vmatpush1.bf16.msra.mxu0 %v3652
    %5053 = vmatprep.subr.bf16.mxu0 %v3657
    %5054 = vmatpush1.bf16.msra.mxu0 %v3656
    %5055 = vmatprep.subr.bf16.mxu0 %v3661
    %5056 = vmatpush1.bf16.msra.mxu0 %v3660
    %5057 = vmatprep.subr.bf16.mxu0 %v3665
    %5058 = vmatpush1.bf16.msra.mxu0 %v3664
    %5059 = vmatprep.subr.bf16.mxu0 %v3669
    %5060 = vmatpush1.bf16.msra.mxu0 %v3668
    %5061 = vmatprep.mubr.bf16.mxu0 %v181
    %5062 = vmatmul.mubr.bf16.gmra.mrb[0].mxu0 %v180
    %v5063 = vpop.f32.mrb[0].mxu0
    %v5064 = vadd.f32 %v5023, %v5063
    %v5065 = vpop.f32.mrb[0].mxu0
    %v5066 = vadd.f32 %v5025, %v5065
    %v5067 = vpop.f32.mrb[0].mxu0
    %v5068 = vpop.f32.mrb[0].mxu0
    %5069 = vdwg.mxu0
    %5070 = vmatprep.subr.bf16.mxu0 %v3673
    %5071 = vmatpush1.bf16.msra.mxu0 %v3672
    %5072 = vmatprep.subr.bf16.mxu0 %v3677
    %5073 = vmatpush1.bf16.msra.mxu0 %v3676
    %5074 = vmatprep.subr.bf16.mxu0 %v3681
    %5075 = vmatpush1.bf16.msra.mxu0 %v3680
    %5076 = vmatprep.subr.bf16.mxu0 %v3685
    %5077 = vmatpush1.bf16.msra.mxu0 %v3684
    %5078 = vmatprep.subr.bf16.mxu0 %v3689
    %5079 = vmatpush1.bf16.msra.mxu0 %v3688
    %5080 = vmatprep.subr.bf16.mxu0 %v3693
    %5081 = vmatpush1.bf16.msra.mxu0 %v3692
    %5082 = vmatprep.subr.bf16.mxu0 %v3697
    %5083 = vmatpush1.bf16.msra.mxu0 %v3696
    %5084 = vmatprep.subr.bf16.mxu0 %v3701
    %5085 = vmatpush1.bf16.msra.mxu0 %v3700
    %5086 = vmatprep.subr.bf16.mxu0 %v3705
    %5087 = vmatpush1.bf16.msra.mxu0 %v3704
    %5088 = vmatprep.subr.bf16.mxu0 %v3709
    %5089 = vmatpush1.bf16.msra.mxu0 %v3708
    %5090 = vmatprep.subr.bf16.mxu0 %v3713
    %5091 = vmatpush1.bf16.msra.mxu0 %v3712
    %5092 = vmatprep.subr.bf16.mxu0 %v3717
    %5093 = vmatpush1.bf16.msra.mxu0 %v3716
    %5094 = vmatprep.subr.bf16.mxu0 %v3721
    %5095 = vmatpush1.bf16.msra.mxu0 %v3720
    %5096 = vmatprep.subr.bf16.mxu0 %v3725
    %5097 = vmatpush1.bf16.msra.mxu0 %v3724
    %5098 = vmatprep.subr.bf16.mxu0 %v3729
    %5099 = vmatpush1.bf16.msra.mxu0 %v3728
    %5100 = vmatprep.subr.bf16.mxu0 %v3733
    %5101 = vmatpush1.bf16.msra.mxu0 %v3732
    %5102 = vmatprep.mubr.bf16.mxu0 %v183
    %5103 = vmatmul.mubr.bf16.gmra.mrb[0].mxu0 %v182
    %v5104 = vpop.f32.mrb[0].mxu0
    %v5105 = vadd.f32 %v5064, %v5104
    %v5106 = vpop.f32.mrb[0].mxu0
    %v5107 = vadd.f32 %v5066, %v5106
    %v5108 = vpop.f32.mrb[0].mxu0
    %v5109 = vpop.f32.mrb[0].mxu0
    %5110 = vdwg.mxu0
    %5111 = vmatprep.subr.bf16.mxu0 %v3737
    %5112 = vmatpush1.bf16.msra.mxu0 %v3736
    %5113 = vmatprep.subr.bf16.mxu0 %v3741
    %5114 = vmatpush1.bf16.msra.mxu0 %v3740
    %5115 = vmatprep.subr.bf16.mxu0 %v3745
    %5116 = vmatpush1.bf16.msra.mxu0 %v3744
    %5117 = vmatprep.subr.bf16.mxu0 %v3749
    %5118 = vmatpush1.bf16.msra.mxu0 %v3748
    %5119 = vmatprep.subr.bf16.mxu0 %v3753
    %5120 = vmatpush1.bf16.msra.mxu0 %v3752
    %5121 = vmatprep.subr.bf16.mxu0 %v3757
    %5122 = vmatpush1.bf16.msra.mxu0 %v3756
    %5123 = vmatprep.subr.bf16.mxu0 %v3761
    %5124 = vmatpush1.bf16.msra.mxu0 %v3760
    %5125 = vmatprep.subr.bf16.mxu0 %v3765
    %5126 = vmatpush1.bf16.msra.mxu0 %v3764
    %5127 = vmatprep.subr.bf16.mxu0 %v3769
    %5128 = vmatpush1.bf16.msra.mxu0 %v3768
    %5129 = vmatprep.subr.bf16.mxu0 %v3773
    %5130 = vmatpush1.bf16.msra.mxu0 %v3772
    %5131 = vmatprep.subr.bf16.mxu0 %v3777
    %5132 = vmatpush1.bf16.msra.mxu0 %v3776
    %5133 = vmatprep.subr.bf16.mxu0 %v3781
    %5134 = vmatpush1.bf16.msra.mxu0 %v3780
    %5135 = vmatprep.subr.bf16.mxu0 %v3785
    %5136 = vmatpush1.bf16.msra.mxu0 %v3784
    %5137 = vmatprep.subr.bf16.mxu0 %v3789
    %5138 = vmatpush1.bf16.msra.mxu0 %v3788
    %5139 = vmatprep.subr.bf16.mxu0 %v3793
    %5140 = vmatpush1.bf16.msra.mxu0 %v3792
    %5141 = vmatprep.subr.bf16.mxu0 %v3797
    %5142 = vmatpush1.bf16.msra.mxu0 %v3796
    %5143 = vmatprep.mubr.bf16.mxu0 %v185
    %5144 = vmatmul.mubr.bf16.gmra.mrb[0].mxu0 %v184
    %v5145 = vpop.f32.mrb[0].mxu0
    %v5146 = vadd.f32 %v5105, %v5145
    %v5147 = vpop.f32.mrb[0].mxu0
    %v5148 = vadd.f32 %v5107, %v5147
    %v5149 = vpop.f32.mrb[0].mxu0
    %v5150 = vpop.f32.mrb[0].mxu0
    %5151 = vdwg.mxu0
    %5152 = vmatprep.subr.bf16.mxu0 %v3801
    %5153 = vmatpush1.bf16.msra.mxu0 %v3800
    %5154 = vmatprep.subr.bf16.mxu0 %v3805
    %5155 = vmatpush1.bf16.msra.mxu0 %v3804
    %5156 = vmatprep.subr.bf16.mxu0 %v3809
    %5157 = vmatpush1.bf16.msra.mxu0 %v3808
    %5158 = vmatprep.subr.bf16.mxu0 %v3813
    %5159 = vmatpush1.bf16.msra.mxu0 %v3812
    %5160 = vmatprep.subr.bf16.mxu0 %v3817
    %5161 = vmatpush1.bf16.msra.mxu0 %v3816
    %5162 = vmatprep.subr.bf16.mxu0 %v3821
    %5163 = vmatpush1.bf16.msra.mxu0 %v3820
    %5164 = vmatprep.subr.bf16.mxu0 %v3825
    %5165 = vmatpush1.bf16.msra.mxu0 %v3824
    %5166 = vmatprep.subr.bf16.mxu0 %v3829
    %5167 = vmatpush1.bf16.msra.mxu0 %v3828
    %5168 = vmatprep.subr.bf16.mxu0 %v3833
    %5169 = vmatpush1.bf16.msra.mxu0 %v3832
    %5170 = vmatprep.subr.bf16.mxu0 %v3837
    %5171 = vmatpush1.bf16.msra.mxu0 %v3836
    %5172 = vmatprep.subr.bf16.mxu0 %v3841
    %5173 = vmatpush1.bf16.msra.mxu0 %v3840
    %5174 = vmatprep.subr.bf16.mxu0 %v3845
    %5175 = vmatpush1.bf16.msra.mxu0 %v3844
    %5176 = vmatprep.subr.bf16.mxu0 %v3849
    %5177 = vmatpush1.bf16.msra.mxu0 %v3848
    %5178 = vmatprep.subr.bf16.mxu0 %v3853
    %5179 = vmatpush1.bf16.msra.mxu0 %v3852
    %5180 = vmatprep.subr.bf16.mxu0 %v3857
    %5181 = vmatpush1.bf16.msra.mxu0 %v3856
    %5182 = vmatprep.subr.bf16.mxu0 %v3861
    %5183 = vmatpush1.bf16.msra.mxu0 %v3860
    %5184 = vmatprep.mubr.bf16.mxu0 %v187
    %5185 = vmatmul.mubr.bf16.gmra.mrb[0].mxu0 %v186
    %v5186 = vpop.f32.mrb[0].mxu0
    %v5187 = vadd.f32 %v5146, %v5186
    %v5188 = vpop.f32.mrb[0].mxu0
    %v5189 = vadd.f32 %v5148, %v5188
    %v5190 = vpop.f32.mrb[0].mxu0
    %v5191 = vpop.f32.mrb[0].mxu0
    %5192 = vdwg.mxu0
    %5193 = vmatprep.subr.bf16.mxu0 %v3865
    %5194 = vmatpush1.bf16.msra.mxu0 %v3864
    %5195 = vmatprep.subr.bf16.mxu0 %v3869
    %5196 = vmatpush1.bf16.msra.mxu0 %v3868
    %5197 = vmatprep.subr.bf16.mxu0 %v3873
    %5198 = vmatpush1.bf16.msra.mxu0 %v3872
    %5199 = vmatprep.subr.bf16.mxu0 %v3877
    %5200 = vmatpush1.bf16.msra.mxu0 %v3876
    %5201 = vmatprep.subr.bf16.mxu0 %v3881
    %5202 = vmatpush1.bf16.msra.mxu0 %v3880
    %5203 = vmatprep.subr.bf16.mxu0 %v3885
    %5204 = vmatpush1.bf16.msra.mxu0 %v3884
    %5205 = vmatprep.subr.bf16.mxu0 %v3889
    %5206 = vmatpush1.bf16.msra.mxu0 %v3888
    %5207 = vmatprep.subr.bf16.mxu0 %v3893
    %5208 = vmatpush1.bf16.msra.mxu0 %v3892
    %5209 = vmatprep.subr.bf16.mxu0 %v3897
    %5210 = vmatpush1.bf16.msra.mxu0 %v3896
    %5211 = vmatprep.subr.bf16.mxu0 %v3901
    %5212 = vmatpush1.bf16.msra.mxu0 %v3900
    %5213 = vmatprep.subr.bf16.mxu0 %v3905
    %5214 = vmatpush1.bf16.msra.mxu0 %v3904
    %5215 = vmatprep.subr.bf16.mxu0 %v3909
    %5216 = vmatpush1.bf16.msra.mxu0 %v3908
    %5217 = vmatprep.subr.bf16.mxu0 %v3913
    %5218 = vmatpush1.bf16.msra.mxu0 %v3912
    %5219 = vmatprep.subr.bf16.mxu0 %v3917
    %5220 = vmatpush1.bf16.msra.mxu0 %v3916
    %5221 = vmatprep.subr.bf16.mxu0 %v3921
    %5222 = vmatpush1.bf16.msra.mxu0 %v3920
    %5223 = vmatprep.subr.bf16.mxu0 %v3925
    %5224 = vmatpush1.bf16.msra.mxu0 %v3924
    %5225 = vmatprep.mubr.bf16.mxu0 %v189
    %5226 = vmatmul.mubr.bf16.gmra.mrb[0].mxu0 %v188
    %v5227 = vpop.f32.mrb[0].mxu0
    %v5228 = vadd.f32 %v5187, %v5227
    %v5229 = vpop.f32.mrb[0].mxu0
    %v5230 = vadd.f32 %v5189, %v5229
    %v5231 = vpop.f32.mrb[0].mxu0
    %v5232 = vpop.f32.mrb[0].mxu0
    %5233 = vdwg.mxu0
    %5234 = vmatprep.subr.bf16.mxu0 %v3929
    %5235 = vmatpush1.bf16.msra.mxu0 %v3928
    %5236 = vmatprep.subr.bf16.mxu0 %v3933
    %5237 = vmatpush1.bf16.msra.mxu0 %v3932
    %5238 = vmatprep.subr.bf16.mxu0 %v3937
    %5239 = vmatpush1.bf16.msra.mxu0 %v3936
    %5240 = vmatprep.subr.bf16.mxu0 %v3941
    %5241 = vmatpush1.bf16.msra.mxu0 %v3940
    %5242 = vmatprep.subr.bf16.mxu0 %v3945
    %5243 = vmatpush1.bf16.msra.mxu0 %v3944
    %5244 = vmatprep.subr.bf16.mxu0 %v3949
    %5245 = vmatpush1.bf16.msra.mxu0 %v3948
    %5246 = vmatprep.subr.bf16.mxu0 %v3953
    %5247 = vmatpush1.bf16.msra.mxu0 %v3952
    %5248 = vmatprep.subr.bf16.mxu0 %v3957
    %5249 = vmatpush1.bf16.msra.mxu0 %v3956
    %5250 = vmatprep.subr.bf16.mxu0 %v3961
    %5251 = vmatpush1.bf16.msra.mxu0 %v3960
    %5252 = vmatprep.subr.bf16.mxu0 %v3965
    %5253 = vmatpush1.bf16.msra.mxu0 %v3964
    %5254 = vmatprep.subr.bf16.mxu0 %v3969
    %5255 = vmatpush1.bf16.msra.mxu0 %v3968
    %5256 = vmatprep.subr.bf16.mxu0 %v3973
    %5257 = vmatpush1.bf16.msra.mxu0 %v3972
    %5258 = vmatprep.subr.bf16.mxu0 %v3977
    %5259 = vmatpush1.bf16.msra.mxu0 %v3976
    %5260 = vmatprep.subr.bf16.mxu0 %v3981
    %5261 = vmatpush1.bf16.msra.mxu0 %v3980
    %5262 = vmatprep.subr.bf16.mxu0 %v3985
    %5263 = vmatpush1.bf16.msra.mxu0 %v3984
    %5264 = vmatprep.subr.bf16.mxu0 %v3989
    %5265 = vmatpush1.bf16.msra.mxu0 %v3988
    %5266 = vmatprep.mubr.bf16.mxu0 %v191
    %5267 = vmatmul.mubr.bf16.gmra.mrb[0].mxu0 %v190
    %v5268 = vpop.f32.mrb[0].mxu0
    %v5269 = vadd.f32 %v5228, %v5268
    %v5270 = vpop.f32.mrb[0].mxu0
    %v5271 = vadd.f32 %v5230, %v5270
    %v5272 = vpop.f32.mrb[0].mxu0
    %v5273 = vpop.f32.mrb[0].mxu0
    %5274 = vdwg.mxu0
    %5275 = vmatprep.subr.bf16.mxu0 %v3993
    %5276 = vmatpush1.bf16.msra.mxu0 %v3992
    %5277 = vmatprep.subr.bf16.mxu0 %v3997
    %5278 = vmatpush1.bf16.msra.mxu0 %v3996
    %5279 = vmatprep.subr.bf16.mxu0 %v4001
    %5280 = vmatpush1.bf16.msra.mxu0 %v4000
    %5281 = vmatprep.subr.bf16.mxu0 %v4005
    %5282 = vmatpush1.bf16.msra.mxu0 %v4004
    %5283 = vmatprep.subr.bf16.mxu0 %v4009
    %5284 = vmatpush1.bf16.msra.mxu0 %v4008
    %5285 = vmatprep.subr.bf16.mxu0 %v4013
    %5286 = vmatpush1.bf16.msra.mxu0 %v4012
    %5287 = vmatprep.subr.bf16.mxu0 %v4017
    %5288 = vmatpush1.bf16.msra.mxu0 %v4016
    %5289 = vmatprep.subr.bf16.mxu0 %v4021
    %5290 = vmatpush1.bf16.msra.mxu0 %v4020
    %5291 = vmatprep.subr.bf16.mxu0 %v4025
    %5292 = vmatpush1.bf16.msra.mxu0 %v4024
    %5293 = vmatprep.subr.bf16.mxu0 %v4029
    %5294 = vmatpush1.bf16.msra.mxu0 %v4028
    %5295 = vmatprep.subr.bf16.mxu0 %v4033
    %5296 = vmatpush1.bf16.msra.mxu0 %v4032
    %5297 = vmatprep.subr.bf16.mxu0 %v4037
    %5298 = vmatpush1.bf16.msra.mxu0 %v4036
    %5299 = vmatprep.subr.bf16.mxu0 %v4041
    %5300 = vmatpush1.bf16.msra.mxu0 %v4040
    %5301 = vmatprep.subr.bf16.mxu0 %v4045
    %5302 = vmatpush1.bf16.msra.mxu0 %v4044
    %5303 = vmatprep.subr.bf16.mxu0 %v4049
    %5304 = vmatpush1.bf16.msra.mxu0 %v4048
    %5305 = vmatprep.subr.bf16.mxu0 %v4053
    %5306 = vmatpush1.bf16.msra.mxu0 %v4052
    %5307 = vmatprep.mubr.bf16.mxu0 %v193
    %5308 = vmatmul.mubr.bf16.gmra.mrb[0].mxu0 %v192
    %v5309 = vpop.f32.mrb[0].mxu0
    %v5310 = vadd.f32 %v5269, %v5309
    %v5311 = vpop.f32.mrb[0].mxu0
    %v5312 = vadd.f32 %v5271, %v5311
    %v5313 = vpop.f32.mrb[0].mxu0
    %v5314 = vpop.f32.mrb[0].mxu0
    %5315 = vdwg.mxu0
    %5316 = vmatprep.subr.bf16.mxu0 %v3291
    %5317 = vmatpush1.bf16.msra.mxu0 %v3290
    %5318 = vmatprep.subr.bf16.mxu0 %v3295
    %5319 = vmatpush1.bf16.msra.mxu0 %v3294
    %5320 = vmatprep.subr.bf16.mxu0 %v3299
    %5321 = vmatpush1.bf16.msra.mxu0 %v3298
    %5322 = vmatprep.subr.bf16.mxu0 %v3303
    %5323 = vmatpush1.bf16.msra.mxu0 %v3302
    %5324 = vmatprep.subr.bf16.mxu0 %v3307
    %5325 = vmatpush1.bf16.msra.mxu0 %v3306
    %5326 = vmatprep.subr.bf16.mxu0 %v3311
    %5327 = vmatpush1.bf16.msra.mxu0 %v3310
    %5328 = vmatprep.subr.bf16.mxu0 %v3315
    %5329 = vmatpush1.bf16.msra.mxu0 %v3314
    %5330 = vmatprep.subr.bf16.mxu0 %v3319
    %5331 = vmatpush1.bf16.msra.mxu0 %v3318
    %5332 = vmatprep.subr.bf16.mxu0 %v3323
    %5333 = vmatpush1.bf16.msra.mxu0 %v3322
    %5334 = vmatprep.subr.bf16.mxu0 %v3327
    %5335 = vmatpush1.bf16.msra.mxu0 %v3326
    %5336 = vmatprep.subr.bf16.mxu0 %v3331
    %5337 = vmatpush1.bf16.msra.mxu0 %v3330
    %5338 = vmatprep.subr.bf16.mxu0 %v3335
    %5339 = vmatpush1.bf16.msra.mxu0 %v3334
    %5340 = vmatprep.subr.bf16.mxu0 %v3339
    %5341 = vmatpush1.bf16.msra.mxu0 %v3338
    %5342 = vmatprep.subr.bf16.mxu0 %v3343
    %5343 = vmatpush1.bf16.msra.mxu0 %v3342
    %5344 = vmatprep.subr.bf16.mxu0 %v3347
    %5345 = vmatpush1.bf16.msra.mxu0 %v3346
    %5346 = vmatprep.subr.bf16.mxu0 %v3351
    %5347 = vmatpush1.bf16.msra.mxu0 %v3350
    %5348 = vmatprep.mubr.bf16.mxu0 %v171
    %5349 = vmatmul.mubr.bf16.gmra.mrb[0].mxu0 %v170
    %v5350 = vpop.f32.mrb[0].mxu0
    %v5351 = vadd.f32 %v975, %v5350
    %v5352 = vpop.f32.mrb[0].mxu0
    %v5353 = vadd.f32 %v979, %v5352
    %v5354 = vpop.f32.mrb[0].mxu0
    %v5355 = vpop.f32.mrb[0].mxu0
    %5356 = vdwg.mxu0
    %5357 = vmatprep.subr.bf16.mxu0 %v3355
    %5358 = vmatpush1.bf16.msra.mxu0 %v3354
    %5359 = vmatprep.subr.bf16.mxu0 %v3359
    %5360 = vmatpush1.bf16.msra.mxu0 %v3358
    %5361 = vmatprep.subr.bf16.mxu0 %v3363
    %5362 = vmatpush1.bf16.msra.mxu0 %v3362
    %5363 = vmatprep.subr.bf16.mxu0 %v3367
    %5364 = vmatpush1.bf16.msra.mxu0 %v3366
    %5365 = vmatprep.subr.bf16.mxu0 %v3371
    %5366 = vmatpush1.bf16.msra.mxu0 %v3370
    %5367 = vmatprep.subr.bf16.mxu0 %v3375
    %5368 = vmatpush1.bf16.msra.mxu0 %v3374
    %5369 = vmatprep.subr.bf16.mxu0 %v3379
    %5370 = vmatpush1.bf16.msra.mxu0 %v3378
    %5371 = vmatprep.subr.bf16.mxu0 %v3383
    %5372 = vmatpush1.bf16.msra.mxu0 %v3382
    %5373 = vmatprep.subr.bf16.mxu0 %v3387
    %5374 = vmatpush1.bf16.msra.mxu0 %v3386
    %5375 = vmatprep.subr.bf16.mxu0 %v3391
    %5376 = vmatpush1.bf16.msra.mxu0 %v3390
    %5377 = vmatprep.subr.bf16.mxu0 %v3395
    %5378 = vmatpush1.bf16.msra.mxu0 %v3394
    %5379 = vmatprep.subr.bf16.mxu0 %v3399
    %5380 = vmatpush1.bf16.msra.mxu0 %v3398
    %5381 = vmatprep.subr.bf16.mxu0 %v3403
    %5382 = vmatpush1.bf16.msra.mxu0 %v3402
    %5383 = vmatprep.subr.bf16.mxu0 %v3407
    %5384 = vmatpush1.bf16.msra.mxu0 %v3406
    %5385 = vmatprep.subr.bf16.mxu0 %v3411
    %5386 = vmatpush1.bf16.msra.mxu0 %v3410
    %5387 = vmatprep.subr.bf16.mxu0 %v3415
    %5388 = vmatpush1.bf16.msra.mxu0 %v3414
    %5389 = vmatprep.mubr.bf16.mxu0 %v173
    %5390 = vmatmul.mubr.bf16.gmra.mrb[0].mxu0 %v172
    %v5391 = vpop.f32.mrb[0].mxu0
    %v5392 = vadd.f32 %v5351, %v5391
    %v5393 = vpop.f32.mrb[0].mxu0
    %v5394 = vadd.f32 %v5353, %v5393
    %v5395 = vpop.f32.mrb[0].mxu0
    %v5396 = vpop.f32.mrb[0].mxu0
    %5397 = vdwg.mxu0
    %5398 = vmatprep.subr.bf16.mxu0 %v3419
    %5399 = vmatpush1.bf16.msra.mxu0 %v3418
    %5400 = vmatprep.subr.bf16.mxu0 %v3423
    %5401 = vmatpush1.bf16.msra.mxu0 %v3422
    %5402 = vmatprep.subr.bf16.mxu0 %v3427
    %5403 = vmatpush1.bf16.msra.mxu0 %v3426
    %5404 = vmatprep.subr.bf16.mxu0 %v3431
    %5405 = vmatpush1.bf16.msra.mxu0 %v3430
    %5406 = vmatprep.subr.bf16.mxu0 %v3435
    %5407 = vmatpush1.bf16.msra.mxu0 %v3434
    %5408 = vmatprep.subr.bf16.mxu0 %v3439
    %5409 = vmatpush1.bf16.msra.mxu0 %v3438
    %5410 = vmatprep.subr.bf16.mxu0 %v3443
    %5411 = vmatpush1.bf16.msra.mxu0 %v3442
    %5412 = vmatprep.subr.bf16.mxu0 %v3447
    %5413 = vmatpush1.bf16.msra.mxu0 %v3446
    %5414 = vmatprep.subr.bf16.mxu0 %v3451
    %5415 = vmatpush1.bf16.msra.mxu0 %v3450
    %5416 = vmatprep.subr.bf16.mxu0 %v3455
    %5417 = vmatpush1.bf16.msra.mxu0 %v3454
    %5418 = vmatprep.subr.bf16.mxu0 %v3459
    %5419 = vmatpush1.bf16.msra.mxu0 %v3458
    %5420 = vmatprep.subr.bf16.mxu0 %v3463
    %5421 = vmatpush1.bf16.msra.mxu0 %v3462
    %5422 = vmatprep.subr.bf16.mxu0 %v3467
    %5423 = vmatpush1.bf16.msra.mxu0 %v3466
    %5424 = vmatprep.subr.bf16.mxu0 %v3471
    %5425 = vmatpush1.bf16.msra.mxu0 %v3470
    %5426 = vmatprep.subr.bf16.mxu0 %v3475
    %5427 = vmatpush1.bf16.msra.mxu0 %v3474
    %5428 = vmatprep.subr.bf16.mxu0 %v3479
    %5429 = vmatpush1.bf16.msra.mxu0 %v3478
    %5430 = vmatprep.mubr.bf16.mxu0 %v175
    %5431 = vmatmul.mubr.bf16.gmra.mrb[0].mxu0 %v174
    %v5432 = vpop.f32.mrb[0].mxu0
    %v5433 = vadd.f32 %v5392, %v5432
    %v5434 = vpop.f32.mrb[0].mxu0
    %v5435 = vadd.f32 %v5394, %v5434
    %v5436 = vpop.f32.mrb[0].mxu0
    %v5437 = vpop.f32.mrb[0].mxu0
    %5438 = vdwg.mxu0
    %5439 = vmatprep.subr.bf16.mxu0 %v3483
    %5440 = vmatpush1.bf16.msra.mxu0 %v3482
    %5441 = vmatprep.subr.bf16.mxu0 %v3487
    %5442 = vmatpush1.bf16.msra.mxu0 %v3486
    %5443 = vmatprep.subr.bf16.mxu0 %v3491
    %5444 = vmatpush1.bf16.msra.mxu0 %v3490
    %5445 = vmatprep.subr.bf16.mxu0 %v3495
    %5446 = vmatpush1.bf16.msra.mxu0 %v3494
    %5447 = vmatprep.subr.bf16.mxu0 %v3499
    %5448 = vmatpush1.bf16.msra.mxu0 %v3498
    %5449 = vmatprep.subr.bf16.mxu0 %v3503
    %5450 = vmatpush1.bf16.msra.mxu0 %v3502
    %5451 = vmatprep.subr.bf16.mxu0 %v3507
    %5452 = vmatpush1.bf16.msra.mxu0 %v3506
    %5453 = vmatprep.subr.bf16.mxu0 %v3511
    %5454 = vmatpush1.bf16.msra.mxu0 %v3510
    %5455 = vmatprep.subr.bf16.mxu0 %v3515
    %5456 = vmatpush1.bf16.msra.mxu0 %v3514
    %5457 = vmatprep.subr.bf16.mxu0 %v3519
    %5458 = vmatpush1.bf16.msra.mxu0 %v3518
    %5459 = vmatprep.subr.bf16.mxu0 %v3523
    %5460 = vmatpush1.bf16.msra.mxu0 %v3522
    %5461 = vmatprep.subr.bf16.mxu0 %v3527
    %5462 = vmatpush1.bf16.msra.mxu0 %v3526
    %5463 = vmatprep.subr.bf16.mxu0 %v3531
    %5464 = vmatpush1.bf16.msra.mxu0 %v3530
    %5465 = vmatprep.subr.bf16.mxu0 %v3535
    %5466 = vmatpush1.bf16.msra.mxu0 %v3534
    %5467 = vmatprep.subr.bf16.mxu0 %v3539
    %5468 = vmatpush1.bf16.msra.mxu0 %v3538
    %5469 = vmatprep.subr.bf16.mxu0 %v3543
    %5470 = vmatpush1.bf16.msra.mxu0 %v3542
    %5471 = vmatprep.mubr.bf16.mxu0 %v177
    %5472 = vmatmul.mubr.bf16.gmra.mrb[0].mxu0 %v176
    %v5473 = vpop.f32.mrb[0].mxu0
    %v5474 = vadd.f32 %v5433, %v5473
    %v5475 = vpop.f32.mrb[0].mxu0
    %v5476 = vadd.f32 %v5435, %v5475
    %v5477 = vpop.f32.mrb[0].mxu0
    %v5478 = vpop.f32.mrb[0].mxu0
    %5479 = vdwg.mxu0
    %5480 = vmatprep.subr.bf16.mxu0 %v3547
    %5481 = vmatpush1.bf16.msra.mxu0 %v3546
    %5482 = vmatprep.subr.bf16.mxu0 %v3551
    %5483 = vmatpush1.bf16.msra.mxu0 %v3550
    %5484 = vmatprep.subr.bf16.mxu0 %v3555
    %5485 = vmatpush1.bf16.msra.mxu0 %v3554
    %5486 = vmatprep.subr.bf16.mxu0 %v3559
    %5487 = vmatpush1.bf16.msra.mxu0 %v3558
    %5488 = vmatprep.subr.bf16.mxu0 %v3563
    %5489 = vmatpush1.bf16.msra.mxu0 %v3562
    %5490 = vmatprep.subr.bf16.mxu0 %v3567
    %5491 = vmatpush1.bf16.msra.mxu0 %v3566
    %5492 = vmatprep.subr.bf16.mxu0 %v3571
    %5493 = vmatpush1.bf16.msra.mxu0 %v3570
    %5494 = vmatprep.subr.bf16.mxu0 %v3575
    %5495 = vmatpush1.bf16.msra.mxu0 %v3574
    %5496 = vmatprep.subr.bf16.mxu0 %v3579
    %5497 = vmatpush1.bf16.msra.mxu0 %v3578
    %5498 = vmatprep.subr.bf16.mxu0 %v3583
    %5499 = vmatpush1.bf16.msra.mxu0 %v3582
    %5500 = vmatprep.subr.bf16.mxu0 %v3587
    %5501 = vmatpush1.bf16.msra.mxu0 %v3586
    %5502 = vmatprep.subr.bf16.mxu0 %v3591
    %5503 = vmatpush1.bf16.msra.mxu0 %v3590
    %5504 = vmatprep.subr.bf16.mxu0 %v3595
    %5505 = vmatpush1.bf16.msra.mxu0 %v3594
    %5506 = vmatprep.subr.bf16.mxu0 %v3599
    %5507 = vmatpush1.bf16.msra.mxu0 %v3598
    %5508 = vmatprep.subr.bf16.mxu0 %v3603
    %5509 = vmatpush1.bf16.msra.mxu0 %v3602
    %5510 = vmatprep.subr.bf16.mxu0 %v3607
    %5511 = vmatpush1.bf16.msra.mxu0 %v3606
    %5512 = vmatprep.mubr.bf16.mxu0 %v179
    %5513 = vmatmul.mubr.bf16.gmra.mrb[0].mxu0 %v178
    %v5514 = vpop.f32.mrb[0].mxu0
    %v5515 = vadd.f32 %v5474, %v5514
    %v5516 = vpop.f32.mrb[0].mxu0
    %v5517 = vadd.f32 %v5476, %v5516
    %v5518 = vpop.f32.mrb[0].mxu0
    %v5519 = vpop.f32.mrb[0].mxu0
    %5520 = vdwg.mxu0
    %5521 = vmatprep.subr.bf16.mxu0 %v3611
    %5522 = vmatpush1.bf16.msra.mxu0 %v3610
    %5523 = vmatprep.subr.bf16.mxu0 %v3615
    %5524 = vmatpush1.bf16.msra.mxu0 %v3614
    %5525 = vmatprep.subr.bf16.mxu0 %v3619
    %5526 = vmatpush1.bf16.msra.mxu0 %v3618
    %5527 = vmatprep.subr.bf16.mxu0 %v3623
    %5528 = vmatpush1.bf16.msra.mxu0 %v3622
    %5529 = vmatprep.subr.bf16.mxu0 %v3627
    %5530 = vmatpush1.bf16.msra.mxu0 %v3626
    %5531 = vmatprep.subr.bf16.mxu0 %v3631
    %5532 = vmatpush1.bf16.msra.mxu0 %v3630
    %5533 = vmatprep.subr.bf16.mxu0 %v3635
    %5534 = vmatpush1.bf16.msra.mxu0 %v3634
    %5535 = vmatprep.subr.bf16.mxu0 %v3639
    %5536 = vmatpush1.bf16.msra.mxu0 %v3638
    %5537 = vmatprep.subr.bf16.mxu0 %v3643
    %5538 = vmatpush1.bf16.msra.mxu0 %v3642
    %5539 = vmatprep.subr.bf16.mxu0 %v3647
    %5540 = vmatpush1.bf16.msra.mxu0 %v3646
    %5541 = vmatprep.subr.bf16.mxu0 %v3651
    %5542 = vmatpush1.bf16.msra.mxu0 %v3650
    %5543 = vmatprep.subr.bf16.mxu0 %v3655
    %5544 = vmatpush1.bf16.msra.mxu0 %v3654
    %5545 = vmatprep.subr.bf16.mxu0 %v3659
    %5546 = vmatpush1.bf16.msra.mxu0 %v3658
    %5547 = vmatprep.subr.bf16.mxu0 %v3663
    %5548 = vmatpush1.bf16.msra.mxu0 %v3662
    %5549 = vmatprep.subr.bf16.mxu0 %v3667
    %5550 = vmatpush1.bf16.msra.mxu0 %v3666
    %5551 = vmatprep.subr.bf16.mxu0 %v3671
    %5552 = vmatpush1.bf16.msra.mxu0 %v3670
    %5553 = vmatprep.mubr.bf16.mxu0 %v181
    %5554 = vmatmul.mubr.bf16.gmra.mrb[0].mxu0 %v180
    %v5555 = vpop.f32.mrb[0].mxu0
    %v5556 = vadd.f32 %v5515, %v5555
    %v5557 = vpop.f32.mrb[0].mxu0
    %v5558 = vadd.f32 %v5517, %v5557
    %v5559 = vpop.f32.mrb[0].mxu0
    %v5560 = vpop.f32.mrb[0].mxu0
    %5561 = vdwg.mxu0
    %5562 = vmatprep.subr.bf16.mxu0 %v3675
    %5563 = vmatpush1.bf16.msra.mxu0 %v3674
    %5564 = vmatprep.subr.bf16.mxu0 %v3679
    %5565 = vmatpush1.bf16.msra.mxu0 %v3678
    %5566 = vmatprep.subr.bf16.mxu0 %v3683
    %5567 = vmatpush1.bf16.msra.mxu0 %v3682
    %5568 = vmatprep.subr.bf16.mxu0 %v3687
    %5569 = vmatpush1.bf16.msra.mxu0 %v3686
    %5570 = vmatprep.subr.bf16.mxu0 %v3691
    %5571 = vmatpush1.bf16.msra.mxu0 %v3690
    %5572 = vmatprep.subr.bf16.mxu0 %v3695
    %5573 = vmatpush1.bf16.msra.mxu0 %v3694
    %5574 = vmatprep.subr.bf16.mxu0 %v3699
    %5575 = vmatpush1.bf16.msra.mxu0 %v3698
    %5576 = vmatprep.subr.bf16.mxu0 %v3703
    %5577 = vmatpush1.bf16.msra.mxu0 %v3702
    %5578 = vmatprep.subr.bf16.mxu0 %v3707
    %5579 = vmatpush1.bf16.msra.mxu0 %v3706
    %5580 = vmatprep.subr.bf16.mxu0 %v3711
    %5581 = vmatpush1.bf16.msra.mxu0 %v3710
    %5582 = vmatprep.subr.bf16.mxu0 %v3715
    %5583 = vmatpush1.bf16.msra.mxu0 %v3714
    %5584 = vmatprep.subr.bf16.mxu0 %v3719
    %5585 = vmatpush1.bf16.msra.mxu0 %v3718
    %5586 = vmatprep.subr.bf16.mxu0 %v3723
    %5587 = vmatpush1.bf16.msra.mxu0 %v3722
    %5588 = vmatprep.subr.bf16.mxu0 %v3727
    %5589 = vmatpush1.bf16.msra.mxu0 %v3726
    %5590 = vmatprep.subr.bf16.mxu0 %v3731
    %5591 = vmatpush1.bf16.msra.mxu0 %v3730
    %5592 = vmatprep.subr.bf16.mxu0 %v3735
    %5593 = vmatpush1.bf16.msra.mxu0 %v3734
    %5594 = vmatprep.mubr.bf16.mxu0 %v183
    %5595 = vmatmul.mubr.bf16.gmra.mrb[0].mxu0 %v182
    %v5596 = vpop.f32.mrb[0].mxu0
    %v5597 = vadd.f32 %v5556, %v5596
    %v5598 = vpop.f32.mrb[0].mxu0
    %v5599 = vadd.f32 %v5558, %v5598
    %v5600 = vpop.f32.mrb[0].mxu0
    %v5601 = vpop.f32.mrb[0].mxu0
    %5602 = vdwg.mxu0
    %5603 = vmatprep.subr.bf16.mxu0 %v3739
    %5604 = vmatpush1.bf16.msra.mxu0 %v3738
    %5605 = vmatprep.subr.bf16.mxu0 %v3743
    %5606 = vmatpush1.bf16.msra.mxu0 %v3742
    %5607 = vmatprep.subr.bf16.mxu0 %v3747
    %5608 = vmatpush1.bf16.msra.mxu0 %v3746
    %5609 = vmatprep.subr.bf16.mxu0 %v3751
    %5610 = vmatpush1.bf16.msra.mxu0 %v3750
    %5611 = vmatprep.subr.bf16.mxu0 %v3755
    %5612 = vmatpush1.bf16.msra.mxu0 %v3754
    %5613 = vmatprep.subr.bf16.mxu0 %v3759
    %5614 = vmatpush1.bf16.msra.mxu0 %v3758
    %5615 = vmatprep.subr.bf16.mxu0 %v3763
    %5616 = vmatpush1.bf16.msra.mxu0 %v3762
    %5617 = vmatprep.subr.bf16.mxu0 %v3767
    %5618 = vmatpush1.bf16.msra.mxu0 %v3766
    %5619 = vmatprep.subr.bf16.mxu0 %v3771
    %5620 = vmatpush1.bf16.msra.mxu0 %v3770
    %5621 = vmatprep.subr.bf16.mxu0 %v3775
    %5622 = vmatpush1.bf16.msra.mxu0 %v3774
    %5623 = vmatprep.subr.bf16.mxu0 %v3779
    %5624 = vmatpush1.bf16.msra.mxu0 %v3778
    %5625 = vmatprep.subr.bf16.mxu0 %v3783
    %5626 = vmatpush1.bf16.msra.mxu0 %v3782
    %5627 = vmatprep.subr.bf16.mxu0 %v3787
    %5628 = vmatpush1.bf16.msra.mxu0 %v3786
    %5629 = vmatprep.subr.bf16.mxu0 %v3791
    %5630 = vmatpush1.bf16.msra.mxu0 %v3790
    %5631 = vmatprep.subr.bf16.mxu0 %v3795
    %5632 = vmatpush1.bf16.msra.mxu0 %v3794
    %5633 = vmatprep.subr.bf16.mxu0 %v3799
    %5634 = vmatpush1.bf16.msra.mxu0 %v3798
    %5635 = vmatprep.mubr.bf16.mxu0 %v185
    %5636 = vmatmul.mubr.bf16.gmra.mrb[0].mxu0 %v184
    %v5637 = vpop.f32.mrb[0].mxu0
    %v5638 = vadd.f32 %v5597, %v5637
    %v5639 = vpop.f32.mrb[0].mxu0
    %v5640 = vadd.f32 %v5599, %v5639
    %v5641 = vpop.f32.mrb[0].mxu0
    %v5642 = vpop.f32.mrb[0].mxu0
    %5643 = vdwg.mxu0
    %5644 = vmatprep.subr.bf16.mxu0 %v3803
    %5645 = vmatpush1.bf16.msra.mxu0 %v3802
    %5646 = vmatprep.subr.bf16.mxu0 %v3807
    %5647 = vmatpush1.bf16.msra.mxu0 %v3806
    %5648 = vmatprep.subr.bf16.mxu0 %v3811
    %5649 = vmatpush1.bf16.msra.mxu0 %v3810
    %5650 = vmatprep.subr.bf16.mxu0 %v3815
    %5651 = vmatpush1.bf16.msra.mxu0 %v3814
    %5652 = vmatprep.subr.bf16.mxu0 %v3819
    %5653 = vmatpush1.bf16.msra.mxu0 %v3818
    %5654 = vmatprep.subr.bf16.mxu0 %v3823
    %5655 = vmatpush1.bf16.msra.mxu0 %v3822
    %5656 = vmatprep.subr.bf16.mxu0 %v3827
    %5657 = vmatpush1.bf16.msra.mxu0 %v3826
    %5658 = vmatprep.subr.bf16.mxu0 %v3831
    %5659 = vmatpush1.bf16.msra.mxu0 %v3830
    %5660 = vmatprep.subr.bf16.mxu0 %v3835
    %5661 = vmatpush1.bf16.msra.mxu0 %v3834
    %5662 = vmatprep.subr.bf16.mxu0 %v3839
    %5663 = vmatpush1.bf16.msra.mxu0 %v3838
    %5664 = vmatprep.subr.bf16.mxu0 %v3843
    %5665 = vmatpush1.bf16.msra.mxu0 %v3842
    %5666 = vmatprep.subr.bf16.mxu0 %v3847
    %5667 = vmatpush1.bf16.msra.mxu0 %v3846
    %5668 = vmatprep.subr.bf16.mxu0 %v3851
    %5669 = vmatpush1.bf16.msra.mxu0 %v3850
    %5670 = vmatprep.subr.bf16.mxu0 %v3855
    %5671 = vmatpush1.bf16.msra.mxu0 %v3854
    %5672 = vmatprep.subr.bf16.mxu0 %v3859
    %5673 = vmatpush1.bf16.msra.mxu0 %v3858
    %5674 = vmatprep.subr.bf16.mxu0 %v3863
    %5675 = vmatpush1.bf16.msra.mxu0 %v3862
    %5676 = vmatprep.mubr.bf16.mxu0 %v187
    %5677 = vmatmul.mubr.bf16.gmra.mrb[0].mxu0 %v186
    %v5678 = vpop.f32.mrb[0].mxu0
    %v5679 = vadd.f32 %v5638, %v5678
    %v5680 = vpop.f32.mrb[0].mxu0
    %v5681 = vadd.f32 %v5640, %v5680
    %v5682 = vpop.f32.mrb[0].mxu0
    %v5683 = vpop.f32.mrb[0].mxu0
    %5684 = vdwg.mxu0
    %5685 = vmatprep.subr.bf16.mxu0 %v3867
    %5686 = vmatpush1.bf16.msra.mxu0 %v3866
    %5687 = vmatprep.subr.bf16.mxu0 %v3871
    %5688 = vmatpush1.bf16.msra.mxu0 %v3870
    %5689 = vmatprep.subr.bf16.mxu0 %v3875
    %5690 = vmatpush1.bf16.msra.mxu0 %v3874
    %5691 = vmatprep.subr.bf16.mxu0 %v3879
    %5692 = vmatpush1.bf16.msra.mxu0 %v3878
    %5693 = vmatprep.subr.bf16.mxu0 %v3883
    %5694 = vmatpush1.bf16.msra.mxu0 %v3882
    %5695 = vmatprep.subr.bf16.mxu0 %v3887
    %5696 = vmatpush1.bf16.msra.mxu0 %v3886
    %5697 = vmatprep.subr.bf16.mxu0 %v3891
    %5698 = vmatpush1.bf16.msra.mxu0 %v3890
    %5699 = vmatprep.subr.bf16.mxu0 %v3895
    %5700 = vmatpush1.bf16.msra.mxu0 %v3894
    %5701 = vmatprep.subr.bf16.mxu0 %v3899
    %5702 = vmatpush1.bf16.msra.mxu0 %v3898
    %5703 = vmatprep.subr.bf16.mxu0 %v3903
    %5704 = vmatpush1.bf16.msra.mxu0 %v3902
    %5705 = vmatprep.subr.bf16.mxu0 %v3907
    %5706 = vmatpush1.bf16.msra.mxu0 %v3906
    %5707 = vmatprep.subr.bf16.mxu0 %v3911
    %5708 = vmatpush1.bf16.msra.mxu0 %v3910
    %5709 = vmatprep.subr.bf16.mxu0 %v3915
    %5710 = vmatpush1.bf16.msra.mxu0 %v3914
    %5711 = vmatprep.subr.bf16.mxu0 %v3919
    %5712 = vmatpush1.bf16.msra.mxu0 %v3918
    %5713 = vmatprep.subr.bf16.mxu0 %v3923
    %5714 = vmatpush1.bf16.msra.mxu0 %v3922
    %5715 = vmatprep.subr.bf16.mxu0 %v3927
    %5716 = vmatpush1.bf16.msra.mxu0 %v3926
    %5717 = vmatprep.mubr.bf16.mxu0 %v189
    %5718 = vmatmul.mubr.bf16.gmra.mrb[0].mxu0 %v188
    %v5719 = vpop.f32.mrb[0].mxu0
    %v5720 = vadd.f32 %v5679, %v5719
    %v5721 = vpop.f32.mrb[0].mxu0
    %v5722 = vadd.f32 %v5681, %v5721
    %v5723 = vpop.f32.mrb[0].mxu0
    %v5724 = vpop.f32.mrb[0].mxu0
    %5725 = vdwg.mxu0
    %5726 = vmatprep.subr.bf16.mxu0 %v3931
    %5727 = vmatpush1.bf16.msra.mxu0 %v3930
    %5728 = vmatprep.subr.bf16.mxu0 %v3935
    %5729 = vmatpush1.bf16.msra.mxu0 %v3934
    %5730 = vmatprep.subr.bf16.mxu0 %v3939
    %5731 = vmatpush1.bf16.msra.mxu0 %v3938
    %5732 = vmatprep.subr.bf16.mxu0 %v3943
    %5733 = vmatpush1.bf16.msra.mxu0 %v3942
    %5734 = vmatprep.subr.bf16.mxu0 %v3947
    %5735 = vmatpush1.bf16.msra.mxu0 %v3946
    %5736 = vmatprep.subr.bf16.mxu0 %v3951
    %5737 = vmatpush1.bf16.msra.mxu0 %v3950
    %5738 = vmatprep.subr.bf16.mxu0 %v3955
    %5739 = vmatpush1.bf16.msra.mxu0 %v3954
    %5740 = vmatprep.subr.bf16.mxu0 %v3959
    %5741 = vmatpush1.bf16.msra.mxu0 %v3958
    %5742 = vmatprep.subr.bf16.mxu0 %v3963
    %5743 = vmatpush1.bf16.msra.mxu0 %v3962
    %5744 = vmatprep.subr.bf16.mxu0 %v3967
    %5745 = vmatpush1.bf16.msra.mxu0 %v3966
    %5746 = vmatprep.subr.bf16.mxu0 %v3971
    %5747 = vmatpush1.bf16.msra.mxu0 %v3970
    %5748 = vmatprep.subr.bf16.mxu0 %v3975
    %5749 = vmatpush1.bf16.msra.mxu0 %v3974
    %5750 = vmatprep.subr.bf16.mxu0 %v3979
    %5751 = vmatpush1.bf16.msra.mxu0 %v3978
    %5752 = vmatprep.subr.bf16.mxu0 %v3983
    %5753 = vmatpush1.bf16.msra.mxu0 %v3982
    %5754 = vmatprep.subr.bf16.mxu0 %v3987
    %5755 = vmatpush1.bf16.msra.mxu0 %v3986
    %5756 = vmatprep.subr.bf16.mxu0 %v3991
    %5757 = vmatpush1.bf16.msra.mxu0 %v3990
    %5758 = vmatprep.mubr.bf16.mxu0 %v191
    %5759 = vmatmul.mubr.bf16.gmra.mrb[0].mxu0 %v190
    %v5760 = vpop.f32.mrb[0].mxu0
    %v5761 = vadd.f32 %v5720, %v5760
    %v5762 = vpop.f32.mrb[0].mxu0
    %v5763 = vadd.f32 %v5722, %v5762
    %v5764 = vpop.f32.mrb[0].mxu0
    %v5765 = vpop.f32.mrb[0].mxu0
    %5766 = vdwg.mxu0
    %5767 = vmatprep.subr.bf16.mxu0 %v3995
    %5768 = vmatpush1.bf16.msra.mxu0 %v3994
    %5769 = vmatprep.subr.bf16.mxu0 %v3999
    %5770 = vmatpush1.bf16.msra.mxu0 %v3998
    %5771 = vmatprep.subr.bf16.mxu0 %v4003
    %5772 = vmatpush1.bf16.msra.mxu0 %v4002
    %5773 = vmatprep.subr.bf16.mxu0 %v4007
    %5774 = vmatpush1.bf16.msra.mxu0 %v4006
    %5775 = vmatprep.subr.bf16.mxu0 %v4011
    %5776 = vmatpush1.bf16.msra.mxu0 %v4010
    %5777 = vmatprep.subr.bf16.mxu0 %v4015
    %5778 = vmatpush1.bf16.msra.mxu0 %v4014
    %5779 = vmatprep.subr.bf16.mxu0 %v4019
    %5780 = vmatpush1.bf16.msra.mxu0 %v4018
    %5781 = vmatprep.subr.bf16.mxu0 %v4023
    %5782 = vmatpush1.bf16.msra.mxu0 %v4022
    %5783 = vmatprep.subr.bf16.mxu0 %v4027
    %5784 = vmatpush1.bf16.msra.mxu0 %v4026
    %5785 = vmatprep.subr.bf16.mxu0 %v4031
    %5786 = vmatpush1.bf16.msra.mxu0 %v4030
    %5787 = vmatprep.subr.bf16.mxu0 %v4035
    %5788 = vmatpush1.bf16.msra.mxu0 %v4034
    %5789 = vmatprep.subr.bf16.mxu0 %v4039
    %5790 = vmatpush1.bf16.msra.mxu0 %v4038
    %5791 = vmatprep.subr.bf16.mxu0 %v4043
    %5792 = vmatpush1.bf16.msra.mxu0 %v4042
    %5793 = vmatprep.subr.bf16.mxu0 %v4047
    %5794 = vmatpush1.bf16.msra.mxu0 %v4046
    %5795 = vmatprep.subr.bf16.mxu0 %v4051
    %5796 = vmatpush1.bf16.msra.mxu0 %v4050
    %5797 = vmatprep.subr.bf16.mxu0 %v4055
    %5798 = vmatpush1.bf16.msra.mxu0 %v4054
    %5799 = vmatprep.mubr.bf16.mxu0 %v193
    %5800 = vmatmul.mubr.bf16.gmra.mrb[0].mxu0 %v192
    %v5801 = vpop.f32.mrb[0].mxu0
    %v5802 = vadd.f32 %v5761, %v5801
    %v5803 = vpop.f32.mrb[0].mxu0
    %v5804 = vadd.f32 %v5763, %v5803
    %v5805 = vpop.f32.mrb[0].mxu0
    %v5806 = vpop.f32.mrb[0].mxu0
    %5807 = vdwg.mxu0
    %v5808 = vmax.f32 %v5310, 0.0
    %v5809 = vmax.f32 %v5312, 0.0
    %v5810 = vmax.f32 %v5802, 0.0
    %v5811 = vmax.f32 %v5804, 0.0
    %v5812 = vpack.c.bf16 %v5808, %v5808
    %v5813 = vpack.c.bf16 %v5809, %v5809
    %v5814 = vpack.c.bf16 %v5810, %v5810
    %v5815 = vpack.c.bf16 %v5811, %v5811
    %v5816 = vld [vmem:[#allocation8] sm:$0xf]
    %v5817 = vld [vmem:[#allocation8 + $0x4] sm:$0xf]
    %v5818 = vld [vmem:[#allocation8 + $0x8] sm:$0xf]
    %v5819 = vld [vmem:[#allocation8 + $0xc] sm:$0xf]
    %v5820 = vld [vmem:[#allocation8 + $0x10] sm:$0xf]
    %v5821 = vld [vmem:[#allocation8 + $0x14] sm:$0xf]
    %v5822 = vld [vmem:[#allocation8 + $0x18] sm:$0xf]
    %v5823 = vld [vmem:[#allocation8 + $0x1c] sm:$0xf]
    %v5824 = vld [vmem:[#allocation8 + $0x20] sm:$0xf]
    %v5825 = vld [vmem:[#allocation8 + $0x24] sm:$0xf]
    %v5826 = vld [vmem:[#allocation8 + $0x28] sm:$0xf]
    %v5827 = vld [vmem:[#allocation8 + $0x2c] sm:$0xf]
    %v5828 = vld [vmem:[#allocation8 + $0x30] sm:$0xf]
    %v5829 = vld [vmem:[#allocation8 + $0x34] sm:$0xf]
    %v5830 = vld [vmem:[#allocation8 + $0x38] sm:$0xf]
    %v5831 = vld [vmem:[#allocation8 + $0x3c] sm:$0xf]
    %v5832 = vld [vmem:[#allocation8 + $0x40] sm:$0xf]
    %v5833 = vld [vmem:[#allocation8 + $0x44] sm:$0xf]
    %v5834 = vld [vmem:[#allocation8 + $0x48] sm:$0xf]
    %v5835 = vld [vmem:[#allocation8 + $0x4c] sm:$0xf]
    %v5836 = vld [vmem:[#allocation8 + $0x50] sm:$0xf]
    %v5837 = vld [vmem:[#allocation8 + $0x54] sm:$0xf]
    %v5838 = vld [vmem:[#allocation8 + $0x58] sm:$0xf]
    %v5839 = vld [vmem:[#allocation8 + $0x5c] sm:$0xf]
    %v5840 = vld [vmem:[#allocation8 + $0x60] sm:$0xf]
    %v5841 = vld [vmem:[#allocation8 + $0x64] sm:$0xf]
    %v5842 = vld [vmem:[#allocation8 + $0x68] sm:$0xf]
    %v5843 = vld [vmem:[#allocation8 + $0x6c] sm:$0xf]
    %v5844 = vld [vmem:[#allocation8 + $0x70] sm:$0xf]
    %v5845 = vld [vmem:[#allocation8 + $0x74] sm:$0xf]
    %v5846 = vld [vmem:[#allocation8 + $0x78] sm:$0xf]
    %v5847 = vld [vmem:[#allocation8 + $0x7c] sm:$0xf]
    %v5848 = vld [vmem:[#allocation8 + $0x80] sm:$0xf]
    %v5849 = vld [vmem:[#allocation8 + $0x84] sm:$0xf]
    %v5850 = vld [vmem:[#allocation8 + $0x88] sm:$0xf]
    %v5851 = vld [vmem:[#allocation8 + $0x8c] sm:$0xf]
    %v5852 = vld [vmem:[#allocation8 + $0x90] sm:$0xf]
    %v5853 = vld [vmem:[#allocation8 + $0x94] sm:$0xf]
    %v5854 = vld [vmem:[#allocation8 + $0x98] sm:$0xf]
    %v5855 = vld [vmem:[#allocation8 + $0x9c] sm:$0xf]
    %v5856 = vld [vmem:[#allocation8 + $0xa0] sm:$0xf]
    %v5857 = vld [vmem:[#allocation8 + $0xa4] sm:$0xf]
    %v5858 = vld [vmem:[#allocation8 + $0xa8] sm:$0xf]
    %v5859 = vld [vmem:[#allocation8 + $0xac] sm:$0xf]
    %v5860 = vld [vmem:[#allocation8 + $0xb0] sm:$0xf]
    %v5861 = vld [vmem:[#allocation8 + $0xb4] sm:$0xf]
    %v5862 = vld [vmem:[#allocation8 + $0xb8] sm:$0xf]
    %v5863 = vld [vmem:[#allocation8 + $0xbc] sm:$0xf]
    %v5864 = vld [vmem:[#allocation8 + $0xc0] sm:$0xf]
    %v5865 = vld [vmem:[#allocation8 + $0xc4] sm:$0xf]
    %v5866 = vld [vmem:[#allocation8 + $0xc8] sm:$0xf]
    %v5867 = vld [vmem:[#allocation8 + $0xcc] sm:$0xf]
    %v5868 = vld [vmem:[#allocation8 + $0xd0] sm:$0xf]
    %v5869 = vld [vmem:[#allocation8 + $0xd4] sm:$0xf]
    %v5870 = vld [vmem:[#allocation8 + $0xd8] sm:$0xf]
    %v5871 = vld [vmem:[#allocation8 + $0xdc] sm:$0xf]
    %v5872 = vld [vmem:[#allocation8 + $0xe0] sm:$0xf]
    %v5873 = vld [vmem:[#allocation8 + $0xe4] sm:$0xf]
    %v5874 = vld [vmem:[#allocation8 + $0xe8] sm:$0xf]
    %v5875 = vld [vmem:[#allocation8 + $0xec] sm:$0xf]
    %v5876 = vld [vmem:[#allocation8 + $0xf0] sm:$0xf]
    %v5877 = vld [vmem:[#allocation8 + $0xf4] sm:$0xf]
    %v5878 = vld [vmem:[#allocation8 + $0xf8] sm:$0xf]
    %v5879 = vld [vmem:[#allocation8 + $0xfc] sm:$0xf]
    %v5880 = vld [vmem:[#allocation10] sm:$0x1]
    %v5882 = vlaneseq
    %v5883 = vshrl.u32 %v5882, 7
    %v5884 = vsub.s32 0, %v5883
    %v5885 = vrot.slane %v5880, %v5884
    %v5951 = vunpack.c.l.b16 %v5816
    %v5952 = vunpack.c.l.b16 %v5817
    %v5953 = vunpack.c.l.b16 %v5818
    %v5954 = vunpack.c.l.b16 %v5819
    %v5955 = vunpack.c.l.b16 %v5820
    %v5956 = vunpack.c.l.b16 %v5821
    %v5957 = vunpack.c.l.b16 %v5822
    %v5958 = vunpack.c.l.b16 %v5823
    %v5959 = vunpack.c.l.b16 %v5824
    %v5960 = vunpack.c.l.b16 %v5825
    %v5961 = vunpack.c.l.b16 %v5826
    %v5962 = vunpack.c.l.b16 %v5827
    %v5963 = vunpack.c.l.b16 %v5828
    %v5964 = vunpack.c.l.b16 %v5829
    %v5965 = vunpack.c.l.b16 %v5830
    %v5966 = vunpack.c.l.b16 %v5831
    %v5967 = vunpack.c.l.b16 %v5832
    %v5968 = vunpack.c.l.b16 %v5833
    %v5969 = vunpack.c.l.b16 %v5834
    %v5970 = vunpack.c.l.b16 %v5835
    %v5971 = vunpack.c.l.b16 %v5836
    %v5972 = vunpack.c.l.b16 %v5837
    %v5973 = vunpack.c.l.b16 %v5838
    %v5974 = vunpack.c.l.b16 %v5839
    %v5975 = vunpack.c.l.b16 %v5840
    %v5976 = vunpack.c.l.b16 %v5841
    %v5977 = vunpack.c.l.b16 %v5842
    %v5978 = vunpack.c.l.b16 %v5843
    %v5979 = vunpack.c.l.b16 %v5844
    %v5980 = vunpack.c.l.b16 %v5845
    %v5981 = vunpack.c.l.b16 %v5846
    %v5982 = vunpack.c.l.b16 %v5847
    %v5983 = vunpack.c.l.b16 %v5848
    %v5984 = vunpack.c.l.b16 %v5849
    %v5985 = vunpack.c.l.b16 %v5850
    %v5986 = vunpack.c.l.b16 %v5851
    %v5987 = vunpack.c.l.b16 %v5852
    %v5988 = vunpack.c.l.b16 %v5853
    %v5989 = vunpack.c.l.b16 %v5854
    %v5990 = vunpack.c.l.b16 %v5855
    %v5991 = vunpack.c.l.b16 %v5856
    %v5992 = vunpack.c.l.b16 %v5857
    %v5993 = vunpack.c.l.b16 %v5858
    %v5994 = vunpack.c.l.b16 %v5859
    %v5995 = vunpack.c.l.b16 %v5860
    %v5996 = vunpack.c.l.b16 %v5861
    %v5997 = vunpack.c.l.b16 %v5862
    %v5998 = vunpack.c.l.b16 %v5863
    %v5999 = vunpack.c.l.b16 %v5864
    %v6000 = vunpack.c.l.b16 %v5865
    %v6001 = vunpack.c.l.b16 %v5866
    %v6002 = vunpack.c.l.b16 %v5867
    %v6003 = vunpack.c.l.b16 %v5868
    %v6004 = vunpack.c.l.b16 %v5869
    %v6005 = vunpack.c.l.b16 %v5870
    %v6006 = vunpack.c.l.b16 %v5871
    %v6007 = vunpack.c.l.b16 %v5872
    %v6008 = vunpack.c.l.b16 %v5873
    %v6009 = vunpack.c.l.b16 %v5874
    %v6010 = vunpack.c.l.b16 %v5875
    %v6011 = vunpack.c.l.b16 %v5876
    %v6012 = vunpack.c.l.b16 %v5877
    %v6013 = vunpack.c.l.b16 %v5878
    %v6014 = vunpack.c.l.b16 %v5879
    %v6015 = vpack.c.b16 %v5952, %v5951
    %v6016 = vpack.c.b16 %v5954, %v5953
    %v6017 = vpack.c.b16 %v5956, %v5955
    %v6018 = vpack.c.b16 %v5958, %v5957
    %v6019 = vpack.c.b16 %v5960, %v5959
    %v6020 = vpack.c.b16 %v5962, %v5961
    %v6021 = vpack.c.b16 %v5964, %v5963
    %v6022 = vpack.c.b16 %v5966, %v5965
    %v6023 = vpack.c.b16 %v5968, %v5967
    %v6024 = vpack.c.b16 %v5970, %v5969
    %v6025 = vpack.c.b16 %v5972, %v5971
    %v6026 = vpack.c.b16 %v5974, %v5973
    %v6027 = vpack.c.b16 %v5976, %v5975
    %v6028 = vpack.c.b16 %v5978, %v5977
    %v6029 = vpack.c.b16 %v5980, %v5979
    %v6030 = vpack.c.b16 %v5982, %v5981
    %v6031 = vpack.c.b16 %v5984, %v5983
    %v6032 = vpack.c.b16 %v5986, %v5985
    %v6033 = vpack.c.b16 %v5988, %v5987
    %v6034 = vpack.c.b16 %v5990, %v5989
    %v6035 = vpack.c.b16 %v5992, %v5991
    %v6036 = vpack.c.b16 %v5994, %v5993
    %v6037 = vpack.c.b16 %v5996, %v5995
    %v6038 = vpack.c.b16 %v5998, %v5997
    %v6039 = vpack.c.b16 %v6000, %v5999
    %v6040 = vpack.c.b16 %v6002, %v6001
    %v6041 = vpack.c.b16 %v6004, %v6003
    %v6042 = vpack.c.b16 %v6006, %v6005
    %v6043 = vpack.c.b16 %v6008, %v6007
    %v6044 = vpack.c.b16 %v6010, %v6009
    %v6045 = vpack.c.b16 %v6012, %v6011
    %v6046 = vpack.c.b16 %v6014, %v6013
    %6079 = vmatprep.subr.bf16.mxu0 0
    %6080 = vmatpush1.bf16.msra.mxu0 %v6015
    %6081 = vmatprep.subr.bf16.mxu0 0
    %6082 = vmatpush1.bf16.msra.mxu0 %v6016
    %6083 = vmatprep.subr.bf16.mxu0 0
    %6084 = vmatpush1.bf16.msra.mxu0 %v6017
    %6085 = vmatprep.subr.bf16.mxu0 0
    %6086 = vmatpush1.bf16.msra.mxu0 %v6018
    %6087 = vmatprep.subr.bf16.mxu0 0
    %6088 = vmatpush1.bf16.msra.mxu0 %v6019
    %6089 = vmatprep.subr.bf16.mxu0 0
    %6090 = vmatpush1.bf16.msra.mxu0 %v6020
    %6091 = vmatprep.subr.bf16.mxu0 0
    %6092 = vmatpush1.bf16.msra.mxu0 %v6021
    %6093 = vmatprep.subr.bf16.mxu0 0
    %6094 = vmatpush1.bf16.msra.mxu0 %v6022
    %6095 = vmatprep.subr.bf16.mxu0 0
    %6096 = vmatpush1.bf16.msra.mxu0 %v6023
    %6097 = vmatprep.subr.bf16.mxu0 0
    %6098 = vmatpush1.bf16.msra.mxu0 %v6024
    %6099 = vmatprep.subr.bf16.mxu0 0
    %6100 = vmatpush1.bf16.msra.mxu0 %v6025
    %6101 = vmatprep.subr.bf16.mxu0 0
    %6102 = vmatpush1.bf16.msra.mxu0 %v6026
    %6103 = vmatprep.subr.bf16.mxu0 0
    %6104 = vmatpush1.bf16.msra.mxu0 %v6027
    %6105 = vmatprep.subr.bf16.mxu0 0
    %6106 = vmatpush1.bf16.msra.mxu0 %v6028
    %6107 = vmatprep.subr.bf16.mxu0 0
    %6108 = vmatpush1.bf16.msra.mxu0 %v6029
    %6109 = vmatprep.subr.bf16.mxu0 0
    %6110 = vmatpush1.bf16.msra.mxu0 %v6030
    %6111 = vmatprep.mubr.bf16.mxu0 %v5813
    %6112 = vmatmul.mubr.bf16.gmra.mrb[0].mxu0 %v5812
    %v6113 = vpop.f32.mrb[0].mxu0
    %v6114 = vadd.f32 %v5885, %v6113
    %v6115 = vpop.f32.mrb[0].mxu0
    %v6116 = vpop.f32.mrb[0].mxu0
    %v6117 = vpop.f32.mrb[0].mxu0
    %6118 = vdwg.mxu0
    %6119 = vmatprep.subr.bf16.mxu0 0
    %6120 = vmatpush1.bf16.msra.mxu0 %v6031
    %6121 = vmatprep.subr.bf16.mxu0 0
    %6122 = vmatpush1.bf16.msra.mxu0 %v6032
    %6123 = vmatprep.subr.bf16.mxu0 0
    %6124 = vmatpush1.bf16.msra.mxu0 %v6033
    %6125 = vmatprep.subr.bf16.mxu0 0
    %6126 = vmatpush1.bf16.msra.mxu0 %v6034
    %6127 = vmatprep.subr.bf16.mxu0 0
    %6128 = vmatpush1.bf16.msra.mxu0 %v6035
    %6129 = vmatprep.subr.bf16.mxu0 0
    %6130 = vmatpush1.bf16.msra.mxu0 %v6036
    %6131 = vmatprep.subr.bf16.mxu0 0
    %6132 = vmatpush1.bf16.msra.mxu0 %v6037
    %6133 = vmatprep.subr.bf16.mxu0 0
    %6134 = vmatpush1.bf16.msra.mxu0 %v6038
    %6135 = vmatprep.subr.bf16.mxu0 0
    %6136 = vmatpush1.bf16.msra.mxu0 %v6039
    %6137 = vmatprep.subr.bf16.mxu0 0
    %6138 = vmatpush1.bf16.msra.mxu0 %v6040
    %6139 = vmatprep.subr.bf16.mxu0 0
    %6140 = vmatpush1.bf16.msra.mxu0 %v6041
    %6141 = vmatprep.subr.bf16.mxu0 0
    %6142 = vmatpush1.bf16.msra.mxu0 %v6042
    %6143 = vmatprep.subr.bf16.mxu0 0
    %6144 = vmatpush1.bf16.msra.mxu0 %v6043
    %6145 = vmatprep.subr.bf16.mxu0 0
    %6146 = vmatpush1.bf16.msra.mxu0 %v6044
    %6147 = vmatprep.subr.bf16.mxu0 0
    %6148 = vmatpush1.bf16.msra.mxu0 %v6045
    %6149 = vmatprep.subr.bf16.mxu0 0
    %6150 = vmatpush1.bf16.msra.mxu0 %v6046
    %6151 = vmatprep.mubr.bf16.mxu0 %v5815
    %6152 = vmatmul.mubr.bf16.gmra.mrb[0].mxu0 %v5814
    %v6153 = vpop.f32.mrb[0].mxu0
    %v6154 = vadd.f32 %v6114, %v6153
    %v6155 = vpop.f32.mrb[0].mxu0
    %v6156 = vpop.f32.mrb[0].mxu0
    %v6157 = vpop.f32.mrb[0].mxu0
    %6158 = vdwg.mxu0
    %v6159 = vpack.c.bf16 %v6154, %v6154
    %v6160 = vld [vmem:[#allocation11] sm:$0xff]
    %v6161 = vld [vmem:[#allocation11 + $0x8] sm:$0xff]
    %v6162 = vld [vmem:[#allocation11 + $0x10] sm:$0xff]
    %v6163 = vld [vmem:[#allocation11 + $0x18] sm:$0xff]
    %v6164 = vld [vmem:[#allocation11 + $0x20] sm:$0xff]
    %v6165 = vld [vmem:[#allocation11 + $0x28] sm:$0xff]
    %v6166 = vld [vmem:[#allocation11 + $0x30] sm:$0xff]
    %v6167 = vld [vmem:[#allocation11 + $0x38] sm:$0xff]
    %v6168 = vld [vmem:[#allocation11 + $0x40] sm:$0xff]
    %v6169 = vld [vmem:[#allocation11 + $0x48] sm:$0xff]
    %v6170 = vld [vmem:[#allocation11 + $0x50] sm:$0xff]
    %v6171 = vld [vmem:[#allocation11 + $0x58] sm:$0xff]
    %v6172 = vld [vmem:[#allocation11 + $0x60] sm:$0xff]
    %v6173 = vld [vmem:[#allocation11 + $0x68] sm:$0xff]
    %v6174 = vld [vmem:[#allocation11 + $0x70] sm:$0xff]
    %v6175 = vld [vmem:[#allocation11 + $0x78] sm:$0xff]
    %v6176 = vld [vmem:[#allocation11 + $0x80] sm:$0xff]
    %v6177 = vld [vmem:[#allocation11 + $0x88] sm:$0xff]
    %v6178 = vld [vmem:[#allocation11 + $0x90] sm:$0xff]
    %v6179 = vld [vmem:[#allocation11 + $0x98] sm:$0xff]
    %v6180 = vld [vmem:[#allocation11 + $0xa0] sm:$0xff]
    %v6181 = vld [vmem:[#allocation11 + $0xa8] sm:$0xff]
    %v6182 = vld [vmem:[#allocation11 + $0xb0] sm:$0xff]
    %v6183 = vld [vmem:[#allocation11 + $0xb8] sm:$0xff]
    %v6184 = vld [vmem:[#allocation11 + $0xc0] sm:$0xff]
    %v6185 = vld [vmem:[#allocation11 + $0xc8] sm:$0xff]
    %v6186 = vld [vmem:[#allocation11 + $0xd0] sm:$0xff]
    %v6187 = vld [vmem:[#allocation11 + $0xd8] sm:$0xff]
    %v6188 = vld [vmem:[#allocation11 + $0xe0] sm:$0xff]
    %v6189 = vld [vmem:[#allocation11 + $0xe8] sm:$0xff]
    %v6190 = vld [vmem:[#allocation11 + $0xf0] sm:$0xff]
    %v6191 = vld [vmem:[#allocation11 + $0xf8] sm:$0xff]
    %v6192 = vld [vmem:[#allocation13] sm:$0xf]
    %v6194 = vlaneseq
    %v6195 = vshrl.u32 %v6194, 7
    %v6196 = vsub.s32 0, %v6195
    %v6197 = vrot.slane %v6192, %v6196
    %v6198 = vlaneseq
    %v6199 = vshrl.u32 %v6198, 7
    %v6200 = vsub.s32 1, %v6199
    %v6201 = vrot.slane %v6192, %v6200
    %v6202 = vlaneseq
    %v6203 = vshrl.u32 %v6202, 7
    %v6204 = vsub.s32 2, %v6203
    %v6205 = vrot.slane %v6192, %v6204
    %v6206 = vlaneseq
    %v6207 = vshrl.u32 %v6206, 7
    %v6208 = vsub.s32 3, %v6207
    %v6209 = vrot.slane %v6192, %v6208
    %v6246 = vunpack.c.l.b16 %v6160
    %v6247 = vunpack.c.h.b16 %v6160
    %v6248 = vunpack.c.l.b16 %v6161
    %v6249 = vunpack.c.h.b16 %v6161
    %v6250 = vunpack.c.l.b16 %v6162
    %v6251 = vunpack.c.h.b16 %v6162
    %v6252 = vunpack.c.l.b16 %v6163
    %v6253 = vunpack.c.h.b16 %v6163
    %v6254 = vunpack.c.l.b16 %v6164
    %v6255 = vunpack.c.h.b16 %v6164
    %v6256 = vunpack.c.l.b16 %v6165
    %v6257 = vunpack.c.h.b16 %v6165
    %v6258 = vunpack.c.l.b16 %v6166
    %v6259 = vunpack.c.h.b16 %v6166
    %v6260 = vunpack.c.l.b16 %v6167
    %v6261 = vunpack.c.h.b16 %v6167
    %v6262 = vunpack.c.l.b16 %v6168
    %v6263 = vunpack.c.h.b16 %v6168
    %v6264 = vunpack.c.l.b16 %v6169
    %v6265 = vunpack.c.h.b16 %v6169
    %v6266 = vunpack.c.l.b16 %v6170
    %v6267 = vunpack.c.h.b16 %v6170
    %v6268 = vunpack.c.l.b16 %v6171
    %v6269 = vunpack.c.h.b16 %v6171
    %v6270 = vunpack.c.l.b16 %v6172
    %v6271 = vunpack.c.h.b16 %v6172
    %v6272 = vunpack.c.l.b16 %v6173
    %v6273 = vunpack.c.h.b16 %v6173
    %v6274 = vunpack.c.l.b16 %v6174
    %v6275 = vunpack.c.h.b16 %v6174
    %v6276 = vunpack.c.l.b16 %v6175
    %v6277 = vunpack.c.h.b16 %v6175
    %v6278 = vunpack.c.l.b16 %v6176
    %v6279 = vunpack.c.h.b16 %v6176
    %v6280 = vunpack.c.l.b16 %v6177
    %v6281 = vunpack.c.h.b16 %v6177
    %v6282 = vunpack.c.l.b16 %v6178
    %v6283 = vunpack.c.h.b16 %v6178
    %v6284 = vunpack.c.l.b16 %v6179
    %v6285 = vunpack.c.h.b16 %v6179
    %v6286 = vunpack.c.l.b16 %v6180
    %v6287 = vunpack.c.h.b16 %v6180
    %v6288 = vunpack.c.l.b16 %v6181
    %v6289 = vunpack.c.h.b16 %v6181
    %v6290 = vunpack.c.l.b16 %v6182
    %v6291 = vunpack.c.h.b16 %v6182
    %v6292 = vunpack.c.l.b16 %v6183
    %v6293 = vunpack.c.h.b16 %v6183
    %v6294 = vunpack.c.l.b16 %v6184
    %v6295 = vunpack.c.h.b16 %v6184
    %v6296 = vunpack.c.l.b16 %v6185
    %v6297 = vunpack.c.h.b16 %v6185
    %v6298 = vunpack.c.l.b16 %v6186
    %v6299 = vunpack.c.h.b16 %v6186
    %v6300 = vunpack.c.l.b16 %v6187
    %v6301 = vunpack.c.h.b16 %v6187
    %v6302 = vunpack.c.l.b16 %v6188
    %v6303 = vunpack.c.h.b16 %v6188
    %v6304 = vunpack.c.l.b16 %v6189
    %v6305 = vunpack.c.h.b16 %v6189
    %v6306 = vunpack.c.l.b16 %v6190
    %v6307 = vunpack.c.h.b16 %v6190
    %v6308 = vunpack.c.l.b16 %v6191
    %v6309 = vunpack.c.h.b16 %v6191
    %v6310 = vpack.c.b16 %v6250, %v6246
    %v6311 = vpack.c.b16 %v6251, %v6247
    %v6312 = vpack.c.b16 %v6252, %v6248
    %v6313 = vpack.c.b16 %v6253, %v6249
    %v6314 = vpack.c.b16 %v6258, %v6254
    %v6315 = vpack.c.b16 %v6259, %v6255
    %v6316 = vpack.c.b16 %v6260, %v6256
    %v6317 = vpack.c.b16 %v6261, %v6257
    %v6318 = vpack.c.b16 %v6266, %v6262
    %v6319 = vpack.c.b16 %v6267, %v6263
    %v6320 = vpack.c.b16 %v6268, %v6264
    %v6321 = vpack.c.b16 %v6269, %v6265
    %v6322 = vpack.c.b16 %v6274, %v6270
    %v6323 = vpack.c.b16 %v6275, %v6271
    %v6324 = vpack.c.b16 %v6276, %v6272
    %v6325 = vpack.c.b16 %v6277, %v6273
    %v6326 = vpack.c.b16 %v6282, %v6278
    %v6327 = vpack.c.b16 %v6283, %v6279
    %v6328 = vpack.c.b16 %v6284, %v6280
    %v6329 = vpack.c.b16 %v6285, %v6281
    %v6330 = vpack.c.b16 %v6290, %v6286
    %v6331 = vpack.c.b16 %v6291, %v6287
    %v6332 = vpack.c.b16 %v6292, %v6288
    %v6333 = vpack.c.b16 %v6293, %v6289
    %v6334 = vpack.c.b16 %v6298, %v6294
    %v6335 = vpack.c.b16 %v6299, %v6295
    %v6336 = vpack.c.b16 %v6300, %v6296
    %v6337 = vpack.c.b16 %v6301, %v6297
    %v6338 = vpack.c.b16 %v6306, %v6302
    %v6339 = vpack.c.b16 %v6307, %v6303
    %v6340 = vpack.c.b16 %v6308, %v6304
    %v6341 = vpack.c.b16 %v6309, %v6305
    %6374 = vmatprep.subr.bf16.mxu0 %v6311
    %6375 = vmatpush1.bf16.msra.mxu0 %v6310
    %6376 = vmatprep.subr.bf16.mxu0 %v6315
    %6377 = vmatpush1.bf16.msra.mxu0 %v6314
    %6378 = vmatprep.subr.bf16.mxu0 %v6319
    %6379 = vmatpush1.bf16.msra.mxu0 %v6318
    %6380 = vmatprep.subr.bf16.mxu0 %v6323
    %6381 = vmatpush1.bf16.msra.mxu0 %v6322
    %6382 = vmatprep.subr.bf16.mxu0 %v6327
    %6383 = vmatpush1.bf16.msra.mxu0 %v6326
    %6384 = vmatprep.subr.bf16.mxu0 %v6331
    %6385 = vmatpush1.bf16.msra.mxu0 %v6330
    %6386 = vmatprep.subr.bf16.mxu0 %v6335
    %6387 = vmatpush1.bf16.msra.mxu0 %v6334
    %6388 = vmatprep.subr.bf16.mxu0 %v6339
    %6389 = vmatpush1.bf16.msra.mxu0 %v6338
    %6390 = vmatprep.subr.bf16.mxu0 0
    %6391 = vmatpush1.bf16.msra.mxu0 0
    %6392 = vmatprep.subr.bf16.mxu0 0
    %6393 = vmatpush1.bf16.msra.mxu0 0
    %6394 = vmatprep.subr.bf16.mxu0 0
    %6395 = vmatpush1.bf16.msra.mxu0 0
    %6396 = vmatprep.subr.bf16.mxu0 0
    %6397 = vmatpush1.bf16.msra.mxu0 0
    %6398 = vmatprep.subr.bf16.mxu0 0
    %6399 = vmatpush1.bf16.msra.mxu0 0
    %6400 = vmatprep.subr.bf16.mxu0 0
    %6401 = vmatpush1.bf16.msra.mxu0 0
    %6402 = vmatprep.subr.bf16.mxu0 0
    %6403 = vmatpush1.bf16.msra.mxu0 0
    %6404 = vmatprep.subr.bf16.mxu0 0
    %6405 = vmatpush1.bf16.msra.mxu0 0
    %6406 = vmatprep.mubr.bf16.mxu0 0
    %6407 = vmatmul.mubr.bf16.gmra.mrb[0].mxu0 %v6159
    %v6408 = vpop.f32.mrb[0].mxu0
    %v6409 = vadd.f32 %v6197, %v6408
    %v6410 = vpop.f32.mrb[0].mxu0
    %v6411 = vadd.f32 %v6201, %v6410
    %v6412 = vpop.f32.mrb[0].mxu0
    %v6413 = vpop.f32.mrb[0].mxu0
    %6414 = vdwg.mxu0
    %6415 = vmatprep.subr.bf16.mxu0 %v6313
    %6416 = vmatpush1.bf16.msra.mxu0 %v6312
    %6417 = vmatprep.subr.bf16.mxu0 %v6317
    %6418 = vmatpush1.bf16.msra.mxu0 %v6316
    %6419 = vmatprep.subr.bf16.mxu0 %v6321
    %6420 = vmatpush1.bf16.msra.mxu0 %v6320
    %6421 = vmatprep.subr.bf16.mxu0 %v6325
    %6422 = vmatpush1.bf16.msra.mxu0 %v6324
    %6423 = vmatprep.subr.bf16.mxu0 %v6329
    %6424 = vmatpush1.bf16.msra.mxu0 %v6328
    %6425 = vmatprep.subr.bf16.mxu0 %v6333
    %6426 = vmatpush1.bf16.msra.mxu0 %v6332
    %6427 = vmatprep.subr.bf16.mxu0 %v6337
    %6428 = vmatpush1.bf16.msra.mxu0 %v6336
    %6429 = vmatprep.subr.bf16.mxu0 %v6341
    %6430 = vmatpush1.bf16.msra.mxu0 %v6340
    %6431 = vmatprep.subr.bf16.mxu0 0
    %6432 = vmatpush1.bf16.msra.mxu0 0
    %6433 = vmatprep.subr.bf16.mxu0 0
    %6434 = vmatpush1.bf16.msra.mxu0 0
    %6435 = vmatprep.subr.bf16.mxu0 0
    %6436 = vmatpush1.bf16.msra.mxu0 0
    %6437 = vmatprep.subr.bf16.mxu0 0
    %6438 = vmatpush1.bf16.msra.mxu0 0
    %6439 = vmatprep.subr.bf16.mxu0 0
    %6440 = vmatpush1.bf16.msra.mxu0 0
    %6441 = vmatprep.subr.bf16.mxu0 0
    %6442 = vmatpush1.bf16.msra.mxu0 0
    %6443 = vmatprep.subr.bf16.mxu0 0
    %6444 = vmatpush1.bf16.msra.mxu0 0
    %6445 = vmatprep.subr.bf16.mxu0 0
    %6446 = vmatpush1.bf16.msra.mxu0 0
    %6447 = vmatprep.mubr.bf16.mxu0 0
    %6448 = vmatmul.mubr.bf16.gmra.mrb[0].mxu0 %v6159
    %v6449 = vpop.f32.mrb[0].mxu0
    %v6450 = vadd.f32 %v6205, %v6449
    %v6451 = vpop.f32.mrb[0].mxu0
    %v6452 = vadd.f32 %v6209, %v6451
    %v6453 = vpop.f32.mrb[0].mxu0
    %v6454 = vpop.f32.mrb[0].mxu0
    %6455 = vdwg.mxu0
    %v6456 = vmax.f32 %v6409, 0.0
    %v6457 = vmax.f32 %v6411, 0.0
    %v6458 = vmax.f32 %v6450, 0.0
    %v6459 = vmax.f32 %v6452, 0.0
    %v6460 = vpack.c.bf16 %v6456, %v6456
    %v6461 = vpack.c.bf16 %v6457, %v6457
    %v6462 = vpack.c.bf16 %v6458, %v6458
    %v6463 = vpack.c.bf16 %v6459, %v6459
    %v6464 = vld [vmem:[#allocation14] sm:$0xff]
    %v6465 = vld [vmem:[#allocation14 + $0x8] sm:$0xff]
    %v6466 = vld [vmem:[#allocation14 + $0x10] sm:$0xff]
    %v6467 = vld [vmem:[#allocation14 + $0x18] sm:$0xff]
    %v6468 = vld [vmem:[#allocation14 + $0x20] sm:$0xff]
    %v6469 = vld [vmem:[#allocation14 + $0x28] sm:$0xff]
    %v6470 = vld [vmem:[#allocation14 + $0x30] sm:$0xff]
    %v6471 = vld [vmem:[#allocation14 + $0x38] sm:$0xff]
    %v6472 = vld [vmem:[#allocation14 + $0x40] sm:$0xff]
    %v6473 = vld [vmem:[#allocation14 + $0x48] sm:$0xff]
    %v6474 = vld [vmem:[#allocation14 + $0x50] sm:$0xff]
    %v6475 = vld [vmem:[#allocation14 + $0x58] sm:$0xff]
    %v6476 = vld [vmem:[#allocation14 + $0x60] sm:$0xff]
    %v6477 = vld [vmem:[#allocation14 + $0x68] sm:$0xff]
    %v6478 = vld [vmem:[#allocation14 + $0x70] sm:$0xff]
    %v6479 = vld [vmem:[#allocation14 + $0x78] sm:$0xff]
    %v6480 = vld [vmem:[#allocation14 + $0x80] sm:$0xff]
    %v6481 = vld [vmem:[#allocation14 + $0x88] sm:$0xff]
    %v6482 = vld [vmem:[#allocation14 + $0x90] sm:$0xff]
    %v6483 = vld [vmem:[#allocation14 + $0x98] sm:$0xff]
    %v6484 = vld [vmem:[#allocation14 + $0xa0] sm:$0xff]
    %v6485 = vld [vmem:[#allocation14 + $0xa8] sm:$0xff]
    %v6486 = vld [vmem:[#allocation14 + $0xb0] sm:$0xff]
    %v6487 = vld [vmem:[#allocation14 + $0xb8] sm:$0xff]
    %v6488 = vld [vmem:[#allocation14 + $0xc0] sm:$0xff]
    %v6489 = vld [vmem:[#allocation14 + $0xc8] sm:$0xff]
    %v6490 = vld [vmem:[#allocation14 + $0xd0] sm:$0xff]
    %v6491 = vld [vmem:[#allocation14 + $0xd8] sm:$0xff]
    %v6492 = vld [vmem:[#allocation14 + $0xe0] sm:$0xff]
    %v6493 = vld [vmem:[#allocation14 + $0xe8] sm:$0xff]
    %v6494 = vld [vmem:[#allocation14 + $0xf0] sm:$0xff]
    %v6495 = vld [vmem:[#allocation14 + $0xf8] sm:$0xff]
    %v6496 = vld [vmem:[#allocation14 + $0x100] sm:$0xff]
    %v6497 = vld [vmem:[#allocation14 + $0x108] sm:$0xff]
    %v6498 = vld [vmem:[#allocation14 + $0x110] sm:$0xff]
    %v6499 = vld [vmem:[#allocation14 + $0x118] sm:$0xff]
    %v6500 = vld [vmem:[#allocation14 + $0x120] sm:$0xff]
    %v6501 = vld [vmem:[#allocation14 + $0x128] sm:$0xff]
    %v6502 = vld [vmem:[#allocation14 + $0x130] sm:$0xff]
    %v6503 = vld [vmem:[#allocation14 + $0x138] sm:$0xff]
    %v6504 = vld [vmem:[#allocation14 + $0x140] sm:$0xff]
    %v6505 = vld [vmem:[#allocation14 + $0x148] sm:$0xff]
    %v6506 = vld [vmem:[#allocation14 + $0x150] sm:$0xff]
    %v6507 = vld [vmem:[#allocation14 + $0x158] sm:$0xff]
    %v6508 = vld [vmem:[#allocation14 + $0x160] sm:$0xff]
    %v6509 = vld [vmem:[#allocation14 + $0x168] sm:$0xff]
    %v6510 = vld [vmem:[#allocation14 + $0x170] sm:$0xff]
    %v6511 = vld [vmem:[#allocation14 + $0x178] sm:$0xff]
    %v6512 = vld [vmem:[#allocation14 + $0x180] sm:$0xff]
    %v6513 = vld [vmem:[#allocation14 + $0x188] sm:$0xff]
    %v6514 = vld [vmem:[#allocation14 + $0x190] sm:$0xff]
    %v6515 = vld [vmem:[#allocation14 + $0x198] sm:$0xff]
    %v6516 = vld [vmem:[#allocation14 + $0x1a0] sm:$0xff]
    %v6517 = vld [vmem:[#allocation14 + $0x1a8] sm:$0xff]
    %v6518 = vld [vmem:[#allocation14 + $0x1b0] sm:$0xff]
    %v6519 = vld [vmem:[#allocation14 + $0x1b8] sm:$0xff]
    %v6520 = vld [vmem:[#allocation14 + $0x1c0] sm:$0xff]
    %v6521 = vld [vmem:[#allocation14 + $0x1c8] sm:$0xff]
    %v6522 = vld [vmem:[#allocation14 + $0x1d0] sm:$0xff]
    %v6523 = vld [vmem:[#allocation14 + $0x1d8] sm:$0xff]
    %v6524 = vld [vmem:[#allocation14 + $0x1e0] sm:$0xff]
    %v6525 = vld [vmem:[#allocation14 + $0x1e8] sm:$0xff]
    %v6526 = vld [vmem:[#allocation14 + $0x1f0] sm:$0xff]
    %v6527 = vld [vmem:[#allocation14 + $0x1f8] sm:$0xff]
    %v6528 = vld [vmem:[#allocation14 + $0x200] sm:$0xff]
    %v6529 = vld [vmem:[#allocation14 + $0x208] sm:$0xff]
    %v6530 = vld [vmem:[#allocation14 + $0x210] sm:$0xff]
    %v6531 = vld [vmem:[#allocation14 + $0x218] sm:$0xff]
    %v6532 = vld [vmem:[#allocation14 + $0x220] sm:$0xff]
    %v6533 = vld [vmem:[#allocation14 + $0x228] sm:$0xff]
    %v6534 = vld [vmem:[#allocation14 + $0x230] sm:$0xff]
    %v6535 = vld [vmem:[#allocation14 + $0x238] sm:$0xff]
    %v6536 = vld [vmem:[#allocation14 + $0x240] sm:$0xff]
    %v6537 = vld [vmem:[#allocation14 + $0x248] sm:$0xff]
    %v6538 = vld [vmem:[#allocation14 + $0x250] sm:$0xff]
    %v6539 = vld [vmem:[#allocation14 + $0x258] sm:$0xff]
    %v6540 = vld [vmem:[#allocation14 + $0x260] sm:$0xff]
    %v6541 = vld [vmem:[#allocation14 + $0x268] sm:$0xff]
    %v6542 = vld [vmem:[#allocation14 + $0x270] sm:$0xff]
    %v6543 = vld [vmem:[#allocation14 + $0x278] sm:$0xff]
    %v6544 = vld [vmem:[#allocation14 + $0x280] sm:$0xff]
    %v6545 = vld [vmem:[#allocation14 + $0x288] sm:$0xff]
    %v6546 = vld [vmem:[#allocation14 + $0x290] sm:$0xff]
    %v6547 = vld [vmem:[#allocation14 + $0x298] sm:$0xff]
    %v6548 = vld [vmem:[#allocation14 + $0x2a0] sm:$0xff]
    %v6549 = vld [vmem:[#allocation14 + $0x2a8] sm:$0xff]
    %v6550 = vld [vmem:[#allocation14 + $0x2b0] sm:$0xff]
    %v6551 = vld [vmem:[#allocation14 + $0x2b8] sm:$0xff]
    %v6552 = vld [vmem:[#allocation14 + $0x2c0] sm:$0xff]
    %v6553 = vld [vmem:[#allocation14 + $0x2c8] sm:$0xff]
    %v6554 = vld [vmem:[#allocation14 + $0x2d0] sm:$0xff]
    %v6555 = vld [vmem:[#allocation14 + $0x2d8] sm:$0xff]
    %v6556 = vld [vmem:[#allocation14 + $0x2e0] sm:$0xff]
    %v6557 = vld [vmem:[#allocation14 + $0x2e8] sm:$0xff]
    %v6558 = vld [vmem:[#allocation14 + $0x2f0] sm:$0xff]
    %v6559 = vld [vmem:[#allocation14 + $0x2f8] sm:$0xff]
    %v6560 = vld [vmem:[#allocation14 + $0x300] sm:$0xff]
    %v6561 = vld [vmem:[#allocation14 + $0x308] sm:$0xff]
    %v6562 = vld [vmem:[#allocation14 + $0x310] sm:$0xff]
    %v6563 = vld [vmem:[#allocation14 + $0x318] sm:$0xff]
    %v6564 = vld [vmem:[#allocation14 + $0x320] sm:$0xff]
    %v6565 = vld [vmem:[#allocation14 + $0x328] sm:$0xff]
    %v6566 = vld [vmem:[#allocation14 + $0x330] sm:$0xff]
    %v6567 = vld [vmem:[#allocation14 + $0x338] sm:$0xff]
    %v6568 = vld [vmem:[#allocation14 + $0x340] sm:$0xff]
    %v6569 = vld [vmem:[#allocation14 + $0x348] sm:$0xff]
    %v6570 = vld [vmem:[#allocation14 + $0x350] sm:$0xff]
    %v6571 = vld [vmem:[#allocation14 + $0x358] sm:$0xff]
    %v6572 = vld [vmem:[#allocation14 + $0x360] sm:$0xff]
    %v6573 = vld [vmem:[#allocation14 + $0x368] sm:$0xff]
    %v6574 = vld [vmem:[#allocation14 + $0x370] sm:$0xff]
    %v6575 = vld [vmem:[#allocation14 + $0x378] sm:$0xff]
    %v6576 = vld [vmem:[#allocation14 + $0x380] sm:$0xff]
    %v6577 = vld [vmem:[#allocation14 + $0x388] sm:$0xff]
    %v6578 = vld [vmem:[#allocation14 + $0x390] sm:$0xff]
    %v6579 = vld [vmem:[#allocation14 + $0x398] sm:$0xff]
    %v6580 = vld [vmem:[#allocation14 + $0x3a0] sm:$0xff]
    %v6581 = vld [vmem:[#allocation14 + $0x3a8] sm:$0xff]
    %v6582 = vld [vmem:[#allocation14 + $0x3b0] sm:$0xff]
    %v6583 = vld [vmem:[#allocation14 + $0x3b8] sm:$0xff]
    %v6584 = vld [vmem:[#allocation14 + $0x3c0] sm:$0xff]
    %v6585 = vld [vmem:[#allocation14 + $0x3c8] sm:$0xff]
    %v6586 = vld [vmem:[#allocation14 + $0x3d0] sm:$0xff]
    %v6587 = vld [vmem:[#allocation14 + $0x3d8] sm:$0xff]
    %v6588 = vld [vmem:[#allocation14 + $0x3e0] sm:$0xff]
    %v6589 = vld [vmem:[#allocation14 + $0x3e8] sm:$0xff]
    %v6590 = vld [vmem:[#allocation14 + $0x3f0] sm:$0xff]
    %v6591 = vld [vmem:[#allocation14 + $0x3f8] sm:$0xff]
    %v6592 = vld [vmem:[#allocation14 + $0x400] sm:$0xff]
    %v6593 = vld [vmem:[#allocation14 + $0x408] sm:$0xff]
    %v6594 = vld [vmem:[#allocation14 + $0x410] sm:$0xff]
    %v6595 = vld [vmem:[#allocation14 + $0x418] sm:$0xff]
    %v6596 = vld [vmem:[#allocation14 + $0x420] sm:$0xff]
    %v6597 = vld [vmem:[#allocation14 + $0x428] sm:$0xff]
    %v6598 = vld [vmem:[#allocation14 + $0x430] sm:$0xff]
    %v6599 = vld [vmem:[#allocation14 + $0x438] sm:$0xff]
    %v6600 = vld [vmem:[#allocation14 + $0x440] sm:$0xff]
    %v6601 = vld [vmem:[#allocation14 + $0x448] sm:$0xff]
    %v6602 = vld [vmem:[#allocation14 + $0x450] sm:$0xff]
    %v6603 = vld [vmem:[#allocation14 + $0x458] sm:$0xff]
    %v6604 = vld [vmem:[#allocation14 + $0x460] sm:$0xff]
    %v6605 = vld [vmem:[#allocation14 + $0x468] sm:$0xff]
    %v6606 = vld [vmem:[#allocation14 + $0x470] sm:$0xff]
    %v6607 = vld [vmem:[#allocation14 + $0x478] sm:$0xff]
    %v6608 = vld [vmem:[#allocation14 + $0x480] sm:$0xff]
    %v6609 = vld [vmem:[#allocation14 + $0x488] sm:$0xff]
    %v6610 = vld [vmem:[#allocation14 + $0x490] sm:$0xff]
    %v6611 = vld [vmem:[#allocation14 + $0x498] sm:$0xff]
    %v6612 = vld [vmem:[#allocation14 + $0x4a0] sm:$0xff]
    %v6613 = vld [vmem:[#allocation14 + $0x4a8] sm:$0xff]
    %v6614 = vld [vmem:[#allocation14 + $0x4b0] sm:$0xff]
    %v6615 = vld [vmem:[#allocation14 + $0x4b8] sm:$0xff]
    %v6616 = vld [vmem:[#allocation14 + $0x4c0] sm:$0xff]
    %v6617 = vld [vmem:[#allocation14 + $0x4c8] sm:$0xff]
    %v6618 = vld [vmem:[#allocation14 + $0x4d0] sm:$0xff]
    %v6619 = vld [vmem:[#allocation14 + $0x4d8] sm:$0xff]
    %v6620 = vld [vmem:[#allocation14 + $0x4e0] sm:$0xff]
    %v6621 = vld [vmem:[#allocation14 + $0x4e8] sm:$0xff]
    %v6622 = vld [vmem:[#allocation14 + $0x4f0] sm:$0xff]
    %v6623 = vld [vmem:[#allocation14 + $0x4f8] sm:$0xff]
    %v6624 = vld [vmem:[#allocation14 + $0x500] sm:$0xff]
    %v6625 = vld [vmem:[#allocation14 + $0x508] sm:$0xff]
    %v6626 = vld [vmem:[#allocation14 + $0x510] sm:$0xff]
    %v6627 = vld [vmem:[#allocation14 + $0x518] sm:$0xff]
    %v6628 = vld [vmem:[#allocation14 + $0x520] sm:$0xff]
    %v6629 = vld [vmem:[#allocation14 + $0x528] sm:$0xff]
    %v6630 = vld [vmem:[#allocation14 + $0x530] sm:$0xff]
    %v6631 = vld [vmem:[#allocation14 + $0x538] sm:$0xff]
    %v6632 = vld [vmem:[#allocation14 + $0x540] sm:$0xff]
    %v6633 = vld [vmem:[#allocation14 + $0x548] sm:$0xff]
    %v6634 = vld [vmem:[#allocation14 + $0x550] sm:$0xff]
    %v6635 = vld [vmem:[#allocation14 + $0x558] sm:$0xff]
    %v6636 = vld [vmem:[#allocation14 + $0x560] sm:$0xff]
    %v6637 = vld [vmem:[#allocation14 + $0x568] sm:$0xff]
    %v6638 = vld [vmem:[#allocation14 + $0x570] sm:$0xff]
    %v6639 = vld [vmem:[#allocation14 + $0x578] sm:$0xff]
    %v6640 = vld [vmem:[#allocation14 + $0x580] sm:$0xff]
    %v6641 = vld [vmem:[#allocation14 + $0x588] sm:$0xff]
    %v6642 = vld [vmem:[#allocation14 + $0x590] sm:$0xff]
    %v6643 = vld [vmem:[#allocation14 + $0x598] sm:$0xff]
    %v6644 = vld [vmem:[#allocation14 + $0x5a0] sm:$0xff]
    %v6645 = vld [vmem:[#allocation14 + $0x5a8] sm:$0xff]
    %v6646 = vld [vmem:[#allocation14 + $0x5b0] sm:$0xff]
    %v6647 = vld [vmem:[#allocation14 + $0x5b8] sm:$0xff]
    %v6648 = vld [vmem:[#allocation14 + $0x5c0] sm:$0xff]
    %v6649 = vld [vmem:[#allocation14 + $0x5c8] sm:$0xff]
    %v6650 = vld [vmem:[#allocation14 + $0x5d0] sm:$0xff]
    %v6651 = vld [vmem:[#allocation14 + $0x5d8] sm:$0xff]
    %v6652 = vld [vmem:[#allocation14 + $0x5e0] sm:$0xff]
    %v6653 = vld [vmem:[#allocation14 + $0x5e8] sm:$0xff]
    %v6654 = vld [vmem:[#allocation14 + $0x5f0] sm:$0xff]
    %v6655 = vld [vmem:[#allocation14 + $0x5f8] sm:$0xff]
    %v6656 = vld [vmem:[#allocation14 + $0x600] sm:$0xff]
    %v6657 = vld [vmem:[#allocation14 + $0x608] sm:$0xff]
    %v6658 = vld [vmem:[#allocation14 + $0x610] sm:$0xff]
    %v6659 = vld [vmem:[#allocation14 + $0x618] sm:$0xff]
    %v6660 = vld [vmem:[#allocation14 + $0x620] sm:$0xff]
    %v6661 = vld [vmem:[#allocation14 + $0x628] sm:$0xff]
    %v6662 = vld [vmem:[#allocation14 + $0x630] sm:$0xff]
    %v6663 = vld [vmem:[#allocation14 + $0x638] sm:$0xff]
    %v6664 = vld [vmem:[#allocation14 + $0x640] sm:$0xff]
    %v6665 = vld [vmem:[#allocation14 + $0x648] sm:$0xff]
    %v6666 = vld [vmem:[#allocation14 + $0x650] sm:$0xff]
    %v6667 = vld [vmem:[#allocation14 + $0x658] sm:$0xff]
    %v6668 = vld [vmem:[#allocation14 + $0x660] sm:$0xff]
    %v6669 = vld [vmem:[#allocation14 + $0x668] sm:$0xff]
    %v6670 = vld [vmem:[#allocation14 + $0x670] sm:$0xff]
    %v6671 = vld [vmem:[#allocation14 + $0x678] sm:$0xff]
    %v6672 = vld [vmem:[#allocation14 + $0x680] sm:$0xff]
    %v6673 = vld [vmem:[#allocation14 + $0x688] sm:$0xff]
    %v6674 = vld [vmem:[#allocation14 + $0x690] sm:$0xff]
    %v6675 = vld [vmem:[#allocation14 + $0x698] sm:$0xff]
    %v6676 = vld [vmem:[#allocation14 + $0x6a0] sm:$0xff]
    %v6677 = vld [vmem:[#allocation14 + $0x6a8] sm:$0xff]
    %v6678 = vld [vmem:[#allocation14 + $0x6b0] sm:$0xff]
    %v6679 = vld [vmem:[#allocation14 + $0x6b8] sm:$0xff]
    %v6680 = vld [vmem:[#allocation14 + $0x6c0] sm:$0xff]
    %v6681 = vld [vmem:[#allocation14 + $0x6c8] sm:$0xff]
    %v6682 = vld [vmem:[#allocation14 + $0x6d0] sm:$0xff]
    %v6683 = vld [vmem:[#allocation14 + $0x6d8] sm:$0xff]
    %v6684 = vld [vmem:[#allocation14 + $0x6e0] sm:$0xff]
    %v6685 = vld [vmem:[#allocation14 + $0x6e8] sm:$0xff]
    %v6686 = vld [vmem:[#allocation14 + $0x6f0] sm:$0xff]
    %v6687 = vld [vmem:[#allocation14 + $0x6f8] sm:$0xff]
    %v6688 = vld [vmem:[#allocation14 + $0x700] sm:$0xff]
    %v6689 = vld [vmem:[#allocation14 + $0x708] sm:$0xff]
    %v6690 = vld [vmem:[#allocation14 + $0x710] sm:$0xff]
    %v6691 = vld [vmem:[#allocation14 + $0x718] sm:$0xff]
    %v6692 = vld [vmem:[#allocation14 + $0x720] sm:$0xff]
    %v6693 = vld [vmem:[#allocation14 + $0x728] sm:$0xff]
    %v6694 = vld [vmem:[#allocation14 + $0x730] sm:$0xff]
    %v6695 = vld [vmem:[#allocation14 + $0x738] sm:$0xff]
    %v6696 = vld [vmem:[#allocation14 + $0x740] sm:$0xff]
    %v6697 = vld [vmem:[#allocation14 + $0x748] sm:$0xff]
    %v6698 = vld [vmem:[#allocation14 + $0x750] sm:$0xff]
    %v6699 = vld [vmem:[#allocation14 + $0x758] sm:$0xff]
    %v6700 = vld [vmem:[#allocation14 + $0x760] sm:$0xff]
    %v6701 = vld [vmem:[#allocation14 + $0x768] sm:$0xff]
    %v6702 = vld [vmem:[#allocation14 + $0x770] sm:$0xff]
    %v6703 = vld [vmem:[#allocation14 + $0x778] sm:$0xff]
    %v6704 = vld [vmem:[#allocation14 + $0x780] sm:$0xff]
    %v6705 = vld [vmem:[#allocation14 + $0x788] sm:$0xff]
    %v6706 = vld [vmem:[#allocation14 + $0x790] sm:$0xff]
    %v6707 = vld [vmem:[#allocation14 + $0x798] sm:$0xff]
    %v6708 = vld [vmem:[#allocation14 + $0x7a0] sm:$0xff]
    %v6709 = vld [vmem:[#allocation14 + $0x7a8] sm:$0xff]
    %v6710 = vld [vmem:[#allocation14 + $0x7b0] sm:$0xff]
    %v6711 = vld [vmem:[#allocation14 + $0x7b8] sm:$0xff]
    %v6712 = vld [vmem:[#allocation14 + $0x7c0] sm:$0xff]
    %v6713 = vld [vmem:[#allocation14 + $0x7c8] sm:$0xff]
    %v6714 = vld [vmem:[#allocation14 + $0x7d0] sm:$0xff]
    %v6715 = vld [vmem:[#allocation14 + $0x7d8] sm:$0xff]
    %v6716 = vld [vmem:[#allocation14 + $0x7e0] sm:$0xff]
    %v6717 = vld [vmem:[#allocation14 + $0x7e8] sm:$0xff]
    %v6718 = vld [vmem:[#allocation14 + $0x7f0] sm:$0xff]
    %v6719 = vld [vmem:[#allocation14 + $0x7f8] sm:$0xff]
    %v6720 = vld [vmem:[#allocation14 + $0x800] sm:$0xff]
    %v6721 = vld [vmem:[#allocation14 + $0x808] sm:$0xff]
    %v6722 = vld [vmem:[#allocation14 + $0x810] sm:$0xff]
    %v6723 = vld [vmem:[#allocation14 + $0x818] sm:$0xff]
    %v6724 = vld [vmem:[#allocation14 + $0x820] sm:$0xff]
    %v6725 = vld [vmem:[#allocation14 + $0x828] sm:$0xff]
    %v6726 = vld [vmem:[#allocation14 + $0x830] sm:$0xff]
    %v6727 = vld [vmem:[#allocation14 + $0x838] sm:$0xff]
    %v6728 = vld [vmem:[#allocation14 + $0x840] sm:$0xff]
    %v6729 = vld [vmem:[#allocation14 + $0x848] sm:$0xff]
    %v6730 = vld [vmem:[#allocation14 + $0x850] sm:$0xff]
    %v6731 = vld [vmem:[#allocation14 + $0x858] sm:$0xff]
    %v6732 = vld [vmem:[#allocation14 + $0x860] sm:$0xff]
    %v6733 = vld [vmem:[#allocation14 + $0x868] sm:$0xff]
    %v6734 = vld [vmem:[#allocation14 + $0x870] sm:$0xff]
    %v6735 = vld [vmem:[#allocation14 + $0x878] sm:$0xff]
    %v6736 = vld [vmem:[#allocation14 + $0x880] sm:$0xff]
    %v6737 = vld [vmem:[#allocation14 + $0x888] sm:$0xff]
    %v6738 = vld [vmem:[#allocation14 + $0x890] sm:$0xff]
    %v6739 = vld [vmem:[#allocation14 + $0x898] sm:$0xff]
    %v6740 = vld [vmem:[#allocation14 + $0x8a0] sm:$0xff]
    %v6741 = vld [vmem:[#allocation14 + $0x8a8] sm:$0xff]
    %v6742 = vld [vmem:[#allocation14 + $0x8b0] sm:$0xff]
    %v6743 = vld [vmem:[#allocation14 + $0x8b8] sm:$0xff]
    %v6744 = vld [vmem:[#allocation14 + $0x8c0] sm:$0xff]
    %v6745 = vld [vmem:[#allocation14 + $0x8c8] sm:$0xff]
    %v6746 = vld [vmem:[#allocation14 + $0x8d0] sm:$0xff]
    %v6747 = vld [vmem:[#allocation14 + $0x8d8] sm:$0xff]
    %v6748 = vld [vmem:[#allocation14 + $0x8e0] sm:$0xff]
    %v6749 = vld [vmem:[#allocation14 + $0x8e8] sm:$0xff]
    %v6750 = vld [vmem:[#allocation14 + $0x8f0] sm:$0xff]
    %v6751 = vld [vmem:[#allocation14 + $0x8f8] sm:$0xff]
    %v6752 = vld [vmem:[#allocation14 + $0x900] sm:$0xff]
    %v6753 = vld [vmem:[#allocation14 + $0x908] sm:$0xff]
    %v6754 = vld [vmem:[#allocation14 + $0x910] sm:$0xff]
    %v6755 = vld [vmem:[#allocation14 + $0x918] sm:$0xff]
    %v6756 = vld [vmem:[#allocation14 + $0x920] sm:$0xff]
    %v6757 = vld [vmem:[#allocation14 + $0x928] sm:$0xff]
    %v6758 = vld [vmem:[#allocation14 + $0x930] sm:$0xff]
    %v6759 = vld [vmem:[#allocation14 + $0x938] sm:$0xff]
    %v6760 = vld [vmem:[#allocation14 + $0x940] sm:$0xff]
    %v6761 = vld [vmem:[#allocation14 + $0x948] sm:$0xff]
    %v6762 = vld [vmem:[#allocation14 + $0x950] sm:$0xff]
    %v6763 = vld [vmem:[#allocation14 + $0x958] sm:$0xff]
    %v6764 = vld [vmem:[#allocation14 + $0x960] sm:$0xff]
    %v6765 = vld [vmem:[#allocation14 + $0x968] sm:$0xff]
    %v6766 = vld [vmem:[#allocation14 + $0x970] sm:$0xff]
    %v6767 = vld [vmem:[#allocation14 + $0x978] sm:$0xff]
    %v6768 = vld [vmem:[#allocation14 + $0x980] sm:$0xff]
    %v6769 = vld [vmem:[#allocation14 + $0x988] sm:$0xff]
    %v6770 = vld [vmem:[#allocation14 + $0x990] sm:$0xff]
    %v6771 = vld [vmem:[#allocation14 + $0x998] sm:$0xff]
    %v6772 = vld [vmem:[#allocation14 + $0x9a0] sm:$0xff]
    %v6773 = vld [vmem:[#allocation14 + $0x9a8] sm:$0xff]
    %v6774 = vld [vmem:[#allocation14 + $0x9b0] sm:$0xff]
    %v6775 = vld [vmem:[#allocation14 + $0x9b8] sm:$0xff]
    %v6776 = vld [vmem:[#allocation14 + $0x9c0] sm:$0xff]
    %v6777 = vld [vmem:[#allocation14 + $0x9c8] sm:$0xff]
    %v6778 = vld [vmem:[#allocation14 + $0x9d0] sm:$0xff]
    %v6779 = vld [vmem:[#allocation14 + $0x9d8] sm:$0xff]
    %v6780 = vld [vmem:[#allocation14 + $0x9e0] sm:$0xff]
    %v6781 = vld [vmem:[#allocation14 + $0x9e8] sm:$0xff]
    %v6782 = vld [vmem:[#allocation14 + $0x9f0] sm:$0xff]
    %v6783 = vld [vmem:[#allocation14 + $0x9f8] sm:$0xff]
    %v6784 = vld [vmem:[#allocation14 + $0xa00] sm:$0xff]
    %v6785 = vld [vmem:[#allocation14 + $0xa08] sm:$0xff]
    %v6786 = vld [vmem:[#allocation14 + $0xa10] sm:$0xff]
    %v6787 = vld [vmem:[#allocation14 + $0xa18] sm:$0xff]
    %v6788 = vld [vmem:[#allocation14 + $0xa20] sm:$0xff]
    %v6789 = vld [vmem:[#allocation14 + $0xa28] sm:$0xff]
    %v6790 = vld [vmem:[#allocation14 + $0xa30] sm:$0xff]
    %v6791 = vld [vmem:[#allocation14 + $0xa38] sm:$0xff]
    %v6792 = vld [vmem:[#allocation14 + $0xa40] sm:$0xff]
    %v6793 = vld [vmem:[#allocation14 + $0xa48] sm:$0xff]
    %v6794 = vld [vmem:[#allocation14 + $0xa50] sm:$0xff]
    %v6795 = vld [vmem:[#allocation14 + $0xa58] sm:$0xff]
    %v6796 = vld [vmem:[#allocation14 + $0xa60] sm:$0xff]
    %v6797 = vld [vmem:[#allocation14 + $0xa68] sm:$0xff]
    %v6798 = vld [vmem:[#allocation14 + $0xa70] sm:$0xff]
    %v6799 = vld [vmem:[#allocation14 + $0xa78] sm:$0xff]
    %v6800 = vld [vmem:[#allocation14 + $0xa80] sm:$0xff]
    %v6801 = vld [vmem:[#allocation14 + $0xa88] sm:$0xff]
    %v6802 = vld [vmem:[#allocation14 + $0xa90] sm:$0xff]
    %v6803 = vld [vmem:[#allocation14 + $0xa98] sm:$0xff]
    %v6804 = vld [vmem:[#allocation14 + $0xaa0] sm:$0xff]
    %v6805 = vld [vmem:[#allocation14 + $0xaa8] sm:$0xff]
    %v6806 = vld [vmem:[#allocation14 + $0xab0] sm:$0xff]
    %v6807 = vld [vmem:[#allocation14 + $0xab8] sm:$0xff]
    %v6808 = vld [vmem:[#allocation14 + $0xac0] sm:$0xff]
    %v6809 = vld [vmem:[#allocation14 + $0xac8] sm:$0xff]
    %v6810 = vld [vmem:[#allocation14 + $0xad0] sm:$0xff]
    %v6811 = vld [vmem:[#allocation14 + $0xad8] sm:$0xff]
    %v6812 = vld [vmem:[#allocation14 + $0xae0] sm:$0xff]
    %v6813 = vld [vmem:[#allocation14 + $0xae8] sm:$0xff]
    %v6814 = vld [vmem:[#allocation14 + $0xaf0] sm:$0xff]
    %v6815 = vld [vmem:[#allocation14 + $0xaf8] sm:$0xff]
    %v6816 = vld [vmem:[#allocation14 + $0xb00] sm:$0xff]
    %v6817 = vld [vmem:[#allocation14 + $0xb08] sm:$0xff]
    %v6818 = vld [vmem:[#allocation14 + $0xb10] sm:$0xff]
    %v6819 = vld [vmem:[#allocation14 + $0xb18] sm:$0xff]
    %v6820 = vld [vmem:[#allocation14 + $0xb20] sm:$0xff]
    %v6821 = vld [vmem:[#allocation14 + $0xb28] sm:$0xff]
    %v6822 = vld [vmem:[#allocation14 + $0xb30] sm:$0xff]
    %v6823 = vld [vmem:[#allocation14 + $0xb38] sm:$0xff]
    %v6824 = vld [vmem:[#allocation14 + $0xb40] sm:$0xff]
    %v6825 = vld [vmem:[#allocation14 + $0xb48] sm:$0xff]
    %v6826 = vld [vmem:[#allocation14 + $0xb50] sm:$0xff]
    %v6827 = vld [vmem:[#allocation14 + $0xb58] sm:$0xff]
    %v6828 = vld [vmem:[#allocation14 + $0xb60] sm:$0xff]
    %v6829 = vld [vmem:[#allocation14 + $0xb68] sm:$0xff]
    %v6830 = vld [vmem:[#allocation14 + $0xb70] sm:$0xff]
    %v6831 = vld [vmem:[#allocation14 + $0xb78] sm:$0xff]
    %v6832 = vld [vmem:[#allocation14 + $0xb80] sm:$0xff]
    %v6833 = vld [vmem:[#allocation14 + $0xb88] sm:$0xff]
    %v6834 = vld [vmem:[#allocation14 + $0xb90] sm:$0xff]
    %v6835 = vld [vmem:[#allocation14 + $0xb98] sm:$0xff]
    %v6836 = vld [vmem:[#allocation14 + $0xba0] sm:$0xff]
    %v6837 = vld [vmem:[#allocation14 + $0xba8] sm:$0xff]
    %v6838 = vld [vmem:[#allocation14 + $0xbb0] sm:$0xff]
    %v6839 = vld [vmem:[#allocation14 + $0xbb8] sm:$0xff]
    %v6840 = vld [vmem:[#allocation14 + $0xbc0] sm:$0xff]
    %v6841 = vld [vmem:[#allocation14 + $0xbc8] sm:$0xff]
    %v6842 = vld [vmem:[#allocation14 + $0xbd0] sm:$0xff]
    %v6843 = vld [vmem:[#allocation14 + $0xbd8] sm:$0xff]
    %v6844 = vld [vmem:[#allocation14 + $0xbe0] sm:$0xff]
    %v6845 = vld [vmem:[#allocation14 + $0xbe8] sm:$0xff]
    %v6846 = vld [vmem:[#allocation14 + $0xbf0] sm:$0xff]
    %v6847 = vld [vmem:[#allocation14 + $0xbf8] sm:$0xff]
    %v6848 = vld [vmem:[#allocation14 + $0xc00] sm:$0xff]
    %v6849 = vld [vmem:[#allocation14 + $0xc08] sm:$0xff]
    %v6850 = vld [vmem:[#allocation14 + $0xc10] sm:$0xff]
    %v6851 = vld [vmem:[#allocation14 + $0xc18] sm:$0xff]
    %v6852 = vld [vmem:[#allocation14 + $0xc20] sm:$0xff]
    %v6853 = vld [vmem:[#allocation14 + $0xc28] sm:$0xff]
    %v6854 = vld [vmem:[#allocation14 + $0xc30] sm:$0xff]
    %v6855 = vld [vmem:[#allocation14 + $0xc38] sm:$0xff]
    %v6856 = vld [vmem:[#allocation14 + $0xc40] sm:$0xff]
    %v6857 = vld [vmem:[#allocation14 + $0xc48] sm:$0xff]
    %v6858 = vld [vmem:[#allocation14 + $0xc50] sm:$0xff]
    %v6859 = vld [vmem:[#allocation14 + $0xc58] sm:$0xff]
    %v6860 = vld [vmem:[#allocation14 + $0xc60] sm:$0xff]
    %v6861 = vld [vmem:[#allocation14 + $0xc68] sm:$0xff]
    %v6862 = vld [vmem:[#allocation14 + $0xc70] sm:$0xff]
    %v6863 = vld [vmem:[#allocation14 + $0xc78] sm:$0xff]
    %v6864 = vld [vmem:[#allocation14 + $0xc80] sm:$0xff]
    %v6865 = vld [vmem:[#allocation14 + $0xc88] sm:$0xff]
    %v6866 = vld [vmem:[#allocation14 + $0xc90] sm:$0xff]
    %v6867 = vld [vmem:[#allocation14 + $0xc98] sm:$0xff]
    %v6868 = vld [vmem:[#allocation14 + $0xca0] sm:$0xff]
    %v6869 = vld [vmem:[#allocation14 + $0xca8] sm:$0xff]
    %v6870 = vld [vmem:[#allocation14 + $0xcb0] sm:$0xff]
    %v6871 = vld [vmem:[#allocation14 + $0xcb8] sm:$0xff]
    %v6872 = vld [vmem:[#allocation14 + $0xcc0] sm:$0xff]
    %v6873 = vld [vmem:[#allocation14 + $0xcc8] sm:$0xff]
    %v6874 = vld [vmem:[#allocation14 + $0xcd0] sm:$0xff]
    %v6875 = vld [vmem:[#allocation14 + $0xcd8] sm:$0xff]
    %v6876 = vld [vmem:[#allocation14 + $0xce0] sm:$0xff]
    %v6877 = vld [vmem:[#allocation14 + $0xce8] sm:$0xff]
    %v6878 = vld [vmem:[#allocation14 + $0xcf0] sm:$0xff]
    %v6879 = vld [vmem:[#allocation14 + $0xcf8] sm:$0xff]
    %v6880 = vld [vmem:[#allocation14 + $0xd00] sm:$0xff]
    %v6881 = vld [vmem:[#allocation14 + $0xd08] sm:$0xff]
    %v6882 = vld [vmem:[#allocation14 + $0xd10] sm:$0xff]
    %v6883 = vld [vmem:[#allocation14 + $0xd18] sm:$0xff]
    %v6884 = vld [vmem:[#allocation14 + $0xd20] sm:$0xff]
    %v6885 = vld [vmem:[#allocation14 + $0xd28] sm:$0xff]
    %v6886 = vld [vmem:[#allocation14 + $0xd30] sm:$0xff]
    %v6887 = vld [vmem:[#allocation14 + $0xd38] sm:$0xff]
    %v6888 = vld [vmem:[#allocation14 + $0xd40] sm:$0xff]
    %v6889 = vld [vmem:[#allocation14 + $0xd48] sm:$0xff]
    %v6890 = vld [vmem:[#allocation14 + $0xd50] sm:$0xff]
    %v6891 = vld [vmem:[#allocation14 + $0xd58] sm:$0xff]
    %v6892 = vld [vmem:[#allocation14 + $0xd60] sm:$0xff]
    %v6893 = vld [vmem:[#allocation14 + $0xd68] sm:$0xff]
    %v6894 = vld [vmem:[#allocation14 + $0xd70] sm:$0xff]
    %v6895 = vld [vmem:[#allocation14 + $0xd78] sm:$0xff]
    %v6896 = vld [vmem:[#allocation14 + $0xd80] sm:$0xff]
    %v6897 = vld [vmem:[#allocation14 + $0xd88] sm:$0xff]
    %v6898 = vld [vmem:[#allocation14 + $0xd90] sm:$0xff]
    %v6899 = vld [vmem:[#allocation14 + $0xd98] sm:$0xff]
    %v6900 = vld [vmem:[#allocation14 + $0xda0] sm:$0xff]
    %v6901 = vld [vmem:[#allocation14 + $0xda8] sm:$0xff]
    %v6902 = vld [vmem:[#allocation14 + $0xdb0] sm:$0xff]
    %v6903 = vld [vmem:[#allocation14 + $0xdb8] sm:$0xff]
    %v6904 = vld [vmem:[#allocation14 + $0xdc0] sm:$0xff]
    %v6905 = vld [vmem:[#allocation14 + $0xdc8] sm:$0xff]
    %v6906 = vld [vmem:[#allocation14 + $0xdd0] sm:$0xff]
    %v6907 = vld [vmem:[#allocation14 + $0xdd8] sm:$0xff]
    %v6908 = vld [vmem:[#allocation14 + $0xde0] sm:$0xff]
    %v6909 = vld [vmem:[#allocation14 + $0xde8] sm:$0xff]
    %v6910 = vld [vmem:[#allocation14 + $0xdf0] sm:$0xff]
    %v6911 = vld [vmem:[#allocation14 + $0xdf8] sm:$0xff]
    %v6912 = vld [vmem:[#allocation14 + $0xe00] sm:$0xff]
    %v6913 = vld [vmem:[#allocation14 + $0xe08] sm:$0xff]
    %v6914 = vld [vmem:[#allocation14 + $0xe10] sm:$0xff]
    %v6915 = vld [vmem:[#allocation14 + $0xe18] sm:$0xff]
    %v6916 = vld [vmem:[#allocation14 + $0xe20] sm:$0xff]
    %v6917 = vld [vmem:[#allocation14 + $0xe28] sm:$0xff]
    %v6918 = vld [vmem:[#allocation14 + $0xe30] sm:$0xff]
    %v6919 = vld [vmem:[#allocation14 + $0xe38] sm:$0xff]
    %v6920 = vld [vmem:[#allocation14 + $0xe40] sm:$0xff]
    %v6921 = vld [vmem:[#allocation14 + $0xe48] sm:$0xff]
    %v6922 = vld [vmem:[#allocation14 + $0xe50] sm:$0xff]
    %v6923 = vld [vmem:[#allocation14 + $0xe58] sm:$0xff]
    %v6924 = vld [vmem:[#allocation14 + $0xe60] sm:$0xff]
    %v6925 = vld [vmem:[#allocation14 + $0xe68] sm:$0xff]
    %v6926 = vld [vmem:[#allocation14 + $0xe70] sm:$0xff]
    %v6927 = vld [vmem:[#allocation14 + $0xe78] sm:$0xff]
    %v6928 = vld [vmem:[#allocation14 + $0xe80] sm:$0xff]
    %v6929 = vld [vmem:[#allocation14 + $0xe88] sm:$0xff]
    %v6930 = vld [vmem:[#allocation14 + $0xe90] sm:$0xff]
    %v6931 = vld [vmem:[#allocation14 + $0xe98] sm:$0xff]
    %v6932 = vld [vmem:[#allocation14 + $0xea0] sm:$0xff]
    %v6933 = vld [vmem:[#allocation14 + $0xea8] sm:$0xff]
    %v6934 = vld [vmem:[#allocation14 + $0xeb0] sm:$0xff]
    %v6935 = vld [vmem:[#allocation14 + $0xeb8] sm:$0xff]
    %v6936 = vld [vmem:[#allocation14 + $0xec0] sm:$0xff]
    %v6937 = vld [vmem:[#allocation14 + $0xec8] sm:$0xff]
    %v6938 = vld [vmem:[#allocation14 + $0xed0] sm:$0xff]
    %v6939 = vld [vmem:[#allocation14 + $0xed8] sm:$0xff]
    %v6940 = vld [vmem:[#allocation14 + $0xee0] sm:$0xff]
    %v6941 = vld [vmem:[#allocation14 + $0xee8] sm:$0xff]
    %v6942 = vld [vmem:[#allocation14 + $0xef0] sm:$0xff]
    %v6943 = vld [vmem:[#allocation14 + $0xef8] sm:$0xff]
    %v6944 = vld [vmem:[#allocation14 + $0xf00] sm:$0xff]
    %v6945 = vld [vmem:[#allocation14 + $0xf08] sm:$0xff]
    %v6946 = vld [vmem:[#allocation14 + $0xf10] sm:$0xff]
    %v6947 = vld [vmem:[#allocation14 + $0xf18] sm:$0xff]
    %v6948 = vld [vmem:[#allocation14 + $0xf20] sm:$0xff]
    %v6949 = vld [vmem:[#allocation14 + $0xf28] sm:$0xff]
    %v6950 = vld [vmem:[#allocation14 + $0xf30] sm:$0xff]
    %v6951 = vld [vmem:[#allocation14 + $0xf38] sm:$0xff]
    %v6952 = vld [vmem:[#allocation14 + $0xf40] sm:$0xff]
    %v6953 = vld [vmem:[#allocation14 + $0xf48] sm:$0xff]
    %v6954 = vld [vmem:[#allocation14 + $0xf50] sm:$0xff]
    %v6955 = vld [vmem:[#allocation14 + $0xf58] sm:$0xff]
    %v6956 = vld [vmem:[#allocation14 + $0xf60] sm:$0xff]
    %v6957 = vld [vmem:[#allocation14 + $0xf68] sm:$0xff]
    %v6958 = vld [vmem:[#allocation14 + $0xf70] sm:$0xff]
    %v6959 = vld [vmem:[#allocation14 + $0xf78] sm:$0xff]
    %v6960 = vld [vmem:[#allocation14 + $0xf80] sm:$0xff]
    %v6961 = vld [vmem:[#allocation14 + $0xf88] sm:$0xff]
    %v6962 = vld [vmem:[#allocation14 + $0xf90] sm:$0xff]
    %v6963 = vld [vmem:[#allocation14 + $0xf98] sm:$0xff]
    %v6964 = vld [vmem:[#allocation14 + $0xfa0] sm:$0xff]
    %v6965 = vld [vmem:[#allocation14 + $0xfa8] sm:$0xff]
    %v6966 = vld [vmem:[#allocation14 + $0xfb0] sm:$0xff]
    %v6967 = vld [vmem:[#allocation14 + $0xfb8] sm:$0xff]
    %v6968 = vld [vmem:[#allocation14 + $0xfc0] sm:$0xff]
    %v6969 = vld [vmem:[#allocation14 + $0xfc8] sm:$0xff]
    %v6970 = vld [vmem:[#allocation14 + $0xfd0] sm:$0xff]
    %v6971 = vld [vmem:[#allocation14 + $0xfd8] sm:$0xff]
    %v6972 = vld [vmem:[#allocation14 + $0xfe0] sm:$0xff]
    %v6973 = vld [vmem:[#allocation14 + $0xfe8] sm:$0xff]
    %v6974 = vld [vmem:[#allocation14 + $0xff0] sm:$0xff]
    %v6975 = vld [vmem:[#allocation14 + $0xff8] sm:$0xff]
    %v6976 = vld [vmem:[#allocation14 + $0x1000] sm:$0xff]
    %v6977 = vld [vmem:[#allocation14 + $0x1008] sm:$0xff]
    %v6978 = vld [vmem:[#allocation14 + $0x1010] sm:$0xff]
    %v6979 = vld [vmem:[#allocation14 + $0x1018] sm:$0xff]
    %v6980 = vld [vmem:[#allocation14 + $0x1020] sm:$0xff]
    %v6981 = vld [vmem:[#allocation14 + $0x1028] sm:$0xff]
    %v6982 = vld [vmem:[#allocation14 + $0x1030] sm:$0xff]
    %v6983 = vld [vmem:[#allocation14 + $0x1038] sm:$0xff]
    %v6984 = vld [vmem:[#allocation14 + $0x1040] sm:$0xff]
    %v6985 = vld [vmem:[#allocation14 + $0x1048] sm:$0xff]
    %v6986 = vld [vmem:[#allocation14 + $0x1050] sm:$0xff]
    %v6987 = vld [vmem:[#allocation14 + $0x1058] sm:$0xff]
    %v6988 = vld [vmem:[#allocation14 + $0x1060] sm:$0xff]
    %v6989 = vld [vmem:[#allocation14 + $0x1068] sm:$0xff]
    %v6990 = vld [vmem:[#allocation14 + $0x1070] sm:$0xff]
    %v6991 = vld [vmem:[#allocation14 + $0x1078] sm:$0xff]
    %v6992 = vld [vmem:[#allocation14 + $0x1080] sm:$0xff]
    %v6993 = vld [vmem:[#allocation14 + $0x1088] sm:$0xff]
    %v6994 = vld [vmem:[#allocation14 + $0x1090] sm:$0xff]
    %v6995 = vld [vmem:[#allocation14 + $0x1098] sm:$0xff]
    %v6996 = vld [vmem:[#allocation14 + $0x10a0] sm:$0xff]
    %v6997 = vld [vmem:[#allocation14 + $0x10a8] sm:$0xff]
    %v6998 = vld [vmem:[#allocation14 + $0x10b0] sm:$0xff]
    %v6999 = vld [vmem:[#allocation14 + $0x10b8] sm:$0xff]
    %v7000 = vld [vmem:[#allocation14 + $0x10c0] sm:$0xff]
    %v7001 = vld [vmem:[#allocation14 + $0x10c8] sm:$0xff]
    %v7002 = vld [vmem:[#allocation14 + $0x10d0] sm:$0xff]
    %v7003 = vld [vmem:[#allocation14 + $0x10d8] sm:$0xff]
    %v7004 = vld [vmem:[#allocation14 + $0x10e0] sm:$0xff]
    %v7005 = vld [vmem:[#allocation14 + $0x10e8] sm:$0xff]
    %v7006 = vld [vmem:[#allocation14 + $0x10f0] sm:$0xff]
    %v7007 = vld [vmem:[#allocation14 + $0x10f8] sm:$0xff]
    %v7008 = vld [vmem:[#allocation14 + $0x1100] sm:$0xff]
    %v7009 = vld [vmem:[#allocation14 + $0x1108] sm:$0xff]
    %v7010 = vld [vmem:[#allocation14 + $0x1110] sm:$0xff]
    %v7011 = vld [vmem:[#allocation14 + $0x1118] sm:$0xff]
    %v7012 = vld [vmem:[#allocation14 + $0x1120] sm:$0xff]
    %v7013 = vld [vmem:[#allocation14 + $0x1128] sm:$0xff]
    %v7014 = vld [vmem:[#allocation14 + $0x1130] sm:$0xff]
    %v7015 = vld [vmem:[#allocation14 + $0x1138] sm:$0xff]
    %v7016 = vld [vmem:[#allocation14 + $0x1140] sm:$0xff]
    %v7017 = vld [vmem:[#allocation14 + $0x1148] sm:$0xff]
    %v7018 = vld [vmem:[#allocation14 + $0x1150] sm:$0xff]
    %v7019 = vld [vmem:[#allocation14 + $0x1158] sm:$0xff]
    %v7020 = vld [vmem:[#allocation14 + $0x1160] sm:$0xff]
    %v7021 = vld [vmem:[#allocation14 + $0x1168] sm:$0xff]
    %v7022 = vld [vmem:[#allocation14 + $0x1170] sm:$0xff]
    %v7023 = vld [vmem:[#allocation14 + $0x1178] sm:$0xff]
    %v7024 = vld [vmem:[#allocation14 + $0x1180] sm:$0xff]
    %v7025 = vld [vmem:[#allocation14 + $0x1188] sm:$0xff]
    %v7026 = vld [vmem:[#allocation14 + $0x1190] sm:$0xff]
    %v7027 = vld [vmem:[#allocation14 + $0x1198] sm:$0xff]
    %v7028 = vld [vmem:[#allocation14 + $0x11a0] sm:$0xff]
    %v7029 = vld [vmem:[#allocation14 + $0x11a8] sm:$0xff]
    %v7030 = vld [vmem:[#allocation14 + $0x11b0] sm:$0xff]
    %v7031 = vld [vmem:[#allocation14 + $0x11b8] sm:$0xff]
    %v7032 = vld [vmem:[#allocation14 + $0x11c0] sm:$0xff]
    %v7033 = vld [vmem:[#allocation14 + $0x11c8] sm:$0xff]
    %v7034 = vld [vmem:[#allocation14 + $0x11d0] sm:$0xff]
    %v7035 = vld [vmem:[#allocation14 + $0x11d8] sm:$0xff]
    %v7036 = vld [vmem:[#allocation14 + $0x11e0] sm:$0xff]
    %v7037 = vld [vmem:[#allocation14 + $0x11e8] sm:$0xff]
    %v7038 = vld [vmem:[#allocation14 + $0x11f0] sm:$0xff]
    %v7039 = vld [vmem:[#allocation14 + $0x11f8] sm:$0xff]
    %v7040 = vld [vmem:[#allocation14 + $0x1200] sm:$0xff]
    %v7041 = vld [vmem:[#allocation14 + $0x1208] sm:$0xff]
    %v7042 = vld [vmem:[#allocation14 + $0x1210] sm:$0xff]
    %v7043 = vld [vmem:[#allocation14 + $0x1218] sm:$0xff]
    %v7044 = vld [vmem:[#allocation14 + $0x1220] sm:$0xff]
    %v7045 = vld [vmem:[#allocation14 + $0x1228] sm:$0xff]
    %v7046 = vld [vmem:[#allocation14 + $0x1230] sm:$0xff]
    %v7047 = vld [vmem:[#allocation14 + $0x1238] sm:$0xff]
    %v7048 = vld [vmem:[#allocation14 + $0x1240] sm:$0xff]
    %v7049 = vld [vmem:[#allocation14 + $0x1248] sm:$0xff]
    %v7050 = vld [vmem:[#allocation14 + $0x1250] sm:$0xff]
    %v7051 = vld [vmem:[#allocation14 + $0x1258] sm:$0xff]
    %v7052 = vld [vmem:[#allocation14 + $0x1260] sm:$0xff]
    %v7053 = vld [vmem:[#allocation14 + $0x1268] sm:$0xff]
    %v7054 = vld [vmem:[#allocation14 + $0x1270] sm:$0xff]
    %v7055 = vld [vmem:[#allocation14 + $0x1278] sm:$0xff]
    %v7056 = vld [vmem:[#allocation14 + $0x1280] sm:$0xff]
    %v7057 = vld [vmem:[#allocation14 + $0x1288] sm:$0xff]
    %v7058 = vld [vmem:[#allocation14 + $0x1290] sm:$0xff]
    %v7059 = vld [vmem:[#allocation14 + $0x1298] sm:$0xff]
    %v7060 = vld [vmem:[#allocation14 + $0x12a0] sm:$0xff]
    %v7061 = vld [vmem:[#allocation14 + $0x12a8] sm:$0xff]
    %v7062 = vld [vmem:[#allocation14 + $0x12b0] sm:$0xff]
    %v7063 = vld [vmem:[#allocation14 + $0x12b8] sm:$0xff]
    %v7064 = vld [vmem:[#allocation14 + $0x12c0] sm:$0xff]
    %v7065 = vld [vmem:[#allocation14 + $0x12c8] sm:$0xff]
    %v7066 = vld [vmem:[#allocation14 + $0x12d0] sm:$0xff]
    %v7067 = vld [vmem:[#allocation14 + $0x12d8] sm:$0xff]
    %v7068 = vld [vmem:[#allocation14 + $0x12e0] sm:$0xff]
    %v7069 = vld [vmem:[#allocation14 + $0x12e8] sm:$0xff]
    %v7070 = vld [vmem:[#allocation14 + $0x12f0] sm:$0xff]
    %v7071 = vld [vmem:[#allocation14 + $0x12f8] sm:$0xff]
    %v7072 = vld [vmem:[#allocation14 + $0x1300] sm:$0xff]
    %v7073 = vld [vmem:[#allocation14 + $0x1308] sm:$0xff]
    %v7074 = vld [vmem:[#allocation14 + $0x1310] sm:$0xff]
    %v7075 = vld [vmem:[#allocation14 + $0x1318] sm:$0xff]
    %v7076 = vld [vmem:[#allocation14 + $0x1320] sm:$0xff]
    %v7077 = vld [vmem:[#allocation14 + $0x1328] sm:$0xff]
    %v7078 = vld [vmem:[#allocation14 + $0x1330] sm:$0xff]
    %v7079 = vld [vmem:[#allocation14 + $0x1338] sm:$0xff]
    %v7080 = vld [vmem:[#allocation14 + $0x1340] sm:$0xff]
    %v7081 = vld [vmem:[#allocation14 + $0x1348] sm:$0xff]
    %v7082 = vld [vmem:[#allocation14 + $0x1350] sm:$0xff]
    %v7083 = vld [vmem:[#allocation14 + $0x1358] sm:$0xff]
    %v7084 = vld [vmem:[#allocation14 + $0x1360] sm:$0xff]
    %v7085 = vld [vmem:[#allocation14 + $0x1368] sm:$0xff]
    %v7086 = vld [vmem:[#allocation14 + $0x1370] sm:$0xff]
    %v7087 = vld [vmem:[#allocation14 + $0x1378] sm:$0xff]
    %v7088 = vld [vmem:[#allocation14 + $0x1380] sm:$0xff]
    %v7089 = vld [vmem:[#allocation14 + $0x1388] sm:$0xff]
    %v7090 = vld [vmem:[#allocation14 + $0x1390] sm:$0xff]
    %v7091 = vld [vmem:[#allocation14 + $0x1398] sm:$0xff]
    %v7092 = vld [vmem:[#allocation14 + $0x13a0] sm:$0xff]
    %v7093 = vld [vmem:[#allocation14 + $0x13a8] sm:$0xff]
    %v7094 = vld [vmem:[#allocation14 + $0x13b0] sm:$0xff]
    %v7095 = vld [vmem:[#allocation14 + $0x13b8] sm:$0xff]
    %v7096 = vld [vmem:[#allocation14 + $0x13c0] sm:$0xff]
    %v7097 = vld [vmem:[#allocation14 + $0x13c8] sm:$0xff]
    %v7098 = vld [vmem:[#allocation14 + $0x13d0] sm:$0xff]
    %v7099 = vld [vmem:[#allocation14 + $0x13d8] sm:$0xff]
    %v7100 = vld [vmem:[#allocation14 + $0x13e0] sm:$0xff]
    %v7101 = vld [vmem:[#allocation14 + $0x13e8] sm:$0xff]
    %v7102 = vld [vmem:[#allocation14 + $0x13f0] sm:$0xff]
    %v7103 = vld [vmem:[#allocation14 + $0x13f8] sm:$0xff]
    %v7104 = vld [vmem:[#allocation14 + $0x1400] sm:$0xff]
    %v7105 = vld [vmem:[#allocation14 + $0x1408] sm:$0xff]
    %v7106 = vld [vmem:[#allocation14 + $0x1410] sm:$0xff]
    %v7107 = vld [vmem:[#allocation14 + $0x1418] sm:$0xff]
    %v7108 = vld [vmem:[#allocation14 + $0x1420] sm:$0xff]
    %v7109 = vld [vmem:[#allocation14 + $0x1428] sm:$0xff]
    %v7110 = vld [vmem:[#allocation14 + $0x1430] sm:$0xff]
    %v7111 = vld [vmem:[#allocation14 + $0x1438] sm:$0xff]
    %v7112 = vld [vmem:[#allocation14 + $0x1440] sm:$0xff]
    %v7113 = vld [vmem:[#allocation14 + $0x1448] sm:$0xff]
    %v7114 = vld [vmem:[#allocation14 + $0x1450] sm:$0xff]
    %v7115 = vld [vmem:[#allocation14 + $0x1458] sm:$0xff]
    %v7116 = vld [vmem:[#allocation14 + $0x1460] sm:$0xff]
    %v7117 = vld [vmem:[#allocation14 + $0x1468] sm:$0xff]
    %v7118 = vld [vmem:[#allocation14 + $0x1470] sm:$0xff]
    %v7119 = vld [vmem:[#allocation14 + $0x1478] sm:$0xff]
    %v7120 = vld [vmem:[#allocation14 + $0x1480] sm:$0xff]
    %v7121 = vld [vmem:[#allocation14 + $0x1488] sm:$0xff]
    %v7122 = vld [vmem:[#allocation14 + $0x1490] sm:$0xff]
    %v7123 = vld [vmem:[#allocation14 + $0x1498] sm:$0xff]
    %v7124 = vld [vmem:[#allocation14 + $0x14a0] sm:$0xff]
    %v7125 = vld [vmem:[#allocation14 + $0x14a8] sm:$0xff]
    %v7126 = vld [vmem:[#allocation14 + $0x14b0] sm:$0xff]
    %v7127 = vld [vmem:[#allocation14 + $0x14b8] sm:$0xff]
    %v7128 = vld [vmem:[#allocation14 + $0x14c0] sm:$0xff]
    %v7129 = vld [vmem:[#allocation14 + $0x14c8] sm:$0xff]
    %v7130 = vld [vmem:[#allocation14 + $0x14d0] sm:$0xff]
    %v7131 = vld [vmem:[#allocation14 + $0x14d8] sm:$0xff]
    %v7132 = vld [vmem:[#allocation14 + $0x14e0] sm:$0xff]
    %v7133 = vld [vmem:[#allocation14 + $0x14e8] sm:$0xff]
    %v7134 = vld [vmem:[#allocation14 + $0x14f0] sm:$0xff]
    %v7135 = vld [vmem:[#allocation14 + $0x14f8] sm:$0xff]
    %v7136 = vld [vmem:[#allocation14 + $0x1500] sm:$0xff]
    %v7137 = vld [vmem:[#allocation14 + $0x1508] sm:$0xff]
    %v7138 = vld [vmem:[#allocation14 + $0x1510] sm:$0xff]
    %v7139 = vld [vmem:[#allocation14 + $0x1518] sm:$0xff]
    %v7140 = vld [vmem:[#allocation14 + $0x1520] sm:$0xff]
    %v7141 = vld [vmem:[#allocation14 + $0x1528] sm:$0xff]
    %v7142 = vld [vmem:[#allocation14 + $0x1530] sm:$0xff]
    %v7143 = vld [vmem:[#allocation14 + $0x1538] sm:$0xff]
    %v7144 = vld [vmem:[#allocation14 + $0x1540] sm:$0xff]
    %v7145 = vld [vmem:[#allocation14 + $0x1548] sm:$0xff]
    %v7146 = vld [vmem:[#allocation14 + $0x1550] sm:$0xff]
    %v7147 = vld [vmem:[#allocation14 + $0x1558] sm:$0xff]
    %v7148 = vld [vmem:[#allocation14 + $0x1560] sm:$0xff]
    %v7149 = vld [vmem:[#allocation14 + $0x1568] sm:$0xff]
    %v7150 = vld [vmem:[#allocation14 + $0x1570] sm:$0xff]
    %v7151 = vld [vmem:[#allocation14 + $0x1578] sm:$0xff]
    %v7152 = vld [vmem:[#allocation14 + $0x1580] sm:$0xff]
    %v7153 = vld [vmem:[#allocation14 + $0x1588] sm:$0xff]
    %v7154 = vld [vmem:[#allocation14 + $0x1590] sm:$0xff]
    %v7155 = vld [vmem:[#allocation14 + $0x1598] sm:$0xff]
    %v7156 = vld [vmem:[#allocation14 + $0x15a0] sm:$0xff]
    %v7157 = vld [vmem:[#allocation14 + $0x15a8] sm:$0xff]
    %v7158 = vld [vmem:[#allocation14 + $0x15b0] sm:$0xff]
    %v7159 = vld [vmem:[#allocation14 + $0x15b8] sm:$0xff]
    %v7160 = vld [vmem:[#allocation14 + $0x15c0] sm:$0xff]
    %v7161 = vld [vmem:[#allocation14 + $0x15c8] sm:$0xff]
    %v7162 = vld [vmem:[#allocation14 + $0x15d0] sm:$0xff]
    %v7163 = vld [vmem:[#allocation14 + $0x15d8] sm:$0xff]
    %v7164 = vld [vmem:[#allocation14 + $0x15e0] sm:$0xff]
    %v7165 = vld [vmem:[#allocation14 + $0x15e8] sm:$0xff]
    %v7166 = vld [vmem:[#allocation14 + $0x15f0] sm:$0xff]
    %v7167 = vld [vmem:[#allocation14 + $0x15f8] sm:$0xff]
    %v7168 = vld [vmem:[#allocation14 + $0x1600] sm:$0xff]
    %v7169 = vld [vmem:[#allocation14 + $0x1608] sm:$0xff]
    %v7170 = vld [vmem:[#allocation14 + $0x1610] sm:$0xff]
    %v7171 = vld [vmem:[#allocation14 + $0x1618] sm:$0xff]
    %v7172 = vld [vmem:[#allocation14 + $0x1620] sm:$0xff]
    %v7173 = vld [vmem:[#allocation14 + $0x1628] sm:$0xff]
    %v7174 = vld [vmem:[#allocation14 + $0x1630] sm:$0xff]
    %v7175 = vld [vmem:[#allocation14 + $0x1638] sm:$0xff]
    %v7176 = vld [vmem:[#allocation14 + $0x1640] sm:$0xff]
    %v7177 = vld [vmem:[#allocation14 + $0x1648] sm:$0xff]
    %v7178 = vld [vmem:[#allocation14 + $0x1650] sm:$0xff]
    %v7179 = vld [vmem:[#allocation14 + $0x1658] sm:$0xff]
    %v7180 = vld [vmem:[#allocation14 + $0x1660] sm:$0xff]
    %v7181 = vld [vmem:[#allocation14 + $0x1668] sm:$0xff]
    %v7182 = vld [vmem:[#allocation14 + $0x1670] sm:$0xff]
    %v7183 = vld [vmem:[#allocation14 + $0x1678] sm:$0xff]
    %v7184 = vld [vmem:[#allocation14 + $0x1680] sm:$0xff]
    %v7185 = vld [vmem:[#allocation14 + $0x1688] sm:$0xff]
    %v7186 = vld [vmem:[#allocation14 + $0x1690] sm:$0xff]
    %v7187 = vld [vmem:[#allocation14 + $0x1698] sm:$0xff]
    %v7188 = vld [vmem:[#allocation14 + $0x16a0] sm:$0xff]
    %v7189 = vld [vmem:[#allocation14 + $0x16a8] sm:$0xff]
    %v7190 = vld [vmem:[#allocation14 + $0x16b0] sm:$0xff]
    %v7191 = vld [vmem:[#allocation14 + $0x16b8] sm:$0xff]
    %v7192 = vld [vmem:[#allocation14 + $0x16c0] sm:$0xff]
    %v7193 = vld [vmem:[#allocation14 + $0x16c8] sm:$0xff]
    %v7194 = vld [vmem:[#allocation14 + $0x16d0] sm:$0xff]
    %v7195 = vld [vmem:[#allocation14 + $0x16d8] sm:$0xff]
    %v7196 = vld [vmem:[#allocation14 + $0x16e0] sm:$0xff]
    %v7197 = vld [vmem:[#allocation14 + $0x16e8] sm:$0xff]
    %v7198 = vld [vmem:[#allocation14 + $0x16f0] sm:$0xff]
    %v7199 = vld [vmem:[#allocation14 + $0x16f8] sm:$0xff]
    %v7200 = vld [vmem:[#allocation14 + $0x1700] sm:$0xff]
    %v7201 = vld [vmem:[#allocation14 + $0x1708] sm:$0xff]
    %v7202 = vld [vmem:[#allocation14 + $0x1710] sm:$0xff]
    %v7203 = vld [vmem:[#allocation14 + $0x1718] sm:$0xff]
    %v7204 = vld [vmem:[#allocation14 + $0x1720] sm:$0xff]
    %v7205 = vld [vmem:[#allocation14 + $0x1728] sm:$0xff]
    %v7206 = vld [vmem:[#allocation14 + $0x1730] sm:$0xff]
    %v7207 = vld [vmem:[#allocation14 + $0x1738] sm:$0xff]
    %v7208 = vld [vmem:[#allocation14 + $0x1740] sm:$0xff]
    %v7209 = vld [vmem:[#allocation14 + $0x1748] sm:$0xff]
    %v7210 = vld [vmem:[#allocation14 + $0x1750] sm:$0xff]
    %v7211 = vld [vmem:[#allocation14 + $0x1758] sm:$0xff]
    %v7212 = vld [vmem:[#allocation14 + $0x1760] sm:$0xff]
    %v7213 = vld [vmem:[#allocation14 + $0x1768] sm:$0xff]
    %v7214 = vld [vmem:[#allocation14 + $0x1770] sm:$0xff]
    %v7215 = vld [vmem:[#allocation14 + $0x1778] sm:$0xff]
    %v7216 = vld [vmem:[#allocation14 + $0x1780] sm:$0xff]
    %v7217 = vld [vmem:[#allocation14 + $0x1788] sm:$0xff]
    %v7218 = vld [vmem:[#allocation14 + $0x1790] sm:$0xff]
    %v7219 = vld [vmem:[#allocation14 + $0x1798] sm:$0xff]
    %v7220 = vld [vmem:[#allocation14 + $0x17a0] sm:$0xff]
    %v7221 = vld [vmem:[#allocation14 + $0x17a8] sm:$0xff]
    %v7222 = vld [vmem:[#allocation14 + $0x17b0] sm:$0xff]
    %v7223 = vld [vmem:[#allocation14 + $0x17b8] sm:$0xff]
    %v7224 = vld [vmem:[#allocation14 + $0x17c0] sm:$0xff]
    %v7225 = vld [vmem:[#allocation14 + $0x17c8] sm:$0xff]
    %v7226 = vld [vmem:[#allocation14 + $0x17d0] sm:$0xff]
    %v7227 = vld [vmem:[#allocation14 + $0x17d8] sm:$0xff]
    %v7228 = vld [vmem:[#allocation14 + $0x17e0] sm:$0xff]
    %v7229 = vld [vmem:[#allocation14 + $0x17e8] sm:$0xff]
    %v7230 = vld [vmem:[#allocation14 + $0x17f0] sm:$0xff]
    %v7231 = vld [vmem:[#allocation14 + $0x17f8] sm:$0xff]
    %v7232 = vld [vmem:[#allocation16] sm:$0xff]
    %v7233 = vld [vmem:[#allocation16 + $0x8] sm:$0xff]
    %v7234 = vld [vmem:[#allocation16 + $0x10] sm:$0xff]
    %v7238 = vlaneseq
    %v7239 = vshrl.u32 %v7238, 7
    %v7240 = vsub.s32 0, %v7239
    %v7241 = vrot.slane %v7232, %v7240
    %v7242 = vlaneseq
    %v7243 = vshrl.u32 %v7242, 7
    %v7244 = vsub.s32 1, %v7243
    %v7245 = vrot.slane %v7232, %v7244
    %v7246 = vlaneseq
    %v7247 = vshrl.u32 %v7246, 7
    %v7248 = vsub.s32 2, %v7247
    %v7249 = vrot.slane %v7232, %v7248
    %v7250 = vlaneseq
    %v7251 = vshrl.u32 %v7250, 7
    %v7252 = vsub.s32 3, %v7251
    %v7253 = vrot.slane %v7232, %v7252
    %v7254 = vlaneseq
    %v7255 = vshrl.u32 %v7254, 7
    %v7256 = vsub.s32 4, %v7255
    %v7257 = vrot.slane %v7232, %v7256
    %v7258 = vlaneseq
    %v7259 = vshrl.u32 %v7258, 7
    %v7260 = vsub.s32 5, %v7259
    %v7261 = vrot.slane %v7232, %v7260
    %v7262 = vlaneseq
    %v7263 = vshrl.u32 %v7262, 7
    %v7264 = vsub.s32 6, %v7263
    %v7265 = vrot.slane %v7232, %v7264
    %v7266 = vlaneseq
    %v7267 = vshrl.u32 %v7266, 7
    %v7268 = vsub.s32 7, %v7267
    %v7269 = vrot.slane %v7232, %v7268
    %v7270 = vlaneseq
    %v7271 = vshrl.u32 %v7270, 7
    %v7272 = vsub.s32 0, %v7271
    %v7273 = vrot.slane %v7233, %v7272
    %v7274 = vlaneseq
    %v7275 = vshrl.u32 %v7274, 7
    %v7276 = vsub.s32 1, %v7275
    %v7277 = vrot.slane %v7233, %v7276
    %v7278 = vlaneseq
    %v7279 = vshrl.u32 %v7278, 7
    %v7280 = vsub.s32 2, %v7279
    %v7281 = vrot.slane %v7233, %v7280
    %v7282 = vlaneseq
    %v7283 = vshrl.u32 %v7282, 7
    %v7284 = vsub.s32 3, %v7283
    %v7285 = vrot.slane %v7233, %v7284
    %v7286 = vlaneseq
    %v7287 = vshrl.u32 %v7286, 7
    %v7288 = vsub.s32 4, %v7287
    %v7289 = vrot.slane %v7233, %v7288
    %v7290 = vlaneseq
    %v7291 = vshrl.u32 %v7290, 7
    %v7292 = vsub.s32 5, %v7291
    %v7293 = vrot.slane %v7233, %v7292
    %v7294 = vlaneseq
    %v7295 = vshrl.u32 %v7294, 7
    %v7296 = vsub.s32 6, %v7295
    %v7297 = vrot.slane %v7233, %v7296
    %v7298 = vlaneseq
    %v7299 = vshrl.u32 %v7298, 7
    %v7300 = vsub.s32 7, %v7299
    %v7301 = vrot.slane %v7233, %v7300
    %v7302 = vlaneseq
    %v7303 = vshrl.u32 %v7302, 7
    %v7304 = vsub.s32 0, %v7303
    %v7305 = vrot.slane %v7234, %v7304
    %v7306 = vlaneseq
    %v7307 = vshrl.u32 %v7306, 7
    %v7308 = vsub.s32 1, %v7307
    %v7309 = vrot.slane %v7234, %v7308
    %v7310 = vlaneseq
    %v7311 = vshrl.u32 %v7310, 7
    %v7312 = vsub.s32 2, %v7311
    %v7313 = vrot.slane %v7234, %v7312
    %v7314 = vlaneseq
    %v7315 = vshrl.u32 %v7314, 7
    %v7316 = vsub.s32 3, %v7315
    %v7317 = vrot.slane %v7234, %v7316
    %v7318 = vlaneseq
    %v7319 = vshrl.u32 %v7318, 7
    %v7320 = vsub.s32 4, %v7319
    %v7321 = vrot.slane %v7234, %v7320
    %v7322 = vlaneseq
    %v7323 = vshrl.u32 %v7322, 7
    %v7324 = vsub.s32 5, %v7323
    %v7325 = vrot.slane %v7234, %v7324
    %v7326 = vlaneseq
    %v7327 = vshrl.u32 %v7326, 7
    %v7328 = vsub.s32 6, %v7327
    %v7329 = vrot.slane %v7234, %v7328
    %v7330 = vlaneseq
    %v7331 = vshrl.u32 %v7330, 7
    %v7332 = vsub.s32 7, %v7331
    %v7333 = vrot.slane %v7234, %v7332
    %v8126 = vunpack.c.l.b16 %v6464
    %v8127 = vunpack.c.h.b16 %v6464
    %v8128 = vunpack.c.l.b16 %v6465
    %v8129 = vunpack.c.h.b16 %v6465
    %v8130 = vunpack.c.l.b16 %v6466
    %v8131 = vunpack.c.h.b16 %v6466
    %v8132 = vunpack.c.l.b16 %v6467
    %v8133 = vunpack.c.h.b16 %v6467
    %v8134 = vunpack.c.l.b16 %v6468
    %v8135 = vunpack.c.h.b16 %v6468
    %v8136 = vunpack.c.l.b16 %v6469
    %v8137 = vunpack.c.h.b16 %v6469
    %v8138 = vunpack.c.l.b16 %v6470
    %v8139 = vunpack.c.h.b16 %v6470
    %v8140 = vunpack.c.l.b16 %v6471
    %v8141 = vunpack.c.h.b16 %v6471
    %v8142 = vunpack.c.l.b16 %v6472
    %v8143 = vunpack.c.h.b16 %v6472
    %v8144 = vunpack.c.l.b16 %v6473
    %v8145 = vunpack.c.h.b16 %v6473
    %v8146 = vunpack.c.l.b16 %v6474
    %v8147 = vunpack.c.h.b16 %v6474
    %v8148 = vunpack.c.l.b16 %v6475
    %v8149 = vunpack.c.h.b16 %v6475
    %v8150 = vunpack.c.l.b16 %v6476
    %v8151 = vunpack.c.h.b16 %v6476
    %v8152 = vunpack.c.l.b16 %v6477
    %v8153 = vunpack.c.h.b16 %v6477
    %v8154 = vunpack.c.l.b16 %v6478
    %v8155 = vunpack.c.h.b16 %v6478
    %v8156 = vunpack.c.l.b16 %v6479
    %v8157 = vunpack.c.h.b16 %v6479
    %v8158 = vunpack.c.l.b16 %v6480
    %v8159 = vunpack.c.h.b16 %v6480
    %v8160 = vunpack.c.l.b16 %v6481
    %v8161 = vunpack.c.h.b16 %v6481
    %v8162 = vunpack.c.l.b16 %v6482
    %v8163 = vunpack.c.h.b16 %v6482
    %v8164 = vunpack.c.l.b16 %v6483
    %v8165 = vunpack.c.h.b16 %v6483
    %v8166 = vunpack.c.l.b16 %v6484
    %v8167 = vunpack.c.h.b16 %v6484
    %v8168 = vunpack.c.l.b16 %v6485
    %v8169 = vunpack.c.h.b16 %v6485
    %v8170 = vunpack.c.l.b16 %v6486
    %v8171 = vunpack.c.h.b16 %v6486
    %v8172 = vunpack.c.l.b16 %v6487
    %v8173 = vunpack.c.h.b16 %v6487
    %v8174 = vunpack.c.l.b16 %v6488
    %v8175 = vunpack.c.h.b16 %v6488
    %v8176 = vunpack.c.l.b16 %v6489
    %v8177 = vunpack.c.h.b16 %v6489
    %v8178 = vunpack.c.l.b16 %v6490
    %v8179 = vunpack.c.h.b16 %v6490
    %v8180 = vunpack.c.l.b16 %v6491
    %v8181 = vunpack.c.h.b16 %v6491
    %v8182 = vunpack.c.l.b16 %v6492
    %v8183 = vunpack.c.h.b16 %v6492
    %v8184 = vunpack.c.l.b16 %v6493
    %v8185 = vunpack.c.h.b16 %v6493
    %v8186 = vunpack.c.l.b16 %v6494
    %v8187 = vunpack.c.h.b16 %v6494
    %v8188 = vunpack.c.l.b16 %v6495
    %v8189 = vunpack.c.h.b16 %v6495
    %v8190 = vunpack.c.l.b16 %v6496
    %v8191 = vunpack.c.h.b16 %v6496
    %v8192 = vunpack.c.l.b16 %v6497
    %v8193 = vunpack.c.h.b16 %v6497
    %v8194 = vunpack.c.l.b16 %v6498
    %v8195 = vunpack.c.h.b16 %v6498
    %v8196 = vunpack.c.l.b16 %v6499
    %v8197 = vunpack.c.h.b16 %v6499
    %v8198 = vunpack.c.l.b16 %v6500
    %v8199 = vunpack.c.h.b16 %v6500
    %v8200 = vunpack.c.l.b16 %v6501
    %v8201 = vunpack.c.h.b16 %v6501
    %v8202 = vunpack.c.l.b16 %v6502
    %v8203 = vunpack.c.h.b16 %v6502
    %v8204 = vunpack.c.l.b16 %v6503
    %v8205 = vunpack.c.h.b16 %v6503
    %v8206 = vunpack.c.l.b16 %v6504
    %v8207 = vunpack.c.h.b16 %v6504
    %v8208 = vunpack.c.l.b16 %v6505
    %v8209 = vunpack.c.h.b16 %v6505
    %v8210 = vunpack.c.l.b16 %v6506
    %v8211 = vunpack.c.h.b16 %v6506
    %v8212 = vunpack.c.l.b16 %v6507
    %v8213 = vunpack.c.h.b16 %v6507
    %v8214 = vunpack.c.l.b16 %v6508
    %v8215 = vunpack.c.h.b16 %v6508
    %v8216 = vunpack.c.l.b16 %v6509
    %v8217 = vunpack.c.h.b16 %v6509
    %v8218 = vunpack.c.l.b16 %v6510
    %v8219 = vunpack.c.h.b16 %v6510
    %v8220 = vunpack.c.l.b16 %v6511
    %v8221 = vunpack.c.h.b16 %v6511
    %v8222 = vunpack.c.l.b16 %v6512
    %v8223 = vunpack.c.h.b16 %v6512
    %v8224 = vunpack.c.l.b16 %v6513
    %v8225 = vunpack.c.h.b16 %v6513
    %v8226 = vunpack.c.l.b16 %v6514
    %v8227 = vunpack.c.h.b16 %v6514
    %v8228 = vunpack.c.l.b16 %v6515
    %v8229 = vunpack.c.h.b16 %v6515
    %v8230 = vunpack.c.l.b16 %v6516
    %v8231 = vunpack.c.h.b16 %v6516
    %v8232 = vunpack.c.l.b16 %v6517
    %v8233 = vunpack.c.h.b16 %v6517
    %v8234 = vunpack.c.l.b16 %v6518
    %v8235 = vunpack.c.h.b16 %v6518
    %v8236 = vunpack.c.l.b16 %v6519
    %v8237 = vunpack.c.h.b16 %v6519
    %v8238 = vunpack.c.l.b16 %v6520
    %v8239 = vunpack.c.h.b16 %v6520
    %v8240 = vunpack.c.l.b16 %v6521
    %v8241 = vunpack.c.h.b16 %v6521
    %v8242 = vunpack.c.l.b16 %v6522
    %v8243 = vunpack.c.h.b16 %v6522
    %v8244 = vunpack.c.l.b16 %v6523
    %v8245 = vunpack.c.h.b16 %v6523
    %v8246 = vunpack.c.l.b16 %v6524
    %v8247 = vunpack.c.h.b16 %v6524
    %v8248 = vunpack.c.l.b16 %v6525
    %v8249 = vunpack.c.h.b16 %v6525
    %v8250 = vunpack.c.l.b16 %v6526
    %v8251 = vunpack.c.h.b16 %v6526
    %v8252 = vunpack.c.l.b16 %v6527
    %v8253 = vunpack.c.h.b16 %v6527
    %v8254 = vunpack.c.l.b16 %v6528
    %v8255 = vunpack.c.h.b16 %v6528
    %v8256 = vunpack.c.l.b16 %v6529
    %v8257 = vunpack.c.h.b16 %v6529
    %v8258 = vunpack.c.l.b16 %v6530
    %v8259 = vunpack.c.h.b16 %v6530
    %v8260 = vunpack.c.l.b16 %v6531
    %v8261 = vunpack.c.h.b16 %v6531
    %v8262 = vunpack.c.l.b16 %v6532
    %v8263 = vunpack.c.h.b16 %v6532
    %v8264 = vunpack.c.l.b16 %v6533
    %v8265 = vunpack.c.h.b16 %v6533
    %v8266 = vunpack.c.l.b16 %v6534
    %v8267 = vunpack.c.h.b16 %v6534
    %v8268 = vunpack.c.l.b16 %v6535
    %v8269 = vunpack.c.h.b16 %v6535
    %v8270 = vunpack.c.l.b16 %v6536
    %v8271 = vunpack.c.h.b16 %v6536
    %v8272 = vunpack.c.l.b16 %v6537
    %v8273 = vunpack.c.h.b16 %v6537
    %v8274 = vunpack.c.l.b16 %v6538
    %v8275 = vunpack.c.h.b16 %v6538
    %v8276 = vunpack.c.l.b16 %v6539
    %v8277 = vunpack.c.h.b16 %v6539
    %v8278 = vunpack.c.l.b16 %v6540
    %v8279 = vunpack.c.h.b16 %v6540
    %v8280 = vunpack.c.l.b16 %v6541
    %v8281 = vunpack.c.h.b16 %v6541
    %v8282 = vunpack.c.l.b16 %v6542
    %v8283 = vunpack.c.h.b16 %v6542
    %v8284 = vunpack.c.l.b16 %v6543
    %v8285 = vunpack.c.h.b16 %v6543
    %v8286 = vunpack.c.l.b16 %v6544
    %v8287 = vunpack.c.h.b16 %v6544
    %v8288 = vunpack.c.l.b16 %v6545
    %v8289 = vunpack.c.h.b16 %v6545
    %v8290 = vunpack.c.l.b16 %v6546
    %v8291 = vunpack.c.h.b16 %v6546
    %v8292 = vunpack.c.l.b16 %v6547
    %v8293 = vunpack.c.h.b16 %v6547
    %v8294 = vunpack.c.l.b16 %v6548
    %v8295 = vunpack.c.h.b16 %v6548
    %v8296 = vunpack.c.l.b16 %v6549
    %v8297 = vunpack.c.h.b16 %v6549
    %v8298 = vunpack.c.l.b16 %v6550
    %v8299 = vunpack.c.h.b16 %v6550
    %v8300 = vunpack.c.l.b16 %v6551
    %v8301 = vunpack.c.h.b16 %v6551
    %v8302 = vunpack.c.l.b16 %v6552
    %v8303 = vunpack.c.h.b16 %v6552
    %v8304 = vunpack.c.l.b16 %v6553
    %v8305 = vunpack.c.h.b16 %v6553
    %v8306 = vunpack.c.l.b16 %v6554
    %v8307 = vunpack.c.h.b16 %v6554
    %v8308 = vunpack.c.l.b16 %v6555
    %v8309 = vunpack.c.h.b16 %v6555
    %v8310 = vunpack.c.l.b16 %v6556
    %v8311 = vunpack.c.h.b16 %v6556
    %v8312 = vunpack.c.l.b16 %v6557
    %v8313 = vunpack.c.h.b16 %v6557
    %v8314 = vunpack.c.l.b16 %v6558
    %v8315 = vunpack.c.h.b16 %v6558
    %v8316 = vunpack.c.l.b16 %v6559
    %v8317 = vunpack.c.h.b16 %v6559
    %v8318 = vunpack.c.l.b16 %v6560
    %v8319 = vunpack.c.h.b16 %v6560
    %v8320 = vunpack.c.l.b16 %v6561
    %v8321 = vunpack.c.h.b16 %v6561
    %v8322 = vunpack.c.l.b16 %v6562
    %v8323 = vunpack.c.h.b16 %v6562
    %v8324 = vunpack.c.l.b16 %v6563
    %v8325 = vunpack.c.h.b16 %v6563
    %v8326 = vunpack.c.l.b16 %v6564
    %v8327 = vunpack.c.h.b16 %v6564
    %v8328 = vunpack.c.l.b16 %v6565
    %v8329 = vunpack.c.h.b16 %v6565
    %v8330 = vunpack.c.l.b16 %v6566
    %v8331 = vunpack.c.h.b16 %v6566
    %v8332 = vunpack.c.l.b16 %v6567
    %v8333 = vunpack.c.h.b16 %v6567
    %v8334 = vunpack.c.l.b16 %v6568
    %v8335 = vunpack.c.h.b16 %v6568
    %v8336 = vunpack.c.l.b16 %v6569
    %v8337 = vunpack.c.h.b16 %v6569
    %v8338 = vunpack.c.l.b16 %v6570
    %v8339 = vunpack.c.h.b16 %v6570
    %v8340 = vunpack.c.l.b16 %v6571
    %v8341 = vunpack.c.h.b16 %v6571
    %v8342 = vunpack.c.l.b16 %v6572
    %v8343 = vunpack.c.h.b16 %v6572
    %v8344 = vunpack.c.l.b16 %v6573
    %v8345 = vunpack.c.h.b16 %v6573
    %v8346 = vunpack.c.l.b16 %v6574
    %v8347 = vunpack.c.h.b16 %v6574
    %v8348 = vunpack.c.l.b16 %v6575
    %v8349 = vunpack.c.h.b16 %v6575
    %v8350 = vunpack.c.l.b16 %v6576
    %v8351 = vunpack.c.h.b16 %v6576
    %v8352 = vunpack.c.l.b16 %v6577
    %v8353 = vunpack.c.h.b16 %v6577
    %v8354 = vunpack.c.l.b16 %v6578
    %v8355 = vunpack.c.h.b16 %v6578
    %v8356 = vunpack.c.l.b16 %v6579
    %v8357 = vunpack.c.h.b16 %v6579
    %v8358 = vunpack.c.l.b16 %v6580
    %v8359 = vunpack.c.h.b16 %v6580
    %v8360 = vunpack.c.l.b16 %v6581
    %v8361 = vunpack.c.h.b16 %v6581
    %v8362 = vunpack.c.l.b16 %v6582
    %v8363 = vunpack.c.h.b16 %v6582
    %v8364 = vunpack.c.l.b16 %v6583
    %v8365 = vunpack.c.h.b16 %v6583
    %v8366 = vunpack.c.l.b16 %v6584
    %v8367 = vunpack.c.h.b16 %v6584
    %v8368 = vunpack.c.l.b16 %v6585
    %v8369 = vunpack.c.h.b16 %v6585
    %v8370 = vunpack.c.l.b16 %v6586
    %v8371 = vunpack.c.h.b16 %v6586
    %v8372 = vunpack.c.l.b16 %v6587
    %v8373 = vunpack.c.h.b16 %v6587
    %v8374 = vunpack.c.l.b16 %v6588
    %v8375 = vunpack.c.h.b16 %v6588
    %v8376 = vunpack.c.l.b16 %v6589
    %v8377 = vunpack.c.h.b16 %v6589
    %v8378 = vunpack.c.l.b16 %v6590
    %v8379 = vunpack.c.h.b16 %v6590
    %v8380 = vunpack.c.l.b16 %v6591
    %v8381 = vunpack.c.h.b16 %v6591
    %v8382 = vunpack.c.l.b16 %v6592
    %v8383 = vunpack.c.h.b16 %v6592
    %v8384 = vunpack.c.l.b16 %v6593
    %v8385 = vunpack.c.h.b16 %v6593
    %v8386 = vunpack.c.l.b16 %v6594
    %v8387 = vunpack.c.h.b16 %v6594
    %v8388 = vunpack.c.l.b16 %v6595
    %v8389 = vunpack.c.h.b16 %v6595
    %v8390 = vunpack.c.l.b16 %v6596
    %v8391 = vunpack.c.h.b16 %v6596
    %v8392 = vunpack.c.l.b16 %v6597
    %v8393 = vunpack.c.h.b16 %v6597
    %v8394 = vunpack.c.l.b16 %v6598
    %v8395 = vunpack.c.h.b16 %v6598
    %v8396 = vunpack.c.l.b16 %v6599
    %v8397 = vunpack.c.h.b16 %v6599
    %v8398 = vunpack.c.l.b16 %v6600
    %v8399 = vunpack.c.h.b16 %v6600
    %v8400 = vunpack.c.l.b16 %v6601
    %v8401 = vunpack.c.h.b16 %v6601
    %v8402 = vunpack.c.l.b16 %v6602
    %v8403 = vunpack.c.h.b16 %v6602
    %v8404 = vunpack.c.l.b16 %v6603
    %v8405 = vunpack.c.h.b16 %v6603
    %v8406 = vunpack.c.l.b16 %v6604
    %v8407 = vunpack.c.h.b16 %v6604
    %v8408 = vunpack.c.l.b16 %v6605
    %v8409 = vunpack.c.h.b16 %v6605
    %v8410 = vunpack.c.l.b16 %v6606
    %v8411 = vunpack.c.h.b16 %v6606
    %v8412 = vunpack.c.l.b16 %v6607
    %v8413 = vunpack.c.h.b16 %v6607
    %v8414 = vunpack.c.l.b16 %v6608
    %v8415 = vunpack.c.h.b16 %v6608
    %v8416 = vunpack.c.l.b16 %v6609
    %v8417 = vunpack.c.h.b16 %v6609
    %v8418 = vunpack.c.l.b16 %v6610
    %v8419 = vunpack.c.h.b16 %v6610
    %v8420 = vunpack.c.l.b16 %v6611
    %v8421 = vunpack.c.h.b16 %v6611
    %v8422 = vunpack.c.l.b16 %v6612
    %v8423 = vunpack.c.h.b16 %v6612
    %v8424 = vunpack.c.l.b16 %v6613
    %v8425 = vunpack.c.h.b16 %v6613
    %v8426 = vunpack.c.l.b16 %v6614
    %v8427 = vunpack.c.h.b16 %v6614
    %v8428 = vunpack.c.l.b16 %v6615
    %v8429 = vunpack.c.h.b16 %v6615
    %v8430 = vunpack.c.l.b16 %v6616
    %v8431 = vunpack.c.h.b16 %v6616
    %v8432 = vunpack.c.l.b16 %v6617
    %v8433 = vunpack.c.h.b16 %v6617
    %v8434 = vunpack.c.l.b16 %v6618
    %v8435 = vunpack.c.h.b16 %v6618
    %v8436 = vunpack.c.l.b16 %v6619
    %v8437 = vunpack.c.h.b16 %v6619
    %v8438 = vunpack.c.l.b16 %v6620
    %v8439 = vunpack.c.h.b16 %v6620
    %v8440 = vunpack.c.l.b16 %v6621
    %v8441 = vunpack.c.h.b16 %v6621
    %v8442 = vunpack.c.l.b16 %v6622
    %v8443 = vunpack.c.h.b16 %v6622
    %v8444 = vunpack.c.l.b16 %v6623
    %v8445 = vunpack.c.h.b16 %v6623
    %v8446 = vunpack.c.l.b16 %v6624
    %v8447 = vunpack.c.h.b16 %v6624
    %v8448 = vunpack.c.l.b16 %v6625
    %v8449 = vunpack.c.h.b16 %v6625
    %v8450 = vunpack.c.l.b16 %v6626
    %v8451 = vunpack.c.h.b16 %v6626
    %v8452 = vunpack.c.l.b16 %v6627
    %v8453 = vunpack.c.h.b16 %v6627
    %v8454 = vunpack.c.l.b16 %v6628
    %v8455 = vunpack.c.h.b16 %v6628
    %v8456 = vunpack.c.l.b16 %v6629
    %v8457 = vunpack.c.h.b16 %v6629
    %v8458 = vunpack.c.l.b16 %v6630
    %v8459 = vunpack.c.h.b16 %v6630
    %v8460 = vunpack.c.l.b16 %v6631
    %v8461 = vunpack.c.h.b16 %v6631
    %v8462 = vunpack.c.l.b16 %v6632
    %v8463 = vunpack.c.h.b16 %v6632
    %v8464 = vunpack.c.l.b16 %v6633
    %v8465 = vunpack.c.h.b16 %v6633
    %v8466 = vunpack.c.l.b16 %v6634
    %v8467 = vunpack.c.h.b16 %v6634
    %v8468 = vunpack.c.l.b16 %v6635
    %v8469 = vunpack.c.h.b16 %v6635
    %v8470 = vunpack.c.l.b16 %v6636
    %v8471 = vunpack.c.h.b16 %v6636
    %v8472 = vunpack.c.l.b16 %v6637
    %v8473 = vunpack.c.h.b16 %v6637
    %v8474 = vunpack.c.l.b16 %v6638
    %v8475 = vunpack.c.h.b16 %v6638
    %v8476 = vunpack.c.l.b16 %v6639
    %v8477 = vunpack.c.h.b16 %v6639
    %v8478 = vunpack.c.l.b16 %v6640
    %v8479 = vunpack.c.h.b16 %v6640
    %v8480 = vunpack.c.l.b16 %v6641
    %v8481 = vunpack.c.h.b16 %v6641
    %v8482 = vunpack.c.l.b16 %v6642
    %v8483 = vunpack.c.h.b16 %v6642
    %v8484 = vunpack.c.l.b16 %v6643
    %v8485 = vunpack.c.h.b16 %v6643
    %v8486 = vunpack.c.l.b16 %v6644
    %v8487 = vunpack.c.h.b16 %v6644
    %v8488 = vunpack.c.l.b16 %v6645
    %v8489 = vunpack.c.h.b16 %v6645
    %v8490 = vunpack.c.l.b16 %v6646
    %v8491 = vunpack.c.h.b16 %v6646
    %v8492 = vunpack.c.l.b16 %v6647
    %v8493 = vunpack.c.h.b16 %v6647
    %v8494 = vunpack.c.l.b16 %v6648
    %v8495 = vunpack.c.h.b16 %v6648
    %v8496 = vunpack.c.l.b16 %v6649
    %v8497 = vunpack.c.h.b16 %v6649
    %v8498 = vunpack.c.l.b16 %v6650
    %v8499 = vunpack.c.h.b16 %v6650
    %v8500 = vunpack.c.l.b16 %v6651
    %v8501 = vunpack.c.h.b16 %v6651
    %v8502 = vunpack.c.l.b16 %v6652
    %v8503 = vunpack.c.h.b16 %v6652
    %v8504 = vunpack.c.l.b16 %v6653
    %v8505 = vunpack.c.h.b16 %v6653
    %v8506 = vunpack.c.l.b16 %v6654
    %v8507 = vunpack.c.h.b16 %v6654
    %v8508 = vunpack.c.l.b16 %v6655
    %v8509 = vunpack.c.h.b16 %v6655
    %v8510 = vunpack.c.l.b16 %v6656
    %v8511 = vunpack.c.h.b16 %v6656
    %v8512 = vunpack.c.l.b16 %v6657
    %v8513 = vunpack.c.h.b16 %v6657
    %v8514 = vunpack.c.l.b16 %v6658
    %v8515 = vunpack.c.h.b16 %v6658
    %v8516 = vunpack.c.l.b16 %v6659
    %v8517 = vunpack.c.h.b16 %v6659
    %v8518 = vunpack.c.l.b16 %v6660
    %v8519 = vunpack.c.h.b16 %v6660
    %v8520 = vunpack.c.l.b16 %v6661
    %v8521 = vunpack.c.h.b16 %v6661
    %v8522 = vunpack.c.l.b16 %v6662
    %v8523 = vunpack.c.h.b16 %v6662
    %v8524 = vunpack.c.l.b16 %v6663
    %v8525 = vunpack.c.h.b16 %v6663
    %v8526 = vunpack.c.l.b16 %v6664
    %v8527 = vunpack.c.h.b16 %v6664
    %v8528 = vunpack.c.l.b16 %v6665
    %v8529 = vunpack.c.h.b16 %v6665
    %v8530 = vunpack.c.l.b16 %v6666
    %v8531 = vunpack.c.h.b16 %v6666
    %v8532 = vunpack.c.l.b16 %v6667
    %v8533 = vunpack.c.h.b16 %v6667
    %v8534 = vunpack.c.l.b16 %v6668
    %v8535 = vunpack.c.h.b16 %v6668
    %v8536 = vunpack.c.l.b16 %v6669
    %v8537 = vunpack.c.h.b16 %v6669
    %v8538 = vunpack.c.l.b16 %v6670
    %v8539 = vunpack.c.h.b16 %v6670
    %v8540 = vunpack.c.l.b16 %v6671
    %v8541 = vunpack.c.h.b16 %v6671
    %v8542 = vunpack.c.l.b16 %v6672
    %v8543 = vunpack.c.h.b16 %v6672
    %v8544 = vunpack.c.l.b16 %v6673
    %v8545 = vunpack.c.h.b16 %v6673
    %v8546 = vunpack.c.l.b16 %v6674
    %v8547 = vunpack.c.h.b16 %v6674
    %v8548 = vunpack.c.l.b16 %v6675
    %v8549 = vunpack.c.h.b16 %v6675
    %v8550 = vunpack.c.l.b16 %v6676
    %v8551 = vunpack.c.h.b16 %v6676
    %v8552 = vunpack.c.l.b16 %v6677
    %v8553 = vunpack.c.h.b16 %v6677
    %v8554 = vunpack.c.l.b16 %v6678
    %v8555 = vunpack.c.h.b16 %v6678
    %v8556 = vunpack.c.l.b16 %v6679
    %v8557 = vunpack.c.h.b16 %v6679
    %v8558 = vunpack.c.l.b16 %v6680
    %v8559 = vunpack.c.h.b16 %v6680
    %v8560 = vunpack.c.l.b16 %v6681
    %v8561 = vunpack.c.h.b16 %v6681
    %v8562 = vunpack.c.l.b16 %v6682
    %v8563 = vunpack.c.h.b16 %v6682
    %v8564 = vunpack.c.l.b16 %v6683
    %v8565 = vunpack.c.h.b16 %v6683
    %v8566 = vunpack.c.l.b16 %v6684
    %v8567 = vunpack.c.h.b16 %v6684
    %v8568 = vunpack.c.l.b16 %v6685
    %v8569 = vunpack.c.h.b16 %v6685
    %v8570 = vunpack.c.l.b16 %v6686
    %v8571 = vunpack.c.h.b16 %v6686
    %v8572 = vunpack.c.l.b16 %v6687
    %v8573 = vunpack.c.h.b16 %v6687
    %v8574 = vunpack.c.l.b16 %v6688
    %v8575 = vunpack.c.h.b16 %v6688
    %v8576 = vunpack.c.l.b16 %v6689
    %v8577 = vunpack.c.h.b16 %v6689
    %v8578 = vunpack.c.l.b16 %v6690
    %v8579 = vunpack.c.h.b16 %v6690
    %v8580 = vunpack.c.l.b16 %v6691
    %v8581 = vunpack.c.h.b16 %v6691
    %v8582 = vunpack.c.l.b16 %v6692
    %v8583 = vunpack.c.h.b16 %v6692
    %v8584 = vunpack.c.l.b16 %v6693
    %v8585 = vunpack.c.h.b16 %v6693
    %v8586 = vunpack.c.l.b16 %v6694
    %v8587 = vunpack.c.h.b16 %v6694
    %v8588 = vunpack.c.l.b16 %v6695
    %v8589 = vunpack.c.h.b16 %v6695
    %v8590 = vunpack.c.l.b16 %v6696
    %v8591 = vunpack.c.h.b16 %v6696
    %v8592 = vunpack.c.l.b16 %v6697
    %v8593 = vunpack.c.h.b16 %v6697
    %v8594 = vunpack.c.l.b16 %v6698
    %v8595 = vunpack.c.h.b16 %v6698
    %v8596 = vunpack.c.l.b16 %v6699
    %v8597 = vunpack.c.h.b16 %v6699
    %v8598 = vunpack.c.l.b16 %v6700
    %v8599 = vunpack.c.h.b16 %v6700
    %v8600 = vunpack.c.l.b16 %v6701
    %v8601 = vunpack.c.h.b16 %v6701
    %v8602 = vunpack.c.l.b16 %v6702
    %v8603 = vunpack.c.h.b16 %v6702
    %v8604 = vunpack.c.l.b16 %v6703
    %v8605 = vunpack.c.h.b16 %v6703
    %v8606 = vunpack.c.l.b16 %v6704
    %v8607 = vunpack.c.h.b16 %v6704
    %v8608 = vunpack.c.l.b16 %v6705
    %v8609 = vunpack.c.h.b16 %v6705
    %v8610 = vunpack.c.l.b16 %v6706
    %v8611 = vunpack.c.h.b16 %v6706
    %v8612 = vunpack.c.l.b16 %v6707
    %v8613 = vunpack.c.h.b16 %v6707
    %v8614 = vunpack.c.l.b16 %v6708
    %v8615 = vunpack.c.h.b16 %v6708
    %v8616 = vunpack.c.l.b16 %v6709
    %v8617 = vunpack.c.h.b16 %v6709
    %v8618 = vunpack.c.l.b16 %v6710
    %v8619 = vunpack.c.h.b16 %v6710
    %v8620 = vunpack.c.l.b16 %v6711
    %v8621 = vunpack.c.h.b16 %v6711
    %v8622 = vunpack.c.l.b16 %v6712
    %v8623 = vunpack.c.h.b16 %v6712
    %v8624 = vunpack.c.l.b16 %v6713
    %v8625 = vunpack.c.h.b16 %v6713
    %v8626 = vunpack.c.l.b16 %v6714
    %v8627 = vunpack.c.h.b16 %v6714
    %v8628 = vunpack.c.l.b16 %v6715
    %v8629 = vunpack.c.h.b16 %v6715
    %v8630 = vunpack.c.l.b16 %v6716
    %v8631 = vunpack.c.h.b16 %v6716
    %v8632 = vunpack.c.l.b16 %v6717
    %v8633 = vunpack.c.h.b16 %v6717
    %v8634 = vunpack.c.l.b16 %v6718
    %v8635 = vunpack.c.h.b16 %v6718
    %v8636 = vunpack.c.l.b16 %v6719
    %v8637 = vunpack.c.h.b16 %v6719
    %v8638 = vunpack.c.l.b16 %v6720
    %v8639 = vunpack.c.h.b16 %v6720
    %v8640 = vunpack.c.l.b16 %v6721
    %v8641 = vunpack.c.h.b16 %v6721
    %v8642 = vunpack.c.l.b16 %v6722
    %v8643 = vunpack.c.h.b16 %v6722
    %v8644 = vunpack.c.l.b16 %v6723
    %v8645 = vunpack.c.h.b16 %v6723
    %v8646 = vunpack.c.l.b16 %v6724
    %v8647 = vunpack.c.h.b16 %v6724
    %v8648 = vunpack.c.l.b16 %v6725
    %v8649 = vunpack.c.h.b16 %v6725
    %v8650 = vunpack.c.l.b16 %v6726
    %v8651 = vunpack.c.h.b16 %v6726
    %v8652 = vunpack.c.l.b16 %v6727
    %v8653 = vunpack.c.h.b16 %v6727
    %v8654 = vunpack.c.l.b16 %v6728
    %v8655 = vunpack.c.h.b16 %v6728
    %v8656 = vunpack.c.l.b16 %v6729
    %v8657 = vunpack.c.h.b16 %v6729
    %v8658 = vunpack.c.l.b16 %v6730
    %v8659 = vunpack.c.h.b16 %v6730
    %v8660 = vunpack.c.l.b16 %v6731
    %v8661 = vunpack.c.h.b16 %v6731
    %v8662 = vunpack.c.l.b16 %v6732
    %v8663 = vunpack.c.h.b16 %v6732
    %v8664 = vunpack.c.l.b16 %v6733
    %v8665 = vunpack.c.h.b16 %v6733
    %v8666 = vunpack.c.l.b16 %v6734
    %v8667 = vunpack.c.h.b16 %v6734
    %v8668 = vunpack.c.l.b16 %v6735
    %v8669 = vunpack.c.h.b16 %v6735
    %v8670 = vunpack.c.l.b16 %v6736
    %v8671 = vunpack.c.h.b16 %v6736
    %v8672 = vunpack.c.l.b16 %v6737
    %v8673 = vunpack.c.h.b16 %v6737
    %v8674 = vunpack.c.l.b16 %v6738
    %v8675 = vunpack.c.h.b16 %v6738
    %v8676 = vunpack.c.l.b16 %v6739
    %v8677 = vunpack.c.h.b16 %v6739
    %v8678 = vunpack.c.l.b16 %v6740
    %v8679 = vunpack.c.h.b16 %v6740
    %v8680 = vunpack.c.l.b16 %v6741
    %v8681 = vunpack.c.h.b16 %v6741
    %v8682 = vunpack.c.l.b16 %v6742
    %v8683 = vunpack.c.h.b16 %v6742
    %v8684 = vunpack.c.l.b16 %v6743
    %v8685 = vunpack.c.h.b16 %v6743
    %v8686 = vunpack.c.l.b16 %v6744
    %v8687 = vunpack.c.h.b16 %v6744
    %v8688 = vunpack.c.l.b16 %v6745
    %v8689 = vunpack.c.h.b16 %v6745
    %v8690 = vunpack.c.l.b16 %v6746
    %v8691 = vunpack.c.h.b16 %v6746
    %v8692 = vunpack.c.l.b16 %v6747
    %v8693 = vunpack.c.h.b16 %v6747
    %v8694 = vunpack.c.l.b16 %v6748
    %v8695 = vunpack.c.h.b16 %v6748
    %v8696 = vunpack.c.l.b16 %v6749
    %v8697 = vunpack.c.h.b16 %v6749
    %v8698 = vunpack.c.l.b16 %v6750
    %v8699 = vunpack.c.h.b16 %v6750
    %v8700 = vunpack.c.l.b16 %v6751
    %v8701 = vunpack.c.h.b16 %v6751
    %v8702 = vunpack.c.l.b16 %v6752
    %v8703 = vunpack.c.h.b16 %v6752
    %v8704 = vunpack.c.l.b16 %v6753
    %v8705 = vunpack.c.h.b16 %v6753
    %v8706 = vunpack.c.l.b16 %v6754
    %v8707 = vunpack.c.h.b16 %v6754
    %v8708 = vunpack.c.l.b16 %v6755
    %v8709 = vunpack.c.h.b16 %v6755
    %v8710 = vunpack.c.l.b16 %v6756
    %v8711 = vunpack.c.h.b16 %v6756
    %v8712 = vunpack.c.l.b16 %v6757
    %v8713 = vunpack.c.h.b16 %v6757
    %v8714 = vunpack.c.l.b16 %v6758
    %v8715 = vunpack.c.h.b16 %v6758
    %v8716 = vunpack.c.l.b16 %v6759
    %v8717 = vunpack.c.h.b16 %v6759
    %v8718 = vunpack.c.l.b16 %v6760
    %v8719 = vunpack.c.h.b16 %v6760
    %v8720 = vunpack.c.l.b16 %v6761
    %v8721 = vunpack.c.h.b16 %v6761
    %v8722 = vunpack.c.l.b16 %v6762
    %v8723 = vunpack.c.h.b16 %v6762
    %v8724 = vunpack.c.l.b16 %v6763
    %v8725 = vunpack.c.h.b16 %v6763
    %v8726 = vunpack.c.l.b16 %v6764
    %v8727 = vunpack.c.h.b16 %v6764
    %v8728 = vunpack.c.l.b16 %v6765
    %v8729 = vunpack.c.h.b16 %v6765
    %v8730 = vunpack.c.l.b16 %v6766
    %v8731 = vunpack.c.h.b16 %v6766
    %v8732 = vunpack.c.l.b16 %v6767
    %v8733 = vunpack.c.h.b16 %v6767
    %v8734 = vunpack.c.l.b16 %v6768
    %v8735 = vunpack.c.h.b16 %v6768
    %v8736 = vunpack.c.l.b16 %v6769
    %v8737 = vunpack.c.h.b16 %v6769
    %v8738 = vunpack.c.l.b16 %v6770
    %v8739 = vunpack.c.h.b16 %v6770
    %v8740 = vunpack.c.l.b16 %v6771
    %v8741 = vunpack.c.h.b16 %v6771
    %v8742 = vunpack.c.l.b16 %v6772
    %v8743 = vunpack.c.h.b16 %v6772
    %v8744 = vunpack.c.l.b16 %v6773
    %v8745 = vunpack.c.h.b16 %v6773
    %v8746 = vunpack.c.l.b16 %v6774
    %v8747 = vunpack.c.h.b16 %v6774
    %v8748 = vunpack.c.l.b16 %v6775
    %v8749 = vunpack.c.h.b16 %v6775
    %v8750 = vunpack.c.l.b16 %v6776
    %v8751 = vunpack.c.h.b16 %v6776
    %v8752 = vunpack.c.l.b16 %v6777
    %v8753 = vunpack.c.h.b16 %v6777
    %v8754 = vunpack.c.l.b16 %v6778
    %v8755 = vunpack.c.h.b16 %v6778
    %v8756 = vunpack.c.l.b16 %v6779
    %v8757 = vunpack.c.h.b16 %v6779
    %v8758 = vunpack.c.l.b16 %v6780
    %v8759 = vunpack.c.h.b16 %v6780
    %v8760 = vunpack.c.l.b16 %v6781
    %v8761 = vunpack.c.h.b16 %v6781
    %v8762 = vunpack.c.l.b16 %v6782
    %v8763 = vunpack.c.h.b16 %v6782
    %v8764 = vunpack.c.l.b16 %v6783
    %v8765 = vunpack.c.h.b16 %v6783
    %v8766 = vunpack.c.l.b16 %v6784
    %v8767 = vunpack.c.h.b16 %v6784
    %v8768 = vunpack.c.l.b16 %v6785
    %v8769 = vunpack.c.h.b16 %v6785
    %v8770 = vunpack.c.l.b16 %v6786
    %v8771 = vunpack.c.h.b16 %v6786
    %v8772 = vunpack.c.l.b16 %v6787
    %v8773 = vunpack.c.h.b16 %v6787
    %v8774 = vunpack.c.l.b16 %v6788
    %v8775 = vunpack.c.h.b16 %v6788
    %v8776 = vunpack.c.l.b16 %v6789
    %v8777 = vunpack.c.h.b16 %v6789
    %v8778 = vunpack.c.l.b16 %v6790
    %v8779 = vunpack.c.h.b16 %v6790
    %v8780 = vunpack.c.l.b16 %v6791
    %v8781 = vunpack.c.h.b16 %v6791
    %v8782 = vunpack.c.l.b16 %v6792
    %v8783 = vunpack.c.h.b16 %v6792
    %v8784 = vunpack.c.l.b16 %v6793
    %v8785 = vunpack.c.h.b16 %v6793
    %v8786 = vunpack.c.l.b16 %v6794
    %v8787 = vunpack.c.h.b16 %v6794
    %v8788 = vunpack.c.l.b16 %v6795
    %v8789 = vunpack.c.h.b16 %v6795
    %v8790 = vunpack.c.l.b16 %v6796
    %v8791 = vunpack.c.h.b16 %v6796
    %v8792 = vunpack.c.l.b16 %v6797
    %v8793 = vunpack.c.h.b16 %v6797
    %v8794 = vunpack.c.l.b16 %v6798
    %v8795 = vunpack.c.h.b16 %v6798
    %v8796 = vunpack.c.l.b16 %v6799
    %v8797 = vunpack.c.h.b16 %v6799
    %v8798 = vunpack.c.l.b16 %v6800
    %v8799 = vunpack.c.h.b16 %v6800
    %v8800 = vunpack.c.l.b16 %v6801
    %v8801 = vunpack.c.h.b16 %v6801
    %v8802 = vunpack.c.l.b16 %v6802
    %v8803 = vunpack.c.h.b16 %v6802
    %v8804 = vunpack.c.l.b16 %v6803
    %v8805 = vunpack.c.h.b16 %v6803
    %v8806 = vunpack.c.l.b16 %v6804
    %v8807 = vunpack.c.h.b16 %v6804
    %v8808 = vunpack.c.l.b16 %v6805
    %v8809 = vunpack.c.h.b16 %v6805
    %v8810 = vunpack.c.l.b16 %v6806
    %v8811 = vunpack.c.h.b16 %v6806
    %v8812 = vunpack.c.l.b16 %v6807
    %v8813 = vunpack.c.h.b16 %v6807
    %v8814 = vunpack.c.l.b16 %v6808
    %v8815 = vunpack.c.h.b16 %v6808
    %v8816 = vunpack.c.l.b16 %v6809
    %v8817 = vunpack.c.h.b16 %v6809
    %v8818 = vunpack.c.l.b16 %v6810
    %v8819 = vunpack.c.h.b16 %v6810
    %v8820 = vunpack.c.l.b16 %v6811
    %v8821 = vunpack.c.h.b16 %v6811
    %v8822 = vunpack.c.l.b16 %v6812
    %v8823 = vunpack.c.h.b16 %v6812
    %v8824 = vunpack.c.l.b16 %v6813
    %v8825 = vunpack.c.h.b16 %v6813
    %v8826 = vunpack.c.l.b16 %v6814
    %v8827 = vunpack.c.h.b16 %v6814
    %v8828 = vunpack.c.l.b16 %v6815
    %v8829 = vunpack.c.h.b16 %v6815
    %v8830 = vunpack.c.l.b16 %v6816
    %v8831 = vunpack.c.h.b16 %v6816
    %v8832 = vunpack.c.l.b16 %v6817
    %v8833 = vunpack.c.h.b16 %v6817
    %v8834 = vunpack.c.l.b16 %v6818
    %v8835 = vunpack.c.h.b16 %v6818
    %v8836 = vunpack.c.l.b16 %v6819
    %v8837 = vunpack.c.h.b16 %v6819
    %v8838 = vunpack.c.l.b16 %v6820
    %v8839 = vunpack.c.h.b16 %v6820
    %v8840 = vunpack.c.l.b16 %v6821
    %v8841 = vunpack.c.h.b16 %v6821
    %v8842 = vunpack.c.l.b16 %v6822
    %v8843 = vunpack.c.h.b16 %v6822
    %v8844 = vunpack.c.l.b16 %v6823
    %v8845 = vunpack.c.h.b16 %v6823
    %v8846 = vunpack.c.l.b16 %v6824
    %v8847 = vunpack.c.h.b16 %v6824
    %v8848 = vunpack.c.l.b16 %v6825
    %v8849 = vunpack.c.h.b16 %v6825
    %v8850 = vunpack.c.l.b16 %v6826
    %v8851 = vunpack.c.h.b16 %v6826
    %v8852 = vunpack.c.l.b16 %v6827
    %v8853 = vunpack.c.h.b16 %v6827
    %v8854 = vunpack.c.l.b16 %v6828
    %v8855 = vunpack.c.h.b16 %v6828
    %v8856 = vunpack.c.l.b16 %v6829
    %v8857 = vunpack.c.h.b16 %v6829
    %v8858 = vunpack.c.l.b16 %v6830
    %v8859 = vunpack.c.h.b16 %v6830
    %v8860 = vunpack.c.l.b16 %v6831
    %v8861 = vunpack.c.h.b16 %v6831
    %v8862 = vunpack.c.l.b16 %v6832
    %v8863 = vunpack.c.h.b16 %v6832
    %v8864 = vunpack.c.l.b16 %v6833
    %v8865 = vunpack.c.h.b16 %v6833
    %v8866 = vunpack.c.l.b16 %v6834
    %v8867 = vunpack.c.h.b16 %v6834
    %v8868 = vunpack.c.l.b16 %v6835
    %v8869 = vunpack.c.h.b16 %v6835
    %v8870 = vunpack.c.l.b16 %v6836
    %v8871 = vunpack.c.h.b16 %v6836
    %v8872 = vunpack.c.l.b16 %v6837
    %v8873 = vunpack.c.h.b16 %v6837
    %v8874 = vunpack.c.l.b16 %v6838
    %v8875 = vunpack.c.h.b16 %v6838
    %v8876 = vunpack.c.l.b16 %v6839
    %v8877 = vunpack.c.h.b16 %v6839
    %v8878 = vunpack.c.l.b16 %v6840
    %v8879 = vunpack.c.h.b16 %v6840
    %v8880 = vunpack.c.l.b16 %v6841
    %v8881 = vunpack.c.h.b16 %v6841
    %v8882 = vunpack.c.l.b16 %v6842
    %v8883 = vunpack.c.h.b16 %v6842
    %v8884 = vunpack.c.l.b16 %v6843
    %v8885 = vunpack.c.h.b16 %v6843
    %v8886 = vunpack.c.l.b16 %v6844
    %v8887 = vunpack.c.h.b16 %v6844
    %v8888 = vunpack.c.l.b16 %v6845
    %v8889 = vunpack.c.h.b16 %v6845
    %v8890 = vunpack.c.l.b16 %v6846
    %v8891 = vunpack.c.h.b16 %v6846
    %v8892 = vunpack.c.l.b16 %v6847
    %v8893 = vunpack.c.h.b16 %v6847
    %v8894 = vunpack.c.l.b16 %v6848
    %v8895 = vunpack.c.h.b16 %v6848
    %v8896 = vunpack.c.l.b16 %v6849
    %v8897 = vunpack.c.h.b16 %v6849
    %v8898 = vunpack.c.l.b16 %v6850
    %v8899 = vunpack.c.h.b16 %v6850
    %v8900 = vunpack.c.l.b16 %v6851
    %v8901 = vunpack.c.h.b16 %v6851
    %v8902 = vunpack.c.l.b16 %v6852
    %v8903 = vunpack.c.h.b16 %v6852
    %v8904 = vunpack.c.l.b16 %v6853
    %v8905 = vunpack.c.h.b16 %v6853
    %v8906 = vunpack.c.l.b16 %v6854
    %v8907 = vunpack.c.h.b16 %v6854
    %v8908 = vunpack.c.l.b16 %v6855
    %v8909 = vunpack.c.h.b16 %v6855
    %v8910 = vunpack.c.l.b16 %v6856
    %v8911 = vunpack.c.h.b16 %v6856
    %v8912 = vunpack.c.l.b16 %v6857
    %v8913 = vunpack.c.h.b16 %v6857
    %v8914 = vunpack.c.l.b16 %v6858
    %v8915 = vunpack.c.h.b16 %v6858
    %v8916 = vunpack.c.l.b16 %v6859
    %v8917 = vunpack.c.h.b16 %v6859
    %v8918 = vunpack.c.l.b16 %v6860
    %v8919 = vunpack.c.h.b16 %v6860
    %v8920 = vunpack.c.l.b16 %v6861
    %v8921 = vunpack.c.h.b16 %v6861
    %v8922 = vunpack.c.l.b16 %v6862
    %v8923 = vunpack.c.h.b16 %v6862
    %v8924 = vunpack.c.l.b16 %v6863
    %v8925 = vunpack.c.h.b16 %v6863
    %v8926 = vunpack.c.l.b16 %v6864
    %v8927 = vunpack.c.h.b16 %v6864
    %v8928 = vunpack.c.l.b16 %v6865
    %v8929 = vunpack.c.h.b16 %v6865
    %v8930 = vunpack.c.l.b16 %v6866
    %v8931 = vunpack.c.h.b16 %v6866
    %v8932 = vunpack.c.l.b16 %v6867
    %v8933 = vunpack.c.h.b16 %v6867
    %v8934 = vunpack.c.l.b16 %v6868
    %v8935 = vunpack.c.h.b16 %v6868
    %v8936 = vunpack.c.l.b16 %v6869
    %v8937 = vunpack.c.h.b16 %v6869
    %v8938 = vunpack.c.l.b16 %v6870
    %v8939 = vunpack.c.h.b16 %v6870
    %v8940 = vunpack.c.l.b16 %v6871
    %v8941 = vunpack.c.h.b16 %v6871
    %v8942 = vunpack.c.l.b16 %v6872
    %v8943 = vunpack.c.h.b16 %v6872
    %v8944 = vunpack.c.l.b16 %v6873
    %v8945 = vunpack.c.h.b16 %v6873
    %v8946 = vunpack.c.l.b16 %v6874
    %v8947 = vunpack.c.h.b16 %v6874
    %v8948 = vunpack.c.l.b16 %v6875
    %v8949 = vunpack.c.h.b16 %v6875
    %v8950 = vunpack.c.l.b16 %v6876
    %v8951 = vunpack.c.h.b16 %v6876
    %v8952 = vunpack.c.l.b16 %v6877
    %v8953 = vunpack.c.h.b16 %v6877
    %v8954 = vunpack.c.l.b16 %v6878
    %v8955 = vunpack.c.h.b16 %v6878
    %v8956 = vunpack.c.l.b16 %v6879
    %v8957 = vunpack.c.h.b16 %v6879
    %v8958 = vunpack.c.l.b16 %v6880
    %v8959 = vunpack.c.h.b16 %v6880
    %v8960 = vunpack.c.l.b16 %v6881
    %v8961 = vunpack.c.h.b16 %v6881
    %v8962 = vunpack.c.l.b16 %v6882
    %v8963 = vunpack.c.h.b16 %v6882
    %v8964 = vunpack.c.l.b16 %v6883
    %v8965 = vunpack.c.h.b16 %v6883
    %v8966 = vunpack.c.l.b16 %v6884
    %v8967 = vunpack.c.h.b16 %v6884
    %v8968 = vunpack.c.l.b16 %v6885
    %v8969 = vunpack.c.h.b16 %v6885
    %v8970 = vunpack.c.l.b16 %v6886
    %v8971 = vunpack.c.h.b16 %v6886
    %v8972 = vunpack.c.l.b16 %v6887
    %v8973 = vunpack.c.h.b16 %v6887
    %v8974 = vunpack.c.l.b16 %v6888
    %v8975 = vunpack.c.h.b16 %v6888
    %v8976 = vunpack.c.l.b16 %v6889
    %v8977 = vunpack.c.h.b16 %v6889
    %v8978 = vunpack.c.l.b16 %v6890
    %v8979 = vunpack.c.h.b16 %v6890
    %v8980 = vunpack.c.l.b16 %v6891
    %v8981 = vunpack.c.h.b16 %v6891
    %v8982 = vunpack.c.l.b16 %v6892
    %v8983 = vunpack.c.h.b16 %v6892
    %v8984 = vunpack.c.l.b16 %v6893
    %v8985 = vunpack.c.h.b16 %v6893
    %v8986 = vunpack.c.l.b16 %v6894
    %v8987 = vunpack.c.h.b16 %v6894
    %v8988 = vunpack.c.l.b16 %v6895
    %v8989 = vunpack.c.h.b16 %v6895
    %v8990 = vunpack.c.l.b16 %v6896
    %v8991 = vunpack.c.h.b16 %v6896
    %v8992 = vunpack.c.l.b16 %v6897
    %v8993 = vunpack.c.h.b16 %v6897
    %v8994 = vunpack.c.l.b16 %v6898
    %v8995 = vunpack.c.h.b16 %v6898
    %v8996 = vunpack.c.l.b16 %v6899
    %v8997 = vunpack.c.h.b16 %v6899
    %v8998 = vunpack.c.l.b16 %v6900
    %v8999 = vunpack.c.h.b16 %v6900
    %v9000 = vunpack.c.l.b16 %v6901
    %v9001 = vunpack.c.h.b16 %v6901
    %v9002 = vunpack.c.l.b16 %v6902
    %v9003 = vunpack.c.h.b16 %v6902
    %v9004 = vunpack.c.l.b16 %v6903
    %v9005 = vunpack.c.h.b16 %v6903
    %v9006 = vunpack.c.l.b16 %v6904
    %v9007 = vunpack.c.h.b16 %v6904
    %v9008 = vunpack.c.l.b16 %v6905
    %v9009 = vunpack.c.h.b16 %v6905
    %v9010 = vunpack.c.l.b16 %v6906
    %v9011 = vunpack.c.h.b16 %v6906
    %v9012 = vunpack.c.l.b16 %v6907
    %v9013 = vunpack.c.h.b16 %v6907
    %v9014 = vunpack.c.l.b16 %v6908
    %v9015 = vunpack.c.h.b16 %v6908
    %v9016 = vunpack.c.l.b16 %v6909
    %v9017 = vunpack.c.h.b16 %v6909
    %v9018 = vunpack.c.l.b16 %v6910
    %v9019 = vunpack.c.h.b16 %v6910
    %v9020 = vunpack.c.l.b16 %v6911
    %v9021 = vunpack.c.h.b16 %v6911
    %v9022 = vunpack.c.l.b16 %v6912
    %v9023 = vunpack.c.h.b16 %v6912
    %v9024 = vunpack.c.l.b16 %v6913
    %v9025 = vunpack.c.h.b16 %v6913
    %v9026 = vunpack.c.l.b16 %v6914
    %v9027 = vunpack.c.h.b16 %v6914
    %v9028 = vunpack.c.l.b16 %v6915
    %v9029 = vunpack.c.h.b16 %v6915
    %v9030 = vunpack.c.l.b16 %v6916
    %v9031 = vunpack.c.h.b16 %v6916
    %v9032 = vunpack.c.l.b16 %v6917
    %v9033 = vunpack.c.h.b16 %v6917
    %v9034 = vunpack.c.l.b16 %v6918
    %v9035 = vunpack.c.h.b16 %v6918
    %v9036 = vunpack.c.l.b16 %v6919
    %v9037 = vunpack.c.h.b16 %v6919
    %v9038 = vunpack.c.l.b16 %v6920
    %v9039 = vunpack.c.h.b16 %v6920
    %v9040 = vunpack.c.l.b16 %v6921
    %v9041 = vunpack.c.h.b16 %v6921
    %v9042 = vunpack.c.l.b16 %v6922
    %v9043 = vunpack.c.h.b16 %v6922
    %v9044 = vunpack.c.l.b16 %v6923
    %v9045 = vunpack.c.h.b16 %v6923
    %v9046 = vunpack.c.l.b16 %v6924
    %v9047 = vunpack.c.h.b16 %v6924
    %v9048 = vunpack.c.l.b16 %v6925
    %v9049 = vunpack.c.h.b16 %v6925
    %v9050 = vunpack.c.l.b16 %v6926
    %v9051 = vunpack.c.h.b16 %v6926
    %v9052 = vunpack.c.l.b16 %v6927
    %v9053 = vunpack.c.h.b16 %v6927
    %v9054 = vunpack.c.l.b16 %v6928
    %v9055 = vunpack.c.h.b16 %v6928
    %v9056 = vunpack.c.l.b16 %v6929
    %v9057 = vunpack.c.h.b16 %v6929
    %v9058 = vunpack.c.l.b16 %v6930
    %v9059 = vunpack.c.h.b16 %v6930
    %v9060 = vunpack.c.l.b16 %v6931
    %v9061 = vunpack.c.h.b16 %v6931
    %v9062 = vunpack.c.l.b16 %v6932
    %v9063 = vunpack.c.h.b16 %v6932
    %v9064 = vunpack.c.l.b16 %v6933
    %v9065 = vunpack.c.h.b16 %v6933
    %v9066 = vunpack.c.l.b16 %v6934
    %v9067 = vunpack.c.h.b16 %v6934
    %v9068 = vunpack.c.l.b16 %v6935
    %v9069 = vunpack.c.h.b16 %v6935
    %v9070 = vunpack.c.l.b16 %v6936
    %v9071 = vunpack.c.h.b16 %v6936
    %v9072 = vunpack.c.l.b16 %v6937
    %v9073 = vunpack.c.h.b16 %v6937
    %v9074 = vunpack.c.l.b16 %v6938
    %v9075 = vunpack.c.h.b16 %v6938
    %v9076 = vunpack.c.l.b16 %v6939
    %v9077 = vunpack.c.h.b16 %v6939
    %v9078 = vunpack.c.l.b16 %v6940
    %v9079 = vunpack.c.h.b16 %v6940
    %v9080 = vunpack.c.l.b16 %v6941
    %v9081 = vunpack.c.h.b16 %v6941
    %v9082 = vunpack.c.l.b16 %v6942
    %v9083 = vunpack.c.h.b16 %v6942
    %v9084 = vunpack.c.l.b16 %v6943
    %v9085 = vunpack.c.h.b16 %v6943
    %v9086 = vunpack.c.l.b16 %v6944
    %v9087 = vunpack.c.h.b16 %v6944
    %v9088 = vunpack.c.l.b16 %v6945
    %v9089 = vunpack.c.h.b16 %v6945
    %v9090 = vunpack.c.l.b16 %v6946
    %v9091 = vunpack.c.h.b16 %v6946
    %v9092 = vunpack.c.l.b16 %v6947
    %v9093 = vunpack.c.h.b16 %v6947
    %v9094 = vunpack.c.l.b16 %v6948
    %v9095 = vunpack.c.h.b16 %v6948
    %v9096 = vunpack.c.l.b16 %v6949
    %v9097 = vunpack.c.h.b16 %v6949
    %v9098 = vunpack.c.l.b16 %v6950
    %v9099 = vunpack.c.h.b16 %v6950
    %v9100 = vunpack.c.l.b16 %v6951
    %v9101 = vunpack.c.h.b16 %v6951
    %v9102 = vunpack.c.l.b16 %v6952
    %v9103 = vunpack.c.h.b16 %v6952
    %v9104 = vunpack.c.l.b16 %v6953
    %v9105 = vunpack.c.h.b16 %v6953
    %v9106 = vunpack.c.l.b16 %v6954
    %v9107 = vunpack.c.h.b16 %v6954
    %v9108 = vunpack.c.l.b16 %v6955
    %v9109 = vunpack.c.h.b16 %v6955
    %v9110 = vunpack.c.l.b16 %v6956
    %v9111 = vunpack.c.h.b16 %v6956
    %v9112 = vunpack.c.l.b16 %v6957
    %v9113 = vunpack.c.h.b16 %v6957
    %v9114 = vunpack.c.l.b16 %v6958
    %v9115 = vunpack.c.h.b16 %v6958
    %v9116 = vunpack.c.l.b16 %v6959
    %v9117 = vunpack.c.h.b16 %v6959
    %v9118 = vunpack.c.l.b16 %v6960
    %v9119 = vunpack.c.h.b16 %v6960
    %v9120 = vunpack.c.l.b16 %v6961
    %v9121 = vunpack.c.h.b16 %v6961
    %v9122 = vunpack.c.l.b16 %v6962
    %v9123 = vunpack.c.h.b16 %v6962
    %v9124 = vunpack.c.l.b16 %v6963
    %v9125 = vunpack.c.h.b16 %v6963
    %v9126 = vunpack.c.l.b16 %v6964
    %v9127 = vunpack.c.h.b16 %v6964
    %v9128 = vunpack.c.l.b16 %v6965
    %v9129 = vunpack.c.h.b16 %v6965
    %v9130 = vunpack.c.l.b16 %v6966
    %v9131 = vunpack.c.h.b16 %v6966
    %v9132 = vunpack.c.l.b16 %v6967
    %v9133 = vunpack.c.h.b16 %v6967
    %v9134 = vunpack.c.l.b16 %v6968
    %v9135 = vunpack.c.h.b16 %v6968
    %v9136 = vunpack.c.l.b16 %v6969
    %v9137 = vunpack.c.h.b16 %v6969
    %v9138 = vunpack.c.l.b16 %v6970
    %v9139 = vunpack.c.h.b16 %v6970
    %v9140 = vunpack.c.l.b16 %v6971
    %v9141 = vunpack.c.h.b16 %v6971
    %v9142 = vunpack.c.l.b16 %v6972
    %v9143 = vunpack.c.h.b16 %v6972
    %v9144 = vunpack.c.l.b16 %v6973
    %v9145 = vunpack.c.h.b16 %v6973
    %v9146 = vunpack.c.l.b16 %v6974
    %v9147 = vunpack.c.h.b16 %v6974
    %v9148 = vunpack.c.l.b16 %v6975
    %v9149 = vunpack.c.h.b16 %v6975
    %v9150 = vunpack.c.l.b16 %v6976
    %v9151 = vunpack.c.h.b16 %v6976
    %v9152 = vunpack.c.l.b16 %v6977
    %v9153 = vunpack.c.h.b16 %v6977
    %v9154 = vunpack.c.l.b16 %v6978
    %v9155 = vunpack.c.h.b16 %v6978
    %v9156 = vunpack.c.l.b16 %v6979
    %v9157 = vunpack.c.h.b16 %v6979
    %v9158 = vunpack.c.l.b16 %v6980
    %v9159 = vunpack.c.h.b16 %v6980
    %v9160 = vunpack.c.l.b16 %v6981
    %v9161 = vunpack.c.h.b16 %v6981
    %v9162 = vunpack.c.l.b16 %v6982
    %v9163 = vunpack.c.h.b16 %v6982
    %v9164 = vunpack.c.l.b16 %v6983
    %v9165 = vunpack.c.h.b16 %v6983
    %v9166 = vunpack.c.l.b16 %v6984
    %v9167 = vunpack.c.h.b16 %v6984
    %v9168 = vunpack.c.l.b16 %v6985
    %v9169 = vunpack.c.h.b16 %v6985
    %v9170 = vunpack.c.l.b16 %v6986
    %v9171 = vunpack.c.h.b16 %v6986
    %v9172 = vunpack.c.l.b16 %v6987
    %v9173 = vunpack.c.h.b16 %v6987
    %v9174 = vunpack.c.l.b16 %v6988
    %v9175 = vunpack.c.h.b16 %v6988
    %v9176 = vunpack.c.l.b16 %v6989
    %v9177 = vunpack.c.h.b16 %v6989
    %v9178 = vunpack.c.l.b16 %v6990
    %v9179 = vunpack.c.h.b16 %v6990
    %v9180 = vunpack.c.l.b16 %v6991
    %v9181 = vunpack.c.h.b16 %v6991
    %v9182 = vunpack.c.l.b16 %v6992
    %v9183 = vunpack.c.h.b16 %v6992
    %v9184 = vunpack.c.l.b16 %v6993
    %v9185 = vunpack.c.h.b16 %v6993
    %v9186 = vunpack.c.l.b16 %v6994
    %v9187 = vunpack.c.h.b16 %v6994
    %v9188 = vunpack.c.l.b16 %v6995
    %v9189 = vunpack.c.h.b16 %v6995
    %v9190 = vunpack.c.l.b16 %v6996
    %v9191 = vunpack.c.h.b16 %v6996
    %v9192 = vunpack.c.l.b16 %v6997
    %v9193 = vunpack.c.h.b16 %v6997
    %v9194 = vunpack.c.l.b16 %v6998
    %v9195 = vunpack.c.h.b16 %v6998
    %v9196 = vunpack.c.l.b16 %v6999
    %v9197 = vunpack.c.h.b16 %v6999
    %v9198 = vunpack.c.l.b16 %v7000
    %v9199 = vunpack.c.h.b16 %v7000
    %v9200 = vunpack.c.l.b16 %v7001
    %v9201 = vunpack.c.h.b16 %v7001
    %v9202 = vunpack.c.l.b16 %v7002
    %v9203 = vunpack.c.h.b16 %v7002
    %v9204 = vunpack.c.l.b16 %v7003
    %v9205 = vunpack.c.h.b16 %v7003
    %v9206 = vunpack.c.l.b16 %v7004
    %v9207 = vunpack.c.h.b16 %v7004
    %v9208 = vunpack.c.l.b16 %v7005
    %v9209 = vunpack.c.h.b16 %v7005
    %v9210 = vunpack.c.l.b16 %v7006
    %v9211 = vunpack.c.h.b16 %v7006
    %v9212 = vunpack.c.l.b16 %v7007
    %v9213 = vunpack.c.h.b16 %v7007
    %v9214 = vunpack.c.l.b16 %v7008
    %v9215 = vunpack.c.h.b16 %v7008
    %v9216 = vunpack.c.l.b16 %v7009
    %v9217 = vunpack.c.h.b16 %v7009
    %v9218 = vunpack.c.l.b16 %v7010
    %v9219 = vunpack.c.h.b16 %v7010
    %v9220 = vunpack.c.l.b16 %v7011
    %v9221 = vunpack.c.h.b16 %v7011
    %v9222 = vunpack.c.l.b16 %v7012
    %v9223 = vunpack.c.h.b16 %v7012
    %v9224 = vunpack.c.l.b16 %v7013
    %v9225 = vunpack.c.h.b16 %v7013
    %v9226 = vunpack.c.l.b16 %v7014
    %v9227 = vunpack.c.h.b16 %v7014
    %v9228 = vunpack.c.l.b16 %v7015
    %v9229 = vunpack.c.h.b16 %v7015
    %v9230 = vunpack.c.l.b16 %v7016
    %v9231 = vunpack.c.h.b16 %v7016
    %v9232 = vunpack.c.l.b16 %v7017
    %v9233 = vunpack.c.h.b16 %v7017
    %v9234 = vunpack.c.l.b16 %v7018
    %v9235 = vunpack.c.h.b16 %v7018
    %v9236 = vunpack.c.l.b16 %v7019
    %v9237 = vunpack.c.h.b16 %v7019
    %v9238 = vunpack.c.l.b16 %v7020
    %v9239 = vunpack.c.h.b16 %v7020
    %v9240 = vunpack.c.l.b16 %v7021
    %v9241 = vunpack.c.h.b16 %v7021
    %v9242 = vunpack.c.l.b16 %v7022
    %v9243 = vunpack.c.h.b16 %v7022
    %v9244 = vunpack.c.l.b16 %v7023
    %v9245 = vunpack.c.h.b16 %v7023
    %v9246 = vunpack.c.l.b16 %v7024
    %v9247 = vunpack.c.h.b16 %v7024
    %v9248 = vunpack.c.l.b16 %v7025
    %v9249 = vunpack.c.h.b16 %v7025
    %v9250 = vunpack.c.l.b16 %v7026
    %v9251 = vunpack.c.h.b16 %v7026
    %v9252 = vunpack.c.l.b16 %v7027
    %v9253 = vunpack.c.h.b16 %v7027
    %v9254 = vunpack.c.l.b16 %v7028
    %v9255 = vunpack.c.h.b16 %v7028
    %v9256 = vunpack.c.l.b16 %v7029
    %v9257 = vunpack.c.h.b16 %v7029
    %v9258 = vunpack.c.l.b16 %v7030
    %v9259 = vunpack.c.h.b16 %v7030
    %v9260 = vunpack.c.l.b16 %v7031
    %v9261 = vunpack.c.h.b16 %v7031
    %v9262 = vunpack.c.l.b16 %v7032
    %v9263 = vunpack.c.h.b16 %v7032
    %v9264 = vunpack.c.l.b16 %v7033
    %v9265 = vunpack.c.h.b16 %v7033
    %v9266 = vunpack.c.l.b16 %v7034
    %v9267 = vunpack.c.h.b16 %v7034
    %v9268 = vunpack.c.l.b16 %v7035
    %v9269 = vunpack.c.h.b16 %v7035
    %v9270 = vunpack.c.l.b16 %v7036
    %v9271 = vunpack.c.h.b16 %v7036
    %v9272 = vunpack.c.l.b16 %v7037
    %v9273 = vunpack.c.h.b16 %v7037
    %v9274 = vunpack.c.l.b16 %v7038
    %v9275 = vunpack.c.h.b16 %v7038
    %v9276 = vunpack.c.l.b16 %v7039
    %v9277 = vunpack.c.h.b16 %v7039
    %v9278 = vunpack.c.l.b16 %v7040
    %v9279 = vunpack.c.h.b16 %v7040
    %v9280 = vunpack.c.l.b16 %v7041
    %v9281 = vunpack.c.h.b16 %v7041
    %v9282 = vunpack.c.l.b16 %v7042
    %v9283 = vunpack.c.h.b16 %v7042
    %v9284 = vunpack.c.l.b16 %v7043
    %v9285 = vunpack.c.h.b16 %v7043
    %v9286 = vunpack.c.l.b16 %v7044
    %v9287 = vunpack.c.h.b16 %v7044
    %v9288 = vunpack.c.l.b16 %v7045
    %v9289 = vunpack.c.h.b16 %v7045
    %v9290 = vunpack.c.l.b16 %v7046
    %v9291 = vunpack.c.h.b16 %v7046
    %v9292 = vunpack.c.l.b16 %v7047
    %v9293 = vunpack.c.h.b16 %v7047
    %v9294 = vunpack.c.l.b16 %v7048
    %v9295 = vunpack.c.h.b16 %v7048
    %v9296 = vunpack.c.l.b16 %v7049
    %v9297 = vunpack.c.h.b16 %v7049
    %v9298 = vunpack.c.l.b16 %v7050
    %v9299 = vunpack.c.h.b16 %v7050
    %v9300 = vunpack.c.l.b16 %v7051
    %v9301 = vunpack.c.h.b16 %v7051
    %v9302 = vunpack.c.l.b16 %v7052
    %v9303 = vunpack.c.h.b16 %v7052
    %v9304 = vunpack.c.l.b16 %v7053
    %v9305 = vunpack.c.h.b16 %v7053
    %v9306 = vunpack.c.l.b16 %v7054
    %v9307 = vunpack.c.h.b16 %v7054
    %v9308 = vunpack.c.l.b16 %v7055
    %v9309 = vunpack.c.h.b16 %v7055
    %v9310 = vunpack.c.l.b16 %v7056
    %v9311 = vunpack.c.h.b16 %v7056
    %v9312 = vunpack.c.l.b16 %v7057
    %v9313 = vunpack.c.h.b16 %v7057
    %v9314 = vunpack.c.l.b16 %v7058
    %v9315 = vunpack.c.h.b16 %v7058
    %v9316 = vunpack.c.l.b16 %v7059
    %v9317 = vunpack.c.h.b16 %v7059
    %v9318 = vunpack.c.l.b16 %v7060
    %v9319 = vunpack.c.h.b16 %v7060
    %v9320 = vunpack.c.l.b16 %v7061
    %v9321 = vunpack.c.h.b16 %v7061
    %v9322 = vunpack.c.l.b16 %v7062
    %v9323 = vunpack.c.h.b16 %v7062
    %v9324 = vunpack.c.l.b16 %v7063
    %v9325 = vunpack.c.h.b16 %v7063
    %v9326 = vunpack.c.l.b16 %v7064
    %v9327 = vunpack.c.h.b16 %v7064
    %v9328 = vunpack.c.l.b16 %v7065
    %v9329 = vunpack.c.h.b16 %v7065
    %v9330 = vunpack.c.l.b16 %v7066
    %v9331 = vunpack.c.h.b16 %v7066
    %v9332 = vunpack.c.l.b16 %v7067
    %v9333 = vunpack.c.h.b16 %v7067
    %v9334 = vunpack.c.l.b16 %v7068
    %v9335 = vunpack.c.h.b16 %v7068
    %v9336 = vunpack.c.l.b16 %v7069
    %v9337 = vunpack.c.h.b16 %v7069
    %v9338 = vunpack.c.l.b16 %v7070
    %v9339 = vunpack.c.h.b16 %v7070
    %v9340 = vunpack.c.l.b16 %v7071
    %v9341 = vunpack.c.h.b16 %v7071
    %v9342 = vunpack.c.l.b16 %v7072
    %v9343 = vunpack.c.h.b16 %v7072
    %v9344 = vunpack.c.l.b16 %v7073
    %v9345 = vunpack.c.h.b16 %v7073
    %v9346 = vunpack.c.l.b16 %v7074
    %v9347 = vunpack.c.h.b16 %v7074
    %v9348 = vunpack.c.l.b16 %v7075
    %v9349 = vunpack.c.h.b16 %v7075
    %v9350 = vunpack.c.l.b16 %v7076
    %v9351 = vunpack.c.h.b16 %v7076
    %v9352 = vunpack.c.l.b16 %v7077
    %v9353 = vunpack.c.h.b16 %v7077
    %v9354 = vunpack.c.l.b16 %v7078
    %v9355 = vunpack.c.h.b16 %v7078
    %v9356 = vunpack.c.l.b16 %v7079
    %v9357 = vunpack.c.h.b16 %v7079
    %v9358 = vunpack.c.l.b16 %v7080
    %v9359 = vunpack.c.h.b16 %v7080
    %v9360 = vunpack.c.l.b16 %v7081
    %v9361 = vunpack.c.h.b16 %v7081
    %v9362 = vunpack.c.l.b16 %v7082
    %v9363 = vunpack.c.h.b16 %v7082
    %v9364 = vunpack.c.l.b16 %v7083
    %v9365 = vunpack.c.h.b16 %v7083
    %v9366 = vunpack.c.l.b16 %v7084
    %v9367 = vunpack.c.h.b16 %v7084
    %v9368 = vunpack.c.l.b16 %v7085
    %v9369 = vunpack.c.h.b16 %v7085
    %v9370 = vunpack.c.l.b16 %v7086
    %v9371 = vunpack.c.h.b16 %v7086
    %v9372 = vunpack.c.l.b16 %v7087
    %v9373 = vunpack.c.h.b16 %v7087
    %v9374 = vunpack.c.l.b16 %v7088
    %v9375 = vunpack.c.h.b16 %v7088
    %v9376 = vunpack.c.l.b16 %v7089
    %v9377 = vunpack.c.h.b16 %v7089
    %v9378 = vunpack.c.l.b16 %v7090
    %v9379 = vunpack.c.h.b16 %v7090
    %v9380 = vunpack.c.l.b16 %v7091
    %v9381 = vunpack.c.h.b16 %v7091
    %v9382 = vunpack.c.l.b16 %v7092
    %v9383 = vunpack.c.h.b16 %v7092
    %v9384 = vunpack.c.l.b16 %v7093
    %v9385 = vunpack.c.h.b16 %v7093
    %v9386 = vunpack.c.l.b16 %v7094
    %v9387 = vunpack.c.h.b16 %v7094
    %v9388 = vunpack.c.l.b16 %v7095
    %v9389 = vunpack.c.h.b16 %v7095
    %v9390 = vunpack.c.l.b16 %v7096
    %v9391 = vunpack.c.h.b16 %v7096
    %v9392 = vunpack.c.l.b16 %v7097
    %v9393 = vunpack.c.h.b16 %v7097
    %v9394 = vunpack.c.l.b16 %v7098
    %v9395 = vunpack.c.h.b16 %v7098
    %v9396 = vunpack.c.l.b16 %v7099
    %v9397 = vunpack.c.h.b16 %v7099
    %v9398 = vunpack.c.l.b16 %v7100
    %v9399 = vunpack.c.h.b16 %v7100
    %v9400 = vunpack.c.l.b16 %v7101
    %v9401 = vunpack.c.h.b16 %v7101
    %v9402 = vunpack.c.l.b16 %v7102
    %v9403 = vunpack.c.h.b16 %v7102
    %v9404 = vunpack.c.l.b16 %v7103
    %v9405 = vunpack.c.h.b16 %v7103
    %v9406 = vunpack.c.l.b16 %v7104
    %v9407 = vunpack.c.h.b16 %v7104
    %v9408 = vunpack.c.l.b16 %v7105
    %v9409 = vunpack.c.h.b16 %v7105
    %v9410 = vunpack.c.l.b16 %v7106
    %v9411 = vunpack.c.h.b16 %v7106
    %v9412 = vunpack.c.l.b16 %v7107
    %v9413 = vunpack.c.h.b16 %v7107
    %v9414 = vunpack.c.l.b16 %v7108
    %v9415 = vunpack.c.h.b16 %v7108
    %v9416 = vunpack.c.l.b16 %v7109
    %v9417 = vunpack.c.h.b16 %v7109
    %v9418 = vunpack.c.l.b16 %v7110
    %v9419 = vunpack.c.h.b16 %v7110
    %v9420 = vunpack.c.l.b16 %v7111
    %v9421 = vunpack.c.h.b16 %v7111
    %v9422 = vunpack.c.l.b16 %v7112
    %v9423 = vunpack.c.h.b16 %v7112
    %v9424 = vunpack.c.l.b16 %v7113
    %v9425 = vunpack.c.h.b16 %v7113
    %v9426 = vunpack.c.l.b16 %v7114
    %v9427 = vunpack.c.h.b16 %v7114
    %v9428 = vunpack.c.l.b16 %v7115
    %v9429 = vunpack.c.h.b16 %v7115
    %v9430 = vunpack.c.l.b16 %v7116
    %v9431 = vunpack.c.h.b16 %v7116
    %v9432 = vunpack.c.l.b16 %v7117
    %v9433 = vunpack.c.h.b16 %v7117
    %v9434 = vunpack.c.l.b16 %v7118
    %v9435 = vunpack.c.h.b16 %v7118
    %v9436 = vunpack.c.l.b16 %v7119
    %v9437 = vunpack.c.h.b16 %v7119
    %v9438 = vunpack.c.l.b16 %v7120
    %v9439 = vunpack.c.h.b16 %v7120
    %v9440 = vunpack.c.l.b16 %v7121
    %v9441 = vunpack.c.h.b16 %v7121
    %v9442 = vunpack.c.l.b16 %v7122
    %v9443 = vunpack.c.h.b16 %v7122
    %v9444 = vunpack.c.l.b16 %v7123
    %v9445 = vunpack.c.h.b16 %v7123
    %v9446 = vunpack.c.l.b16 %v7124
    %v9447 = vunpack.c.h.b16 %v7124
    %v9448 = vunpack.c.l.b16 %v7125
    %v9449 = vunpack.c.h.b16 %v7125
    %v9450 = vunpack.c.l.b16 %v7126
    %v9451 = vunpack.c.h.b16 %v7126
    %v9452 = vunpack.c.l.b16 %v7127
    %v9453 = vunpack.c.h.b16 %v7127
    %v9454 = vunpack.c.l.b16 %v7128
    %v9455 = vunpack.c.h.b16 %v7128
    %v9456 = vunpack.c.l.b16 %v7129
    %v9457 = vunpack.c.h.b16 %v7129
    %v9458 = vunpack.c.l.b16 %v7130
    %v9459 = vunpack.c.h.b16 %v7130
    %v9460 = vunpack.c.l.b16 %v7131
    %v9461 = vunpack.c.h.b16 %v7131
    %v9462 = vunpack.c.l.b16 %v7132
    %v9463 = vunpack.c.h.b16 %v7132
    %v9464 = vunpack.c.l.b16 %v7133
    %v9465 = vunpack.c.h.b16 %v7133
    %v9466 = vunpack.c.l.b16 %v7134
    %v9467 = vunpack.c.h.b16 %v7134
    %v9468 = vunpack.c.l.b16 %v7135
    %v9469 = vunpack.c.h.b16 %v7135
    %v9470 = vunpack.c.l.b16 %v7136
    %v9471 = vunpack.c.h.b16 %v7136
    %v9472 = vunpack.c.l.b16 %v7137
    %v9473 = vunpack.c.h.b16 %v7137
    %v9474 = vunpack.c.l.b16 %v7138
    %v9475 = vunpack.c.h.b16 %v7138
    %v9476 = vunpack.c.l.b16 %v7139
    %v9477 = vunpack.c.h.b16 %v7139
    %v9478 = vunpack.c.l.b16 %v7140
    %v9479 = vunpack.c.h.b16 %v7140
    %v9480 = vunpack.c.l.b16 %v7141
    %v9481 = vunpack.c.h.b16 %v7141
    %v9482 = vunpack.c.l.b16 %v7142
    %v9483 = vunpack.c.h.b16 %v7142
    %v9484 = vunpack.c.l.b16 %v7143
    %v9485 = vunpack.c.h.b16 %v7143
    %v9486 = vunpack.c.l.b16 %v7144
    %v9487 = vunpack.c.h.b16 %v7144
    %v9488 = vunpack.c.l.b16 %v7145
    %v9489 = vunpack.c.h.b16 %v7145
    %v9490 = vunpack.c.l.b16 %v7146
    %v9491 = vunpack.c.h.b16 %v7146
    %v9492 = vunpack.c.l.b16 %v7147
    %v9493 = vunpack.c.h.b16 %v7147
    %v9494 = vunpack.c.l.b16 %v7148
    %v9495 = vunpack.c.h.b16 %v7148
    %v9496 = vunpack.c.l.b16 %v7149
    %v9497 = vunpack.c.h.b16 %v7149
    %v9498 = vunpack.c.l.b16 %v7150
    %v9499 = vunpack.c.h.b16 %v7150
    %v9500 = vunpack.c.l.b16 %v7151
    %v9501 = vunpack.c.h.b16 %v7151
    %v9502 = vunpack.c.l.b16 %v7152
    %v9503 = vunpack.c.h.b16 %v7152
    %v9504 = vunpack.c.l.b16 %v7153
    %v9505 = vunpack.c.h.b16 %v7153
    %v9506 = vunpack.c.l.b16 %v7154
    %v9507 = vunpack.c.h.b16 %v7154
    %v9508 = vunpack.c.l.b16 %v7155
    %v9509 = vunpack.c.h.b16 %v7155
    %v9510 = vunpack.c.l.b16 %v7156
    %v9511 = vunpack.c.h.b16 %v7156
    %v9512 = vunpack.c.l.b16 %v7157
    %v9513 = vunpack.c.h.b16 %v7157
    %v9514 = vunpack.c.l.b16 %v7158
    %v9515 = vunpack.c.h.b16 %v7158
    %v9516 = vunpack.c.l.b16 %v7159
    %v9517 = vunpack.c.h.b16 %v7159
    %v9518 = vunpack.c.l.b16 %v7160
    %v9519 = vunpack.c.h.b16 %v7160
    %v9520 = vunpack.c.l.b16 %v7161
    %v9521 = vunpack.c.h.b16 %v7161
    %v9522 = vunpack.c.l.b16 %v7162
    %v9523 = vunpack.c.h.b16 %v7162
    %v9524 = vunpack.c.l.b16 %v7163
    %v9525 = vunpack.c.h.b16 %v7163
    %v9526 = vunpack.c.l.b16 %v7164
    %v9527 = vunpack.c.h.b16 %v7164
    %v9528 = vunpack.c.l.b16 %v7165
    %v9529 = vunpack.c.h.b16 %v7165
    %v9530 = vunpack.c.l.b16 %v7166
    %v9531 = vunpack.c.h.b16 %v7166
    %v9532 = vunpack.c.l.b16 %v7167
    %v9533 = vunpack.c.h.b16 %v7167
    %v9534 = vunpack.c.l.b16 %v7168
    %v9535 = vunpack.c.h.b16 %v7168
    %v9536 = vunpack.c.l.b16 %v7169
    %v9537 = vunpack.c.h.b16 %v7169
    %v9538 = vunpack.c.l.b16 %v7170
    %v9539 = vunpack.c.h.b16 %v7170
    %v9540 = vunpack.c.l.b16 %v7171
    %v9541 = vunpack.c.h.b16 %v7171
    %v9542 = vunpack.c.l.b16 %v7172
    %v9543 = vunpack.c.h.b16 %v7172
    %v9544 = vunpack.c.l.b16 %v7173
    %v9545 = vunpack.c.h.b16 %v7173
    %v9546 = vunpack.c.l.b16 %v7174
    %v9547 = vunpack.c.h.b16 %v7174
    %v9548 = vunpack.c.l.b16 %v7175
    %v9549 = vunpack.c.h.b16 %v7175
    %v9550 = vunpack.c.l.b16 %v7176
    %v9551 = vunpack.c.h.b16 %v7176
    %v9552 = vunpack.c.l.b16 %v7177
    %v9553 = vunpack.c.h.b16 %v7177
    %v9554 = vunpack.c.l.b16 %v7178
    %v9555 = vunpack.c.h.b16 %v7178
    %v9556 = vunpack.c.l.b16 %v7179
    %v9557 = vunpack.c.h.b16 %v7179
    %v9558 = vunpack.c.l.b16 %v7180
    %v9559 = vunpack.c.h.b16 %v7180
    %v9560 = vunpack.c.l.b16 %v7181
    %v9561 = vunpack.c.h.b16 %v7181
    %v9562 = vunpack.c.l.b16 %v7182
    %v9563 = vunpack.c.h.b16 %v7182
    %v9564 = vunpack.c.l.b16 %v7183
    %v9565 = vunpack.c.h.b16 %v7183
    %v9566 = vunpack.c.l.b16 %v7184
    %v9567 = vunpack.c.h.b16 %v7184
    %v9568 = vunpack.c.l.b16 %v7185
    %v9569 = vunpack.c.h.b16 %v7185
    %v9570 = vunpack.c.l.b16 %v7186
    %v9571 = vunpack.c.h.b16 %v7186
    %v9572 = vunpack.c.l.b16 %v7187
    %v9573 = vunpack.c.h.b16 %v7187
    %v9574 = vunpack.c.l.b16 %v7188
    %v9575 = vunpack.c.h.b16 %v7188
    %v9576 = vunpack.c.l.b16 %v7189
    %v9577 = vunpack.c.h.b16 %v7189
    %v9578 = vunpack.c.l.b16 %v7190
    %v9579 = vunpack.c.h.b16 %v7190
    %v9580 = vunpack.c.l.b16 %v7191
    %v9581 = vunpack.c.h.b16 %v7191
    %v9582 = vunpack.c.l.b16 %v7192
    %v9583 = vunpack.c.h.b16 %v7192
    %v9584 = vunpack.c.l.b16 %v7193
    %v9585 = vunpack.c.h.b16 %v7193
    %v9586 = vunpack.c.l.b16 %v7194
    %v9587 = vunpack.c.h.b16 %v7194
    %v9588 = vunpack.c.l.b16 %v7195
    %v9589 = vunpack.c.h.b16 %v7195
    %v9590 = vunpack.c.l.b16 %v7196
    %v9591 = vunpack.c.h.b16 %v7196
    %v9592 = vunpack.c.l.b16 %v7197
    %v9593 = vunpack.c.h.b16 %v7197
    %v9594 = vunpack.c.l.b16 %v7198
    %v9595 = vunpack.c.h.b16 %v7198
    %v9596 = vunpack.c.l.b16 %v7199
    %v9597 = vunpack.c.h.b16 %v7199
    %v9598 = vunpack.c.l.b16 %v7200
    %v9599 = vunpack.c.h.b16 %v7200
    %v9600 = vunpack.c.l.b16 %v7201
    %v9601 = vunpack.c.h.b16 %v7201
    %v9602 = vunpack.c.l.b16 %v7202
    %v9603 = vunpack.c.h.b16 %v7202
    %v9604 = vunpack.c.l.b16 %v7203
    %v9605 = vunpack.c.h.b16 %v7203
    %v9606 = vunpack.c.l.b16 %v7204
    %v9607 = vunpack.c.h.b16 %v7204
    %v9608 = vunpack.c.l.b16 %v7205
    %v9609 = vunpack.c.h.b16 %v7205
    %v9610 = vunpack.c.l.b16 %v7206
    %v9611 = vunpack.c.h.b16 %v7206
    %v9612 = vunpack.c.l.b16 %v7207
    %v9613 = vunpack.c.h.b16 %v7207
    %v9614 = vunpack.c.l.b16 %v7208
    %v9615 = vunpack.c.h.b16 %v7208
    %v9616 = vunpack.c.l.b16 %v7209
    %v9617 = vunpack.c.h.b16 %v7209
    %v9618 = vunpack.c.l.b16 %v7210
    %v9619 = vunpack.c.h.b16 %v7210
    %v9620 = vunpack.c.l.b16 %v7211
    %v9621 = vunpack.c.h.b16 %v7211
    %v9622 = vunpack.c.l.b16 %v7212
    %v9623 = vunpack.c.h.b16 %v7212
    %v9624 = vunpack.c.l.b16 %v7213
    %v9625 = vunpack.c.h.b16 %v7213
    %v9626 = vunpack.c.l.b16 %v7214
    %v9627 = vunpack.c.h.b16 %v7214
    %v9628 = vunpack.c.l.b16 %v7215
    %v9629 = vunpack.c.h.b16 %v7215
    %v9630 = vunpack.c.l.b16 %v7216
    %v9631 = vunpack.c.h.b16 %v7216
    %v9632 = vunpack.c.l.b16 %v7217
    %v9633 = vunpack.c.h.b16 %v7217
    %v9634 = vunpack.c.l.b16 %v7218
    %v9635 = vunpack.c.h.b16 %v7218
    %v9636 = vunpack.c.l.b16 %v7219
    %v9637 = vunpack.c.h.b16 %v7219
    %v9638 = vunpack.c.l.b16 %v7220
    %v9639 = vunpack.c.h.b16 %v7220
    %v9640 = vunpack.c.l.b16 %v7221
    %v9641 = vunpack.c.h.b16 %v7221
    %v9642 = vunpack.c.l.b16 %v7222
    %v9643 = vunpack.c.h.b16 %v7222
    %v9644 = vunpack.c.l.b16 %v7223
    %v9645 = vunpack.c.h.b16 %v7223
    %v9646 = vunpack.c.l.b16 %v7224
    %v9647 = vunpack.c.h.b16 %v7224
    %v9648 = vunpack.c.l.b16 %v7225
    %v9649 = vunpack.c.h.b16 %v7225
    %v9650 = vunpack.c.l.b16 %v7226
    %v9651 = vunpack.c.h.b16 %v7226
    %v9652 = vunpack.c.l.b16 %v7227
    %v9653 = vunpack.c.h.b16 %v7227
    %v9654 = vunpack.c.l.b16 %v7228
    %v9655 = vunpack.c.h.b16 %v7228
    %v9656 = vunpack.c.l.b16 %v7229
    %v9657 = vunpack.c.h.b16 %v7229
    %v9658 = vunpack.c.l.b16 %v7230
    %v9659 = vunpack.c.h.b16 %v7230
    %v9660 = vunpack.c.l.b16 %v7231
    %v9661 = vunpack.c.h.b16 %v7231
    %v9662 = vpack.c.b16 %v8150, %v8126
    %v9663 = vpack.c.b16 %v8151, %v8127
    %v9664 = vpack.c.b16 %v8152, %v8128
    %v9665 = vpack.c.b16 %v8153, %v8129
    %v9666 = vpack.c.b16 %v8154, %v8130
    %v9667 = vpack.c.b16 %v8155, %v8131
    %v9668 = vpack.c.b16 %v8156, %v8132
    %v9669 = vpack.c.b16 %v8157, %v8133
    %v9670 = vpack.c.b16 %v8158, %v8134
    %v9671 = vpack.c.b16 %v8159, %v8135
    %v9672 = vpack.c.b16 %v8160, %v8136
    %v9673 = vpack.c.b16 %v8161, %v8137
    %v9674 = vpack.c.b16 %v8162, %v8138
    %v9675 = vpack.c.b16 %v8163, %v8139
    %v9676 = vpack.c.b16 %v8164, %v8140
    %v9677 = vpack.c.b16 %v8165, %v8141
    %v9678 = vpack.c.b16 %v8166, %v8142
    %v9679 = vpack.c.b16 %v8167, %v8143
    %v9680 = vpack.c.b16 %v8168, %v8144
    %v9681 = vpack.c.b16 %v8169, %v8145
    %v9682 = vpack.c.b16 %v8170, %v8146
    %v9683 = vpack.c.b16 %v8171, %v8147
    %v9684 = vpack.c.b16 %v8172, %v8148
    %v9685 = vpack.c.b16 %v8173, %v8149
    %v9686 = vpack.c.b16 %v8198, %v8174
    %v9687 = vpack.c.b16 %v8199, %v8175
    %v9688 = vpack.c.b16 %v8200, %v8176
    %v9689 = vpack.c.b16 %v8201, %v8177
    %v9690 = vpack.c.b16 %v8202, %v8178
    %v9691 = vpack.c.b16 %v8203, %v8179
    %v9692 = vpack.c.b16 %v8204, %v8180
    %v9693 = vpack.c.b16 %v8205, %v8181
    %v9694 = vpack.c.b16 %v8206, %v8182
    %v9695 = vpack.c.b16 %v8207, %v8183
    %v9696 = vpack.c.b16 %v8208, %v8184
    %v9697 = vpack.c.b16 %v8209, %v8185
    %v9698 = vpack.c.b16 %v8210, %v8186
    %v9699 = vpack.c.b16 %v8211, %v8187
    %v9700 = vpack.c.b16 %v8212, %v8188
    %v9701 = vpack.c.b16 %v8213, %v8189
    %v9702 = vpack.c.b16 %v8214, %v8190
    %v9703 = vpack.c.b16 %v8215, %v8191
    %v9704 = vpack.c.b16 %v8216, %v8192
    %v9705 = vpack.c.b16 %v8217, %v8193
    %v9706 = vpack.c.b16 %v8218, %v8194
    %v9707 = vpack.c.b16 %v8219, %v8195
    %v9708 = vpack.c.b16 %v8220, %v8196
    %v9709 = vpack.c.b16 %v8221, %v8197
    %v9710 = vpack.c.b16 %v8246, %v8222
    %v9711 = vpack.c.b16 %v8247, %v8223
    %v9712 = vpack.c.b16 %v8248, %v8224
    %v9713 = vpack.c.b16 %v8249, %v8225
    %v9714 = vpack.c.b16 %v8250, %v8226
    %v9715 = vpack.c.b16 %v8251, %v8227
    %v9716 = vpack.c.b16 %v8252, %v8228
    %v9717 = vpack.c.b16 %v8253, %v8229
    %v9718 = vpack.c.b16 %v8254, %v8230
    %v9719 = vpack.c.b16 %v8255, %v8231
    %v9720 = vpack.c.b16 %v8256, %v8232
    %v9721 = vpack.c.b16 %v8257, %v8233
    %v9722 = vpack.c.b16 %v8258, %v8234
    %v9723 = vpack.c.b16 %v8259, %v8235
    %v9724 = vpack.c.b16 %v8260, %v8236
    %v9725 = vpack.c.b16 %v8261, %v8237
    %v9726 = vpack.c.b16 %v8262, %v8238
    %v9727 = vpack.c.b16 %v8263, %v8239
    %v9728 = vpack.c.b16 %v8264, %v8240
    %v9729 = vpack.c.b16 %v8265, %v8241
    %v9730 = vpack.c.b16 %v8266, %v8242
    %v9731 = vpack.c.b16 %v8267, %v8243
    %v9732 = vpack.c.b16 %v8268, %v8244
    %v9733 = vpack.c.b16 %v8269, %v8245
    %v9734 = vpack.c.b16 %v8294, %v8270
    %v9735 = vpack.c.b16 %v8295, %v8271
    %v9736 = vpack.c.b16 %v8296, %v8272
    %v9737 = vpack.c.b16 %v8297, %v8273
    %v9738 = vpack.c.b16 %v8298, %v8274
    %v9739 = vpack.c.b16 %v8299, %v8275
    %v9740 = vpack.c.b16 %v8300, %v8276
    %v9741 = vpack.c.b16 %v8301, %v8277
    %v9742 = vpack.c.b16 %v8302, %v8278
    %v9743 = vpack.c.b16 %v8303, %v8279
    %v9744 = vpack.c.b16 %v8304, %v8280
    %v9745 = vpack.c.b16 %v8305, %v8281
    %v9746 = vpack.c.b16 %v8306, %v8282
    %v9747 = vpack.c.b16 %v8307, %v8283
    %v9748 = vpack.c.b16 %v8308, %v8284
    %v9749 = vpack.c.b16 %v8309, %v8285
    %v9750 = vpack.c.b16 %v8310, %v8286
    %v9751 = vpack.c.b16 %v8311, %v8287
    %v9752 = vpack.c.b16 %v8312, %v8288
    %v9753 = vpack.c.b16 %v8313, %v8289
    %v9754 = vpack.c.b16 %v8314, %v8290
    %v9755 = vpack.c.b16 %v8315, %v8291
    %v9756 = vpack.c.b16 %v8316, %v8292
    %v9757 = vpack.c.b16 %v8317, %v8293
    %v9758 = vpack.c.b16 %v8342, %v8318
    %v9759 = vpack.c.b16 %v8343, %v8319
    %v9760 = vpack.c.b16 %v8344, %v8320
    %v9761 = vpack.c.b16 %v8345, %v8321
    %v9762 = vpack.c.b16 %v8346, %v8322
    %v9763 = vpack.c.b16 %v8347, %v8323
    %v9764 = vpack.c.b16 %v8348, %v8324
    %v9765 = vpack.c.b16 %v8349, %v8325
    %v9766 = vpack.c.b16 %v8350, %v8326
    %v9767 = vpack.c.b16 %v8351, %v8327
    %v9768 = vpack.c.b16 %v8352, %v8328
    %v9769 = vpack.c.b16 %v8353, %v8329
    %v9770 = vpack.c.b16 %v8354, %v8330
    %v9771 = vpack.c.b16 %v8355, %v8331
    %v9772 = vpack.c.b16 %v8356, %v8332
    %v9773 = vpack.c.b16 %v8357, %v8333
    %v9774 = vpack.c.b16 %v8358, %v8334
    %v9775 = vpack.c.b16 %v8359, %v8335
    %v9776 = vpack.c.b16 %v8360, %v8336
    %v9777 = vpack.c.b16 %v8361, %v8337
    %v9778 = vpack.c.b16 %v8362, %v8338
    %v9779 = vpack.c.b16 %v8363, %v8339
    %v9780 = vpack.c.b16 %v8364, %v8340
    %v9781 = vpack.c.b16 %v8365, %v8341
    %v9782 = vpack.c.b16 %v8390, %v8366
    %v9783 = vpack.c.b16 %v8391, %v8367
    %v9784 = vpack.c.b16 %v8392, %v8368
    %v9785 = vpack.c.b16 %v8393, %v8369
    %v9786 = vpack.c.b16 %v8394, %v8370
    %v9787 = vpack.c.b16 %v8395, %v8371
    %v9788 = vpack.c.b16 %v8396, %v8372
    %v9789 = vpack.c.b16 %v8397, %v8373
    %v9790 = vpack.c.b16 %v8398, %v8374
    %v9791 = vpack.c.b16 %v8399, %v8375
    %v9792 = vpack.c.b16 %v8400, %v8376
    %v9793 = vpack.c.b16 %v8401, %v8377
    %v9794 = vpack.c.b16 %v8402, %v8378
    %v9795 = vpack.c.b16 %v8403, %v8379
    %v9796 = vpack.c.b16 %v8404, %v8380
    %v9797 = vpack.c.b16 %v8405, %v8381
    %v9798 = vpack.c.b16 %v8406, %v8382
    %v9799 = vpack.c.b16 %v8407, %v8383
    %v9800 = vpack.c.b16 %v8408, %v8384
    %v9801 = vpack.c.b16 %v8409, %v8385
    %v9802 = vpack.c.b16 %v8410, %v8386
    %v9803 = vpack.c.b16 %v8411, %v8387
    %v9804 = vpack.c.b16 %v8412, %v8388
    %v9805 = vpack.c.b16 %v8413, %v8389
    %v9806 = vpack.c.b16 %v8438, %v8414
    %v9807 = vpack.c.b16 %v8439, %v8415
    %v9808 = vpack.c.b16 %v8440, %v8416
    %v9809 = vpack.c.b16 %v8441, %v8417
    %v9810 = vpack.c.b16 %v8442, %v8418
    %v9811 = vpack.c.b16 %v8443, %v8419
    %v9812 = vpack.c.b16 %v8444, %v8420
    %v9813 = vpack.c.b16 %v8445, %v8421
    %v9814 = vpack.c.b16 %v8446, %v8422
    %v9815 = vpack.c.b16 %v8447, %v8423
    %v9816 = vpack.c.b16 %v8448, %v8424
    %v9817 = vpack.c.b16 %v8449, %v8425
    %v9818 = vpack.c.b16 %v8450, %v8426
    %v9819 = vpack.c.b16 %v8451, %v8427
    %v9820 = vpack.c.b16 %v8452, %v8428
    %v9821 = vpack.c.b16 %v8453, %v8429
    %v9822 = vpack.c.b16 %v8454, %v8430
    %v9823 = vpack.c.b16 %v8455, %v8431
    %v9824 = vpack.c.b16 %v8456, %v8432
    %v9825 = vpack.c.b16 %v8457, %v8433
    %v9826 = vpack.c.b16 %v8458, %v8434
    %v9827 = vpack.c.b16 %v8459, %v8435
    %v9828 = vpack.c.b16 %v8460, %v8436
    %v9829 = vpack.c.b16 %v8461, %v8437
    %v9830 = vpack.c.b16 %v8486, %v8462
    %v9831 = vpack.c.b16 %v8487, %v8463
    %v9832 = vpack.c.b16 %v8488, %v8464
    %v9833 = vpack.c.b16 %v8489, %v8465
    %v9834 = vpack.c.b16 %v8490, %v8466
    %v9835 = vpack.c.b16 %v8491, %v8467
    %v9836 = vpack.c.b16 %v8492, %v8468
    %v9837 = vpack.c.b16 %v8493, %v8469
    %v9838 = vpack.c.b16 %v8494, %v8470
    %v9839 = vpack.c.b16 %v8495, %v8471
    %v9840 = vpack.c.b16 %v8496, %v8472
    %v9841 = vpack.c.b16 %v8497, %v8473
    %v9842 = vpack.c.b16 %v8498, %v8474
    %v9843 = vpack.c.b16 %v8499, %v8475
    %v9844 = vpack.c.b16 %v8500, %v8476
    %v9845 = vpack.c.b16 %v8501, %v8477
    %v9846 = vpack.c.b16 %v8502, %v8478
    %v9847 = vpack.c.b16 %v8503, %v8479
    %v9848 = vpack.c.b16 %v8504, %v8480
    %v9849 = vpack.c.b16 %v8505, %v8481
    %v9850 = vpack.c.b16 %v8506, %v8482
    %v9851 = vpack.c.b16 %v8507, %v8483
    %v9852 = vpack.c.b16 %v8508, %v8484
    %v9853 = vpack.c.b16 %v8509, %v8485
    %v9854 = vpack.c.b16 %v8534, %v8510
    %v9855 = vpack.c.b16 %v8535, %v8511
    %v9856 = vpack.c.b16 %v8536, %v8512
    %v9857 = vpack.c.b16 %v8537, %v8513
    %v9858 = vpack.c.b16 %v8538, %v8514
    %v9859 = vpack.c.b16 %v8539, %v8515
    %v9860 = vpack.c.b16 %v8540, %v8516
    %v9861 = vpack.c.b16 %v8541, %v8517
    %v9862 = vpack.c.b16 %v8542, %v8518
    %v9863 = vpack.c.b16 %v8543, %v8519
    %v9864 = vpack.c.b16 %v8544, %v8520
    %v9865 = vpack.c.b16 %v8545, %v8521
    %v9866 = vpack.c.b16 %v8546, %v8522
    %v9867 = vpack.c.b16 %v8547, %v8523
    %v9868 = vpack.c.b16 %v8548, %v8524
    %v9869 = vpack.c.b16 %v8549, %v8525
    %v9870 = vpack.c.b16 %v8550, %v8526
    %v9871 = vpack.c.b16 %v8551, %v8527
    %v9872 = vpack.c.b16 %v8552, %v8528
    %v9873 = vpack.c.b16 %v8553, %v8529
    %v9874 = vpack.c.b16 %v8554, %v8530
    %v9875 = vpack.c.b16 %v8555, %v8531
    %v9876 = vpack.c.b16 %v8556, %v8532
    %v9877 = vpack.c.b16 %v8557, %v8533
    %v9878 = vpack.c.b16 %v8582, %v8558
    %v9879 = vpack.c.b16 %v8583, %v8559
    %v9880 = vpack.c.b16 %v8584, %v8560
    %v9881 = vpack.c.b16 %v8585, %v8561
    %v9882 = vpack.c.b16 %v8586, %v8562
    %v9883 = vpack.c.b16 %v8587, %v8563
    %v9884 = vpack.c.b16 %v8588, %v8564
    %v9885 = vpack.c.b16 %v8589, %v8565
    %v9886 = vpack.c.b16 %v8590, %v8566
    %v9887 = vpack.c.b16 %v8591, %v8567
    %v9888 = vpack.c.b16 %v8592, %v8568
    %v9889 = vpack.c.b16 %v8593, %v8569
    %v9890 = vpack.c.b16 %v8594, %v8570
    %v9891 = vpack.c.b16 %v8595, %v8571
    %v9892 = vpack.c.b16 %v8596, %v8572
    %v9893 = vpack.c.b16 %v8597, %v8573
    %v9894 = vpack.c.b16 %v8598, %v8574
    %v9895 = vpack.c.b16 %v8599, %v8575
    %v9896 = vpack.c.b16 %v8600, %v8576
    %v9897 = vpack.c.b16 %v8601, %v8577
    %v9898 = vpack.c.b16 %v8602, %v8578
    %v9899 = vpack.c.b16 %v8603, %v8579
    %v9900 = vpack.c.b16 %v8604, %v8580
    %v9901 = vpack.c.b16 %v8605, %v8581
    %v9902 = vpack.c.b16 %v8630, %v8606
    %v9903 = vpack.c.b16 %v8631, %v8607
    %v9904 = vpack.c.b16 %v8632, %v8608
    %v9905 = vpack.c.b16 %v8633, %v8609
    %v9906 = vpack.c.b16 %v8634, %v8610
    %v9907 = vpack.c.b16 %v8635, %v8611
    %v9908 = vpack.c.b16 %v8636, %v8612
    %v9909 = vpack.c.b16 %v8637, %v8613
    %v9910 = vpack.c.b16 %v8638, %v8614
    %v9911 = vpack.c.b16 %v8639, %v8615
    %v9912 = vpack.c.b16 %v8640, %v8616
    %v9913 = vpack.c.b16 %v8641, %v8617
    %v9914 = vpack.c.b16 %v8642, %v8618
    %v9915 = vpack.c.b16 %v8643, %v8619
    %v9916 = vpack.c.b16 %v8644, %v8620
    %v9917 = vpack.c.b16 %v8645, %v8621
    %v9918 = vpack.c.b16 %v8646, %v8622
    %v9919 = vpack.c.b16 %v8647, %v8623
    %v9920 = vpack.c.b16 %v8648, %v8624
    %v9921 = vpack.c.b16 %v8649, %v8625
    %v9922 = vpack.c.b16 %v8650, %v8626
    %v9923 = vpack.c.b16 %v8651, %v8627
    %v9924 = vpack.c.b16 %v8652, %v8628
    %v9925 = vpack.c.b16 %v8653, %v8629
    %v9926 = vpack.c.b16 %v8678, %v8654
    %v9927 = vpack.c.b16 %v8679, %v8655
    %v9928 = vpack.c.b16 %v8680, %v8656
    %v9929 = vpack.c.b16 %v8681, %v8657
    %v9930 = vpack.c.b16 %v8682, %v8658
    %v9931 = vpack.c.b16 %v8683, %v8659
    %v9932 = vpack.c.b16 %v8684, %v8660
    %v9933 = vpack.c.b16 %v8685, %v8661
    %v9934 = vpack.c.b16 %v8686, %v8662
    %v9935 = vpack.c.b16 %v8687, %v8663
    %v9936 = vpack.c.b16 %v8688, %v8664
    %v9937 = vpack.c.b16 %v8689, %v8665
    %v9938 = vpack.c.b16 %v8690, %v8666
    %v9939 = vpack.c.b16 %v8691, %v8667
    %v9940 = vpack.c.b16 %v8692, %v8668
    %v9941 = vpack.c.b16 %v8693, %v8669
    %v9942 = vpack.c.b16 %v8694, %v8670
    %v9943 = vpack.c.b16 %v8695, %v8671
    %v9944 = vpack.c.b16 %v8696, %v8672
    %v9945 = vpack.c.b16 %v8697, %v8673
    %v9946 = vpack.c.b16 %v8698, %v8674
    %v9947 = vpack.c.b16 %v8699, %v8675
    %v9948 = vpack.c.b16 %v8700, %v8676
    %v9949 = vpack.c.b16 %v8701, %v8677
    %v9950 = vpack.c.b16 %v8726, %v8702
    %v9951 = vpack.c.b16 %v8727, %v8703
    %v9952 = vpack.c.b16 %v8728, %v8704
    %v9953 = vpack.c.b16 %v8729, %v8705
    %v9954 = vpack.c.b16 %v8730, %v8706
    %v9955 = vpack.c.b16 %v8731, %v8707
    %v9956 = vpack.c.b16 %v8732, %v8708
    %v9957 = vpack.c.b16 %v8733, %v8709
    %v9958 = vpack.c.b16 %v8734, %v8710
    %v9959 = vpack.c.b16 %v8735, %v8711
    %v9960 = vpack.c.b16 %v8736, %v8712
    %v9961 = vpack.c.b16 %v8737, %v8713
    %v9962 = vpack.c.b16 %v8738, %v8714
    %v9963 = vpack.c.b16 %v8739, %v8715
    %v9964 = vpack.c.b16 %v8740, %v8716
    %v9965 = vpack.c.b16 %v8741, %v8717
    %v9966 = vpack.c.b16 %v8742, %v8718
    %v9967 = vpack.c.b16 %v8743, %v8719
    %v9968 = vpack.c.b16 %v8744, %v8720
    %v9969 = vpack.c.b16 %v8745, %v8721
    %v9970 = vpack.c.b16 %v8746, %v8722
    %v9971 = vpack.c.b16 %v8747, %v8723
    %v9972 = vpack.c.b16 %v8748, %v8724
    %v9973 = vpack.c.b16 %v8749, %v8725
    %v9974 = vpack.c.b16 %v8774, %v8750
    %v9975 = vpack.c.b16 %v8775, %v8751
    %v9976 = vpack.c.b16 %v8776, %v8752
    %v9977 = vpack.c.b16 %v8777, %v8753
    %v9978 = vpack.c.b16 %v8778, %v8754
    %v9979 = vpack.c.b16 %v8779, %v8755
    %v9980 = vpack.c.b16 %v8780, %v8756
    %v9981 = vpack.c.b16 %v8781, %v8757
    %v9982 = vpack.c.b16 %v8782, %v8758
    %v9983 = vpack.c.b16 %v8783, %v8759
    %v9984 = vpack.c.b16 %v8784, %v8760
    %v9985 = vpack.c.b16 %v8785, %v8761
    %v9986 = vpack.c.b16 %v8786, %v8762
    %v9987 = vpack.c.b16 %v8787, %v8763
    %v9988 = vpack.c.b16 %v8788, %v8764
    %v9989 = vpack.c.b16 %v8789, %v8765
    %v9990 = vpack.c.b16 %v8790, %v8766
    %v9991 = vpack.c.b16 %v8791, %v8767
    %v9992 = vpack.c.b16 %v8792, %v8768
    %v9993 = vpack.c.b16 %v8793, %v8769
    %v9994 = vpack.c.b16 %v8794, %v8770
    %v9995 = vpack.c.b16 %v8795, %v8771
    %v9996 = vpack.c.b16 %v8796, %v8772
    %v9997 = vpack.c.b16 %v8797, %v8773
    %v9998 = vpack.c.b16 %v8822, %v8798
    %v9999 = vpack.c.b16 %v8823, %v8799
    %v10000 = vpack.c.b16 %v8824, %v8800
    %v10001 = vpack.c.b16 %v8825, %v8801
    %v10002 = vpack.c.b16 %v8826, %v8802
    %v10003 = vpack.c.b16 %v8827, %v8803
    %v10004 = vpack.c.b16 %v8828, %v8804
    %v10005 = vpack.c.b16 %v8829, %v8805
    %v10006 = vpack.c.b16 %v8830, %v8806
    %v10007 = vpack.c.b16 %v8831, %v8807
    %v10008 = vpack.c.b16 %v8832, %v8808
    %v10009 = vpack.c.b16 %v8833, %v8809
    %v10010 = vpack.c.b16 %v8834, %v8810
    %v10011 = vpack.c.b16 %v8835, %v8811
    %v10012 = vpack.c.b16 %v8836, %v8812
    %v10013 = vpack.c.b16 %v8837, %v8813
    %v10014 = vpack.c.b16 %v8838, %v8814
    %v10015 = vpack.c.b16 %v8839, %v8815
    %v10016 = vpack.c.b16 %v8840, %v8816
    %v10017 = vpack.c.b16 %v8841, %v8817
    %v10018 = vpack.c.b16 %v8842, %v8818
    %v10019 = vpack.c.b16 %v8843, %v8819
    %v10020 = vpack.c.b16 %v8844, %v8820
    %v10021 = vpack.c.b16 %v8845, %v8821
    %v10022 = vpack.c.b16 %v8870, %v8846
    %v10023 = vpack.c.b16 %v8871, %v8847
    %v10024 = vpack.c.b16 %v8872, %v8848
    %v10025 = vpack.c.b16 %v8873, %v8849
    %v10026 = vpack.c.b16 %v8874, %v8850
    %v10027 = vpack.c.b16 %v8875, %v8851
    %v10028 = vpack.c.b16 %v8876, %v8852
    %v10029 = vpack.c.b16 %v8877, %v8853
    %v10030 = vpack.c.b16 %v8878, %v8854
    %v10031 = vpack.c.b16 %v8879, %v8855
    %v10032 = vpack.c.b16 %v8880, %v8856
    %v10033 = vpack.c.b16 %v8881, %v8857
    %v10034 = vpack.c.b16 %v8882, %v8858
    %v10035 = vpack.c.b16 %v8883, %v8859
    %v10036 = vpack.c.b16 %v8884, %v8860
    %v10037 = vpack.c.b16 %v8885, %v8861
    %v10038 = vpack.c.b16 %v8886, %v8862
    %v10039 = vpack.c.b16 %v8887, %v8863
    %v10040 = vpack.c.b16 %v8888, %v8864
    %v10041 = vpack.c.b16 %v8889, %v8865
    %v10042 = vpack.c.b16 %v8890, %v8866
    %v10043 = vpack.c.b16 %v8891, %v8867
    %v10044 = vpack.c.b16 %v8892, %v8868
    %v10045 = vpack.c.b16 %v8893, %v8869
    %v10046 = vpack.c.b16 %v8918, %v8894
    %v10047 = vpack.c.b16 %v8919, %v8895
    %v10048 = vpack.c.b16 %v8920, %v8896
    %v10049 = vpack.c.b16 %v8921, %v8897
    %v10050 = vpack.c.b16 %v8922, %v8898
    %v10051 = vpack.c.b16 %v8923, %v8899
    %v10052 = vpack.c.b16 %v8924, %v8900
    %v10053 = vpack.c.b16 %v8925, %v8901
    %v10054 = vpack.c.b16 %v8926, %v8902
    %v10055 = vpack.c.b16 %v8927, %v8903
    %v10056 = vpack.c.b16 %v8928, %v8904
    %v10057 = vpack.c.b16 %v8929, %v8905
    %v10058 = vpack.c.b16 %v8930, %v8906
    %v10059 = vpack.c.b16 %v8931, %v8907
    %v10060 = vpack.c.b16 %v8932, %v8908
    %v10061 = vpack.c.b16 %v8933, %v8909
    %v10062 = vpack.c.b16 %v8934, %v8910
    %v10063 = vpack.c.b16 %v8935, %v8911
    %v10064 = vpack.c.b16 %v8936, %v8912
    %v10065 = vpack.c.b16 %v8937, %v8913
    %v10066 = vpack.c.b16 %v8938, %v8914
    %v10067 = vpack.c.b16 %v8939, %v8915
    %v10068 = vpack.c.b16 %v8940, %v8916
    %v10069 = vpack.c.b16 %v8941, %v8917
    %v10070 = vpack.c.b16 %v8966, %v8942
    %v10071 = vpack.c.b16 %v8967, %v8943
    %v10072 = vpack.c.b16 %v8968, %v8944
    %v10073 = vpack.c.b16 %v8969, %v8945
    %v10074 = vpack.c.b16 %v8970, %v8946
    %v10075 = vpack.c.b16 %v8971, %v8947
    %v10076 = vpack.c.b16 %v8972, %v8948
    %v10077 = vpack.c.b16 %v8973, %v8949
    %v10078 = vpack.c.b16 %v8974, %v8950
    %v10079 = vpack.c.b16 %v8975, %v8951
    %v10080 = vpack.c.b16 %v8976, %v8952
    %v10081 = vpack.c.b16 %v8977, %v8953
    %v10082 = vpack.c.b16 %v8978, %v8954
    %v10083 = vpack.c.b16 %v8979, %v8955
    %v10084 = vpack.c.b16 %v8980, %v8956
    %v10085 = vpack.c.b16 %v8981, %v8957
    %v10086 = vpack.c.b16 %v8982, %v8958
    %v10087 = vpack.c.b16 %v8983, %v8959
    %v10088 = vpack.c.b16 %v8984, %v8960
    %v10089 = vpack.c.b16 %v8985, %v8961
    %v10090 = vpack.c.b16 %v8986, %v8962
    %v10091 = vpack.c.b16 %v8987, %v8963
    %v10092 = vpack.c.b16 %v8988, %v8964
    %v10093 = vpack.c.b16 %v8989, %v8965
    %v10094 = vpack.c.b16 %v9014, %v8990
    %v10095 = vpack.c.b16 %v9015, %v8991
    %v10096 = vpack.c.b16 %v9016, %v8992
    %v10097 = vpack.c.b16 %v9017, %v8993
    %v10098 = vpack.c.b16 %v9018, %v8994
    %v10099 = vpack.c.b16 %v9019, %v8995
    %v10100 = vpack.c.b16 %v9020, %v8996
    %v10101 = vpack.c.b16 %v9021, %v8997
    %v10102 = vpack.c.b16 %v9022, %v8998
    %v10103 = vpack.c.b16 %v9023, %v8999
    %v10104 = vpack.c.b16 %v9024, %v9000
    %v10105 = vpack.c.b16 %v9025, %v9001
    %v10106 = vpack.c.b16 %v9026, %v9002
    %v10107 = vpack.c.b16 %v9027, %v9003
    %v10108 = vpack.c.b16 %v9028, %v9004
    %v10109 = vpack.c.b16 %v9029, %v9005
    %v10110 = vpack.c.b16 %v9030, %v9006
    %v10111 = vpack.c.b16 %v9031, %v9007
    %v10112 = vpack.c.b16 %v9032, %v9008
    %v10113 = vpack.c.b16 %v9033, %v9009
    %v10114 = vpack.c.b16 %v9034, %v9010
    %v10115 = vpack.c.b16 %v9035, %v9011
    %v10116 = vpack.c.b16 %v9036, %v9012
    %v10117 = vpack.c.b16 %v9037, %v9013
    %v10118 = vpack.c.b16 %v9062, %v9038
    %v10119 = vpack.c.b16 %v9063, %v9039
    %v10120 = vpack.c.b16 %v9064, %v9040
    %v10121 = vpack.c.b16 %v9065, %v9041
    %v10122 = vpack.c.b16 %v9066, %v9042
    %v10123 = vpack.c.b16 %v9067, %v9043
    %v10124 = vpack.c.b16 %v9068, %v9044
    %v10125 = vpack.c.b16 %v9069, %v9045
    %v10126 = vpack.c.b16 %v9070, %v9046
    %v10127 = vpack.c.b16 %v9071, %v9047
    %v10128 = vpack.c.b16 %v9072, %v9048
    %v10129 = vpack.c.b16 %v9073, %v9049
    %v10130 = vpack.c.b16 %v9074, %v9050
    %v10131 = vpack.c.b16 %v9075, %v9051
    %v10132 = vpack.c.b16 %v9076, %v9052
    %v10133 = vpack.c.b16 %v9077, %v9053
    %v10134 = vpack.c.b16 %v9078, %v9054
    %v10135 = vpack.c.b16 %v9079, %v9055
    %v10136 = vpack.c.b16 %v9080, %v9056
    %v10137 = vpack.c.b16 %v9081, %v9057
    %v10138 = vpack.c.b16 %v9082, %v9058
    %v10139 = vpack.c.b16 %v9083, %v9059
    %v10140 = vpack.c.b16 %v9084, %v9060
    %v10141 = vpack.c.b16 %v9085, %v9061
    %v10142 = vpack.c.b16 %v9110, %v9086
    %v10143 = vpack.c.b16 %v9111, %v9087
    %v10144 = vpack.c.b16 %v9112, %v9088
    %v10145 = vpack.c.b16 %v9113, %v9089
    %v10146 = vpack.c.b16 %v9114, %v9090
    %v10147 = vpack.c.b16 %v9115, %v9091
    %v10148 = vpack.c.b16 %v9116, %v9092
    %v10149 = vpack.c.b16 %v9117, %v9093
    %v10150 = vpack.c.b16 %v9118, %v9094
    %v10151 = vpack.c.b16 %v9119, %v9095
    %v10152 = vpack.c.b16 %v9120, %v9096
    %v10153 = vpack.c.b16 %v9121, %v9097
    %v10154 = vpack.c.b16 %v9122, %v9098
    %v10155 = vpack.c.b16 %v9123, %v9099
    %v10156 = vpack.c.b16 %v9124, %v9100
    %v10157 = vpack.c.b16 %v9125, %v9101
    %v10158 = vpack.c.b16 %v9126, %v9102
    %v10159 = vpack.c.b16 %v9127, %v9103
    %v10160 = vpack.c.b16 %v9128, %v9104
    %v10161 = vpack.c.b16 %v9129, %v9105
    %v10162 = vpack.c.b16 %v9130, %v9106
    %v10163 = vpack.c.b16 %v9131, %v9107
    %v10164 = vpack.c.b16 %v9132, %v9108
    %v10165 = vpack.c.b16 %v9133, %v9109
    %v10166 = vpack.c.b16 %v9158, %v9134
    %v10167 = vpack.c.b16 %v9159, %v9135
    %v10168 = vpack.c.b16 %v9160, %v9136
    %v10169 = vpack.c.b16 %v9161, %v9137
    %v10170 = vpack.c.b16 %v9162, %v9138
    %v10171 = vpack.c.b16 %v9163, %v9139
    %v10172 = vpack.c.b16 %v9164, %v9140
    %v10173 = vpack.c.b16 %v9165, %v9141
    %v10174 = vpack.c.b16 %v9166, %v9142
    %v10175 = vpack.c.b16 %v9167, %v9143
    %v10176 = vpack.c.b16 %v9168, %v9144
    %v10177 = vpack.c.b16 %v9169, %v9145
    %v10178 = vpack.c.b16 %v9170, %v9146
    %v10179 = vpack.c.b16 %v9171, %v9147
    %v10180 = vpack.c.b16 %v9172, %v9148
    %v10181 = vpack.c.b16 %v9173, %v9149
    %v10182 = vpack.c.b16 %v9174, %v9150
    %v10183 = vpack.c.b16 %v9175, %v9151
    %v10184 = vpack.c.b16 %v9176, %v9152
    %v10185 = vpack.c.b16 %v9177, %v9153
    %v10186 = vpack.c.b16 %v9178, %v9154
    %v10187 = vpack.c.b16 %v9179, %v9155
    %v10188 = vpack.c.b16 %v9180, %v9156
    %v10189 = vpack.c.b16 %v9181, %v9157
    %v10190 = vpack.c.b16 %v9206, %v9182
    %v10191 = vpack.c.b16 %v9207, %v9183
    %v10192 = vpack.c.b16 %v9208, %v9184
    %v10193 = vpack.c.b16 %v9209, %v9185
    %v10194 = vpack.c.b16 %v9210, %v9186
    %v10195 = vpack.c.b16 %v9211, %v9187
    %v10196 = vpack.c.b16 %v9212, %v9188
    %v10197 = vpack.c.b16 %v9213, %v9189
    %v10198 = vpack.c.b16 %v9214, %v9190
    %v10199 = vpack.c.b16 %v9215, %v9191
    %v10200 = vpack.c.b16 %v9216, %v9192
    %v10201 = vpack.c.b16 %v9217, %v9193
    %v10202 = vpack.c.b16 %v9218, %v9194
    %v10203 = vpack.c.b16 %v9219, %v9195
    %v10204 = vpack.c.b16 %v9220, %v9196
    %v10205 = vpack.c.b16 %v9221, %v9197
    %v10206 = vpack.c.b16 %v9222, %v9198
    %v10207 = vpack.c.b16 %v9223, %v9199
    %v10208 = vpack.c.b16 %v9224, %v9200
    %v10209 = vpack.c.b16 %v9225, %v9201
    %v10210 = vpack.c.b16 %v9226, %v9202
    %v10211 = vpack.c.b16 %v9227, %v9203
    %v10212 = vpack.c.b16 %v9228, %v9204
    %v10213 = vpack.c.b16 %v9229, %v9205
    %v10214 = vpack.c.b16 %v9254, %v9230
    %v10215 = vpack.c.b16 %v9255, %v9231
    %v10216 = vpack.c.b16 %v9256, %v9232
    %v10217 = vpack.c.b16 %v9257, %v9233
    %v10218 = vpack.c.b16 %v9258, %v9234
    %v10219 = vpack.c.b16 %v9259, %v9235
    %v10220 = vpack.c.b16 %v9260, %v9236
    %v10221 = vpack.c.b16 %v9261, %v9237
    %v10222 = vpack.c.b16 %v9262, %v9238
    %v10223 = vpack.c.b16 %v9263, %v9239
    %v10224 = vpack.c.b16 %v9264, %v9240
    %v10225 = vpack.c.b16 %v9265, %v9241
    %v10226 = vpack.c.b16 %v9266, %v9242
    %v10227 = vpack.c.b16 %v9267, %v9243
    %v10228 = vpack.c.b16 %v9268, %v9244
    %v10229 = vpack.c.b16 %v9269, %v9245
    %v10230 = vpack.c.b16 %v9270, %v9246
    %v10231 = vpack.c.b16 %v9271, %v9247
    %v10232 = vpack.c.b16 %v9272, %v9248
    %v10233 = vpack.c.b16 %v9273, %v9249
    %v10234 = vpack.c.b16 %v9274, %v9250
    %v10235 = vpack.c.b16 %v9275, %v9251
    %v10236 = vpack.c.b16 %v9276, %v9252
    %v10237 = vpack.c.b16 %v9277, %v9253
    %v10238 = vpack.c.b16 %v9302, %v9278
    %v10239 = vpack.c.b16 %v9303, %v9279
    %v10240 = vpack.c.b16 %v9304, %v9280
    %v10241 = vpack.c.b16 %v9305, %v9281
    %v10242 = vpack.c.b16 %v9306, %v9282
    %v10243 = vpack.c.b16 %v9307, %v9283
    %v10244 = vpack.c.b16 %v9308, %v9284
    %v10245 = vpack.c.b16 %v9309, %v9285
    %v10246 = vpack.c.b16 %v9310, %v9286
    %v10247 = vpack.c.b16 %v9311, %v9287
    %v10248 = vpack.c.b16 %v9312, %v9288
    %v10249 = vpack.c.b16 %v9313, %v9289
    %v10250 = vpack.c.b16 %v9314, %v9290
    %v10251 = vpack.c.b16 %v9315, %v9291
    %v10252 = vpack.c.b16 %v9316, %v9292
    %v10253 = vpack.c.b16 %v9317, %v9293
    %v10254 = vpack.c.b16 %v9318, %v9294
    %v10255 = vpack.c.b16 %v9319, %v9295
    %v10256 = vpack.c.b16 %v9320, %v9296
    %v10257 = vpack.c.b16 %v9321, %v9297
    %v10258 = vpack.c.b16 %v9322, %v9298
    %v10259 = vpack.c.b16 %v9323, %v9299
    %v10260 = vpack.c.b16 %v9324, %v9300
    %v10261 = vpack.c.b16 %v9325, %v9301
    %v10262 = vpack.c.b16 %v9350, %v9326
    %v10263 = vpack.c.b16 %v9351, %v9327
    %v10264 = vpack.c.b16 %v9352, %v9328
    %v10265 = vpack.c.b16 %v9353, %v9329
    %v10266 = vpack.c.b16 %v9354, %v9330
    %v10267 = vpack.c.b16 %v9355, %v9331
    %v10268 = vpack.c.b16 %v9356, %v9332
    %v10269 = vpack.c.b16 %v9357, %v9333
    %v10270 = vpack.c.b16 %v9358, %v9334
    %v10271 = vpack.c.b16 %v9359, %v9335
    %v10272 = vpack.c.b16 %v9360, %v9336
    %v10273 = vpack.c.b16 %v9361, %v9337
    %v10274 = vpack.c.b16 %v9362, %v9338
    %v10275 = vpack.c.b16 %v9363, %v9339
    %v10276 = vpack.c.b16 %v9364, %v9340
    %v10277 = vpack.c.b16 %v9365, %v9341
    %v10278 = vpack.c.b16 %v9366, %v9342
    %v10279 = vpack.c.b16 %v9367, %v9343
    %v10280 = vpack.c.b16 %v9368, %v9344
    %v10281 = vpack.c.b16 %v9369, %v9345
    %v10282 = vpack.c.b16 %v9370, %v9346
    %v10283 = vpack.c.b16 %v9371, %v9347
    %v10284 = vpack.c.b16 %v9372, %v9348
    %v10285 = vpack.c.b16 %v9373, %v9349
    %v10286 = vpack.c.b16 %v9398, %v9374
    %v10287 = vpack.c.b16 %v9399, %v9375
    %v10288 = vpack.c.b16 %v9400, %v9376
    %v10289 = vpack.c.b16 %v9401, %v9377
    %v10290 = vpack.c.b16 %v9402, %v9378
    %v10291 = vpack.c.b16 %v9403, %v9379
    %v10292 = vpack.c.b16 %v9404, %v9380
    %v10293 = vpack.c.b16 %v9405, %v9381
    %v10294 = vpack.c.b16 %v9406, %v9382
    %v10295 = vpack.c.b16 %v9407, %v9383
    %v10296 = vpack.c.b16 %v9408, %v9384
    %v10297 = vpack.c.b16 %v9409, %v9385
    %v10298 = vpack.c.b16 %v9410, %v9386
    %v10299 = vpack.c.b16 %v9411, %v9387
    %v10300 = vpack.c.b16 %v9412, %v9388
    %v10301 = vpack.c.b16 %v9413, %v9389
    %v10302 = vpack.c.b16 %v9414, %v9390
    %v10303 = vpack.c.b16 %v9415, %v9391
    %v10304 = vpack.c.b16 %v9416, %v9392
    %v10305 = vpack.c.b16 %v9417, %v9393
    %v10306 = vpack.c.b16 %v9418, %v9394
    %v10307 = vpack.c.b16 %v9419, %v9395
    %v10308 = vpack.c.b16 %v9420, %v9396
    %v10309 = vpack.c.b16 %v9421, %v9397
    %v10310 = vpack.c.b16 %v9446, %v9422
    %v10311 = vpack.c.b16 %v9447, %v9423
    %v10312 = vpack.c.b16 %v9448, %v9424
    %v10313 = vpack.c.b16 %v9449, %v9425
    %v10314 = vpack.c.b16 %v9450, %v9426
    %v10315 = vpack.c.b16 %v9451, %v9427
    %v10316 = vpack.c.b16 %v9452, %v9428
    %v10317 = vpack.c.b16 %v9453, %v9429
    %v10318 = vpack.c.b16 %v9454, %v9430
    %v10319 = vpack.c.b16 %v9455, %v9431
    %v10320 = vpack.c.b16 %v9456, %v9432
    %v10321 = vpack.c.b16 %v9457, %v9433
    %v10322 = vpack.c.b16 %v9458, %v9434
    %v10323 = vpack.c.b16 %v9459, %v9435
    %v10324 = vpack.c.b16 %v9460, %v9436
    %v10325 = vpack.c.b16 %v9461, %v9437
    %v10326 = vpack.c.b16 %v9462, %v9438
    %v10327 = vpack.c.b16 %v9463, %v9439
    %v10328 = vpack.c.b16 %v9464, %v9440
    %v10329 = vpack.c.b16 %v9465, %v9441
    %v10330 = vpack.c.b16 %v9466, %v9442
    %v10331 = vpack.c.b16 %v9467, %v9443
    %v10332 = vpack.c.b16 %v9468, %v9444
    %v10333 = vpack.c.b16 %v9469, %v9445
    %v10334 = vpack.c.b16 %v9494, %v9470
    %v10335 = vpack.c.b16 %v9495, %v9471
    %v10336 = vpack.c.b16 %v9496, %v9472
    %v10337 = vpack.c.b16 %v9497, %v9473
    %v10338 = vpack.c.b16 %v9498, %v9474
    %v10339 = vpack.c.b16 %v9499, %v9475
    %v10340 = vpack.c.b16 %v9500, %v9476
    %v10341 = vpack.c.b16 %v9501, %v9477
    %v10342 = vpack.c.b16 %v9502, %v9478
    %v10343 = vpack.c.b16 %v9503, %v9479
    %v10344 = vpack.c.b16 %v9504, %v9480
    %v10345 = vpack.c.b16 %v9505, %v9481
    %v10346 = vpack.c.b16 %v9506, %v9482
    %v10347 = vpack.c.b16 %v9507, %v9483
    %v10348 = vpack.c.b16 %v9508, %v9484
    %v10349 = vpack.c.b16 %v9509, %v9485
    %v10350 = vpack.c.b16 %v9510, %v9486
    %v10351 = vpack.c.b16 %v9511, %v9487
    %v10352 = vpack.c.b16 %v9512, %v9488
    %v10353 = vpack.c.b16 %v9513, %v9489
    %v10354 = vpack.c.b16 %v9514, %v9490
    %v10355 = vpack.c.b16 %v9515, %v9491
    %v10356 = vpack.c.b16 %v9516, %v9492
    %v10357 = vpack.c.b16 %v9517, %v9493
    %v10358 = vpack.c.b16 %v9542, %v9518
    %v10359 = vpack.c.b16 %v9543, %v9519
    %v10360 = vpack.c.b16 %v9544, %v9520
    %v10361 = vpack.c.b16 %v9545, %v9521
    %v10362 = vpack.c.b16 %v9546, %v9522
    %v10363 = vpack.c.b16 %v9547, %v9523
    %v10364 = vpack.c.b16 %v9548, %v9524
    %v10365 = vpack.c.b16 %v9549, %v9525
    %v10366 = vpack.c.b16 %v9550, %v9526
    %v10367 = vpack.c.b16 %v9551, %v9527
    %v10368 = vpack.c.b16 %v9552, %v9528
    %v10369 = vpack.c.b16 %v9553, %v9529
    %v10370 = vpack.c.b16 %v9554, %v9530
    %v10371 = vpack.c.b16 %v9555, %v9531
    %v10372 = vpack.c.b16 %v9556, %v9532
    %v10373 = vpack.c.b16 %v9557, %v9533
    %v10374 = vpack.c.b16 %v9558, %v9534
    %v10375 = vpack.c.b16 %v9559, %v9535
    %v10376 = vpack.c.b16 %v9560, %v9536
    %v10377 = vpack.c.b16 %v9561, %v9537
    %v10378 = vpack.c.b16 %v9562, %v9538
    %v10379 = vpack.c.b16 %v9563, %v9539
    %v10380 = vpack.c.b16 %v9564, %v9540
    %v10381 = vpack.c.b16 %v9565, %v9541
    %v10382 = vpack.c.b16 %v9590, %v9566
    %v10383 = vpack.c.b16 %v9591, %v9567
    %v10384 = vpack.c.b16 %v9592, %v9568
    %v10385 = vpack.c.b16 %v9593, %v9569
    %v10386 = vpack.c.b16 %v9594, %v9570
    %v10387 = vpack.c.b16 %v9595, %v9571
    %v10388 = vpack.c.b16 %v9596, %v9572
    %v10389 = vpack.c.b16 %v9597, %v9573
    %v10390 = vpack.c.b16 %v9598, %v9574
    %v10391 = vpack.c.b16 %v9599, %v9575
    %v10392 = vpack.c.b16 %v9600, %v9576
    %v10393 = vpack.c.b16 %v9601, %v9577
    %v10394 = vpack.c.b16 %v9602, %v9578
    %v10395 = vpack.c.b16 %v9603, %v9579
    %v10396 = vpack.c.b16 %v9604, %v9580
    %v10397 = vpack.c.b16 %v9605, %v9581
    %v10398 = vpack.c.b16 %v9606, %v9582
    %v10399 = vpack.c.b16 %v9607, %v9583
    %v10400 = vpack.c.b16 %v9608, %v9584
    %v10401 = vpack.c.b16 %v9609, %v9585
    %v10402 = vpack.c.b16 %v9610, %v9586
    %v10403 = vpack.c.b16 %v9611, %v9587
    %v10404 = vpack.c.b16 %v9612, %v9588
    %v10405 = vpack.c.b16 %v9613, %v9589
    %v10406 = vpack.c.b16 %v9638, %v9614
    %v10407 = vpack.c.b16 %v9639, %v9615
    %v10408 = vpack.c.b16 %v9640, %v9616
    %v10409 = vpack.c.b16 %v9641, %v9617
    %v10410 = vpack.c.b16 %v9642, %v9618
    %v10411 = vpack.c.b16 %v9643, %v9619
    %v10412 = vpack.c.b16 %v9644, %v9620
    %v10413 = vpack.c.b16 %v9645, %v9621
    %v10414 = vpack.c.b16 %v9646, %v9622
    %v10415 = vpack.c.b16 %v9647, %v9623
    %v10416 = vpack.c.b16 %v9648, %v9624
    %v10417 = vpack.c.b16 %v9649, %v9625
    %v10418 = vpack.c.b16 %v9650, %v9626
    %v10419 = vpack.c.b16 %v9651, %v9627
    %v10420 = vpack.c.b16 %v9652, %v9628
    %v10421 = vpack.c.b16 %v9653, %v9629
    %v10422 = vpack.c.b16 %v9654, %v9630
    %v10423 = vpack.c.b16 %v9655, %v9631
    %v10424 = vpack.c.b16 %v9656, %v9632
    %v10425 = vpack.c.b16 %v9657, %v9633
    %v10426 = vpack.c.b16 %v9658, %v9634
    %v10427 = vpack.c.b16 %v9659, %v9635
    %v10428 = vpack.c.b16 %v9660, %v9636
    %v10429 = vpack.c.b16 %v9661, %v9637
    %11198 = vmatprep.subr.bf16.mxu0 %v9663
    %11199 = vmatpush1.bf16.msra.mxu0 %v9662
    %11200 = vmatprep.subr.bf16.mxu0 %v9687
    %11201 = vmatpush1.bf16.msra.mxu0 %v9686
    %11202 = vmatprep.subr.bf16.mxu0 %v9711
    %11203 = vmatpush1.bf16.msra.mxu0 %v9710
    %11204 = vmatprep.subr.bf16.mxu0 %v9735
    %11205 = vmatpush1.bf16.msra.mxu0 %v9734
    %11206 = vmatprep.subr.bf16.mxu0 %v9759
    %11207 = vmatpush1.bf16.msra.mxu0 %v9758
    %11208 = vmatprep.subr.bf16.mxu0 %v9783
    %11209 = vmatpush1.bf16.msra.mxu0 %v9782
    %11210 = vmatprep.subr.bf16.mxu0 %v9807
    %11211 = vmatpush1.bf16.msra.mxu0 %v9806
    %11212 = vmatprep.subr.bf16.mxu0 %v9831
    %11213 = vmatpush1.bf16.msra.mxu0 %v9830
    %11214 = vmatprep.subr.bf16.mxu0 %v9855
    %11215 = vmatpush1.bf16.msra.mxu0 %v9854
    %11216 = vmatprep.subr.bf16.mxu0 %v9879
    %11217 = vmatpush1.bf16.msra.mxu0 %v9878
    %11218 = vmatprep.subr.bf16.mxu0 %v9903
    %11219 = vmatpush1.bf16.msra.mxu0 %v9902
    %11220 = vmatprep.subr.bf16.mxu0 %v9927
    %11221 = vmatpush1.bf16.msra.mxu0 %v9926
    %11222 = vmatprep.subr.bf16.mxu0 %v9951
    %11223 = vmatpush1.bf16.msra.mxu0 %v9950
    %11224 = vmatprep.subr.bf16.mxu0 %v9975
    %11225 = vmatpush1.bf16.msra.mxu0 %v9974
    %11226 = vmatprep.subr.bf16.mxu0 %v9999
    %11227 = vmatpush1.bf16.msra.mxu0 %v9998
    %11228 = vmatprep.subr.bf16.mxu0 %v10023
    %11229 = vmatpush1.bf16.msra.mxu0 %v10022
    %11230 = vmatprep.mubr.bf16.mxu0 %v6461
    %11231 = vmatmul.mubr.bf16.gmra.mrb[0].mxu0 %v6460
    %v11232 = vpop.f32.mrb[0].mxu0
    %v11233 = vadd.f32 %v7241, %v11232
    %v11234 = vpop.f32.mrb[0].mxu0
    %v11235 = vadd.f32 %v7245, %v11234
    %v11236 = vpop.f32.mrb[0].mxu0
    %v11237 = vpop.f32.mrb[0].mxu0
    %11238 = vdwg.mxu0
    %11239 = vmatprep.subr.bf16.mxu0 %v10047
    %11240 = vmatpush1.bf16.msra.mxu0 %v10046
    %11241 = vmatprep.subr.bf16.mxu0 %v10071
    %11242 = vmatpush1.bf16.msra.mxu0 %v10070
    %11243 = vmatprep.subr.bf16.mxu0 %v10095
    %11244 = vmatpush1.bf16.msra.mxu0 %v10094
    %11245 = vmatprep.subr.bf16.mxu0 %v10119
    %11246 = vmatpush1.bf16.msra.mxu0 %v10118
    %11247 = vmatprep.subr.bf16.mxu0 %v10143
    %11248 = vmatpush1.bf16.msra.mxu0 %v10142
    %11249 = vmatprep.subr.bf16.mxu0 %v10167
    %11250 = vmatpush1.bf16.msra.mxu0 %v10166
    %11251 = vmatprep.subr.bf16.mxu0 %v10191
    %11252 = vmatpush1.bf16.msra.mxu0 %v10190
    %11253 = vmatprep.subr.bf16.mxu0 %v10215
    %11254 = vmatpush1.bf16.msra.mxu0 %v10214
    %11255 = vmatprep.subr.bf16.mxu0 %v10239
    %11256 = vmatpush1.bf16.msra.mxu0 %v10238
    %11257 = vmatprep.subr.bf16.mxu0 %v10263
    %11258 = vmatpush1.bf16.msra.mxu0 %v10262
    %11259 = vmatprep.subr.bf16.mxu0 %v10287
    %11260 = vmatpush1.bf16.msra.mxu0 %v10286
    %11261 = vmatprep.subr.bf16.mxu0 %v10311
    %11262 = vmatpush1.bf16.msra.mxu0 %v10310
    %11263 = vmatprep.subr.bf16.mxu0 %v10335
    %11264 = vmatpush1.bf16.msra.mxu0 %v10334
    %11265 = vmatprep.subr.bf16.mxu0 %v10359
    %11266 = vmatpush1.bf16.msra.mxu0 %v10358
    %11267 = vmatprep.subr.bf16.mxu0 %v10383
    %11268 = vmatpush1.bf16.msra.mxu0 %v10382
    %11269 = vmatprep.subr.bf16.mxu0 %v10407
    %11270 = vmatpush1.bf16.msra.mxu0 %v10406
    %11271 = vmatprep.mubr.bf16.mxu0 %v6463
    %11272 = vmatmul.mubr.bf16.gmra.mrb[0].mxu0 %v6462
    %v11273 = vpop.f32.mrb[0].mxu0
    %v11274 = vadd.f32 %v11233, %v11273
    %v11275 = vpop.f32.mrb[0].mxu0
    %v11276 = vadd.f32 %v11235, %v11275
    %v11277 = vpop.f32.mrb[0].mxu0
    %v11278 = vpop.f32.mrb[0].mxu0
    %11279 = vdwg.mxu0
    %11280 = vmatprep.subr.bf16.mxu0 %v9665
    %11281 = vmatpush1.bf16.msra.mxu0 %v9664
    %11282 = vmatprep.subr.bf16.mxu0 %v9689
    %11283 = vmatpush1.bf16.msra.mxu0 %v9688
    %11284 = vmatprep.subr.bf16.mxu0 %v9713
    %11285 = vmatpush1.bf16.msra.mxu0 %v9712
    %11286 = vmatprep.subr.bf16.mxu0 %v9737
    %11287 = vmatpush1.bf16.msra.mxu0 %v9736
    %11288 = vmatprep.subr.bf16.mxu0 %v9761
    %11289 = vmatpush1.bf16.msra.mxu0 %v9760
    %11290 = vmatprep.subr.bf16.mxu0 %v9785
    %11291 = vmatpush1.bf16.msra.mxu0 %v9784
    %11292 = vmatprep.subr.bf16.mxu0 %v9809
    %11293 = vmatpush1.bf16.msra.mxu0 %v9808
    %11294 = vmatprep.subr.bf16.mxu0 %v9833
    %11295 = vmatpush1.bf16.msra.mxu0 %v9832
    %11296 = vmatprep.subr.bf16.mxu0 %v9857
    %11297 = vmatpush1.bf16.msra.mxu0 %v9856
    %11298 = vmatprep.subr.bf16.mxu0 %v9881
    %11299 = vmatpush1.bf16.msra.mxu0 %v9880
    %11300 = vmatprep.subr.bf16.mxu0 %v9905
    %11301 = vmatpush1.bf16.msra.mxu0 %v9904
    %11302 = vmatprep.subr.bf16.mxu0 %v9929
    %11303 = vmatpush1.bf16.msra.mxu0 %v9928
    %11304 = vmatprep.subr.bf16.mxu0 %v9953
    %11305 = vmatpush1.bf16.msra.mxu0 %v9952
    %11306 = vmatprep.subr.bf16.mxu0 %v9977
    %11307 = vmatpush1.bf16.msra.mxu0 %v9976
    %11308 = vmatprep.subr.bf16.mxu0 %v10001
    %11309 = vmatpush1.bf16.msra.mxu0 %v10000
    %11310 = vmatprep.subr.bf16.mxu0 %v10025
    %11311 = vmatpush1.bf16.msra.mxu0 %v10024
    %11312 = vmatprep.mubr.bf16.mxu0 %v6461
    %11313 = vmatmul.mubr.bf16.gmra.mrb[0].mxu0 %v6460
    %v11314 = vpop.f32.mrb[0].mxu0
    %v11315 = vadd.f32 %v7249, %v11314
    %v11316 = vpop.f32.mrb[0].mxu0
    %v11317 = vadd.f32 %v7253, %v11316
    %v11318 = vpop.f32.mrb[0].mxu0
    %v11319 = vpop.f32.mrb[0].mxu0
    %11320 = vdwg.mxu0
    %11321 = vmatprep.subr.bf16.mxu0 %v10049
    %11322 = vmatpush1.bf16.msra.mxu0 %v10048
    %11323 = vmatprep.subr.bf16.mxu0 %v10073
    %11324 = vmatpush1.bf16.msra.mxu0 %v10072
    %11325 = vmatprep.subr.bf16.mxu0 %v10097
    %11326 = vmatpush1.bf16.msra.mxu0 %v10096
    %11327 = vmatprep.subr.bf16.mxu0 %v10121
    %11328 = vmatpush1.bf16.msra.mxu0 %v10120
    %11329 = vmatprep.subr.bf16.mxu0 %v10145
    %11330 = vmatpush1.bf16.msra.mxu0 %v10144
    %11331 = vmatprep.subr.bf16.mxu0 %v10169
    %11332 = vmatpush1.bf16.msra.mxu0 %v10168
    %11333 = vmatprep.subr.bf16.mxu0 %v10193
    %11334 = vmatpush1.bf16.msra.mxu0 %v10192
    %11335 = vmatprep.subr.bf16.mxu0 %v10217
    %11336 = vmatpush1.bf16.msra.mxu0 %v10216
    %11337 = vmatprep.subr.bf16.mxu0 %v10241
    %11338 = vmatpush1.bf16.msra.mxu0 %v10240
    %11339 = vmatprep.subr.bf16.mxu0 %v10265
    %11340 = vmatpush1.bf16.msra.mxu0 %v10264
    %11341 = vmatprep.subr.bf16.mxu0 %v10289
    %11342 = vmatpush1.bf16.msra.mxu0 %v10288
    %11343 = vmatprep.subr.bf16.mxu0 %v10313
    %11344 = vmatpush1.bf16.msra.mxu0 %v10312
    %11345 = vmatprep.subr.bf16.mxu0 %v10337
    %11346 = vmatpush1.bf16.msra.mxu0 %v10336
    %11347 = vmatprep.subr.bf16.mxu0 %v10361
    %11348 = vmatpush1.bf16.msra.mxu0 %v10360
    %11349 = vmatprep.subr.bf16.mxu0 %v10385
    %11350 = vmatpush1.bf16.msra.mxu0 %v10384
    %11351 = vmatprep.subr.bf16.mxu0 %v10409
    %11352 = vmatpush1.bf16.msra.mxu0 %v10408
    %11353 = vmatprep.mubr.bf16.mxu0 %v6463
    %11354 = vmatmul.mubr.bf16.gmra.mrb[0].mxu0 %v6462
    %v11355 = vpop.f32.mrb[0].mxu0
    %v11356 = vadd.f32 %v11315, %v11355
    %v11357 = vpop.f32.mrb[0].mxu0
    %v11358 = vadd.f32 %v11317, %v11357
    %v11359 = vpop.f32.mrb[0].mxu0
    %v11360 = vpop.f32.mrb[0].mxu0
    %11361 = vdwg.mxu0
    %11362 = vmatprep.subr.bf16.mxu0 %v9667
    %11363 = vmatpush1.bf16.msra.mxu0 %v9666
    %11364 = vmatprep.subr.bf16.mxu0 %v9691
    %11365 = vmatpush1.bf16.msra.mxu0 %v9690
    %11366 = vmatprep.subr.bf16.mxu0 %v9715
    %11367 = vmatpush1.bf16.msra.mxu0 %v9714
    %11368 = vmatprep.subr.bf16.mxu0 %v9739
    %11369 = vmatpush1.bf16.msra.mxu0 %v9738
    %11370 = vmatprep.subr.bf16.mxu0 %v9763
    %11371 = vmatpush1.bf16.msra.mxu0 %v9762
    %11372 = vmatprep.subr.bf16.mxu0 %v9787
    %11373 = vmatpush1.bf16.msra.mxu0 %v9786
    %11374 = vmatprep.subr.bf16.mxu0 %v9811
    %11375 = vmatpush1.bf16.msra.mxu0 %v9810
    %11376 = vmatprep.subr.bf16.mxu0 %v9835
    %11377 = vmatpush1.bf16.msra.mxu0 %v9834
    %11378 = vmatprep.subr.bf16.mxu0 %v9859
    %11379 = vmatpush1.bf16.msra.mxu0 %v9858
    %11380 = vmatprep.subr.bf16.mxu0 %v9883
    %11381 = vmatpush1.bf16.msra.mxu0 %v9882
    %11382 = vmatprep.subr.bf16.mxu0 %v9907
    %11383 = vmatpush1.bf16.msra.mxu0 %v9906
    %11384 = vmatprep.subr.bf16.mxu0 %v9931
    %11385 = vmatpush1.bf16.msra.mxu0 %v9930
    %11386 = vmatprep.subr.bf16.mxu0 %v9955
    %11387 = vmatpush1.bf16.msra.mxu0 %v9954
    %11388 = vmatprep.subr.bf16.mxu0 %v9979
    %11389 = vmatpush1.bf16.msra.mxu0 %v9978
    %11390 = vmatprep.subr.bf16.mxu0 %v10003
    %11391 = vmatpush1.bf16.msra.mxu0 %v10002
    %11392 = vmatprep.subr.bf16.mxu0 %v10027
    %11393 = vmatpush1.bf16.msra.mxu0 %v10026
    %11394 = vmatprep.mubr.bf16.mxu0 %v6461
    %11395 = vmatmul.mubr.bf16.gmra.mrb[0].mxu0 %v6460
    %v11396 = vpop.f32.mrb[0].mxu0
    %v11397 = vadd.f32 %v7257, %v11396
    %v11398 = vpop.f32.mrb[0].mxu0
    %v11399 = vadd.f32 %v7261, %v11398
    %v11400 = vpop.f32.mrb[0].mxu0
    %v11401 = vpop.f32.mrb[0].mxu0
    %11402 = vdwg.mxu0
    %11403 = vmatprep.subr.bf16.mxu0 %v10051
    %11404 = vmatpush1.bf16.msra.mxu0 %v10050
    %11405 = vmatprep.subr.bf16.mxu0 %v10075
    %11406 = vmatpush1.bf16.msra.mxu0 %v10074
    %11407 = vmatprep.subr.bf16.mxu0 %v10099
    %11408 = vmatpush1.bf16.msra.mxu0 %v10098
    %11409 = vmatprep.subr.bf16.mxu0 %v10123
    %11410 = vmatpush1.bf16.msra.mxu0 %v10122
    %11411 = vmatprep.subr.bf16.mxu0 %v10147
    %11412 = vmatpush1.bf16.msra.mxu0 %v10146
    %11413 = vmatprep.subr.bf16.mxu0 %v10171
    %11414 = vmatpush1.bf16.msra.mxu0 %v10170
    %11415 = vmatprep.subr.bf16.mxu0 %v10195
    %11416 = vmatpush1.bf16.msra.mxu0 %v10194
    %11417 = vmatprep.subr.bf16.mxu0 %v10219
    %11418 = vmatpush1.bf16.msra.mxu0 %v10218
    %11419 = vmatprep.subr.bf16.mxu0 %v10243
    %11420 = vmatpush1.bf16.msra.mxu0 %v10242
    %11421 = vmatprep.subr.bf16.mxu0 %v10267
    %11422 = vmatpush1.bf16.msra.mxu0 %v10266
    %11423 = vmatprep.subr.bf16.mxu0 %v10291
    %11424 = vmatpush1.bf16.msra.mxu0 %v10290
    %11425 = vmatprep.subr.bf16.mxu0 %v10315
    %11426 = vmatpush1.bf16.msra.mxu0 %v10314
    %11427 = vmatprep.subr.bf16.mxu0 %v10339
    %11428 = vmatpush1.bf16.msra.mxu0 %v10338
    %11429 = vmatprep.subr.bf16.mxu0 %v10363
    %11430 = vmatpush1.bf16.msra.mxu0 %v10362
    %11431 = vmatprep.subr.bf16.mxu0 %v10387
    %11432 = vmatpush1.bf16.msra.mxu0 %v10386
    %11433 = vmatprep.subr.bf16.mxu0 %v10411
    %11434 = vmatpush1.bf16.msra.mxu0 %v10410
    %11435 = vmatprep.mubr.bf16.mxu0 %v6463
    %11436 = vmatmul.mubr.bf16.gmra.mrb[0].mxu0 %v6462
    %v11437 = vpop.f32.mrb[0].mxu0
    %v11438 = vadd.f32 %v11397, %v11437
    %v11439 = vpop.f32.mrb[0].mxu0
    %v11440 = vadd.f32 %v11399, %v11439
    %v11441 = vpop.f32.mrb[0].mxu0
    %v11442 = vpop.f32.mrb[0].mxu0
    %11443 = vdwg.mxu0
    %11444 = vmatprep.subr.bf16.mxu0 %v9669
    %11445 = vmatpush1.bf16.msra.mxu0 %v9668
    %11446 = vmatprep.subr.bf16.mxu0 %v9693
    %11447 = vmatpush1.bf16.msra.mxu0 %v9692
    %11448 = vmatprep.subr.bf16.mxu0 %v9717
    %11449 = vmatpush1.bf16.msra.mxu0 %v9716
    %11450 = vmatprep.subr.bf16.mxu0 %v9741
    %11451 = vmatpush1.bf16.msra.mxu0 %v9740
    %11452 = vmatprep.subr.bf16.mxu0 %v9765
    %11453 = vmatpush1.bf16.msra.mxu0 %v9764
    %11454 = vmatprep.subr.bf16.mxu0 %v9789
    %11455 = vmatpush1.bf16.msra.mxu0 %v9788
    %11456 = vmatprep.subr.bf16.mxu0 %v9813
    %11457 = vmatpush1.bf16.msra.mxu0 %v9812
    %11458 = vmatprep.subr.bf16.mxu0 %v9837
    %11459 = vmatpush1.bf16.msra.mxu0 %v9836
    %11460 = vmatprep.subr.bf16.mxu0 %v9861
    %11461 = vmatpush1.bf16.msra.mxu0 %v9860
    %11462 = vmatprep.subr.bf16.mxu0 %v9885
    %11463 = vmatpush1.bf16.msra.mxu0 %v9884
    %11464 = vmatprep.subr.bf16.mxu0 %v9909
    %11465 = vmatpush1.bf16.msra.mxu0 %v9908
    %11466 = vmatprep.subr.bf16.mxu0 %v9933
    %11467 = vmatpush1.bf16.msra.mxu0 %v9932
    %11468 = vmatprep.subr.bf16.mxu0 %v9957
    %11469 = vmatpush1.bf16.msra.mxu0 %v9956
    %11470 = vmatprep.subr.bf16.mxu0 %v9981
    %11471 = vmatpush1.bf16.msra.mxu0 %v9980
    %11472 = vmatprep.subr.bf16.mxu0 %v10005
    %11473 = vmatpush1.bf16.msra.mxu0 %v10004
    %11474 = vmatprep.subr.bf16.mxu0 %v10029
    %11475 = vmatpush1.bf16.msra.mxu0 %v10028
    %11476 = vmatprep.mubr.bf16.mxu0 %v6461
    %11477 = vmatmul.mubr.bf16.gmra.mrb[0].mxu0 %v6460
    %v11478 = vpop.f32.mrb[0].mxu0
    %v11479 = vadd.f32 %v7265, %v11478
    %v11480 = vpop.f32.mrb[0].mxu0
    %v11481 = vadd.f32 %v7269, %v11480
    %v11482 = vpop.f32.mrb[0].mxu0
    %v11483 = vpop.f32.mrb[0].mxu0
    %11484 = vdwg.mxu0
    %11485 = vmatprep.subr.bf16.mxu0 %v10053
    %11486 = vmatpush1.bf16.msra.mxu0 %v10052
    %11487 = vmatprep.subr.bf16.mxu0 %v10077
    %11488 = vmatpush1.bf16.msra.mxu0 %v10076
    %11489 = vmatprep.subr.bf16.mxu0 %v10101
    %11490 = vmatpush1.bf16.msra.mxu0 %v10100
    %11491 = vmatprep.subr.bf16.mxu0 %v10125
    %11492 = vmatpush1.bf16.msra.mxu0 %v10124
    %11493 = vmatprep.subr.bf16.mxu0 %v10149
    %11494 = vmatpush1.bf16.msra.mxu0 %v10148
    %11495 = vmatprep.subr.bf16.mxu0 %v10173
    %11496 = vmatpush1.bf16.msra.mxu0 %v10172
    %11497 = vmatprep.subr.bf16.mxu0 %v10197
    %11498 = vmatpush1.bf16.msra.mxu0 %v10196
    %11499 = vmatprep.subr.bf16.mxu0 %v10221
    %11500 = vmatpush1.bf16.msra.mxu0 %v10220
    %11501 = vmatprep.subr.bf16.mxu0 %v10245
    %11502 = vmatpush1.bf16.msra.mxu0 %v10244
    %11503 = vmatprep.subr.bf16.mxu0 %v10269
    %11504 = vmatpush1.bf16.msra.mxu0 %v10268
    %11505 = vmatprep.subr.bf16.mxu0 %v10293
    %11506 = vmatpush1.bf16.msra.mxu0 %v10292
    %11507 = vmatprep.subr.bf16.mxu0 %v10317
    %11508 = vmatpush1.bf16.msra.mxu0 %v10316
    %11509 = vmatprep.subr.bf16.mxu0 %v10341
    %11510 = vmatpush1.bf16.msra.mxu0 %v10340
    %11511 = vmatprep.subr.bf16.mxu0 %v10365
    %11512 = vmatpush1.bf16.msra.mxu0 %v10364
    %11513 = vmatprep.subr.bf16.mxu0 %v10389
    %11514 = vmatpush1.bf16.msra.mxu0 %v10388
    %11515 = vmatprep.subr.bf16.mxu0 %v10413
    %11516 = vmatpush1.bf16.msra.mxu0 %v10412
    %11517 = vmatprep.mubr.bf16.mxu0 %v6463
    %11518 = vmatmul.mubr.bf16.gmra.mrb[0].mxu0 %v6462
    %v11519 = vpop.f32.mrb[0].mxu0
    %v11520 = vadd.f32 %v11479, %v11519
    %v11521 = vpop.f32.mrb[0].mxu0
    %v11522 = vadd.f32 %v11481, %v11521
    %v11523 = vpop.f32.mrb[0].mxu0
    %v11524 = vpop.f32.mrb[0].mxu0
    %11525 = vdwg.mxu0
    %11526 = vmatprep.subr.bf16.mxu0 %v9671
    %11527 = vmatpush1.bf16.msra.mxu0 %v9670
    %11528 = vmatprep.subr.bf16.mxu0 %v9695
    %11529 = vmatpush1.bf16.msra.mxu0 %v9694
    %11530 = vmatprep.subr.bf16.mxu0 %v9719
    %11531 = vmatpush1.bf16.msra.mxu0 %v9718
    %11532 = vmatprep.subr.bf16.mxu0 %v9743
    %11533 = vmatpush1.bf16.msra.mxu0 %v9742
    %11534 = vmatprep.subr.bf16.mxu0 %v9767
    %11535 = vmatpush1.bf16.msra.mxu0 %v9766
    %11536 = vmatprep.subr.bf16.mxu0 %v9791
    %11537 = vmatpush1.bf16.msra.mxu0 %v9790
    %11538 = vmatprep.subr.bf16.mxu0 %v9815
    %11539 = vmatpush1.bf16.msra.mxu0 %v9814
    %11540 = vmatprep.subr.bf16.mxu0 %v9839
    %11541 = vmatpush1.bf16.msra.mxu0 %v9838
    %11542 = vmatprep.subr.bf16.mxu0 %v9863
    %11543 = vmatpush1.bf16.msra.mxu0 %v9862
    %11544 = vmatprep.subr.bf16.mxu0 %v9887
    %11545 = vmatpush1.bf16.msra.mxu0 %v9886
    %11546 = vmatprep.subr.bf16.mxu0 %v9911
    %11547 = vmatpush1.bf16.msra.mxu0 %v9910
    %11548 = vmatprep.subr.bf16.mxu0 %v9935
    %11549 = vmatpush1.bf16.msra.mxu0 %v9934
    %11550 = vmatprep.subr.bf16.mxu0 %v9959
    %11551 = vmatpush1.bf16.msra.mxu0 %v9958
    %11552 = vmatprep.subr.bf16.mxu0 %v9983
    %11553 = vmatpush1.bf16.msra.mxu0 %v9982
    %11554 = vmatprep.subr.bf16.mxu0 %v10007
    %11555 = vmatpush1.bf16.msra.mxu0 %v10006
    %11556 = vmatprep.subr.bf16.mxu0 %v10031
    %11557 = vmatpush1.bf16.msra.mxu0 %v10030
    %11558 = vmatprep.mubr.bf16.mxu0 %v6461
    %11559 = vmatmul.mubr.bf16.gmra.mrb[0].mxu0 %v6460
    %v11560 = vpop.f32.mrb[0].mxu0
    %v11561 = vadd.f32 %v7273, %v11560
    %v11562 = vpop.f32.mrb[0].mxu0
    %v11563 = vadd.f32 %v7277, %v11562
    %v11564 = vpop.f32.mrb[0].mxu0
    %v11565 = vpop.f32.mrb[0].mxu0
    %11566 = vdwg.mxu0
    %11567 = vmatprep.subr.bf16.mxu0 %v10055
    %11568 = vmatpush1.bf16.msra.mxu0 %v10054
    %11569 = vmatprep.subr.bf16.mxu0 %v10079
    %11570 = vmatpush1.bf16.msra.mxu0 %v10078
    %11571 = vmatprep.subr.bf16.mxu0 %v10103
    %11572 = vmatpush1.bf16.msra.mxu0 %v10102
    %11573 = vmatprep.subr.bf16.mxu0 %v10127
    %11574 = vmatpush1.bf16.msra.mxu0 %v10126
    %11575 = vmatprep.subr.bf16.mxu0 %v10151
    %11576 = vmatpush1.bf16.msra.mxu0 %v10150
    %11577 = vmatprep.subr.bf16.mxu0 %v10175
    %11578 = vmatpush1.bf16.msra.mxu0 %v10174
    %11579 = vmatprep.subr.bf16.mxu0 %v10199
    %11580 = vmatpush1.bf16.msra.mxu0 %v10198
    %11581 = vmatprep.subr.bf16.mxu0 %v10223
    %11582 = vmatpush1.bf16.msra.mxu0 %v10222
    %11583 = vmatprep.subr.bf16.mxu0 %v10247
    %11584 = vmatpush1.bf16.msra.mxu0 %v10246
    %11585 = vmatprep.subr.bf16.mxu0 %v10271
    %11586 = vmatpush1.bf16.msra.mxu0 %v10270
    %11587 = vmatprep.subr.bf16.mxu0 %v10295
    %11588 = vmatpush1.bf16.msra.mxu0 %v10294
    %11589 = vmatprep.subr.bf16.mxu0 %v10319
    %11590 = vmatpush1.bf16.msra.mxu0 %v10318
    %11591 = vmatprep.subr.bf16.mxu0 %v10343
    %11592 = vmatpush1.bf16.msra.mxu0 %v10342
    %11593 = vmatprep.subr.bf16.mxu0 %v10367
    %11594 = vmatpush1.bf16.msra.mxu0 %v10366
    %11595 = vmatprep.subr.bf16.mxu0 %v10391
    %11596 = vmatpush1.bf16.msra.mxu0 %v10390
    %11597 = vmatprep.subr.bf16.mxu0 %v10415
    %11598 = vmatpush1.bf16.msra.mxu0 %v10414
    %11599 = vmatprep.mubr.bf16.mxu0 %v6463
    %11600 = vmatmul.mubr.bf16.gmra.mrb[0].mxu0 %v6462
    %v11601 = vpop.f32.mrb[0].mxu0
    %v11602 = vadd.f32 %v11561, %v11601
    %v11603 = vpop.f32.mrb[0].mxu0
    %v11604 = vadd.f32 %v11563, %v11603
    %v11605 = vpop.f32.mrb[0].mxu0
    %v11606 = vpop.f32.mrb[0].mxu0
    %11607 = vdwg.mxu0
    %11608 = vmatprep.subr.bf16.mxu0 %v9673
    %11609 = vmatpush1.bf16.msra.mxu0 %v9672
    %11610 = vmatprep.subr.bf16.mxu0 %v9697
    %11611 = vmatpush1.bf16.msra.mxu0 %v9696
    %11612 = vmatprep.subr.bf16.mxu0 %v9721
    %11613 = vmatpush1.bf16.msra.mxu0 %v9720
    %11614 = vmatprep.subr.bf16.mxu0 %v9745
    %11615 = vmatpush1.bf16.msra.mxu0 %v9744
    %11616 = vmatprep.subr.bf16.mxu0 %v9769
    %11617 = vmatpush1.bf16.msra.mxu0 %v9768
    %11618 = vmatprep.subr.bf16.mxu0 %v9793
    %11619 = vmatpush1.bf16.msra.mxu0 %v9792
    %11620 = vmatprep.subr.bf16.mxu0 %v9817
    %11621 = vmatpush1.bf16.msra.mxu0 %v9816
    %11622 = vmatprep.subr.bf16.mxu0 %v9841
    %11623 = vmatpush1.bf16.msra.mxu0 %v9840
    %11624 = vmatprep.subr.bf16.mxu0 %v9865
    %11625 = vmatpush1.bf16.msra.mxu0 %v9864
    %11626 = vmatprep.subr.bf16.mxu0 %v9889
    %11627 = vmatpush1.bf16.msra.mxu0 %v9888
    %11628 = vmatprep.subr.bf16.mxu0 %v9913
    %11629 = vmatpush1.bf16.msra.mxu0 %v9912
    %11630 = vmatprep.subr.bf16.mxu0 %v9937
    %11631 = vmatpush1.bf16.msra.mxu0 %v9936
    %11632 = vmatprep.subr.bf16.mxu0 %v9961
    %11633 = vmatpush1.bf16.msra.mxu0 %v9960
    %11634 = vmatprep.subr.bf16.mxu0 %v9985
    %11635 = vmatpush1.bf16.msra.mxu0 %v9984
    %11636 = vmatprep.subr.bf16.mxu0 %v10009
    %11637 = vmatpush1.bf16.msra.mxu0 %v10008
    %11638 = vmatprep.subr.bf16.mxu0 %v10033
    %11639 = vmatpush1.bf16.msra.mxu0 %v10032
    %11640 = vmatprep.mubr.bf16.mxu0 %v6461
    %11641 = vmatmul.mubr.bf16.gmra.mrb[0].mxu0 %v6460
    %v11642 = vpop.f32.mrb[0].mxu0
    %v11643 = vadd.f32 %v7281, %v11642
    %v11644 = vpop.f32.mrb[0].mxu0
    %v11645 = vadd.f32 %v7285, %v11644
    %v11646 = vpop.f32.mrb[0].mxu0
    %v11647 = vpop.f32.mrb[0].mxu0
    %11648 = vdwg.mxu0
    %11649 = vmatprep.subr.bf16.mxu0 %v10057
    %11650 = vmatpush1.bf16.msra.mxu0 %v10056
    %11651 = vmatprep.subr.bf16.mxu0 %v10081
    %11652 = vmatpush1.bf16.msra.mxu0 %v10080
    %11653 = vmatprep.subr.bf16.mxu0 %v10105
    %11654 = vmatpush1.bf16.msra.mxu0 %v10104
    %11655 = vmatprep.subr.bf16.mxu0 %v10129
    %11656 = vmatpush1.bf16.msra.mxu0 %v10128
    %11657 = vmatprep.subr.bf16.mxu0 %v10153
    %11658 = vmatpush1.bf16.msra.mxu0 %v10152
    %11659 = vmatprep.subr.bf16.mxu0 %v10177
    %11660 = vmatpush1.bf16.msra.mxu0 %v10176
    %11661 = vmatprep.subr.bf16.mxu0 %v10201
    %11662 = vmatpush1.bf16.msra.mxu0 %v10200
    %11663 = vmatprep.subr.bf16.mxu0 %v10225
    %11664 = vmatpush1.bf16.msra.mxu0 %v10224
    %11665 = vmatprep.subr.bf16.mxu0 %v10249
    %11666 = vmatpush1.bf16.msra.mxu0 %v10248
    %11667 = vmatprep.subr.bf16.mxu0 %v10273
    %11668 = vmatpush1.bf16.msra.mxu0 %v10272
    %11669 = vmatprep.subr.bf16.mxu0 %v10297
    %11670 = vmatpush1.bf16.msra.mxu0 %v10296
    %11671 = vmatprep.subr.bf16.mxu0 %v10321
    %11672 = vmatpush1.bf16.msra.mxu0 %v10320
    %11673 = vmatprep.subr.bf16.mxu0 %v10345
    %11674 = vmatpush1.bf16.msra.mxu0 %v10344
    %11675 = vmatprep.subr.bf16.mxu0 %v10369
    %11676 = vmatpush1.bf16.msra.mxu0 %v10368
    %11677 = vmatprep.subr.bf16.mxu0 %v10393
    %11678 = vmatpush1.bf16.msra.mxu0 %v10392
    %11679 = vmatprep.subr.bf16.mxu0 %v10417
    %11680 = vmatpush1.bf16.msra.mxu0 %v10416
    %11681 = vmatprep.mubr.bf16.mxu0 %v6463
    %11682 = vmatmul.mubr.bf16.gmra.mrb[0].mxu0 %v6462
    %v11683 = vpop.f32.mrb[0].mxu0
    %v11684 = vadd.f32 %v11643, %v11683
    %v11685 = vpop.f32.mrb[0].mxu0
    %v11686 = vadd.f32 %v11645, %v11685
    %v11687 = vpop.f32.mrb[0].mxu0
    %v11688 = vpop.f32.mrb[0].mxu0
    %11689 = vdwg.mxu0
    %11690 = vmatprep.subr.bf16.mxu0 %v9675
    %11691 = vmatpush1.bf16.msra.mxu0 %v9674
    %11692 = vmatprep.subr.bf16.mxu0 %v9699
    %11693 = vmatpush1.bf16.msra.mxu0 %v9698
    %11694 = vmatprep.subr.bf16.mxu0 %v9723
    %11695 = vmatpush1.bf16.msra.mxu0 %v9722
    %11696 = vmatprep.subr.bf16.mxu0 %v9747
    %11697 = vmatpush1.bf16.msra.mxu0 %v9746
    %11698 = vmatprep.subr.bf16.mxu0 %v9771
    %11699 = vmatpush1.bf16.msra.mxu0 %v9770
    %11700 = vmatprep.subr.bf16.mxu0 %v9795
    %11701 = vmatpush1.bf16.msra.mxu0 %v9794
    %11702 = vmatprep.subr.bf16.mxu0 %v9819
    %11703 = vmatpush1.bf16.msra.mxu0 %v9818
    %11704 = vmatprep.subr.bf16.mxu0 %v9843
    %11705 = vmatpush1.bf16.msra.mxu0 %v9842
    %11706 = vmatprep.subr.bf16.mxu0 %v9867
    %11707 = vmatpush1.bf16.msra.mxu0 %v9866
    %11708 = vmatprep.subr.bf16.mxu0 %v9891
    %11709 = vmatpush1.bf16.msra.mxu0 %v9890
    %11710 = vmatprep.subr.bf16.mxu0 %v9915
    %11711 = vmatpush1.bf16.msra.mxu0 %v9914
    %11712 = vmatprep.subr.bf16.mxu0 %v9939
    %11713 = vmatpush1.bf16.msra.mxu0 %v9938
    %11714 = vmatprep.subr.bf16.mxu0 %v9963
    %11715 = vmatpush1.bf16.msra.mxu0 %v9962
    %11716 = vmatprep.subr.bf16.mxu0 %v9987
    %11717 = vmatpush1.bf16.msra.mxu0 %v9986
    %11718 = vmatprep.subr.bf16.mxu0 %v10011
    %11719 = vmatpush1.bf16.msra.mxu0 %v10010
    %11720 = vmatprep.subr.bf16.mxu0 %v10035
    %11721 = vmatpush1.bf16.msra.mxu0 %v10034
    %11722 = vmatprep.mubr.bf16.mxu0 %v6461
    %11723 = vmatmul.mubr.bf16.gmra.mrb[0].mxu0 %v6460
    %v11724 = vpop.f32.mrb[0].mxu0
    %v11725 = vadd.f32 %v7289, %v11724
    %v11726 = vpop.f32.mrb[0].mxu0
    %v11727 = vadd.f32 %v7293, %v11726
    %v11728 = vpop.f32.mrb[0].mxu0
    %v11729 = vpop.f32.mrb[0].mxu0
    %11730 = vdwg.mxu0
    %11731 = vmatprep.subr.bf16.mxu0 %v10059
    %11732 = vmatpush1.bf16.msra.mxu0 %v10058
    %11733 = vmatprep.subr.bf16.mxu0 %v10083
    %11734 = vmatpush1.bf16.msra.mxu0 %v10082
    %11735 = vmatprep.subr.bf16.mxu0 %v10107
    %11736 = vmatpush1.bf16.msra.mxu0 %v10106
    %11737 = vmatprep.subr.bf16.mxu0 %v10131
    %11738 = vmatpush1.bf16.msra.mxu0 %v10130
    %11739 = vmatprep.subr.bf16.mxu0 %v10155
    %11740 = vmatpush1.bf16.msra.mxu0 %v10154
    %11741 = vmatprep.subr.bf16.mxu0 %v10179
    %11742 = vmatpush1.bf16.msra.mxu0 %v10178
    %11743 = vmatprep.subr.bf16.mxu0 %v10203
    %11744 = vmatpush1.bf16.msra.mxu0 %v10202
    %11745 = vmatprep.subr.bf16.mxu0 %v10227
    %11746 = vmatpush1.bf16.msra.mxu0 %v10226
    %11747 = vmatprep.subr.bf16.mxu0 %v10251
    %11748 = vmatpush1.bf16.msra.mxu0 %v10250
    %11749 = vmatprep.subr.bf16.mxu0 %v10275
    %11750 = vmatpush1.bf16.msra.mxu0 %v10274
    %11751 = vmatprep.subr.bf16.mxu0 %v10299
    %11752 = vmatpush1.bf16.msra.mxu0 %v10298
    %11753 = vmatprep.subr.bf16.mxu0 %v10323
    %11754 = vmatpush1.bf16.msra.mxu0 %v10322
    %11755 = vmatprep.subr.bf16.mxu0 %v10347
    %11756 = vmatpush1.bf16.msra.mxu0 %v10346
    %11757 = vmatprep.subr.bf16.mxu0 %v10371
    %11758 = vmatpush1.bf16.msra.mxu0 %v10370
    %11759 = vmatprep.subr.bf16.mxu0 %v10395
    %11760 = vmatpush1.bf16.msra.mxu0 %v10394
    %11761 = vmatprep.subr.bf16.mxu0 %v10419
    %11762 = vmatpush1.bf16.msra.mxu0 %v10418
    %11763 = vmatprep.mubr.bf16.mxu0 %v6463
    %11764 = vmatmul.mubr.bf16.gmra.mrb[0].mxu0 %v6462
    %v11765 = vpop.f32.mrb[0].mxu0
    %v11766 = vadd.f32 %v11725, %v11765
    %v11767 = vpop.f32.mrb[0].mxu0
    %v11768 = vadd.f32 %v11727, %v11767
    %v11769 = vpop.f32.mrb[0].mxu0
    %v11770 = vpop.f32.mrb[0].mxu0
    %11771 = vdwg.mxu0
    %11772 = vmatprep.subr.bf16.mxu0 %v9677
    %11773 = vmatpush1.bf16.msra.mxu0 %v9676
    %11774 = vmatprep.subr.bf16.mxu0 %v9701
    %11775 = vmatpush1.bf16.msra.mxu0 %v9700
    %11776 = vmatprep.subr.bf16.mxu0 %v9725
    %11777 = vmatpush1.bf16.msra.mxu0 %v9724
    %11778 = vmatprep.subr.bf16.mxu0 %v9749
    %11779 = vmatpush1.bf16.msra.mxu0 %v9748
    %11780 = vmatprep.subr.bf16.mxu0 %v9773
    %11781 = vmatpush1.bf16.msra.mxu0 %v9772
    %11782 = vmatprep.subr.bf16.mxu0 %v9797
    %11783 = vmatpush1.bf16.msra.mxu0 %v9796
    %11784 = vmatprep.subr.bf16.mxu0 %v9821
    %11785 = vmatpush1.bf16.msra.mxu0 %v9820
    %11786 = vmatprep.subr.bf16.mxu0 %v9845
    %11787 = vmatpush1.bf16.msra.mxu0 %v9844
    %11788 = vmatprep.subr.bf16.mxu0 %v9869
    %11789 = vmatpush1.bf16.msra.mxu0 %v9868
    %11790 = vmatprep.subr.bf16.mxu0 %v9893
    %11791 = vmatpush1.bf16.msra.mxu0 %v9892
    %11792 = vmatprep.subr.bf16.mxu0 %v9917
    %11793 = vmatpush1.bf16.msra.mxu0 %v9916
    %11794 = vmatprep.subr.bf16.mxu0 %v9941
    %11795 = vmatpush1.bf16.msra.mxu0 %v9940
    %11796 = vmatprep.subr.bf16.mxu0 %v9965
    %11797 = vmatpush1.bf16.msra.mxu0 %v9964
    %11798 = vmatprep.subr.bf16.mxu0 %v9989
    %11799 = vmatpush1.bf16.msra.mxu0 %v9988
    %11800 = vmatprep.subr.bf16.mxu0 %v10013
    %11801 = vmatpush1.bf16.msra.mxu0 %v10012
    %11802 = vmatprep.subr.bf16.mxu0 %v10037
    %11803 = vmatpush1.bf16.msra.mxu0 %v10036
    %11804 = vmatprep.mubr.bf16.mxu0 %v6461
    %11805 = vmatmul.mubr.bf16.gmra.mrb[0].mxu0 %v6460
    %v11806 = vpop.f32.mrb[0].mxu0
    %v11807 = vadd.f32 %v7297, %v11806
    %v11808 = vpop.f32.mrb[0].mxu0
    %v11809 = vadd.f32 %v7301, %v11808
    %v11810 = vpop.f32.mrb[0].mxu0
    %v11811 = vpop.f32.mrb[0].mxu0
    %11812 = vdwg.mxu0
    %11813 = vmatprep.subr.bf16.mxu0 %v10061
    %11814 = vmatpush1.bf16.msra.mxu0 %v10060
    %11815 = vmatprep.subr.bf16.mxu0 %v10085
    %11816 = vmatpush1.bf16.msra.mxu0 %v10084
    %11817 = vmatprep.subr.bf16.mxu0 %v10109
    %11818 = vmatpush1.bf16.msra.mxu0 %v10108
    %11819 = vmatprep.subr.bf16.mxu0 %v10133
    %11820 = vmatpush1.bf16.msra.mxu0 %v10132
    %11821 = vmatprep.subr.bf16.mxu0 %v10157
    %11822 = vmatpush1.bf16.msra.mxu0 %v10156
    %11823 = vmatprep.subr.bf16.mxu0 %v10181
    %11824 = vmatpush1.bf16.msra.mxu0 %v10180
    %11825 = vmatprep.subr.bf16.mxu0 %v10205
    %11826 = vmatpush1.bf16.msra.mxu0 %v10204
    %11827 = vmatprep.subr.bf16.mxu0 %v10229
    %11828 = vmatpush1.bf16.msra.mxu0 %v10228
    %11829 = vmatprep.subr.bf16.mxu0 %v10253
    %11830 = vmatpush1.bf16.msra.mxu0 %v10252
    %11831 = vmatprep.subr.bf16.mxu0 %v10277
    %11832 = vmatpush1.bf16.msra.mxu0 %v10276
    %11833 = vmatprep.subr.bf16.mxu0 %v10301
    %11834 = vmatpush1.bf16.msra.mxu0 %v10300
    %11835 = vmatprep.subr.bf16.mxu0 %v10325
    %11836 = vmatpush1.bf16.msra.mxu0 %v10324
    %11837 = vmatprep.subr.bf16.mxu0 %v10349
    %11838 = vmatpush1.bf16.msra.mxu0 %v10348
    %11839 = vmatprep.subr.bf16.mxu0 %v10373
    %11840 = vmatpush1.bf16.msra.mxu0 %v10372
    %11841 = vmatprep.subr.bf16.mxu0 %v10397
    %11842 = vmatpush1.bf16.msra.mxu0 %v10396
    %11843 = vmatprep.subr.bf16.mxu0 %v10421
    %11844 = vmatpush1.bf16.msra.mxu0 %v10420
    %11845 = vmatprep.mubr.bf16.mxu0 %v6463
    %11846 = vmatmul.mubr.bf16.gmra.mrb[0].mxu0 %v6462
    %v11847 = vpop.f32.mrb[0].mxu0
    %v11848 = vadd.f32 %v11807, %v11847
    %v11849 = vpop.f32.mrb[0].mxu0
    %v11850 = vadd.f32 %v11809, %v11849
    %v11851 = vpop.f32.mrb[0].mxu0
    %v11852 = vpop.f32.mrb[0].mxu0
    %11853 = vdwg.mxu0
    %11854 = vmatprep.subr.bf16.mxu0 %v9679
    %11855 = vmatpush1.bf16.msra.mxu0 %v9678
    %11856 = vmatprep.subr.bf16.mxu0 %v9703
    %11857 = vmatpush1.bf16.msra.mxu0 %v9702
    %11858 = vmatprep.subr.bf16.mxu0 %v9727
    %11859 = vmatpush1.bf16.msra.mxu0 %v9726
    %11860 = vmatprep.subr.bf16.mxu0 %v9751
    %11861 = vmatpush1.bf16.msra.mxu0 %v9750
    %11862 = vmatprep.subr.bf16.mxu0 %v9775
    %11863 = vmatpush1.bf16.msra.mxu0 %v9774
    %11864 = vmatprep.subr.bf16.mxu0 %v9799
    %11865 = vmatpush1.bf16.msra.mxu0 %v9798
    %11866 = vmatprep.subr.bf16.mxu0 %v9823
    %11867 = vmatpush1.bf16.msra.mxu0 %v9822
    %11868 = vmatprep.subr.bf16.mxu0 %v9847
    %11869 = vmatpush1.bf16.msra.mxu0 %v9846
    %11870 = vmatprep.subr.bf16.mxu0 %v9871
    %11871 = vmatpush1.bf16.msra.mxu0 %v9870
    %11872 = vmatprep.subr.bf16.mxu0 %v9895
    %11873 = vmatpush1.bf16.msra.mxu0 %v9894
    %11874 = vmatprep.subr.bf16.mxu0 %v9919
    %11875 = vmatpush1.bf16.msra.mxu0 %v9918
    %11876 = vmatprep.subr.bf16.mxu0 %v9943
    %11877 = vmatpush1.bf16.msra.mxu0 %v9942
    %11878 = vmatprep.subr.bf16.mxu0 %v9967
    %11879 = vmatpush1.bf16.msra.mxu0 %v9966
    %11880 = vmatprep.subr.bf16.mxu0 %v9991
    %11881 = vmatpush1.bf16.msra.mxu0 %v9990
    %11882 = vmatprep.subr.bf16.mxu0 %v10015
    %11883 = vmatpush1.bf16.msra.mxu0 %v10014
    %11884 = vmatprep.subr.bf16.mxu0 %v10039
    %11885 = vmatpush1.bf16.msra.mxu0 %v10038
    %11886 = vmatprep.mubr.bf16.mxu0 %v6461
    %11887 = vmatmul.mubr.bf16.gmra.mrb[0].mxu0 %v6460
    %v11888 = vpop.f32.mrb[0].mxu0
    %v11889 = vadd.f32 %v7305, %v11888
    %v11890 = vpop.f32.mrb[0].mxu0
    %v11891 = vadd.f32 %v7309, %v11890
    %v11892 = vpop.f32.mrb[0].mxu0
    %v11893 = vpop.f32.mrb[0].mxu0
    %11894 = vdwg.mxu0
    %11895 = vmatprep.subr.bf16.mxu0 %v10063
    %11896 = vmatpush1.bf16.msra.mxu0 %v10062
    %11897 = vmatprep.subr.bf16.mxu0 %v10087
    %11898 = vmatpush1.bf16.msra.mxu0 %v10086
    %11899 = vmatprep.subr.bf16.mxu0 %v10111
    %11900 = vmatpush1.bf16.msra.mxu0 %v10110
    %11901 = vmatprep.subr.bf16.mxu0 %v10135
    %11902 = vmatpush1.bf16.msra.mxu0 %v10134
    %11903 = vmatprep.subr.bf16.mxu0 %v10159
    %11904 = vmatpush1.bf16.msra.mxu0 %v10158
    %11905 = vmatprep.subr.bf16.mxu0 %v10183
    %11906 = vmatpush1.bf16.msra.mxu0 %v10182
    %11907 = vmatprep.subr.bf16.mxu0 %v10207
    %11908 = vmatpush1.bf16.msra.mxu0 %v10206
    %11909 = vmatprep.subr.bf16.mxu0 %v10231
    %11910 = vmatpush1.bf16.msra.mxu0 %v10230
    %11911 = vmatprep.subr.bf16.mxu0 %v10255
    %11912 = vmatpush1.bf16.msra.mxu0 %v10254
    %11913 = vmatprep.subr.bf16.mxu0 %v10279
    %11914 = vmatpush1.bf16.msra.mxu0 %v10278
    %11915 = vmatprep.subr.bf16.mxu0 %v10303
    %11916 = vmatpush1.bf16.msra.mxu0 %v10302
    %11917 = vmatprep.subr.bf16.mxu0 %v10327
    %11918 = vmatpush1.bf16.msra.mxu0 %v10326
    %11919 = vmatprep.subr.bf16.mxu0 %v10351
    %11920 = vmatpush1.bf16.msra.mxu0 %v10350
    %11921 = vmatprep.subr.bf16.mxu0 %v10375
    %11922 = vmatpush1.bf16.msra.mxu0 %v10374
    %11923 = vmatprep.subr.bf16.mxu0 %v10399
    %11924 = vmatpush1.bf16.msra.mxu0 %v10398
    %11925 = vmatprep.subr.bf16.mxu0 %v10423
    %11926 = vmatpush1.bf16.msra.mxu0 %v10422
    %11927 = vmatprep.mubr.bf16.mxu0 %v6463
    %11928 = vmatmul.mubr.bf16.gmra.mrb[0].mxu0 %v6462
    %v11929 = vpop.f32.mrb[0].mxu0
    %v11930 = vadd.f32 %v11889, %v11929
    %v11931 = vpop.f32.mrb[0].mxu0
    %v11932 = vadd.f32 %v11891, %v11931
    %v11933 = vpop.f32.mrb[0].mxu0
    %v11934 = vpop.f32.mrb[0].mxu0
    %11935 = vdwg.mxu0
    %11936 = vmatprep.subr.bf16.mxu0 %v9681
    %11937 = vmatpush1.bf16.msra.mxu0 %v9680
    %11938 = vmatprep.subr.bf16.mxu0 %v9705
    %11939 = vmatpush1.bf16.msra.mxu0 %v9704
    %11940 = vmatprep.subr.bf16.mxu0 %v9729
    %11941 = vmatpush1.bf16.msra.mxu0 %v9728
    %11942 = vmatprep.subr.bf16.mxu0 %v9753
    %11943 = vmatpush1.bf16.msra.mxu0 %v9752
    %11944 = vmatprep.subr.bf16.mxu0 %v9777
    %11945 = vmatpush1.bf16.msra.mxu0 %v9776
    %11946 = vmatprep.subr.bf16.mxu0 %v9801
    %11947 = vmatpush1.bf16.msra.mxu0 %v9800
    %11948 = vmatprep.subr.bf16.mxu0 %v9825
    %11949 = vmatpush1.bf16.msra.mxu0 %v9824
    %11950 = vmatprep.subr.bf16.mxu0 %v9849
    %11951 = vmatpush1.bf16.msra.mxu0 %v9848
    %11952 = vmatprep.subr.bf16.mxu0 %v9873
    %11953 = vmatpush1.bf16.msra.mxu0 %v9872
    %11954 = vmatprep.subr.bf16.mxu0 %v9897
    %11955 = vmatpush1.bf16.msra.mxu0 %v9896
    %11956 = vmatprep.subr.bf16.mxu0 %v9921
    %11957 = vmatpush1.bf16.msra.mxu0 %v9920
    %11958 = vmatprep.subr.bf16.mxu0 %v9945
    %11959 = vmatpush1.bf16.msra.mxu0 %v9944
    %11960 = vmatprep.subr.bf16.mxu0 %v9969
    %11961 = vmatpush1.bf16.msra.mxu0 %v9968
    %11962 = vmatprep.subr.bf16.mxu0 %v9993
    %11963 = vmatpush1.bf16.msra.mxu0 %v9992
    %11964 = vmatprep.subr.bf16.mxu0 %v10017
    %11965 = vmatpush1.bf16.msra.mxu0 %v10016
    %11966 = vmatprep.subr.bf16.mxu0 %v10041
    %11967 = vmatpush1.bf16.msra.mxu0 %v10040
    %11968 = vmatprep.mubr.bf16.mxu0 %v6461
    %11969 = vmatmul.mubr.bf16.gmra.mrb[0].mxu0 %v6460
    %v11970 = vpop.f32.mrb[0].mxu0
    %v11971 = vadd.f32 %v7313, %v11970
    %v11972 = vpop.f32.mrb[0].mxu0
    %v11973 = vadd.f32 %v7317, %v11972
    %v11974 = vpop.f32.mrb[0].mxu0
    %v11975 = vpop.f32.mrb[0].mxu0
    %11976 = vdwg.mxu0
    %11977 = vmatprep.subr.bf16.mxu0 %v10065
    %11978 = vmatpush1.bf16.msra.mxu0 %v10064
    %11979 = vmatprep.subr.bf16.mxu0 %v10089
    %11980 = vmatpush1.bf16.msra.mxu0 %v10088
    %11981 = vmatprep.subr.bf16.mxu0 %v10113
    %11982 = vmatpush1.bf16.msra.mxu0 %v10112
    %11983 = vmatprep.subr.bf16.mxu0 %v10137
    %11984 = vmatpush1.bf16.msra.mxu0 %v10136
    %11985 = vmatprep.subr.bf16.mxu0 %v10161
    %11986 = vmatpush1.bf16.msra.mxu0 %v10160
    %11987 = vmatprep.subr.bf16.mxu0 %v10185
    %11988 = vmatpush1.bf16.msra.mxu0 %v10184
    %11989 = vmatprep.subr.bf16.mxu0 %v10209
    %11990 = vmatpush1.bf16.msra.mxu0 %v10208
    %11991 = vmatprep.subr.bf16.mxu0 %v10233
    %11992 = vmatpush1.bf16.msra.mxu0 %v10232
    %11993 = vmatprep.subr.bf16.mxu0 %v10257
    %11994 = vmatpush1.bf16.msra.mxu0 %v10256
    %11995 = vmatprep.subr.bf16.mxu0 %v10281
    %11996 = vmatpush1.bf16.msra.mxu0 %v10280
    %11997 = vmatprep.subr.bf16.mxu0 %v10305
    %11998 = vmatpush1.bf16.msra.mxu0 %v10304
    %11999 = vmatprep.subr.bf16.mxu0 %v10329
    %12000 = vmatpush1.bf16.msra.mxu0 %v10328
    %12001 = vmatprep.subr.bf16.mxu0 %v10353
    %12002 = vmatpush1.bf16.msra.mxu0 %v10352
    %12003 = vmatprep.subr.bf16.mxu0 %v10377
    %12004 = vmatpush1.bf16.msra.mxu0 %v10376
    %12005 = vmatprep.subr.bf16.mxu0 %v10401
    %12006 = vmatpush1.bf16.msra.mxu0 %v10400
    %12007 = vmatprep.subr.bf16.mxu0 %v10425
    %12008 = vmatpush1.bf16.msra.mxu0 %v10424
    %12009 = vmatprep.mubr.bf16.mxu0 %v6463
    %12010 = vmatmul.mubr.bf16.gmra.mrb[0].mxu0 %v6462
    %v12011 = vpop.f32.mrb[0].mxu0
    %v12012 = vadd.f32 %v11971, %v12011
    %v12013 = vpop.f32.mrb[0].mxu0
    %v12014 = vadd.f32 %v11973, %v12013
    %v12015 = vpop.f32.mrb[0].mxu0
    %v12016 = vpop.f32.mrb[0].mxu0
    %12017 = vdwg.mxu0
    %12018 = vmatprep.subr.bf16.mxu0 %v9683
    %12019 = vmatpush1.bf16.msra.mxu0 %v9682
    %12020 = vmatprep.subr.bf16.mxu0 %v9707
    %12021 = vmatpush1.bf16.msra.mxu0 %v9706
    %12022 = vmatprep.subr.bf16.mxu0 %v9731
    %12023 = vmatpush1.bf16.msra.mxu0 %v9730
    %12024 = vmatprep.subr.bf16.mxu0 %v9755
    %12025 = vmatpush1.bf16.msra.mxu0 %v9754
    %12026 = vmatprep.subr.bf16.mxu0 %v9779
    %12027 = vmatpush1.bf16.msra.mxu0 %v9778
    %12028 = vmatprep.subr.bf16.mxu0 %v9803
    %12029 = vmatpush1.bf16.msra.mxu0 %v9802
    %12030 = vmatprep.subr.bf16.mxu0 %v9827
    %12031 = vmatpush1.bf16.msra.mxu0 %v9826
    %12032 = vmatprep.subr.bf16.mxu0 %v9851
    %12033 = vmatpush1.bf16.msra.mxu0 %v9850
    %12034 = vmatprep.subr.bf16.mxu0 %v9875
    %12035 = vmatpush1.bf16.msra.mxu0 %v9874
    %12036 = vmatprep.subr.bf16.mxu0 %v9899
    %12037 = vmatpush1.bf16.msra.mxu0 %v9898
    %12038 = vmatprep.subr.bf16.mxu0 %v9923
    %12039 = vmatpush1.bf16.msra.mxu0 %v9922
    %12040 = vmatprep.subr.bf16.mxu0 %v9947
    %12041 = vmatpush1.bf16.msra.mxu0 %v9946
    %12042 = vmatprep.subr.bf16.mxu0 %v9971
    %12043 = vmatpush1.bf16.msra.mxu0 %v9970
    %12044 = vmatprep.subr.bf16.mxu0 %v9995
    %12045 = vmatpush1.bf16.msra.mxu0 %v9994
    %12046 = vmatprep.subr.bf16.mxu0 %v10019
    %12047 = vmatpush1.bf16.msra.mxu0 %v10018
    %12048 = vmatprep.subr.bf16.mxu0 %v10043
    %12049 = vmatpush1.bf16.msra.mxu0 %v10042
    %12050 = vmatprep.mubr.bf16.mxu0 %v6461
    %12051 = vmatmul.mubr.bf16.gmra.mrb[0].mxu0 %v6460
    %v12052 = vpop.f32.mrb[0].mxu0
    %v12053 = vadd.f32 %v7321, %v12052
    %v12054 = vpop.f32.mrb[0].mxu0
    %v12055 = vadd.f32 %v7325, %v12054
    %v12056 = vpop.f32.mrb[0].mxu0
    %v12057 = vpop.f32.mrb[0].mxu0
    %12058 = vdwg.mxu0
    %12059 = vmatprep.subr.bf16.mxu0 %v10067
    %12060 = vmatpush1.bf16.msra.mxu0 %v10066
    %12061 = vmatprep.subr.bf16.mxu0 %v10091
    %12062 = vmatpush1.bf16.msra.mxu0 %v10090
    %12063 = vmatprep.subr.bf16.mxu0 %v10115
    %12064 = vmatpush1.bf16.msra.mxu0 %v10114
    %12065 = vmatprep.subr.bf16.mxu0 %v10139
    %12066 = vmatpush1.bf16.msra.mxu0 %v10138
    %12067 = vmatprep.subr.bf16.mxu0 %v10163
    %12068 = vmatpush1.bf16.msra.mxu0 %v10162
    %12069 = vmatprep.subr.bf16.mxu0 %v10187
    %12070 = vmatpush1.bf16.msra.mxu0 %v10186
    %12071 = vmatprep.subr.bf16.mxu0 %v10211
    %12072 = vmatpush1.bf16.msra.mxu0 %v10210
    %12073 = vmatprep.subr.bf16.mxu0 %v10235
    %12074 = vmatpush1.bf16.msra.mxu0 %v10234
    %12075 = vmatprep.subr.bf16.mxu0 %v10259
    %12076 = vmatpush1.bf16.msra.mxu0 %v10258
    %12077 = vmatprep.subr.bf16.mxu0 %v10283
    %12078 = vmatpush1.bf16.msra.mxu0 %v10282
    %12079 = vmatprep.subr.bf16.mxu0 %v10307
    %12080 = vmatpush1.bf16.msra.mxu0 %v10306
    %12081 = vmatprep.subr.bf16.mxu0 %v10331
    %12082 = vmatpush1.bf16.msra.mxu0 %v10330
    %12083 = vmatprep.subr.bf16.mxu0 %v10355
    %12084 = vmatpush1.bf16.msra.mxu0 %v10354
    %12085 = vmatprep.subr.bf16.mxu0 %v10379
    %12086 = vmatpush1.bf16.msra.mxu0 %v10378
    %12087 = vmatprep.subr.bf16.mxu0 %v10403
    %12088 = vmatpush1.bf16.msra.mxu0 %v10402
    %12089 = vmatprep.subr.bf16.mxu0 %v10427
    %12090 = vmatpush1.bf16.msra.mxu0 %v10426
    %12091 = vmatprep.mubr.bf16.mxu0 %v6463
    %12092 = vmatmul.mubr.bf16.gmra.mrb[0].mxu0 %v6462
    %v12093 = vpop.f32.mrb[0].mxu0
    %v12094 = vadd.f32 %v12053, %v12093
    %v12095 = vpop.f32.mrb[0].mxu0
    %v12096 = vadd.f32 %v12055, %v12095
    %v12097 = vpop.f32.mrb[0].mxu0
    %v12098 = vpop.f32.mrb[0].mxu0
    %12099 = vdwg.mxu0
    %12100 = vmatprep.subr.bf16.mxu0 %v9685
    %12101 = vmatpush1.bf16.msra.mxu0 %v9684
    %12102 = vmatprep.subr.bf16.mxu0 %v9709
    %12103 = vmatpush1.bf16.msra.mxu0 %v9708
    %12104 = vmatprep.subr.bf16.mxu0 %v9733
    %12105 = vmatpush1.bf16.msra.mxu0 %v9732
    %12106 = vmatprep.subr.bf16.mxu0 %v9757
    %12107 = vmatpush1.bf16.msra.mxu0 %v9756
    %12108 = vmatprep.subr.bf16.mxu0 %v9781
    %12109 = vmatpush1.bf16.msra.mxu0 %v9780
    %12110 = vmatprep.subr.bf16.mxu0 %v9805
    %12111 = vmatpush1.bf16.msra.mxu0 %v9804
    %12112 = vmatprep.subr.bf16.mxu0 %v9829
    %12113 = vmatpush1.bf16.msra.mxu0 %v9828
    %12114 = vmatprep.subr.bf16.mxu0 %v9853
    %12115 = vmatpush1.bf16.msra.mxu0 %v9852
    %12116 = vmatprep.subr.bf16.mxu0 %v9877
    %12117 = vmatpush1.bf16.msra.mxu0 %v9876
    %12118 = vmatprep.subr.bf16.mxu0 %v9901
    %12119 = vmatpush1.bf16.msra.mxu0 %v9900
    %12120 = vmatprep.subr.bf16.mxu0 %v9925
    %12121 = vmatpush1.bf16.msra.mxu0 %v9924
    %12122 = vmatprep.subr.bf16.mxu0 %v9949
    %12123 = vmatpush1.bf16.msra.mxu0 %v9948
    %12124 = vmatprep.subr.bf16.mxu0 %v9973
    %12125 = vmatpush1.bf16.msra.mxu0 %v9972
    %12126 = vmatprep.subr.bf16.mxu0 %v9997
    %12127 = vmatpush1.bf16.msra.mxu0 %v9996
    %12128 = vmatprep.subr.bf16.mxu0 %v10021
    %12129 = vmatpush1.bf16.msra.mxu0 %v10020
    %12130 = vmatprep.subr.bf16.mxu0 %v10045
    %12131 = vmatpush1.bf16.msra.mxu0 %v10044
    %12132 = vmatprep.mubr.bf16.mxu0 %v6461
    %12133 = vmatmul.mubr.bf16.gmra.mrb[0].mxu0 %v6460
    %v12134 = vpop.f32.mrb[0].mxu0
    %v12135 = vadd.f32 %v7329, %v12134
    %v12136 = vpop.f32.mrb[0].mxu0
    %v12137 = vadd.f32 %v7333, %v12136
    %v12138 = vpop.f32.mrb[0].mxu0
    %v12139 = vpop.f32.mrb[0].mxu0
    %12140 = vdwg.mxu0
    %12141 = vmatprep.subr.bf16.mxu0 %v10069
    %12142 = vmatpush1.bf16.msra.mxu0 %v10068
    %12143 = vmatprep.subr.bf16.mxu0 %v10093
    %12144 = vmatpush1.bf16.msra.mxu0 %v10092
    %12145 = vmatprep.subr.bf16.mxu0 %v10117
    %12146 = vmatpush1.bf16.msra.mxu0 %v10116
    %12147 = vmatprep.subr.bf16.mxu0 %v10141
    %12148 = vmatpush1.bf16.msra.mxu0 %v10140
    %12149 = vmatprep.subr.bf16.mxu0 %v10165
    %12150 = vmatpush1.bf16.msra.mxu0 %v10164
    %12151 = vmatprep.subr.bf16.mxu0 %v10189
    %12152 = vmatpush1.bf16.msra.mxu0 %v10188
    %12153 = vmatprep.subr.bf16.mxu0 %v10213
    %12154 = vmatpush1.bf16.msra.mxu0 %v10212
    %12155 = vmatprep.subr.bf16.mxu0 %v10237
    %12156 = vmatpush1.bf16.msra.mxu0 %v10236
    %12157 = vmatprep.subr.bf16.mxu0 %v10261
    %12158 = vmatpush1.bf16.msra.mxu0 %v10260
    %12159 = vmatprep.subr.bf16.mxu0 %v10285
    %12160 = vmatpush1.bf16.msra.mxu0 %v10284
    %12161 = vmatprep.subr.bf16.mxu0 %v10309
    %12162 = vmatpush1.bf16.msra.mxu0 %v10308
    %12163 = vmatprep.subr.bf16.mxu0 %v10333
    %12164 = vmatpush1.bf16.msra.mxu0 %v10332
    %12165 = vmatprep.subr.bf16.mxu0 %v10357
    %12166 = vmatpush1.bf16.msra.mxu0 %v10356
    %12167 = vmatprep.subr.bf16.mxu0 %v10381
    %12168 = vmatpush1.bf16.msra.mxu0 %v10380
    %12169 = vmatprep.subr.bf16.mxu0 %v10405
    %12170 = vmatpush1.bf16.msra.mxu0 %v10404
    %12171 = vmatprep.subr.bf16.mxu0 %v10429
    %12172 = vmatpush1.bf16.msra.mxu0 %v10428
    %12173 = vmatprep.mubr.bf16.mxu0 %v6463
    %12174 = vmatmul.mubr.bf16.gmra.mrb[0].mxu0 %v6462
    %v12175 = vpop.f32.mrb[0].mxu0
    %v12176 = vadd.f32 %v12135, %v12175
    %v12177 = vpop.f32.mrb[0].mxu0
    %v12178 = vadd.f32 %v12137, %v12177
    %v12179 = vpop.f32.mrb[0].mxu0
    %v12180 = vpop.f32.mrb[0].mxu0
    %12181 = vdwg.mxu0
    %v12182 = vmul.f32 %v11274, 0.5
    %v12183 = vmul.f32 %v11276, 0.5
    %v12184 = vmul.f32 %v11356, 0.5
    %v12185 = vmul.f32 %v11358, 0.5
    %v12186 = vmul.f32 %v11438, 0.5
    %v12187 = vmul.f32 %v11440, 0.5
    %v12188 = vmul.f32 %v11520, 0.5
    %v12189 = vmul.f32 %v11522, 0.5
    %v12190 = vmul.f32 %v11602, 0.5
    %v12191 = vmul.f32 %v11604, 0.5
    %v12192 = vmul.f32 %v11684, 0.5
    %v12193 = vmul.f32 %v11686, 0.5
    %v12194 = vmul.f32 %v11766, 0.5
    %v12195 = vmul.f32 %v11768, 0.5
    %v12196 = vmul.f32 %v11848, 0.5
    %v12197 = vmul.f32 %v11850, 0.5
    %v12198 = vmul.f32 %v11930, 0.5
    %v12199 = vmul.f32 %v11932, 0.5
    %v12200 = vmul.f32 %v12012, 0.5
    %v12201 = vmul.f32 %v12014, 0.5
    %v12202 = vmul.f32 %v12094, 0.5
    %v12203 = vmul.f32 %v12096, 0.5
    %v12204 = vmul.f32 %v12176, 0.5
    %v12205 = vmul.f32 %v12178, 0.5
    %v12206 = vtanh.pop %v12182
    %v12207 = vtanh.pop %v12183
    %v12208 = vtanh.pop %v12184
    %v12209 = vtanh.pop %v12185
    %v12210 = vtanh.pop %v12186
    %v12211 = vtanh.pop %v12187
    %v12212 = vtanh.pop %v12188
    %v12213 = vtanh.pop %v12189
    %v12214 = vtanh.pop %v12190
    %v12215 = vtanh.pop %v12191
    %v12216 = vtanh.pop %v12192
    %v12217 = vtanh.pop %v12193
    %v12218 = vtanh.pop %v12194
    %v12219 = vtanh.pop %v12195
    %v12220 = vtanh.pop %v12196
    %v12221 = vtanh.pop %v12197
    %v12222 = vtanh.pop %v12198
    %v12223 = vtanh.pop %v12199
    %v12224 = vtanh.pop %v12200
    %v12225 = vtanh.pop %v12201
    %v12226 = vtanh.pop %v12202
    %v12227 = vtanh.pop %v12203
    %v12228 = vtanh.pop %v12204
    %v12229 = vtanh.pop %v12205
    %v12230 = vadd.f32 %v12206, 1.0
    %v12231 = vadd.f32 %v12207, 1.0
    %v12232 = vadd.f32 %v12208, 1.0
    %v12233 = vadd.f32 %v12209, 1.0
    %v12234 = vadd.f32 %v12210, 1.0
    %v12235 = vadd.f32 %v12211, 1.0
    %v12236 = vadd.f32 %v12212, 1.0
    %v12237 = vadd.f32 %v12213, 1.0
    %v12238 = vadd.f32 %v12214, 1.0
    %v12239 = vadd.f32 %v12215, 1.0
    %v12240 = vadd.f32 %v12216, 1.0
    %v12241 = vadd.f32 %v12217, 1.0
    %v12242 = vadd.f32 %v12218, 1.0
    %v12243 = vadd.f32 %v12219, 1.0
    %v12244 = vadd.f32 %v12220, 1.0
    %v12245 = vadd.f32 %v12221, 1.0
    %v12246 = vadd.f32 %v12222, 1.0
    %v12247 = vadd.f32 %v12223, 1.0
    %v12248 = vadd.f32 %v12224, 1.0
    %v12249 = vadd.f32 %v12225, 1.0
    %v12250 = vadd.f32 %v12226, 1.0
    %v12251 = vadd.f32 %v12227, 1.0
    %v12252 = vadd.f32 %v12228, 1.0
    %v12253 = vadd.f32 %v12229, 1.0
    %v12254 = vmul.f32 %v12230, 0.5
    %v12255 = vmul.f32 %v12231, 0.5
    %v12256 = vmul.f32 %v12232, 0.5
    %v12257 = vmul.f32 %v12233, 0.5
    %v12258 = vmul.f32 %v12234, 0.5
    %v12259 = vmul.f32 %v12235, 0.5
    %v12260 = vmul.f32 %v12236, 0.5
    %v12261 = vmul.f32 %v12237, 0.5
    %v12262 = vmul.f32 %v12238, 0.5
    %v12263 = vmul.f32 %v12239, 0.5
    %v12264 = vmul.f32 %v12240, 0.5
    %v12265 = vmul.f32 %v12241, 0.5
    %v12266 = vmul.f32 %v12242, 0.5
    %v12267 = vmul.f32 %v12243, 0.5
    %v12268 = vmul.f32 %v12244, 0.5
    %v12269 = vmul.f32 %v12245, 0.5
    %v12270 = vmul.f32 %v12246, 0.5
    %v12271 = vmul.f32 %v12247, 0.5
    %v12272 = vmul.f32 %v12248, 0.5
    %v12273 = vmul.f32 %v12249, 0.5
    %v12274 = vmul.f32 %v12250, 0.5
    %v12275 = vmul.f32 %v12251, 0.5
    %v12276 = vmul.f32 %v12252, 0.5
    %v12277 = vmul.f32 %v12253, 0.5
    %v12278 = vpack.c.bf16 %v12254, %v12254
    %v12279 = vpack.c.bf16 %v12255, %v12255
    %v12280 = vpack.c.bf16 %v12256, %v12256
    %v12281 = vpack.c.bf16 %v12257, %v12257
    %v12282 = vpack.c.bf16 %v12258, %v12258
    %v12283 = vpack.c.bf16 %v12259, %v12259
    %v12284 = vpack.c.bf16 %v12260, %v12260
    %v12285 = vpack.c.bf16 %v12261, %v12261
    %v12286 = vpack.c.bf16 %v12262, %v12262
    %v12287 = vpack.c.bf16 %v12263, %v12263
    %v12288 = vpack.c.bf16 %v12264, %v12264
    %v12289 = vpack.c.bf16 %v12265, %v12265
    %v12290 = vpack.c.bf16 %v12266, %v12266
    %v12291 = vpack.c.bf16 %v12267, %v12267
    %v12292 = vpack.c.bf16 %v12268, %v12268
    %v12293 = vpack.c.bf16 %v12269, %v12269
    %v12294 = vpack.c.bf16 %v12270, %v12270
    %v12295 = vpack.c.bf16 %v12271, %v12271
    %v12296 = vpack.c.bf16 %v12272, %v12272
    %v12297 = vpack.c.bf16 %v12273, %v12273
    %v12298 = vpack.c.bf16 %v12274, %v12274
    %v12299 = vpack.c.bf16 %v12275, %v12275
    %v12300 = vpack.c.bf16 %v12276, %v12276
    %v12301 = vpack.c.bf16 %v12277, %v12277
    %v12326 = vunpack.c.l.b16 %v12278
    %v12327 = vunpack.c.l.b16 %v12279
    %v12328 = vunpack.c.l.b16 %v12280
    %v12329 = vunpack.c.l.b16 %v12281
    %v12330 = vunpack.c.l.b16 %v12282
    %v12331 = vunpack.c.l.b16 %v12283
    %v12332 = vunpack.c.l.b16 %v12284
    %v12333 = vunpack.c.l.b16 %v12285
    %v12334 = vunpack.c.l.b16 %v12286
    %v12335 = vunpack.c.l.b16 %v12287
    %v12336 = vunpack.c.l.b16 %v12288
    %v12337 = vunpack.c.l.b16 %v12289
    %v12338 = vunpack.c.l.b16 %v12290
    %v12339 = vunpack.c.l.b16 %v12291
    %v12340 = vunpack.c.l.b16 %v12292
    %v12341 = vunpack.c.l.b16 %v12293
    %v12342 = vunpack.c.l.b16 %v12294
    %v12343 = vunpack.c.l.b16 %v12295
    %v12344 = vunpack.c.l.b16 %v12296
    %v12345 = vunpack.c.l.b16 %v12297
    %v12346 = vunpack.c.l.b16 %v12298
    %v12347 = vunpack.c.l.b16 %v12299
    %v12348 = vunpack.c.l.b16 %v12300
    %v12349 = vunpack.c.l.b16 %v12301
    %v12350 = vpack.c.b16 %v12327, %v12326
    %v12351 = vpack.c.b16 %v12329, %v12328
    %v12352 = vpack.c.b16 %v12331, %v12330
    %v12353 = vpack.c.b16 %v12333, %v12332
    %v12354 = vpack.c.b16 %v12335, %v12334
    %v12355 = vpack.c.b16 %v12337, %v12336
    %v12356 = vpack.c.b16 %v12339, %v12338
    %v12357 = vpack.c.b16 %v12341, %v12340
    %v12358 = vpack.c.b16 %v12343, %v12342
    %v12359 = vpack.c.b16 %v12345, %v12344
    %v12360 = vpack.c.b16 %v12347, %v12346
    %v12361 = vpack.c.b16 %v12349, %v12348
    %12374 = vst [vmem:[#allocation17] sm:$0xff] %v12350
    %12375 = vst [vmem:[#allocation17 + $0x8] sm:$0xff] %v12351
    %12376 = vst [vmem:[#allocation17 + $0x10] sm:$0xff] %v12352
    %12377 = vst [vmem:[#allocation17 + $0x18] sm:$0xff] %v12353
    %12378 = vst [vmem:[#allocation17 + $0x20] sm:$0xff] %v12354
    %12379 = vst [vmem:[#allocation17 + $0x28] sm:$0xff] %v12355
    %12380 = vst [vmem:[#allocation17 + $0x30] sm:$0xff] %v12356
    %12381 = vst [vmem:[#allocation17 + $0x38] sm:$0xff] %v12357
    %12382 = vst [vmem:[#allocation17 + $0x40] sm:$0xff] %v12358
    %12383 = vst [vmem:[#allocation17 + $0x48] sm:$0xff] %v12359
    %12384 = vst [vmem:[#allocation17 + $0x50] sm:$0xff] %v12360
    %12385 = vst [vmem:[#allocation17 + $0x58] sm:$0xff] %v12361
    // Predicated region
    $region74: #{tpu_custom_call.1} parent=1 // pred_check
      _
    $region75: #{tpu_custom_call.1} parent=1 // pred_check_branch
      %12387 = sbr.rel (0) target = $region77
    $region76: #{tpu_custom_call.1} parent=1 // pred_region
      %s12389 = ssub.s32 1536, 1536
      %12390 = vsyncadd [#allocation4], %s12389
      %s12392 = sshll.u32 [#allocation17], 4
      %s12393 = int_to_ptr.vmem [resolvable:$true] %s12392
      %12395 = dma.vmem_to_hbm [thread:$0]  %s12393, 1536, %s9, [#allocation4]
    $region77: #{tpu_custom_call.1} parent=1 // pred_fallthru
      _
    // Predicated region
    $region78: #{tpu_custom_call.1} parent=1 // pred_check
      _
    $region79: #{tpu_custom_call.1} parent=1 // pred_check_branch
      %12397 = sbr.rel (0) target = $region81
    $region80: #{tpu_custom_call.1} parent=1 // pred_region
      %12398 = dma.done [#allocation4], 1536
    $region81: #{tpu_custom_call.1} parent=1 // pred_fallthru
      _
    %12399 = vsyncpa [#allocation3], 1
    %12400 = vsyncpa [#allocation6], 1
    %12401 = vsyncpa [#allocation9], 1
    %12402 = vsyncpa [#allocation12], 1
    %12403 = vsyncpa [#allocation15], 1
    %12404 = vsyncpa [#allocation4], 1

</llo_original>
